<compile_context>
chip_gen: v7x
topology: tpu7x:2x2x1
jax: 0.10.0
libtpu: 0.0.40
codegen_flags: <defaults>
</compile_context>

<pallas_src>
import math

import jax
import jax.numpy as jnp
from jax import lax
from jax.experimental import pallas as pl
from jax.experimental.pallas import tpu as pltpu


def _vmem_limits():
    """(tiling budget, scoped vmem limit) in bytes, derived from the device."""
    phys = 64 * 1024 * 1024                      # conservative default (v7x per-TC)
    try:
        info = pltpu.get_tpu_info()
        phys = int(getattr(info, "vmem_capacity_bytes", phys)) or phys
    except Exception:
        pass
    budget = min(phys // 2, 64 * 1024 * 1024)    # working-set target for tile sizing
    limit = int(phys * 0.85)                     # headroom for compiler scratch/spills
    return budget, limit


def _tile_bytes(th, W, C, Cout):
    """Rough per-grid-step VMEM working set for row-tile height `th` (bytes)."""
    Wp = W + 2
    b = 0
    b += 2 * th * Wp * C * 4             # double-buffered body input block (f32)
    b += 2 * 2 * Wp * C * 4              # double-buffered 2-row halo block
    b += 16 * C * Cout * 2               # resident folded weights (bf16, single-buffered)
    b += 2 * 4 * th * W * Cout * 4       # double-buffered f32 output block
    b += (th + 2) * Wp * C * 4           # in-kernel row concat (f32)
    b += 3 * (th + 2) * W * C * 2        # three bf16 column-shifted views
    b += 2 * (th + 2) * W * 2 * C * 2    # deep-K column patches (when Cin % 128 == 0)
    b += 2 * th * W * Cout * 4           # live f32 accumulator / matmul results
    return b


def _pick_tile_h(H, W, C, Cout, n_batch, budget):
    """Largest even row tile fitting the VMEM budget; >=2 row tiles when N == 1."""
    if n_batch >= 2:
        max_th = H + (H % 2)
    else:
        max_th = max(2, (H // 2) & ~1)   # keep >=2 grid steps so both v7x TCs get work
    best = 0
    for th in range(2, min(H, max_th) + 1, 2):   # prefer even divisors (no padded rows)
        if H % th == 0 and _tile_bytes(th, W, C, Cout) <= budget:
            best = th
    if best:
        return best, H
    th = 2
    for cand in range(2, max_th + 1, 2):         # otherwise pad H up to a multiple of th
        if _tile_bytes(cand, W, C, Cout) <= budget:
            th = cand
    Hw = -(-H // th) * th
    return th, Hw


def _fold_weights(weight, deep_k):
    """Fold 3x3 OIHW conv weights into per-parity window matrices (bf16).

    The conv input is a nearest 2x upsample of x, so the output pixel at parity
    (py, px) only sees a 2x2 window of ORIGINAL pixels; the 3 kernel taps along
    each axis collapse onto those 2 window positions:
        parity 0: taps {0} -> pos 0, taps {1, 2} -> pos 1
        parity 1: taps {0, 1} -> pos 0, taps {2} -> pos 1
    deep_k=True : returns (8, 2*Cin, Cout), matrix idx = (py*2+px)*2 + a, with the
                  two column taps stacked along the contraction dim (K = 2*Cin).
    deep_k=False: returns (16, Cin, Cout), matrix idx = ((py*2+px)*2 + a)*2 + b.
    """
    w = jnp.transpose(weight, (2, 3, 1, 0)).astype(jnp.float32)  # (ky, kx, Cin, Cout)
    sets = (((0,), (1, 2)), ((0, 1), (2,)))                      # [parity][pos] -> taps
    mats = []
    for py in range(2):
        for px in range(2):
            for a in range(2):
                blocks = [
                    sum(w[ky, kx] for ky in sets[py][a] for kx in sets[px][b])
                    for b in range(2)
                ]
                if deep_k:
                    mats.append(jnp.concatenate(blocks, axis=0))  # (2*Cin, Cout)
                else:
                    mats.extend(blocks)                           # 2 x (Cin, Cout)
    return jnp.stack(mats, axis=0).astype(jnp.bfloat16)


def _upsample_conv_kernel(xb_ref, xh_ref, w_ref, b_ref, o_ref):
    """Fused nearest-2x-upsample + 3x3 conv for one (batch, row-tile) block.

    xb_ref: (1, TH,  W+2, Cin)   zero-padded original-res rows [i*TH, i*TH+TH)  (f32)
    xh_ref: (1, 2,   W+2, Cin)   2-row bottom halo [i*TH+TH, i*TH+TH+2)         (f32)
    w_ref : (8, 2*Cin, Cout) or (16, Cin, Cout)  folded bf16 weights
    b_ref : (1, Cout)            bias (f32)
    o_ref : (1, 4, TH, W, Cout)  parity-separated outputs, plane p = py*2 + px
    """
    th = xb_ref.shape[1]
    W = o_ref.shape[3]
    deep_k = (w_ref.shape[0] == 8)
    cdt = w_ref.dtype                                            # bf16 MXU operand dtype

    # TH+2 padded rows for this tile (body ++ halo); concat along the 3rd-minor axis.
    rows = jnp.concatenate([xb_ref[0], xh_ref[0]], axis=0)       # (TH+2, W+2, Cin) f32

    # Column-shifted views: shift in f32 (cheap/safe sublane relayout, materialized
    # at most once each), then one elementwise cast to bf16 for the MXU.
    cols = [rows[:, c:c + W, :].astype(cdt) for c in range(3)]   # 3 x (TH+2, W, Cin)

    bias = b_ref[0].astype(jnp.float32)                          # (Cout,)

    def mm(lhs, rhs):                                            # MXU, f32 accumulate
        return lax.dot_general(lhs, rhs,
                               dimension_numbers=(((2,), (0,)), ((), ())),
                               preferred_element_type=jnp.float32)

    if deep_k:
        # Deep-K path (Cin % 128 == 0): fold the two column taps of each parity into
        # one lane-aligned contraction of depth 2*Cin -> 2 matmuls + 1 add per parity.
        col2 = [jnp.concatenate([cols[px], cols[px + 1]], axis=-1) for px in range(2)]
        for py in range(2):
            for px in range(2):
                base = (py * 2 + px) * 2
                acc = mm(col2[px][py:py + th], w_ref[base])
                acc = acc + mm(col2[px][py + 1:py + 1 + th], w_ref[base + 1])
                o_ref[0, py * 2 + px] = (acc + bias).astype(o_ref.dtype)
    else:
        # Small / unaligned channel fallback: per-tap matmuls (row slices along the
        # leading axis are cheap views).
        for py in range(2):
            for px in range(2):
                acc = None
                for a in range(2):
                    for b in range(2):
                        idx = ((py * 2 + px) * 2 + a) * 2 + b
                        term = mm(cols[px + b][py + a:py + a + th], w_ref[idx])
                        acc = term if acc is None else acc + term
                o_ref[0, py * 2 + px] = (acc + bias).astype(o_ref.dtype)


def upsample_forward(x_nchw, temb, weight, bias):
    """Equivalent of UpSample.forward(x, temb): nearest 2x upsample + Conv2d(3x3, pad=1).

    x_nchw : (N, C, H, W)       (PyTorch NCHW)
    temb   : unused (mirrors the PyTorch signature)
    weight : (Cout, Cin, 3, 3)  (PyTorch OIHW)
    bias   : (Cout,)
    returns: (N, Cout, 2H, 2W)  (NCHW)
    """
    del temb  # unused by the reference module
    N, C, H, W = x_nchw.shape
    Cout = weight.shape[0]
    dtype = x_nchw.dtype

    budget, vmem_limit = _vmem_limits()
    th, Hw = _pick_tile_h(H, W, C, Cout, N, budget)
    Wp = W + 2

    # NCHW -> NHWC (channels on lanes) + zero pad at ORIGINAL resolution only:
    # the 4x-sized upsampled intermediate is never materialized in HBM.
    x = jnp.transpose(x_nchw, (0, 2, 3, 1))
    xp = jnp.pad(x, ((0, 0), (1, Hw + 1 - H), (1, 1), (0, 0)))   # (N, Hw+2, W+2, C)

    deep_k = (C % 128 == 0)
    wf = _fold_weights(weight, deep_k)                           # bf16 folded weights
    b2d = bias.reshape(1, Cout).astype(jnp.float32)

    const_kw = {}
    if hasattr(pl, "Buffered"):
        const_kw = dict(pipeline_mode=pl.Buffered(1))            # constants: no 2nd copy

    def build(const_kwargs):
        return pl.pallas_call(
            _upsample_conv_kernel,
            out_shape=jax.ShapeDtypeStruct((N, 4, Hw, W, Cout), dtype),
            grid=(N, Hw // th),
            in_specs=[
                # Body rows of the padded input: padded rows [i*th, i*th + th).
                pl.BlockSpec((1, th, Wp, C), lambda n, i: (n, i, 0, 0)),
                # Bottom halo: padded rows [i*th + th, i*th + th + 2). th is even, so
                # the element offset is a block index with block height 2.
                pl.BlockSpec((1, 2, Wp, C), lambda n, i: (n, (i + 1) * (th // 2), 0, 0)),
                # Folded weights / bias stay resident (constant index map, 1 buffer).
                pl.BlockSpec(wf.shape, lambda n, i: (0, 0, 0), **const_kwargs),
                pl.BlockSpec((1, Cout), lambda n, i: (0, 0), **const_kwargs),
            ],
            out_specs=pl.BlockSpec((1, 4, th, W, Cout), lambda n, i: (n, 0, i, 0, 0)),
            compiler_params=pltpu.CompilerParams(
                dimension_semantics=("parallel", "parallel"),
                vmem_limit_bytes=vmem_limit,
            ),
        )

    try:
        out5 = build(const_kw)(xp, xp, wf, b2d)
    except Exception:
        if not const_kw:
            raise
        out5 = build({})(xp, xp, wf, b2d)   # fall back to default double-buffering

    # Crop row padding; ONE transpose then performs both the parity interleave and
    # the NHWC -> NCHW conversion (both reshapes are layout-free row-major merges).
    out6 = out5[:, :, :H].reshape(N, 2, 2, H, W, Cout)
    out = jnp.transpose(out6, (0, 5, 3, 1, 4, 2)).reshape(N, Cout, 2 * H, 2 * W)
    return out


def _init_params(key, in_ch):
    # nn.Conv2d(in_ch, in_ch, 3): weight (in_ch, in_ch, 3, 3), xavier_uniform_; bias zeros.
    fan_in = in_ch * 3 * 3
    fan_out = in_ch * 3 * 3
    bound = math.sqrt(6.0 / (fan_in + fan_out))
    weight = jax.random.uniform(
        key, (in_ch, in_ch, 3, 3), dtype=jnp.float32, minval=-bound, maxval=bound
    )
    bias = jnp.zeros((in_ch,), jnp.float32)
    return weight, bias


if __name__ == "__main__":
    key = jax.random.PRNGKey(0)
    k_x, k_t, k_w = jax.random.split(key, 3)

    N, C, H, W = 2, 4, 16, 16
    x = jax.random.normal(k_x, (N, C, H, W), dtype=jnp.float32)
    temb = jax.random.normal(k_t, (N, 32), dtype=jnp.float32)   # unused, mirrors signature
    weight, bias = _init_params(k_w, C)

    out = jax.block_until_ready(upsample_forward(x, temb, weight, bias))
    assert out.shape == (N, C, 2 * H, 2 * W), out.shape

    # Reference: XLA f32 conv on the explicitly upsampled input.  Kernel uses bf16
    # MXU operands (f32 accumulation), so tolerance is loosened vs a pure-f32 match.
    x_up = jnp.repeat(jnp.repeat(x, 2, axis=2), 2, axis=3)
    ref = lax.conv_general_dilated(
        x_up, weight, window_strides=(1, 1), padding=((1, 1), (1, 1)),
        dimension_numbers=("NCHW", "OIHW", "NCHW"),
    ) + bias.reshape(1, C, 1, 1)
    err = float(jnp.max(jnp.abs(out - ref)))
    assert jnp.allclose(out, ref, atol=5e-2, rtol=5e-2), err

    # Exercise the bias path with a non-zero bias as well.
    bias2 = jax.random.normal(k_t, (C,), dtype=jnp.float32)
    out2 = jax.block_until_ready(upsample_forward(x, temb, weight, bias2))
    ref2 = ref + bias2.reshape(1, C, 1, 1)
    assert jnp.allclose(out2, ref2, atol=5e-2, rtol=5e-2)

    print("KERNEL_OK")
</pallas_src>

<mosaic_0001>
module attributes {stable_mosaic.version = 11 : i64} {
  func.func @_upsample_conv_kernel(%arg0: i32, %arg1: i32, %arg2: memref<1x16x18x4xf32, #tpu.memory_space<vmem>>, %arg3: memref<1x2x18x4xf32, #tpu.memory_space<vmem>>, %arg4: memref<16x4x4xbf16, #tpu.memory_space<vmem>>, %arg5: memref<1x4xf32, #tpu.memory_space<vmem>>, %arg6: memref<1x4x16x16x4xf32, #tpu.memory_space<vmem>>) attributes {dimension_semantics = [#tpu.dimension_semantics<parallel>, #tpu.dimension_semantics<parallel>], iteration_bounds = array<i64: 2, 1>, scalar_prefetch = 0 : i64, scratch_operands = 0 : i64, tpu.core_type = #tpu.core_type<tc>, window_params = [{transform_indices = @transform_0, window_bounds = array<i64: 1, 16, 18, 4>}, {transform_indices = @transform_1, window_bounds = array<i64: 1, 2, 18, 4>}, {pipeline_mode = #tpu.pipeline_mode<synchronous>, transform_indices = @transform_2, window_bounds = array<i64: 16, 4, 4>}, {pipeline_mode = #tpu.pipeline_mode<synchronous>, transform_indices = @transform_3, window_bounds = array<i64: 1, 4>}, {transform_indices = @transform_4, window_bounds = array<i64: 1, 4, 16, 16, 4>}]} {
    %c0 = arith.constant 0 : index
    %c0_0 = arith.constant 0 : index
    %c0_1 = arith.constant 0 : index
    %c0_2 = arith.constant 0 : index
    %0 = vector.load %arg2[%c0, %c0_0, %c0_1, %c0_2] : memref<1x16x18x4xf32, #tpu.memory_space<vmem>>, vector<1x16x18x4xf32>
    %1 = vector.shape_cast %0 : vector<1x16x18x4xf32> to vector<16x18x4xf32>
    %c0_3 = arith.constant 0 : index
    %c0_4 = arith.constant 0 : index
    %c0_5 = arith.constant 0 : index
    %c0_6 = arith.constant 0 : index
    %2 = vector.load %arg3[%c0_3, %c0_4, %c0_5, %c0_6] : memref<1x2x18x4xf32, #tpu.memory_space<vmem>>, vector<1x2x18x4xf32>
    %3 = vector.shape_cast %2 : vector<1x2x18x4xf32> to vector<2x18x4xf32>
    %4 = tpu.concatenate %1, %3 in 0 : vector<16x18x4xf32>, vector<2x18x4xf32> -> vector<18x18x4xf32>
    %5 = vector.extract_strided_slice %4 {offsets = [0, 0, 0], sizes = [18, 16, 4], strides = [1, 1, 1]} : vector<18x18x4xf32> to vector<18x16x4xf32>
    %6 = arith.truncf %5 : vector<18x16x4xf32> to vector<18x16x4xbf16>
    %7 = vector.extract_strided_slice %4 {offsets = [0, 1, 0], sizes = [18, 16, 4], strides = [1, 1, 1]} : vector<18x18x4xf32> to vector<18x16x4xf32>
    %8 = arith.truncf %7 : vector<18x16x4xf32> to vector<18x16x4xbf16>
    %9 = vector.extract_strided_slice %4 {offsets = [0, 2, 0], sizes = [18, 16, 4], strides = [1, 1, 1]} : vector<18x18x4xf32> to vector<18x16x4xf32>
    %10 = arith.truncf %9 : vector<18x16x4xf32> to vector<18x16x4xbf16>
    %c0_7 = arith.constant 0 : index
    %c0_8 = arith.constant 0 : index
    %11 = vector.load %arg5[%c0_7, %c0_8] : memref<1x4xf32, #tpu.memory_space<vmem>>, vector<1x4xf32>
    %12 = vector.shape_cast %11 : vector<1x4xf32> to vector<4xf32>
    %13 = vector.extract_strided_slice %6 {offsets = [0, 0, 0], sizes = [16, 16, 4], strides = [1, 1, 1]} : vector<18x16x4xbf16> to vector<16x16x4xbf16>
    %c0_9 = arith.constant 0 : index
    %c0_10 = arith.constant 0 : index
    %c0_11 = arith.constant 0 : index
    %14 = vector.load %arg4[%c0_9, %c0_10, %c0_11] : memref<16x4x4xbf16, #tpu.memory_space<vmem>>, vector<1x4x4xbf16>
    %15 = vector.shape_cast %14 : vector<1x4x4xbf16> to vector<4x4xbf16>
    %cst = arith.constant dense<0.000000e+00> : vector<16x16x4xf32>
    %16 = tpu.matmul %13, %15, %cst {dimension_numbers = #tpu.dot_dimension_numbers<[2], [0], [0, 1], [1], [0, 0, 0, 1, 1, 1], [], []>} : vector<16x16x4xbf16>, vector<4x4xbf16>, vector<16x16x4xf32> -> vector<16x16x4xf32>
    %17 = vector.extract_strided_slice %8 {offsets = [0, 0, 0], sizes = [16, 16, 4], strides = [1, 1, 1]} : vector<18x16x4xbf16> to vector<16x16x4xbf16>
    %c1 = arith.constant 1 : index
    %c0_12 = arith.constant 0 : index
    %c0_13 = arith.constant 0 : index
    %18 = vector.load %arg4[%c1, %c0_12, %c0_13] : memref<16x4x4xbf16, #tpu.memory_space<vmem>>, vector<1x4x4xbf16>
    %19 = vector.shape_cast %18 : vector<1x4x4xbf16> to vector<4x4xbf16>
    %cst_14 = arith.constant dense<0.000000e+00> : vector<16x16x4xf32>
    %20 = tpu.matmul %17, %19, %cst_14 {dimension_numbers = #tpu.dot_dimension_numbers<[2], [0], [0, 1], [1], [0, 0, 0, 1, 1, 1], [], []>} : vector<16x16x4xbf16>, vector<4x4xbf16>, vector<16x16x4xf32> -> vector<16x16x4xf32>
    %21 = arith.addf %16, %20 : vector<16x16x4xf32>
    %22 = vector.extract_strided_slice %6 {offsets = [1, 0, 0], sizes = [16, 16, 4], strides = [1, 1, 1]} : vector<18x16x4xbf16> to vector<16x16x4xbf16>
    %c2 = arith.constant 2 : index
    %c0_15 = arith.constant 0 : index
    %c0_16 = arith.constant 0 : index
    %23 = vector.load %arg4[%c2, %c0_15, %c0_16] : memref<16x4x4xbf16, #tpu.memory_space<vmem>>, vector<1x4x4xbf16>
    %24 = vector.shape_cast %23 : vector<1x4x4xbf16> to vector<4x4xbf16>
    %cst_17 = arith.constant dense<0.000000e+00> : vector<16x16x4xf32>
    %25 = tpu.matmul %22, %24, %cst_17 {dimension_numbers = #tpu.dot_dimension_numbers<[2], [0], [0, 1], [1], [0, 0, 0, 1, 1, 1], [], []>} : vector<16x16x4xbf16>, vector<4x4xbf16>, vector<16x16x4xf32> -> vector<16x16x4xf32>
    %26 = arith.addf %21, %25 : vector<16x16x4xf32>
    %27 = vector.extract_strided_slice %8 {offsets = [1, 0, 0], sizes = [16, 16, 4], strides = [1, 1, 1]} : vector<18x16x4xbf16> to vector<16x16x4xbf16>
    %c3 = arith.constant 3 : index
    %c0_18 = arith.constant 0 : index
    %c0_19 = arith.constant 0 : index
    %28 = vector.load %arg4[%c3, %c0_18, %c0_19] : memref<16x4x4xbf16, #tpu.memory_space<vmem>>, vector<1x4x4xbf16>
    %29 = vector.shape_cast %28 : vector<1x4x4xbf16> to vector<4x4xbf16>
    %cst_20 = arith.constant dense<0.000000e+00> : vector<16x16x4xf32>
    %30 = tpu.matmul %27, %29, %cst_20 {dimension_numbers = #tpu.dot_dimension_numbers<[2], [0], [0, 1], [1], [0, 0, 0, 1, 1, 1], [], []>} : vector<16x16x4xbf16>, vector<4x4xbf16>, vector<16x16x4xf32> -> vector<16x16x4xf32>
    %31 = arith.addf %26, %30 : vector<16x16x4xf32>
    %32 = vector.shape_cast %12 : vector<4xf32> to vector<1x1x4xf32>
    %33 = vector.broadcast %32 : vector<1x1x4xf32> to vector<16x16x4xf32>
    %34 = arith.addf %31, %33 : vector<16x16x4xf32>
    %c0_21 = arith.constant 0 : index
    %c0_22 = arith.constant 0 : index
    %c0_23 = arith.constant 0 : index
    %c0_24 = arith.constant 0 : index
    %c0_25 = arith.constant 0 : index
    %35 = vector.load %arg6[%c0_21, %c0_22, %c0_23, %c0_24, %c0_25] : memref<1x4x16x16x4xf32, #tpu.memory_space<vmem>>, vector<1x1x16x16x4xf32>
    %36 = vector.shape_cast %35 : vector<1x1x16x16x4xf32> to vector<16x16x4xf32>
    %37 = vector.shape_cast %34 : vector<16x16x4xf32> to vector<1x1x16x16x4xf32>
    tpu.vector_store %arg6[%c0_21, %c0_22, %c0_23, %c0_24, %c0_25], %37 {strides = array<i32>} : memref<1x4x16x16x4xf32, #tpu.memory_space<vmem>>, vector<1x1x16x16x4xf32>,
    %38 = vector.extract_strided_slice %8 {offsets = [0, 0, 0], sizes = [16, 16, 4], strides = [1, 1, 1]} : vector<18x16x4xbf16> to vector<16x16x4xbf16>
    %c4 = arith.constant 4 : index
    %c0_26 = arith.constant 0 : index
    %c0_27 = arith.constant 0 : index
    %39 = vector.load %arg4[%c4, %c0_26, %c0_27] : memref<16x4x4xbf16, #tpu.memory_space<vmem>>, vector<1x4x4xbf16>
    %40 = vector.shape_cast %39 : vector<1x4x4xbf16> to vector<4x4xbf16>
    %cst_28 = arith.constant dense<0.000000e+00> : vector<16x16x4xf32>
    %41 = tpu.matmul %38, %40, %cst_28 {dimension_numbers = #tpu.dot_dimension_numbers<[2], [0], [0, 1], [1], [0, 0, 0, 1, 1, 1], [], []>} : vector<16x16x4xbf16>, vector<4x4xbf16>, vector<16x16x4xf32> -> vector<16x16x4xf32>
    %42 = vector.extract_strided_slice %10 {offsets = [0, 0, 0], sizes = [16, 16, 4], strides = [1, 1, 1]} : vector<18x16x4xbf16> to vector<16x16x4xbf16>
    %c5 = arith.constant 5 : index
    %c0_29 = arith.constant 0 : index
    %c0_30 = arith.constant 0 : index
    %43 = vector.load %arg4[%c5, %c0_29, %c0_30] : memref<16x4x4xbf16, #tpu.memory_space<vmem>>, vector<1x4x4xbf16>
    %44 = vector.shape_cast %43 : vector<1x4x4xbf16> to vector<4x4xbf16>
    %cst_31 = arith.constant dense<0.000000e+00> : vector<16x16x4xf32>
    %45 = tpu.matmul %42, %44, %cst_31 {dimension_numbers = #tpu.dot_dimension_numbers<[2], [0], [0, 1], [1], [0, 0, 0, 1, 1, 1], [], []>} : vector<16x16x4xbf16>, vector<4x4xbf16>, vector<16x16x4xf32> -> vector<16x16x4xf32>
    %46 = arith.addf %41, %45 : vector<16x16x4xf32>
    %47 = vector.extract_strided_slice %8 {offsets = [1, 0, 0], sizes = [16, 16, 4], strides = [1, 1, 1]} : vector<18x16x4xbf16> to vector<16x16x4xbf16>
    %c6 = arith.constant 6 : index
    %c0_32 = arith.constant 0 : index
    %c0_33 = arith.constant 0 : index
    %48 = vector.load %arg4[%c6, %c0_32, %c0_33] : memref<16x4x4xbf16, #tpu.memory_space<vmem>>, vector<1x4x4xbf16>
    %49 = vector.shape_cast %48 : vector<1x4x4xbf16> to vector<4x4xbf16>
    %cst_34 = arith.constant dense<0.000000e+00> : vector<16x16x4xf32>
    %50 = tpu.matmul %47, %49, %cst_34 {dimension_numbers = #tpu.dot_dimension_numbers<[2], [0], [0, 1], [1], [0, 0, 0, 1, 1, 1], [], []>} : vector<16x16x4xbf16>, vector<4x4xbf16>, vector<16x16x4xf32> -> vector<16x16x4xf32>
    %51 = arith.addf %46, %50 : vector<16x16x4xf32>
    %52 = vector.extract_strided_slice %10 {offsets = [1, 0, 0], sizes = [16, 16, 4], strides = [1, 1, 1]} : vector<18x16x4xbf16> to vector<16x16x4xbf16>
    %c7 = arith.constant 7 : index
    %c0_35 = arith.constant 0 : index
    %c0_36 = arith.constant 0 : index
    %53 = vector.load %arg4[%c7, %c0_35, %c0_36] : memref<16x4x4xbf16, #tpu.memory_space<vmem>>, vector<1x4x4xbf16>
    %54 = vector.shape_cast %53 : vector<1x4x4xbf16> to vector<4x4xbf16>
    %cst_37 = arith.constant dense<0.000000e+00> : vector<16x16x4xf32>
    %55 = tpu.matmul %52, %54, %cst_37 {dimension_numbers = #tpu.dot_dimension_numbers<[2], [0], [0, 1], [1], [0, 0, 0, 1, 1, 1], [], []>} : vector<16x16x4xbf16>, vector<4x4xbf16>, vector<16x16x4xf32> -> vector<16x16x4xf32>
    %56 = arith.addf %51, %55 : vector<16x16x4xf32>
    %57 = vector.shape_cast %12 : vector<4xf32> to vector<1x1x4xf32>
    %58 = vector.broadcast %57 : vector<1x1x4xf32> to vector<16x16x4xf32>
    %59 = arith.addf %56, %58 : vector<16x16x4xf32>
    %c0_38 = arith.constant 0 : index
    %c1_39 = arith.constant 1 : index
    %c0_40 = arith.constant 0 : index
    %c0_41 = arith.constant 0 : index
    %c0_42 = arith.constant 0 : index
    %60 = vector.load %arg6[%c0_38, %c1_39, %c0_40, %c0_41, %c0_42] : memref<1x4x16x16x4xf32, #tpu.memory_space<vmem>>, vector<1x1x16x16x4xf32>
    %61 = vector.shape_cast %60 : vector<1x1x16x16x4xf32> to vector<16x16x4xf32>
    %62 = vector.shape_cast %59 : vector<16x16x4xf32> to vector<1x1x16x16x4xf32>
    tpu.vector_store %arg6[%c0_38, %c1_39, %c0_40, %c0_41, %c0_42], %62 {strides = array<i32>} : memref<1x4x16x16x4xf32, #tpu.memory_space<vmem>>, vector<1x1x16x16x4xf32>,
    %63 = vector.extract_strided_slice %6 {offsets = [1, 0, 0], sizes = [16, 16, 4], strides = [1, 1, 1]} : vector<18x16x4xbf16> to vector<16x16x4xbf16>
    %c8 = arith.constant 8 : index
    %c0_43 = arith.constant 0 : index
    %c0_44 = arith.constant 0 : index
    %64 = vector.load %arg4[%c8, %c0_43, %c0_44] : memref<16x4x4xbf16, #tpu.memory_space<vmem>>, vector<1x4x4xbf16>
    %65 = vector.shape_cast %64 : vector<1x4x4xbf16> to vector<4x4xbf16>
    %cst_45 = arith.constant dense<0.000000e+00> : vector<16x16x4xf32>
    %66 = tpu.matmul %63, %65, %cst_45 {dimension_numbers = #tpu.dot_dimension_numbers<[2], [0], [0, 1], [1], [0, 0, 0, 1, 1, 1], [], []>} : vector<16x16x4xbf16>, vector<4x4xbf16>, vector<16x16x4xf32> -> vector<16x16x4xf32>
    %67 = vector.extract_strided_slice %8 {offsets = [1, 0, 0], sizes = [16, 16, 4], strides = [1, 1, 1]} : vector<18x16x4xbf16> to vector<16x16x4xbf16>
    %c9 = arith.constant 9 : index
    %c0_46 = arith.constant 0 : index
    %c0_47 = arith.constant 0 : index
    %68 = vector.load %arg4[%c9, %c0_46, %c0_47] : memref<16x4x4xbf16, #tpu.memory_space<vmem>>, vector<1x4x4xbf16>
    %69 = vector.shape_cast %68 : vector<1x4x4xbf16> to vector<4x4xbf16>
    %cst_48 = arith.constant dense<0.000000e+00> : vector<16x16x4xf32>
    %70 = tpu.matmul %67, %69, %cst_48 {dimension_numbers = #tpu.dot_dimension_numbers<[2], [0], [0, 1], [1], [0, 0, 0, 1, 1, 1], [], []>} : vector<16x16x4xbf16>, vector<4x4xbf16>, vector<16x16x4xf32> -> vector<16x16x4xf32>
    %71 = arith.addf %66, %70 : vector<16x16x4xf32>
    %72 = vector.extract_strided_slice %6 {offsets = [2, 0, 0], sizes = [16, 16, 4], strides = [1, 1, 1]} : vector<18x16x4xbf16> to vector<16x16x4xbf16>
    %c10 = arith.constant 10 : index
    %c0_49 = arith.constant 0 : index
    %c0_50 = arith.constant 0 : index
    %73 = vector.load %arg4[%c10, %c0_49, %c0_50] : memref<16x4x4xbf16, #tpu.memory_space<vmem>>, vector<1x4x4xbf16>
    %74 = vector.shape_cast %73 : vector<1x4x4xbf16> to vector<4x4xbf16>
    %cst_51 = arith.constant dense<0.000000e+00> : vector<16x16x4xf32>
    %75 = tpu.matmul %72, %74, %cst_51 {dimension_numbers = #tpu.dot_dimension_numbers<[2], [0], [0, 1], [1], [0, 0, 0, 1, 1, 1], [], []>} : vector<16x16x4xbf16>, vector<4x4xbf16>, vector<16x16x4xf32> -> vector<16x16x4xf32>
    %76 = arith.addf %71, %75 : vector<16x16x4xf32>
    %77 = vector.extract_strided_slice %8 {offsets = [2, 0, 0], sizes = [16, 16, 4], strides = [1, 1, 1]} : vector<18x16x4xbf16> to vector<16x16x4xbf16>
    %c11 = arith.constant 11 : index
    %c0_52 = arith.constant 0 : index
    %c0_53 = arith.constant 0 : index
    %78 = vector.load %arg4[%c11, %c0_52, %c0_53] : memref<16x4x4xbf16, #tpu.memory_space<vmem>>, vector<1x4x4xbf16>
    %79 = vector.shape_cast %78 : vector<1x4x4xbf16> to vector<4x4xbf16>
    %cst_54 = arith.constant dense<0.000000e+00> : vector<16x16x4xf32>
    %80 = tpu.matmul %77, %79, %cst_54 {dimension_numbers = #tpu.dot_dimension_numbers<[2], [0], [0, 1], [1], [0, 0, 0, 1, 1, 1], [], []>} : vector<16x16x4xbf16>, vector<4x4xbf16>, vector<16x16x4xf32> -> vector<16x16x4xf32>
    %81 = arith.addf %76, %80 : vector<16x16x4xf32>
    %82 = vector.shape_cast %12 : vector<4xf32> to vector<1x1x4xf32>
    %83 = vector.broadcast %82 : vector<1x1x4xf32> to vector<16x16x4xf32>
    %84 = arith.addf %81, %83 : vector<16x16x4xf32>
    %c0_55 = arith.constant 0 : index
    %c2_56 = arith.constant 2 : index
    %c0_57 = arith.constant 0 : index
    %c0_58 = arith.constant 0 : index
    %c0_59 = arith.constant 0 : index
    %85 = vector.load %arg6[%c0_55, %c2_56, %c0_57, %c0_58, %c0_59] : memref<1x4x16x16x4xf32, #tpu.memory_space<vmem>>, vector<1x1x16x16x4xf32>
    %86 = vector.shape_cast %85 : vector<1x1x16x16x4xf32> to vector<16x16x4xf32>
    %87 = vector.shape_cast %84 : vector<16x16x4xf32> to vector<1x1x16x16x4xf32>
    tpu.vector_store %arg6[%c0_55, %c2_56, %c0_57, %c0_58, %c0_59], %87 {strides = array<i32>} : memref<1x4x16x16x4xf32, #tpu.memory_space<vmem>>, vector<1x1x16x16x4xf32>,
    %88 = vector.extract_strided_slice %8 {offsets = [1, 0, 0], sizes = [16, 16, 4], strides = [1, 1, 1]} : vector<18x16x4xbf16> to vector<16x16x4xbf16>
    %c12 = arith.constant 12 : index
    %c0_60 = arith.constant 0 : index
    %c0_61 = arith.constant 0 : index
    %89 = vector.load %arg4[%c12, %c0_60, %c0_61] : memref<16x4x4xbf16, #tpu.memory_space<vmem>>, vector<1x4x4xbf16>
    %90 = vector.shape_cast %89 : vector<1x4x4xbf16> to vector<4x4xbf16>
    %cst_62 = arith.constant dense<0.000000e+00> : vector<16x16x4xf32>
    %91 = tpu.matmul %88, %90, %cst_62 {dimension_numbers = #tpu.dot_dimension_numbers<[2], [0], [0, 1], [1], [0, 0, 0, 1, 1, 1], [], []>} : vector<16x16x4xbf16>, vector<4x4xbf16>, vector<16x16x4xf32> -> vector<16x16x4xf32>
    %92 = vector.extract_strided_slice %10 {offsets = [1, 0, 0], sizes = [16, 16, 4], strides = [1, 1, 1]} : vector<18x16x4xbf16> to vector<16x16x4xbf16>
    %c13 = arith.constant 13 : index
    %c0_63 = arith.constant 0 : index
    %c0_64 = arith.constant 0 : index
    %93 = vector.load %arg4[%c13, %c0_63, %c0_64] : memref<16x4x4xbf16, #tpu.memory_space<vmem>>, vector<1x4x4xbf16>
    %94 = vector.shape_cast %93 : vector<1x4x4xbf16> to vector<4x4xbf16>
    %cst_65 = arith.constant dense<0.000000e+00> : vector<16x16x4xf32>
    %95 = tpu.matmul %92, %94, %cst_65 {dimension_numbers = #tpu.dot_dimension_numbers<[2], [0], [0, 1], [1], [0, 0, 0, 1, 1, 1], [], []>} : vector<16x16x4xbf16>, vector<4x4xbf16>, vector<16x16x4xf32> -> vector<16x16x4xf32>
    %96 = arith.addf %91, %95 : vector<16x16x4xf32>
    %97 = vector.extract_strided_slice %8 {offsets = [2, 0, 0], sizes = [16, 16, 4], strides = [1, 1, 1]} : vector<18x16x4xbf16> to vector<16x16x4xbf16>
    %c14 = arith.constant 14 : index
    %c0_66 = arith.constant 0 : index
    %c0_67 = arith.constant 0 : index
    %98 = vector.load %arg4[%c14, %c0_66, %c0_67] : memref<16x4x4xbf16, #tpu.memory_space<vmem>>, vector<1x4x4xbf16>
    %99 = vector.shape_cast %98 : vector<1x4x4xbf16> to vector<4x4xbf16>
    %cst_68 = arith.constant dense<0.000000e+00> : vector<16x16x4xf32>
    %100 = tpu.matmul %97, %99, %cst_68 {dimension_numbers = #tpu.dot_dimension_numbers<[2], [0], [0, 1], [1], [0, 0, 0, 1, 1, 1], [], []>} : vector<16x16x4xbf16>, vector<4x4xbf16>, vector<16x16x4xf32> -> vector<16x16x4xf32>
    %101 = arith.addf %96, %100 : vector<16x16x4xf32>
    %102 = vector.extract_strided_slice %10 {offsets = [2, 0, 0], sizes = [16, 16, 4], strides = [1, 1, 1]} : vector<18x16x4xbf16> to vector<16x16x4xbf16>
    %c15 = arith.constant 15 : index
    %c0_69 = arith.constant 0 : index
    %c0_70 = arith.constant 0 : index
    %103 = vector.load %arg4[%c15, %c0_69, %c0_70] : memref<16x4x4xbf16, #tpu.memory_space<vmem>>, vector<1x4x4xbf16>
    %104 = vector.shape_cast %103 : vector<1x4x4xbf16> to vector<4x4xbf16>
    %cst_71 = arith.constant dense<0.000000e+00> : vector<16x16x4xf32>
    %105 = tpu.matmul %102, %104, %cst_71 {dimension_numbers = #tpu.dot_dimension_numbers<[2], [0], [0, 1], [1], [0, 0, 0, 1, 1, 1], [], []>} : vector<16x16x4xbf16>, vector<4x4xbf16>, vector<16x16x4xf32> -> vector<16x16x4xf32>
    %106 = arith.addf %101, %105 : vector<16x16x4xf32>
    %107 = vector.shape_cast %12 : vector<4xf32> to vector<1x1x4xf32>
    %108 = vector.broadcast %107 : vector<1x1x4xf32> to vector<16x16x4xf32>
    %109 = arith.addf %106, %108 : vector<16x16x4xf32>
    %c0_72 = arith.constant 0 : index
    %c3_73 = arith.constant 3 : index
    %c0_74 = arith.constant 0 : index
    %c0_75 = arith.constant 0 : index
    %c0_76 = arith.constant 0 : index
    %110 = vector.load %arg6[%c0_72, %c3_73, %c0_74, %c0_75, %c0_76] : memref<1x4x16x16x4xf32, #tpu.memory_space<vmem>>, vector<1x1x16x16x4xf32>
    %111 = vector.shape_cast %110 : vector<1x1x16x16x4xf32> to vector<16x16x4xf32>
    %112 = vector.shape_cast %109 : vector<16x16x4xf32> to vector<1x1x16x16x4xf32>
    tpu.vector_store %arg6[%c0_72, %c3_73, %c0_74, %c0_75, %c0_76], %112 {strides = array<i32>} : memref<1x4x16x16x4xf32, #tpu.memory_space<vmem>>, vector<1x1x16x16x4xf32>,
    return
  }
  func.func @transform_0(%arg0: i32, %arg1: i32) -> (i32, i32, i32, i32) {
    %c0_i32 = arith.constant 0 : i32
    %c0_i32_0 = arith.constant 0 : i32
    %c0_i32_1 = arith.constant 0 : i32
    return %arg0, %arg1, %c0_i32, %c0_i32_0 : i32, i32, i32, i32
  }
  func.func @transform_1(%arg0: i32, %arg1: i32) -> (i32, i32, i32, i32) {
    %c1_i32 = arith.constant 1 : i32
    %0 = arith.addi %arg1, %c1_i32 : i32
    %c8_i32 = arith.constant 8 : i32
    %1 = arith.muli %0, %c8_i32 : i32
    %c0_i32 = arith.constant 0 : i32
    %c0_i32_0 = arith.constant 0 : i32
    %c0_i32_1 = arith.constant 0 : i32
    return %arg0, %1, %c0_i32, %c0_i32_0 : i32, i32, i32, i32
  }
  func.func @transform_2(%arg0: i32, %arg1: i32) -> (i32, i32, i32) {
    %c0_i32 = arith.constant 0 : i32
    %c0_i32_0 = arith.constant 0 : i32
    %c0_i32_1 = arith.constant 0 : i32
    %c0_i32_2 = arith.constant 0 : i32
    return %c0_i32, %c0_i32_0, %c0_i32_1 : i32, i32, i32
  }
  func.func @transform_3(%arg0: i32, %arg1: i32) -> (i32, i32) {
    %c0_i32 = arith.constant 0 : i32
    %c0_i32_0 = arith.constant 0 : i32
    %c0_i32_1 = arith.constant 0 : i32
    return %c0_i32, %c0_i32_0 : i32, i32
  }
  func.func @transform_4(%arg0: i32, %arg1: i32) -> (i32, i32, i32, i32, i32) {
    %c0_i32 = arith.constant 0 : i32
    %c0_i32_0 = arith.constant 0 : i32
    %c0_i32_1 = arith.constant 0 : i32
    %c0_i32_2 = arith.constant 0 : i32
    return %arg0, %c0_i32, %arg1, %c0_i32_0, %c0_i32_1 : i32, i32, i32, i32, i32
  }
}

module attributes {stable_mosaic.version = 11 : i64} {
  func.func @_upsample_conv_kernel(%arg0: i32, %arg1: i32, %arg2: memref<1x16x18x4xf32, #tpu.memory_space<vmem>>, %arg3: memref<1x2x18x4xf32, #tpu.memory_space<vmem>>, %arg4: memref<16x4x4xbf16, #tpu.memory_space<vmem>>, %arg5: memref<1x4xf32, #tpu.memory_space<vmem>>, %arg6: memref<1x4x16x16x4xf32, #tpu.memory_space<vmem>>) attributes {dimension_semantics = [#tpu.dimension_semantics<parallel>, #tpu.dimension_semantics<parallel>], iteration_bounds = array<i64: 2, 1>, scalar_prefetch = 0 : i64, scratch_operands = 0 : i64, tpu.core_type = #tpu.core_type<tc>, window_params = [{transform_indices = @transform_0, window_bounds = array<i64: 1, 16, 18, 4>}, {transform_indices = @transform_1, window_bounds = array<i64: 1, 2, 18, 4>}, {pipeline_mode = #tpu.pipeline_mode<synchronous>, transform_indices = @transform_2, window_bounds = array<i64: 16, 4, 4>}, {pipeline_mode = #tpu.pipeline_mode<synchronous>, transform_indices = @transform_3, window_bounds = array<i64: 1, 4>}, {transform_indices = @transform_4, window_bounds = array<i64: 1, 4, 16, 16, 4>}]} {
    %c0 = arith.constant 0 : index
    %c0_0 = arith.constant 0 : index
    %c0_1 = arith.constant 0 : index
    %c0_2 = arith.constant 0 : index
    %0 = vector.load %arg2[%c0, %c0_0, %c0_1, %c0_2] : memref<1x16x18x4xf32, #tpu.memory_space<vmem>>, vector<1x16x18x4xf32>
    %1 = vector.shape_cast %0 : vector<1x16x18x4xf32> to vector<16x18x4xf32>
    %c0_3 = arith.constant 0 : index
    %c0_4 = arith.constant 0 : index
    %c0_5 = arith.constant 0 : index
    %c0_6 = arith.constant 0 : index
    %2 = vector.load %arg3[%c0_3, %c0_4, %c0_5, %c0_6] : memref<1x2x18x4xf32, #tpu.memory_space<vmem>>, vector<1x2x18x4xf32>
    %3 = vector.shape_cast %2 : vector<1x2x18x4xf32> to vector<2x18x4xf32>
    %4 = tpu.concatenate %1, %3 in 0 : vector<16x18x4xf32>, vector<2x18x4xf32> -> vector<18x18x4xf32>
    %5 = vector.extract_strided_slice %4 {offsets = [0, 0, 0], sizes = [18, 16, 4], strides = [1, 1, 1]} : vector<18x18x4xf32> to vector<18x16x4xf32>
    %6 = arith.truncf %5 : vector<18x16x4xf32> to vector<18x16x4xbf16>
    %7 = vector.extract_strided_slice %4 {offsets = [0, 1, 0], sizes = [18, 16, 4], strides = [1, 1, 1]} : vector<18x18x4xf32> to vector<18x16x4xf32>
    %8 = arith.truncf %7 : vector<18x16x4xf32> to vector<18x16x4xbf16>
    %9 = vector.extract_strided_slice %4 {offsets = [0, 2, 0], sizes = [18, 16, 4], strides = [1, 1, 1]} : vector<18x18x4xf32> to vector<18x16x4xf32>
    %10 = arith.truncf %9 : vector<18x16x4xf32> to vector<18x16x4xbf16>
    %c0_7 = arith.constant 0 : index
    %c0_8 = arith.constant 0 : index
    %11 = vector.load %arg5[%c0_7, %c0_8] : memref<1x4xf32, #tpu.memory_space<vmem>>, vector<1x4xf32>
    %12 = vector.shape_cast %11 : vector<1x4xf32> to vector<4xf32>
    %13 = vector.extract_strided_slice %6 {offsets = [0, 0, 0], sizes = [16, 16, 4], strides = [1, 1, 1]} : vector<18x16x4xbf16> to vector<16x16x4xbf16>
    %c0_9 = arith.constant 0 : index
    %c0_10 = arith.constant 0 : index
    %c0_11 = arith.constant 0 : index
    %14 = vector.load %arg4[%c0_9, %c0_10, %c0_11] : memref<16x4x4xbf16, #tpu.memory_space<vmem>>, vector<1x4x4xbf16>
    %15 = vector.shape_cast %14 : vector<1x4x4xbf16> to vector<4x4xbf16>
    %cst = arith.constant dense<0.000000e+00> : vector<16x16x4xf32>
    %16 = tpu.matmul %13, %15, %cst {dimension_numbers = #tpu.dot_dimension_numbers<[2], [0], [0, 1], [1], [0, 0, 0, 1, 1, 1], [], []>} : vector<16x16x4xbf16>, vector<4x4xbf16>, vector<16x16x4xf32> -> vector<16x16x4xf32>
    %17 = vector.extract_strided_slice %8 {offsets = [0, 0, 0], sizes = [16, 16, 4], strides = [1, 1, 1]} : vector<18x16x4xbf16> to vector<16x16x4xbf16>
    %c1 = arith.constant 1 : index
    %c0_12 = arith.constant 0 : index
    %c0_13 = arith.constant 0 : index
    %18 = vector.load %arg4[%c1, %c0_12, %c0_13] : memref<16x4x4xbf16, #tpu.memory_space<vmem>>, vector<1x4x4xbf16>
    %19 = vector.shape_cast %18 : vector<1x4x4xbf16> to vector<4x4xbf16>
    %cst_14 = arith.constant dense<0.000000e+00> : vector<16x16x4xf32>
    %20 = tpu.matmul %17, %19, %cst_14 {dimension_numbers = #tpu.dot_dimension_numbers<[2], [0], [0, 1], [1], [0, 0, 0, 1, 1, 1], [], []>} : vector<16x16x4xbf16>, vector<4x4xbf16>, vector<16x16x4xf32> -> vector<16x16x4xf32>
    %21 = arith.addf %16, %20 : vector<16x16x4xf32>
    %22 = vector.extract_strided_slice %6 {offsets = [1, 0, 0], sizes = [16, 16, 4], strides = [1, 1, 1]} : vector<18x16x4xbf16> to vector<16x16x4xbf16>
    %c2 = arith.constant 2 : index
    %c0_15 = arith.constant 0 : index
    %c0_16 = arith.constant 0 : index
    %23 = vector.load %arg4[%c2, %c0_15, %c0_16] : memref<16x4x4xbf16, #tpu.memory_space<vmem>>, vector<1x4x4xbf16>
    %24 = vector.shape_cast %23 : vector<1x4x4xbf16> to vector<4x4xbf16>
    %cst_17 = arith.constant dense<0.000000e+00> : vector<16x16x4xf32>
    %25 = tpu.matmul %22, %24, %cst_17 {dimension_numbers = #tpu.dot_dimension_numbers<[2], [0], [0, 1], [1], [0, 0, 0, 1, 1, 1], [], []>} : vector<16x16x4xbf16>, vector<4x4xbf16>, vector<16x16x4xf32> -> vector<16x16x4xf32>
    %26 = arith.addf %21, %25 : vector<16x16x4xf32>
    %27 = vector.extract_strided_slice %8 {offsets = [1, 0, 0], sizes = [16, 16, 4], strides = [1, 1, 1]} : vector<18x16x4xbf16> to vector<16x16x4xbf16>
    %c3 = arith.constant 3 : index
    %c0_18 = arith.constant 0 : index
    %c0_19 = arith.constant 0 : index
    %28 = vector.load %arg4[%c3, %c0_18, %c0_19] : memref<16x4x4xbf16, #tpu.memory_space<vmem>>, vector<1x4x4xbf16>
    %29 = vector.shape_cast %28 : vector<1x4x4xbf16> to vector<4x4xbf16>
    %cst_20 = arith.constant dense<0.000000e+00> : vector<16x16x4xf32>
    %30 = tpu.matmul %27, %29, %cst_20 {dimension_numbers = #tpu.dot_dimension_numbers<[2], [0], [0, 1], [1], [0, 0, 0, 1, 1, 1], [], []>} : vector<16x16x4xbf16>, vector<4x4xbf16>, vector<16x16x4xf32> -> vector<16x16x4xf32>
    %31 = arith.addf %26, %30 : vector<16x16x4xf32>
    %32 = vector.shape_cast %12 : vector<4xf32> to vector<1x1x4xf32>
    %33 = vector.broadcast %32 : vector<1x1x4xf32> to vector<16x16x4xf32>
    %34 = arith.addf %31, %33 : vector<16x16x4xf32>
    %c0_21 = arith.constant 0 : index
    %c0_22 = arith.constant 0 : index
    %c0_23 = arith.constant 0 : index
    %c0_24 = arith.constant 0 : index
    %c0_25 = arith.constant 0 : index
    %35 = vector.load %arg6[%c0_21, %c0_22, %c0_23, %c0_24, %c0_25] : memref<1x4x16x16x4xf32, #tpu.memory_space<vmem>>, vector<1x1x16x16x4xf32>
    %36 = vector.shape_cast %35 : vector<1x1x16x16x4xf32> to vector<16x16x4xf32>
    %37 = vector.shape_cast %34 : vector<16x16x4xf32> to vector<1x1x16x16x4xf32>
    tpu.vector_store %arg6[%c0_21, %c0_22, %c0_23, %c0_24, %c0_25], %37 {strides = array<i32>} : memref<1x4x16x16x4xf32, #tpu.memory_space<vmem>>, vector<1x1x16x16x4xf32>,
    %38 = vector.extract_strided_slice %8 {offsets = [0, 0, 0], sizes = [16, 16, 4], strides = [1, 1, 1]} : vector<18x16x4xbf16> to vector<16x16x4xbf16>
    %c4 = arith.constant 4 : index
    %c0_26 = arith.constant 0 : index
    %c0_27 = arith.constant 0 : index
    %39 = vector.load %arg4[%c4, %c0_26, %c0_27] : memref<16x4x4xbf16, #tpu.memory_space<vmem>>, vector<1x4x4xbf16>
    %40 = vector.shape_cast %39 : vector<1x4x4xbf16> to vector<4x4xbf16>
    %cst_28 = arith.constant dense<0.000000e+00> : vector<16x16x4xf32>
    %41 = tpu.matmul %38, %40, %cst_28 {dimension_numbers = #tpu.dot_dimension_numbers<[2], [0], [0, 1], [1], [0, 0, 0, 1, 1, 1], [], []>} : vector<16x16x4xbf16>, vector<4x4xbf16>, vector<16x16x4xf32> -> vector<16x16x4xf32>
    %42 = vector.extract_strided_slice %10 {offsets = [0, 0, 0], sizes = [16, 16, 4], strides = [1, 1, 1]} : vector<18x16x4xbf16> to vector<16x16x4xbf16>
    %c5 = arith.constant 5 : index
    %c0_29 = arith.constant 0 : index
    %c0_30 = arith.constant 0 : index
    %43 = vector.load %arg4[%c5, %c0_29, %c0_30] : memref<16x4x4xbf16, #tpu.memory_space<vmem>>, vector<1x4x4xbf16>
    %44 = vector.shape_cast %43 : vector<1x4x4xbf16> to vector<4x4xbf16>
    %cst_31 = arith.constant dense<0.000000e+00> : vector<16x16x4xf32>
    %45 = tpu.matmul %42, %44, %cst_31 {dimension_numbers = #tpu.dot_dimension_numbers<[2], [0], [0, 1], [1], [0, 0, 0, 1, 1, 1], [], []>} : vector<16x16x4xbf16>, vector<4x4xbf16>, vector<16x16x4xf32> -> vector<16x16x4xf32>
    %46 = arith.addf %41, %45 : vector<16x16x4xf32>
    %47 = vector.extract_strided_slice %8 {offsets = [1, 0, 0], sizes = [16, 16, 4], strides = [1, 1, 1]} : vector<18x16x4xbf16> to vector<16x16x4xbf16>
    %c6 = arith.constant 6 : index
    %c0_32 = arith.constant 0 : index
    %c0_33 = arith.constant 0 : index
    %48 = vector.load %arg4[%c6, %c0_32, %c0_33] : memref<16x4x4xbf16, #tpu.memory_space<vmem>>, vector<1x4x4xbf16>
    %49 = vector.shape_cast %48 : vector<1x4x4xbf16> to vector<4x4xbf16>
    %cst_34 = arith.constant dense<0.000000e+00> : vector<16x16x4xf32>
    %50 = tpu.matmul %47, %49, %cst_34 {dimension_numbers = #tpu.dot_dimension_numbers<[2], [0], [0, 1], [1], [0, 0, 0, 1, 1, 1], [], []>} : vector<16x16x4xbf16>, vector<4x4xbf16>, vector<16x16x4xf32> -> vector<16x16x4xf32>
    %51 = arith.addf %46, %50 : vector<16x16x4xf32>
    %52 = vector.extract_strided_slice %10 {offsets = [1, 0, 0], sizes = [16, 16, 4], strides = [1, 1, 1]} : vector<18x16x4xbf16> to vector<16x16x4xbf16>
    %c7 = arith.constant 7 : index
    %c0_35 = arith.constant 0 : index
    %c0_36 = arith.constant 0 : index
    %53 = vector.load %arg4[%c7, %c0_35, %c0_36] : memref<16x4x4xbf16, #tpu.memory_space<vmem>>, vector<1x4x4xbf16>
    %54 = vector.shape_cast %53 : vector<1x4x4xbf16> to vector<4x4xbf16>
    %cst_37 = arith.constant dense<0.000000e+00> : vector<16x16x4xf32>
    %55 = tpu.matmul %52, %54, %cst_37 {dimension_numbers = #tpu.dot_dimension_numbers<[2], [0], [0, 1], [1], [0, 0, 0, 1, 1, 1], [], []>} : vector<16x16x4xbf16>, vector<4x4xbf16>, vector<16x16x4xf32> -> vector<16x16x4xf32>
    %56 = arith.addf %51, %55 : vector<16x16x4xf32>
    %57 = vector.shape_cast %12 : vector<4xf32> to vector<1x1x4xf32>
    %58 = vector.broadcast %57 : vector<1x1x4xf32> to vector<16x16x4xf32>
    %59 = arith.addf %56, %58 : vector<16x16x4xf32>
    %c0_38 = arith.constant 0 : index
    %c1_39 = arith.constant 1 : index
    %c0_40 = arith.constant 0 : index
    %c0_41 = arith.constant 0 : index
    %c0_42 = arith.constant 0 : index
    %60 = vector.load %arg6[%c0_38, %c1_39, %c0_40, %c0_41, %c0_42] : memref<1x4x16x16x4xf32, #tpu.memory_space<vmem>>, vector<1x1x16x16x4xf32>
    %61 = vector.shape_cast %60 : vector<1x1x16x16x4xf32> to vector<16x16x4xf32>
    %62 = vector.shape_cast %59 : vector<16x16x4xf32> to vector<1x1x16x16x4xf32>
    tpu.vector_store %arg6[%c0_38, %c1_39, %c0_40, %c0_41, %c0_42], %62 {strides = array<i32>} : memref<1x4x16x16x4xf32, #tpu.memory_space<vmem>>, vector<1x1x16x16x4xf32>,
    %63 = vector.extract_strided_slice %6 {offsets = [1, 0, 0], sizes = [16, 16, 4], strides = [1, 1, 1]} : vector<18x16x4xbf16> to vector<16x16x4xbf16>
    %c8 = arith.constant 8 : index
    %c0_43 = arith.constant 0 : index
    %c0_44 = arith.constant 0 : index
    %64 = vector.load %arg4[%c8, %c0_43, %c0_44] : memref<16x4x4xbf16, #tpu.memory_space<vmem>>, vector<1x4x4xbf16>
    %65 = vector.shape_cast %64 : vector<1x4x4xbf16> to vector<4x4xbf16>
    %cst_45 = arith.constant dense<0.000000e+00> : vector<16x16x4xf32>
    %66 = tpu.matmul %63, %65, %cst_45 {dimension_numbers = #tpu.dot_dimension_numbers<[2], [0], [0, 1], [1], [0, 0, 0, 1, 1, 1], [], []>} : vector<16x16x4xbf16>, vector<4x4xbf16>, vector<16x16x4xf32> -> vector<16x16x4xf32>
    %67 = vector.extract_strided_slice %8 {offsets = [1, 0, 0], sizes = [16, 16, 4], strides = [1, 1, 1]} : vector<18x16x4xbf16> to vector<16x16x4xbf16>
    %c9 = arith.constant 9 : index
    %c0_46 = arith.constant 0 : index
    %c0_47 = arith.constant 0 : index
    %68 = vector.load %arg4[%c9, %c0_46, %c0_47] : memref<16x4x4xbf16, #tpu.memory_space<vmem>>, vector<1x4x4xbf16>
    %69 = vector.shape_cast %68 : vector<1x4x4xbf16> to vector<4x4xbf16>
    %cst_48 = arith.constant dense<0.000000e+00> : vector<16x16x4xf32>
    %70 = tpu.matmul %67, %69, %cst_48 {dimension_numbers = #tpu.dot_dimension_numbers<[2], [0], [0, 1], [1], [0, 0, 0, 1, 1, 1], [], []>} : vector<16x16x4xbf16>, vector<4x4xbf16>, vector<16x16x4xf32> -> vector<16x16x4xf32>
    %71 = arith.addf %66, %70 : vector<16x16x4xf32>
    %72 = vector.extract_strided_slice %6 {offsets = [2, 0, 0], sizes = [16, 16, 4], strides = [1, 1, 1]} : vector<18x16x4xbf16> to vector<16x16x4xbf16>
    %c10 = arith.constant 10 : index
    %c0_49 = arith.constant 0 : index
    %c0_50 = arith.constant 0 : index
    %73 = vector.load %arg4[%c10, %c0_49, %c0_50] : memref<16x4x4xbf16, #tpu.memory_space<vmem>>, vector<1x4x4xbf16>
    %74 = vector.shape_cast %73 : vector<1x4x4xbf16> to vector<4x4xbf16>
    %cst_51 = arith.constant dense<0.000000e+00> : vector<16x16x4xf32>
    %75 = tpu.matmul %72, %74, %cst_51 {dimension_numbers = #tpu.dot_dimension_numbers<[2], [0], [0, 1], [1], [0, 0, 0, 1, 1, 1], [], []>} : vector<16x16x4xbf16>, vector<4x4xbf16>, vector<16x16x4xf32> -> vector<16x16x4xf32>
    %76 = arith.addf %71, %75 : vector<16x16x4xf32>
    %77 = vector.extract_strided_slice %8 {offsets = [2, 0, 0], sizes = [16, 16, 4], strides = [1, 1, 1]} : vector<18x16x4xbf16> to vector<16x16x4xbf16>
    %c11 = arith.constant 11 : index
    %c0_52 = arith.constant 0 : index
    %c0_53 = arith.constant 0 : index
    %78 = vector.load %arg4[%c11, %c0_52, %c0_53] : memref<16x4x4xbf16, #tpu.memory_space<vmem>>, vector<1x4x4xbf16>
    %79 = vector.shape_cast %78 : vector<1x4x4xbf16> to vector<4x4xbf16>
    %cst_54 = arith.constant dense<0.000000e+00> : vector<16x16x4xf32>
    %80 = tpu.matmul %77, %79, %cst_54 {dimension_numbers = #tpu.dot_dimension_numbers<[2], [0], [0, 1], [1], [0, 0, 0, 1, 1, 1], [], []>} : vector<16x16x4xbf16>, vector<4x4xbf16>, vector<16x16x4xf32> -> vector<16x16x4xf32>
    %81 = arith.addf %76, %80 : vector<16x16x4xf32>
    %82 = vector.shape_cast %12 : vector<4xf32> to vector<1x1x4xf32>
    %83 = vector.broadcast %82 : vector<1x1x4xf32> to vector<16x16x4xf32>
    %84 = arith.addf %81, %83 : vector<16x16x4xf32>
    %c0_55 = arith.constant 0 : index
    %c2_56 = arith.constant 2 : index
    %c0_57 = arith.constant 0 : index
    %c0_58 = arith.constant 0 : index
    %c0_59 = arith.constant 0 : index
    %85 = vector.load %arg6[%c0_55, %c2_56, %c0_57, %c0_58, %c0_59] : memref<1x4x16x16x4xf32, #tpu.memory_space<vmem>>, vector<1x1x16x16x4xf32>
    %86 = vector.shape_cast %85 : vector<1x1x16x16x4xf32> to vector<16x16x4xf32>
    %87 = vector.shape_cast %84 : vector<16x16x4xf32> to vector<1x1x16x16x4xf32>
    tpu.vector_store %arg6[%c0_55, %c2_56, %c0_57, %c0_58, %c0_59], %87 {strides = array<i32>} : memref<1x4x16x16x4xf32, #tpu.memory_space<vmem>>, vector<1x1x16x16x4xf32>,
    %88 = vector.extract_strided_slice %8 {offsets = [1, 0, 0], sizes = [16, 16, 4], strides = [1, 1, 1]} : vector<18x16x4xbf16> to vector<16x16x4xbf16>
    %c12 = arith.constant 12 : index
    %c0_60 = arith.constant 0 : index
    %c0_61 = arith.constant 0 : index
    %89 = vector.load %arg4[%c12, %c0_60, %c0_61] : memref<16x4x4xbf16, #tpu.memory_space<vmem>>, vector<1x4x4xbf16>
    %90 = vector.shape_cast %89 : vector<1x4x4xbf16> to vector<4x4xbf16>
    %cst_62 = arith.constant dense<0.000000e+00> : vector<16x16x4xf32>
    %91 = tpu.matmul %88, %90, %cst_62 {dimension_numbers = #tpu.dot_dimension_numbers<[2], [0], [0, 1], [1], [0, 0, 0, 1, 1, 1], [], []>} : vector<16x16x4xbf16>, vector<4x4xbf16>, vector<16x16x4xf32> -> vector<16x16x4xf32>
    %92 = vector.extract_strided_slice %10 {offsets = [1, 0, 0], sizes = [16, 16, 4], strides = [1, 1, 1]} : vector<18x16x4xbf16> to vector<16x16x4xbf16>
    %c13 = arith.constant 13 : index
    %c0_63 = arith.constant 0 : index
    %c0_64 = arith.constant 0 : index
    %93 = vector.load %arg4[%c13, %c0_63, %c0_64] : memref<16x4x4xbf16, #tpu.memory_space<vmem>>, vector<1x4x4xbf16>
    %94 = vector.shape_cast %93 : vector<1x4x4xbf16> to vector<4x4xbf16>
    %cst_65 = arith.constant dense<0.000000e+00> : vector<16x16x4xf32>
    %95 = tpu.matmul %92, %94, %cst_65 {dimension_numbers = #tpu.dot_dimension_numbers<[2], [0], [0, 1], [1], [0, 0, 0, 1, 1, 1], [], []>} : vector<16x16x4xbf16>, vector<4x4xbf16>, vector<16x16x4xf32> -> vector<16x16x4xf32>
    %96 = arith.addf %91, %95 : vector<16x16x4xf32>
    %97 = vector.extract_strided_slice %8 {offsets = [2, 0, 0], sizes = [16, 16, 4], strides = [1, 1, 1]} : vector<18x16x4xbf16> to vector<16x16x4xbf16>
    %c14 = arith.constant 14 : index
    %c0_66 = arith.constant 0 : index
    %c0_67 = arith.constant 0 : index
    %98 = vector.load %arg4[%c14, %c0_66, %c0_67] : memref<16x4x4xbf16, #tpu.memory_space<vmem>>, vector<1x4x4xbf16>
    %99 = vector.shape_cast %98 : vector<1x4x4xbf16> to vector<4x4xbf16>
    %cst_68 = arith.constant dense<0.000000e+00> : vector<16x16x4xf32>
    %100 = tpu.matmul %97, %99, %cst_68 {dimension_numbers = #tpu.dot_dimension_numbers<[2], [0], [0, 1], [1], [0, 0, 0, 1, 1, 1], [], []>} : vector<16x16x4xbf16>, vector<4x4xbf16>, vector<16x16x4xf32> -> vector<16x16x4xf32>
    %101 = arith.addf %96, %100 : vector<16x16x4xf32>
    %102 = vector.extract_strided_slice %10 {offsets = [2, 0, 0], sizes = [16, 16, 4], strides = [1, 1, 1]} : vector<18x16x4xbf16> to vector<16x16x4xbf16>
    %c15 = arith.constant 15 : index
    %c0_69 = arith.constant 0 : index
    %c0_70 = arith.constant 0 : index
    %103 = vector.load %arg4[%c15, %c0_69, %c0_70] : memref<16x4x4xbf16, #tpu.memory_space<vmem>>, vector<1x4x4xbf16>
    %104 = vector.shape_cast %103 : vector<1x4x4xbf16> to vector<4x4xbf16>
    %cst_71 = arith.constant dense<0.000000e+00> : vector<16x16x4xf32>
    %105 = tpu.matmul %102, %104, %cst_71 {dimension_numbers = #tpu.dot_dimension_numbers<[2], [0], [0, 1], [1], [0, 0, 0, 1, 1, 1], [], []>} : vector<16x16x4xbf16>, vector<4x4xbf16>, vector<16x16x4xf32> -> vector<16x16x4xf32>
    %106 = arith.addf %101, %105 : vector<16x16x4xf32>
    %107 = vector.shape_cast %12 : vector<4xf32> to vector<1x1x4xf32>
    %108 = vector.broadcast %107 : vector<1x1x4xf32> to vector<16x16x4xf32>
    %109 = arith.addf %106, %108 : vector<16x16x4xf32>
    %c0_72 = arith.constant 0 : index
    %c3_73 = arith.constant 3 : index
    %c0_74 = arith.constant 0 : index
    %c0_75 = arith.constant 0 : index
    %c0_76 = arith.constant 0 : index
    %110 = vector.load %arg6[%c0_72, %c3_73, %c0_74, %c0_75, %c0_76] : memref<1x4x16x16x4xf32, #tpu.memory_space<vmem>>, vector<1x1x16x16x4xf32>
    %111 = vector.shape_cast %110 : vector<1x1x16x16x4xf32> to vector<16x16x4xf32>
    %112 = vector.shape_cast %109 : vector<16x16x4xf32> to vector<1x1x16x16x4xf32>
    tpu.vector_store %arg6[%c0_72, %c3_73, %c0_74, %c0_75, %c0_76], %112 {strides = array<i32>} : memref<1x4x16x16x4xf32, #tpu.memory_space<vmem>>, vector<1x1x16x16x4xf32>,
    return
  }
  func.func @transform_0(%arg0: i32, %arg1: i32) -> (i32, i32, i32, i32) {
    %c0_i32 = arith.constant 0 : i32
    %c0_i32_0 = arith.constant 0 : i32
    %c0_i32_1 = arith.constant 0 : i32
    return %arg0, %arg1, %c0_i32, %c0_i32_0 : i32, i32, i32, i32
  }
  func.func @transform_1(%arg0: i32, %arg1: i32) -> (i32, i32, i32, i32) {
    %c1_i32 = arith.constant 1 : i32
    %0 = arith.addi %arg1, %c1_i32 : i32
    %c8_i32 = arith.constant 8 : i32
    %1 = arith.muli %0, %c8_i32 : i32
    %c0_i32 = arith.constant 0 : i32
    %c0_i32_0 = arith.constant 0 : i32
    %c0_i32_1 = arith.constant 0 : i32
    return %arg0, %1, %c0_i32, %c0_i32_0 : i32, i32, i32, i32
  }
  func.func @transform_2(%arg0: i32, %arg1: i32) -> (i32, i32, i32) {
    %c0_i32 = arith.constant 0 : i32
    %c0_i32_0 = arith.constant 0 : i32
    %c0_i32_1 = arith.constant 0 : i32
    %c0_i32_2 = arith.constant 0 : i32
    return %c0_i32, %c0_i32_0, %c0_i32_1 : i32, i32, i32
  }
  func.func @transform_3(%arg0: i32, %arg1: i32) -> (i32, i32) {
    %c0_i32 = arith.constant 0 : i32
    %c0_i32_0 = arith.constant 0 : i32
    %c0_i32_1 = arith.constant 0 : i32
    return %c0_i32, %c0_i32_0 : i32, i32
  }
  func.func @transform_4(%arg0: i32, %arg1: i32) -> (i32, i32, i32, i32, i32) {
    %c0_i32 = arith.constant 0 : i32
    %c0_i32_0 = arith.constant 0 : i32
    %c0_i32_1 = arith.constant 0 : i32
    %c0_i32_2 = arith.constant 0 : i32
    return %arg0, %c0_i32, %arg1, %c0_i32_0, %c0_i32_1 : i32, i32, i32, i32, i32
  }
}

</mosaic_0001>

<llo_original>
// kernel: tpu_custom_call.1
$region0: #{tpu_custom_call.1}
  #allocation0 [shape = 'u32[]', space=smem, size = 0x4, offset = 0x4, fixed_abs, tag = 'smem constant byte address 0x4 - core index']
  #allocation1 [shape = 'u32[144,128]{1,0:T(1,128)}', space=vmem, size = 0x12000, scoped, tag = 'internal scratch']
  %s0 = inlined_call_operand.vmem [shape: f32[2,18,18,4], index: 0, kind: input, shape index: {}]
  %s1 = inlined_call_operand.vmem [shape: f32[2,18,18,4], index: 1, kind: input, shape index: {}]
  %s2 = inlined_call_operand.vmem [shape: bf16[16,4,4], index: 2, kind: input, shape index: {}]
  %s3 = inlined_call_operand.vmem [shape: f32[1,4], index: 3, kind: input, shape index: {}]
  %s4 = inlined_call_operand.vmem [shape: f32[2,4,16,16,4], index: 4, kind: output, shape index: {}]
  %s5 = sld [smem:[#allocation0]]
  $region49: #{tpu_custom_call.1} parent=0
    _
  %s7 = ssub.s32 1, %s5
  %s8 = scalar_select 0, %s7, %s5
  loop: start=0, step=1, limit=4
  $region2: #{tpu_custom_call.1} parent=0 // loop_pre_header
    _
  $region3: #{tpu_custom_call.1} parent=0 // loop_header
    %s10 = sphi 0, %s14
    %p11 = scmp.ge.s32.totalorder %s10, 4
    %s17 = sphi 0, %s29
    %s18 = sphi 0, %s25
    %s19 = sphi 0, %s17
    %s20 = sphi 0, %s18
    %s21 = sphi 0, %s19
    %s22 = sphi 0, %s20
    %s34 = sphi 0, %s36
    %s37 = sphi 0, %s34
    %s38 = sphi 0, %s37
    %s54 = sphi 0, %s38
    %s66 = sphi 0, %s68
    %s69 = sphi 0, %s66
    %s70 = sphi 0, %s69
    %s86 = sphi 0, %s70
    %s90 = sphi 0, %s90
    %s92 = sphi 0, %s90
    %s93 = sphi 0, %s92
    %s107 = sphi 0, %s93
    %s111 = sphi 0, %s111
    %s113 = sphi 0, %s111
    %s114 = sphi 0, %s113
    %s128 = sphi 0, %s114
    %s136 = sphi 0, %s138
    %s139 = sphi 0, %s136
    %s140 = sphi 0, %s139
    %s156 = sphi 0, %s140
  $region4: #{tpu_custom_call.1} parent=0 // loop_header_branch
    %13 = sbr.rel (%p11) target = $region8
  $region5: #{tpu_custom_call.1} parent=0 // loop_body
    %s15 = ssub.s32 %s10, 1
    %s16 = ssub.s32 %s10, 2
    %s23 = sadd.s32 1, %s18
    %p24 = scmp.ge.s32.totalorder %s23, 1
    %s25 = scalar_select %p24, 0, %s23
    %s26 = sadd.s32 1, %s17
    %s27 = scalar_select %p24, %s26, %s17
    %p28 = scmp.ge.s32.totalorder %s27, 2
    %s29 = scalar_select %p28, 0, %s27
    %s30 = ssub.s32 %s17, %s29
    %s31 = ssub.s32 %s18, %s25
    %s32 = sor.u32 %s30, %s31
    %p33 = scmp.eq.s32.totalorder %s32, 0
    %s35 = sadd.s32 %s34, 1
    %s36 = scalar_select %p33, %s34, %s35
    %p39 = pneg %p33
    %p40 = scmp.eq.s32.totalorder %s10, 1
    %p41 = por %p39, %p40
    %p42 = scmp.ne.s32.totalorder %s34, %s37
    %p43 = scmp.eq.s32.totalorder %s10, 0
    %p44 = por %p42, %p43
    %p45 = scmp.ne.s32.totalorder %s34, %s37
    %p46 = scmp.eq.s32.totalorder %s15, 1
    %p47 = por %p45, %p46
    %p48 = scmp.ne.s32.totalorder %s37, %s38
    %p49 = scmp.eq.s32.totalorder %s15, 0
    %p50 = por %p48, %p49
    %p51 = scmp.ne.s32.totalorder %s37, %s38
    %p52 = scmp.eq.s32.totalorder %s16, 1
    %p53 = por %p51, %p52
    %p55 = scmp.ne.s32.totalorder %s38, %s54
    %p56 = scmp.eq.s32.totalorder %s16, 0
    %p57 = por %p55, %p56
    %s58 = sadd.s32 %s18, 1
    %s59 = smul.u32 %s58, 8
    %s60 = sadd.s32 %s25, 1
    %s61 = smul.u32 %s60, 8
    %s62 = ssub.s32 %s17, %s29
    %s63 = ssub.s32 %s59, %s61
    %s64 = sor.u32 %s62, %s63
    %p65 = scmp.eq.s32.totalorder %s64, 0
    %s67 = sadd.s32 %s66, 1
    %s68 = scalar_select %p65, %s66, %s67
    %p71 = pneg %p65
    %p72 = scmp.eq.s32.totalorder %s10, 1
    %p73 = por %p71, %p72
    %p74 = scmp.ne.s32.totalorder %s66, %s69
    %p75 = scmp.eq.s32.totalorder %s10, 0
    %p76 = por %p74, %p75
    %p77 = scmp.ne.s32.totalorder %s66, %s69
    %p78 = scmp.eq.s32.totalorder %s15, 1
    %p79 = por %p77, %p78
    %p80 = scmp.ne.s32.totalorder %s69, %s70
    %p81 = scmp.eq.s32.totalorder %s15, 0
    %p82 = por %p80, %p81
    %p83 = scmp.ne.s32.totalorder %s69, %s70
    %p84 = scmp.eq.s32.totalorder %s16, 1
    %p85 = por %p83, %p84
    %p87 = scmp.ne.s32.totalorder %s70, %s86
    %p88 = scmp.eq.s32.totalorder %s16, 0
    %p89 = por %p87, %p88
    %s91 = sadd.s32 %s90, 1
    %p94 = scmp.eq.s32.totalorder %s10, 1
    %p95 = scmp.ne.s32.totalorder %s90, %s92
    %p96 = scmp.eq.s32.totalorder %s10, 0
    %p97 = por %p95, %p96
    %p98 = scmp.ne.s32.totalorder %s90, %s92
    %p99 = scmp.eq.s32.totalorder %s15, 1
    %p100 = por %p98, %p99
    %p101 = scmp.ne.s32.totalorder %s92, %s93
    %p102 = scmp.eq.s32.totalorder %s15, 0
    %p103 = por %p101, %p102
    %p104 = scmp.ne.s32.totalorder %s92, %s93
    %p105 = scmp.eq.s32.totalorder %s16, 1
    %p106 = por %p104, %p105
    %p108 = scmp.ne.s32.totalorder %s93, %s107
    %p109 = scmp.eq.s32.totalorder %s16, 0
    %p110 = por %p108, %p109
    %s112 = sadd.s32 %s111, 1
    %p115 = scmp.eq.s32.totalorder %s10, 1
    %p116 = scmp.ne.s32.totalorder %s111, %s113
    %p117 = scmp.eq.s32.totalorder %s10, 0
    %p118 = por %p116, %p117
    %p119 = scmp.ne.s32.totalorder %s111, %s113
    %p120 = scmp.eq.s32.totalorder %s15, 1
    %p121 = por %p119, %p120
    %p122 = scmp.ne.s32.totalorder %s113, %s114
    %p123 = scmp.eq.s32.totalorder %s15, 0
    %p124 = por %p122, %p123
    %p125 = scmp.ne.s32.totalorder %s113, %s114
    %p126 = scmp.eq.s32.totalorder %s16, 1
    %p127 = por %p125, %p126
    %p129 = scmp.ne.s32.totalorder %s114, %s128
    %p130 = scmp.eq.s32.totalorder %s16, 0
    %p131 = por %p129, %p130
    %s132 = ssub.s32 %s17, %s29
    %s133 = ssub.s32 %s18, %s25
    %s134 = sor.u32 %s132, %s133
    %p135 = scmp.eq.s32.totalorder %s134, 0
    %s137 = sadd.s32 %s136, 1
    %s138 = scalar_select %p135, %s136, %s137
    %p141 = pneg %p135
    %p142 = scmp.eq.s32.totalorder %s10, 1
    %p143 = por %p141, %p142
    %p144 = scmp.ne.s32.totalorder %s136, %s139
    %p145 = scmp.eq.s32.totalorder %s10, 0
    %p146 = por %p144, %p145
    %p147 = scmp.ne.s32.totalorder %s136, %s139
    %p148 = scmp.eq.s32.totalorder %s15, 1
    %p149 = por %p147, %p148
    %p150 = scmp.ne.s32.totalorder %s139, %s140
    %p151 = scmp.eq.s32.totalorder %s15, 0
    %p152 = por %p150, %p151
    %p153 = scmp.ne.s32.totalorder %s139, %s140
    %p154 = scmp.eq.s32.totalorder %s16, 1
    %p155 = por %p153, %p154
    %p157 = scmp.ne.s32.totalorder %s140, %s156
    %p158 = scmp.eq.s32.totalorder %s16, 0
    %p159 = por %p157, %p158
    %p160 = scmp.le.s32.totalorder 1, %s10
    %p161 = scmp.lt.s32.totalorder %s10, 3
    %p162 = pnand %p160, %p161
    %p163 = pneg %p162
    // Predicated region
    $region9: #{tpu_custom_call.1} parent=5 // pred_check
      _
    $region10: #{tpu_custom_call.1} parent=5 // pred_check_branch
      %165 = sbr.rel (%p162) target = $region12
    $region11: #{tpu_custom_call.1} parent=5 // pred_region
      %s166 = ssub.s32 %s10, 1
      // Predicated region
      $region13: #{tpu_custom_call.1} parent=11 // pred_check
        %p167 = pneg %p103
      $region14: #{tpu_custom_call.1} parent=11 // pred_check_branch
        %169 = sbr.rel (%p167) target = $region16
      $region15: #{tpu_custom_call.1} parent=11 // pred_region
        _
      $region16: #{tpu_custom_call.1} parent=11 // pred_fallthru
        _
      // Predicated region
      $region17: #{tpu_custom_call.1} parent=11 // pred_check
        %p170 = pneg %p124
      $region18: #{tpu_custom_call.1} parent=11 // pred_check_branch
        %172 = sbr.rel (%p170) target = $region20
      $region19: #{tpu_custom_call.1} parent=11 // pred_region
        _
      $region20: #{tpu_custom_call.1} parent=11 // pred_fallthru
        _
    $region12: #{tpu_custom_call.1} parent=5 // pred_fallthru
      _
    %p173 = scmp.lt.s32.totalorder %s10, 2
    // Predicated region
    $region21: #{tpu_custom_call.1} parent=5 // pred_check
      %p174 = pneg %p173
    $region22: #{tpu_custom_call.1} parent=5 // pred_check_branch
      %176 = sbr.rel (%p174) target = $region24
    $region23: #{tpu_custom_call.1} parent=5 // pred_region
      // Predicated region
      $region25: #{tpu_custom_call.1} parent=23 // pred_check
        %p177 = pneg %p44
      $region26: #{tpu_custom_call.1} parent=23 // pred_check_branch
        %179 = sbr.rel (%p177) target = $region28
      $region27: #{tpu_custom_call.1} parent=23 // pred_region
        %s180 = smul.u32 16, %s18
        %s181 = ssub.s32 18, %s180
        %p182 = scmp.lt.s32.totalorder %s181, 16
        %s183 = scalar_select %p182, %s181, 16
        %s184 = smul.u32 128, %s183
        %s185 = smul.u32 %s184, 3
        %p186 = scmp.lt.s32.totalorder %s17, 1
        %s187 = scalar_select %p186, %s17, 1
        %p188 = scmp.lt.s32.totalorder %s180, 17
        %s189 = scalar_select %p188, %s180, 17
        %s190 = smul.addr %s189, 3
        %s191 = smul.addr %s187, 54
        %s192 = sadd.s32 %s190, %s191
        %s193 = smul.addr %s192, 8
        %s194 = scalar_lea.vmem %s0, %s193
        %s195 = smul.u32 16, %s18
        %s196 = ssub.s32 18, %s195
        %p197 = scmp.lt.s32.totalorder %s196, 16
        %s198 = scalar_select %p197, %s196, 16
        %s199 = smul.u32 128, %s198
        %s200 = smul.u32 %s199, 3
      $region28: #{tpu_custom_call.1} parent=23 // pred_fallthru
        _
      // Predicated region
      $region29: #{tpu_custom_call.1} parent=23 // pred_check
        %p201 = pneg %p76
      $region30: #{tpu_custom_call.1} parent=23 // pred_check_branch
        %203 = sbr.rel (%p201) target = $region32
      $region31: #{tpu_custom_call.1} parent=23 // pred_region
        %s204 = sadd.s32 %s18, 1
        %s205 = smul.u32 %s204, 8
        %s206 = smul.u32 2, %s205
        %p207 = scmp.lt.s32.totalorder %s17, 1
        %s208 = scalar_select %p207, %s17, 1
        %p209 = scmp.lt.s32.totalorder %s206, 17
        %s210 = scalar_select %p209, %s206, 17
        %s211 = smul.addr %s210, 3
        %s212 = smul.addr %s208, 54
        %s213 = sadd.s32 %s211, %s212
        %s214 = smul.addr %s213, 8
        %s215 = scalar_lea.vmem %s1, %s214
        %s216 = sadd.s32 %s18, 1
        %s217 = smul.u32 %s216, 8
        %s218 = smul.u32 2, %s217
      $region32: #{tpu_custom_call.1} parent=23 // pred_fallthru
        _
    $region24: #{tpu_custom_call.1} parent=5 // pred_fallthru
      _
    %p219 = scmp.le.s32.totalorder 1, %s10
    %p220 = scmp.lt.s32.totalorder %s10, 3
    %p221 = pnand %p219, %p220
    %p222 = pneg %p221
    // Predicated region
    $region33: #{tpu_custom_call.1} parent=5 // pred_check
      _
    $region34: #{tpu_custom_call.1} parent=5 // pred_check_branch
      %224 = sbr.rel (%p221) target = $region36
    $region35: #{tpu_custom_call.1} parent=5 // pred_region
      %s225 = ssub.s32 %s10, 1
      %s226 = smul.u32 16, %s20
      %s227 = ssub.s32 18, %s226
      %p228 = scmp.lt.s32.totalorder %s227, 16
      %s229 = scalar_select %p228, %s227, 16
      %s230 = smul.u32 128, %s229
      %s231 = smul.u32 %s230, 3
      %p232 = scmp.lt.s32.totalorder %s19, 1
      %s233 = scalar_select %p232, %s19, 1
      %p234 = scmp.lt.s32.totalorder %s226, 17
      %s235 = scalar_select %p234, %s226, 17
      %s236 = smul.addr %s235, 3
      %s237 = smul.addr %s233, 54
      %s238 = sadd.s32 %s236, %s237
      %s239 = smul.addr %s238, 8
      %s240 = scalar_lea.vmem %s0, %s239
      %p241 = pneg %p50
      %p242 = pneg %p47
      %s243 = sadd.s32 %s20, 1
      %s244 = smul.u32 %s243, 8
      %s245 = smul.u32 2, %s244
      %p246 = scmp.lt.s32.totalorder %s19, 1
      %s247 = scalar_select %p246, %s19, 1
      %p248 = scmp.lt.s32.totalorder %s245, 17
      %s249 = scalar_select %p248, %s245, 17
      %s250 = smul.addr %s249, 3
      %s251 = smul.addr %s247, 54
      %s252 = sadd.s32 %s250, %s251
      %s253 = smul.addr %s252, 8
      %s254 = scalar_lea.vmem %s1, %s253
      %p255 = pneg %p82
      %p256 = pneg %p79
      %p257 = pneg %p103
      %p258 = pneg %p100
      %p259 = pneg %p124
      %p260 = pneg %p121
      %p261 = pneg %p152
      %p262 = pneg %p149
      %s263 = smul.u32 16, %s20
      %p264 = scmp.lt.s32.totalorder %s19, 1
      %s265 = scalar_select %p264, %s19, 1
      %p266 = scmp.lt.s32.totalorder %s263, 15
      %s267 = scalar_select %p266, %s263, 15
      %s268 = smul.addr %s267, 2
      %s269 = smul.addr %s265, 128
      %s270 = sadd.s32 %s268, %s269
      %s271 = smul.addr %s270, 8
      %s272 = scalar_lea.vmem %s4, %s271
      %s273 = smul.u32 16, %s20
      %s274 = ssub.s32 18, %s273
      %p275 = scmp.lt.s32.totalorder %s274, 16
      %s276 = scalar_select %p275, %s274, 16
      %s277 = smul.u32 128, %s276
      %s278 = smul.u32 %s277, 3
      %p279 = scmp.lt.s32.totalorder %s19, 1
      %s280 = scalar_select %p279, %s19, 1
      %p281 = scmp.lt.s32.totalorder %s273, 17
      %s282 = scalar_select %p281, %s273, 17
      %s283 = smul.addr %s282, 3
      %s284 = smul.addr %s280, 54
      %s285 = sadd.s32 %s283, %s284
      %s286 = smul.addr %s285, 8
      %s287 = scalar_lea.vmem %s0, %s286
      %s288 = smul.u32 16, %s20
      %s289 = ssub.s32 18, %s288
      %p290 = scmp.lt.s32.totalorder %s289, 16
      %s291 = scalar_select %p290, %s289, 16
      %s292 = smul.u32 128, %s291
      %s293 = smul.u32 %s292, 3
      %s294 = sadd.s32 %s20, 1
      %s295 = smul.u32 %s294, 8
      %s296 = smul.u32 2, %s295
      %p297 = scmp.lt.s32.totalorder %s19, 1
      %s298 = scalar_select %p297, %s19, 1
      %p299 = scmp.lt.s32.totalorder %s296, 17
      %s300 = scalar_select %p299, %s296, 17
      %s301 = smul.addr %s300, 3
      %s302 = smul.addr %s298, 54
      %s303 = sadd.s32 %s301, %s302
      %s304 = smul.addr %s303, 8
      %s305 = scalar_lea.vmem %s1, %s304
      %s306 = sadd.s32 %s20, 1
      %s307 = smul.u32 %s306, 8
      %s308 = smul.u32 2, %s307
      %s309 = smul.u32 16, %s20
      %p310 = scmp.lt.s32.totalorder %s19, 1
      %s311 = scalar_select %p310, %s19, 1
      %p312 = scmp.lt.s32.totalorder %s309, 15
      %s313 = scalar_select %p312, %s309, 15
      %s314 = smul.addr %s313, 2
      %s315 = smul.addr %s311, 128
      %s316 = sadd.s32 %s314, %s315
      %s317 = smul.addr %s316, 8
      %s318 = scalar_lea.vmem %s4, %s317
      %s319 = smul.u32 16, %s20
      %v321 = vld [vmem:[%s287] sm:$0xff]
      %v322 = vld [vmem:[%s287 + $0x8] sm:$0xff]
      %v323 = vld [vmem:[%s287 + $0x10] sm:$0x3]
      %v324 = vld [vmem:[%s287 + $0x18] sm:$0xff]
      %v325 = vld [vmem:[%s287 + $0x20] sm:$0xff]
      %v326 = vld [vmem:[%s287 + $0x28] sm:$0x3]
      %v327 = vld [vmem:[%s287 + $0x30] sm:$0xff]
      %v328 = vld [vmem:[%s287 + $0x38] sm:$0xff]
      %v329 = vld [vmem:[%s287 + $0x40] sm:$0x3]
      %v330 = vld [vmem:[%s287 + $0x48] sm:$0xff]
      %v331 = vld [vmem:[%s287 + $0x50] sm:$0xff]
      %v332 = vld [vmem:[%s287 + $0x58] sm:$0x3]
      %v333 = vld [vmem:[%s287 + $0x60] sm:$0xff]
      %v334 = vld [vmem:[%s287 + $0x68] sm:$0xff]
      %v335 = vld [vmem:[%s287 + $0x70] sm:$0x3]
      %v336 = vld [vmem:[%s287 + $0x78] sm:$0xff]
      %v337 = vld [vmem:[%s287 + $0x80] sm:$0xff]
      %v338 = vld [vmem:[%s287 + $0x88] sm:$0x3]
      %v339 = vld [vmem:[%s287 + $0x90] sm:$0xff]
      %v340 = vld [vmem:[%s287 + $0x98] sm:$0xff]
      %v341 = vld [vmem:[%s287 + $0xa0] sm:$0x3]
      %v342 = vld [vmem:[%s287 + $0xa8] sm:$0xff]
      %v343 = vld [vmem:[%s287 + $0xb0] sm:$0xff]
      %v344 = vld [vmem:[%s287 + $0xb8] sm:$0x3]
      %v345 = vld [vmem:[%s287 + $0xc0] sm:$0xff]
      %v346 = vld [vmem:[%s287 + $0xc8] sm:$0xff]
      %v347 = vld [vmem:[%s287 + $0xd0] sm:$0x3]
      %v348 = vld [vmem:[%s287 + $0xd8] sm:$0xff]
      %v349 = vld [vmem:[%s287 + $0xe0] sm:$0xff]
      %v350 = vld [vmem:[%s287 + $0xe8] sm:$0x3]
      %v351 = vld [vmem:[%s287 + $0xf0] sm:$0xff]
      %v352 = vld [vmem:[%s287 + $0xf8] sm:$0xff]
      %v353 = vld [vmem:[%s287 + $0x100] sm:$0x3]
      %v354 = vld [vmem:[%s287 + $0x108] sm:$0xff]
      %v355 = vld [vmem:[%s287 + $0x110] sm:$0xff]
      %v356 = vld [vmem:[%s287 + $0x118] sm:$0x3]
      %v357 = vld [vmem:[%s287 + $0x120] sm:$0xff]
      %v358 = vld [vmem:[%s287 + $0x128] sm:$0xff]
      %v359 = vld [vmem:[%s287 + $0x130] sm:$0x3]
      %v360 = vld [vmem:[%s287 + $0x138] sm:$0xff]
      %v361 = vld [vmem:[%s287 + $0x140] sm:$0xff]
      %v362 = vld [vmem:[%s287 + $0x148] sm:$0x3]
      %v363 = vld [vmem:[%s287 + $0x150] sm:$0xff]
      %v364 = vld [vmem:[%s287 + $0x158] sm:$0xff]
      %v365 = vld [vmem:[%s287 + $0x160] sm:$0x3]
      %v366 = vld [vmem:[%s287 + $0x168] sm:$0xff]
      %v367 = vld [vmem:[%s287 + $0x170] sm:$0xff]
      %v368 = vld [vmem:[%s287 + $0x178] sm:$0x3]
      %v369 = vld [vmem:[%s305] sm:$0xff]
      %v370 = vld [vmem:[%s305 + $0x8] sm:$0xff]
      %v371 = vld [vmem:[%s305 + $0x10] sm:$0x3]
      %v372 = vld [vmem:[%s305 + $0x18] sm:$0xff]
      %v373 = vld [vmem:[%s305 + $0x20] sm:$0xff]
      %v374 = vld [vmem:[%s305 + $0x28] sm:$0x3]
      %v375 = vpack.c.bf16 %v322, %v321
      %v376 = vpack.c.bf16 %v325, %v324
      %v377 = vpack.c.bf16 %v328, %v327
      %v378 = vpack.c.bf16 %v331, %v330
      %v379 = vpack.c.bf16 %v334, %v333
      %v380 = vpack.c.bf16 %v337, %v336
      %v381 = vpack.c.bf16 %v340, %v339
      %v382 = vpack.c.bf16 %v343, %v342
      %v383 = vpack.c.bf16 %v346, %v345
      %v384 = vpack.c.bf16 %v349, %v348
      %v385 = vpack.c.bf16 %v352, %v351
      %v386 = vpack.c.bf16 %v355, %v354
      %v387 = vpack.c.bf16 %v358, %v357
      %v388 = vpack.c.bf16 %v361, %v360
      %v389 = vpack.c.bf16 %v364, %v363
      %v390 = vpack.c.bf16 %v367, %v366
      %v391 = vpack.c.bf16 %v370, %v369
      %v392 = vpack.c.bf16 %v373, %v372
      %v393 = vpack.c.bf16 %v323, %v323
      %v394 = vpack.c.bf16 %v326, %v326
      %v395 = vpack.c.bf16 %v329, %v329
      %v396 = vpack.c.bf16 %v332, %v332
      %v397 = vpack.c.bf16 %v335, %v335
      %v398 = vpack.c.bf16 %v338, %v338
      %v399 = vpack.c.bf16 %v341, %v341
      %v400 = vpack.c.bf16 %v344, %v344
      %v401 = vpack.c.bf16 %v347, %v347
      %v402 = vpack.c.bf16 %v350, %v350
      %v403 = vpack.c.bf16 %v353, %v353
      %v404 = vpack.c.bf16 %v356, %v356
      %v405 = vpack.c.bf16 %v359, %v359
      %v406 = vpack.c.bf16 %v362, %v362
      %v407 = vpack.c.bf16 %v365, %v365
      %v408 = vpack.c.bf16 %v368, %v368
      %v409 = vpack.c.bf16 %v371, %v371
      %v410 = vpack.c.bf16 %v374, %v374
      %v411 = vld [vmem:[%s3] sm:$0x1]
      %v412 = vld [vmem:[%s2] sm:$0x3]
      %s413 = scalar_lea.vmem %s2, 2
      %v414 = vld [vmem:[%s413] sm:$0x3]
      %vm415 = vsmask.f32 7424
      %v417 = vshrl.u32 %v375, 16
      %v419 = vshll.u32 %v375, 16
      %v421 = vrot.slane %v419, 1
      %v422 = vor.u32 %v417, %v421
      %v424 = vshll.u32 %v393, 16
      %v426 = vrot.slane %v424, 1
      %v427 = vsel %vm415, %v422, %v426
      %v429 = vshrl.u32 %v376, 16
      %v431 = vshll.u32 %v376, 16
      %v433 = vrot.slane %v431, 1
      %v434 = vor.u32 %v429, %v433
      %v436 = vshll.u32 %v394, 16
      %v438 = vrot.slane %v436, 1
      %v439 = vsel %vm415, %v434, %v438
      %v441 = vshrl.u32 %v377, 16
      %v443 = vshll.u32 %v377, 16
      %v445 = vrot.slane %v443, 1
      %v446 = vor.u32 %v441, %v445
      %v448 = vshll.u32 %v395, 16
      %v450 = vrot.slane %v448, 1
      %v451 = vsel %vm415, %v446, %v450
      %v453 = vshrl.u32 %v378, 16
      %v455 = vshll.u32 %v378, 16
      %v457 = vrot.slane %v455, 1
      %v458 = vor.u32 %v453, %v457
      %v460 = vshll.u32 %v396, 16
      %v462 = vrot.slane %v460, 1
      %v463 = vsel %vm415, %v458, %v462
      %v465 = vshrl.u32 %v379, 16
      %v467 = vshll.u32 %v379, 16
      %v469 = vrot.slane %v467, 1
      %v470 = vor.u32 %v465, %v469
      %v472 = vshll.u32 %v397, 16
      %v474 = vrot.slane %v472, 1
      %v475 = vsel %vm415, %v470, %v474
      %v477 = vshrl.u32 %v380, 16
      %v479 = vshll.u32 %v380, 16
      %v481 = vrot.slane %v479, 1
      %v482 = vor.u32 %v477, %v481
      %v484 = vshll.u32 %v398, 16
      %v486 = vrot.slane %v484, 1
      %v487 = vsel %vm415, %v482, %v486
      %v489 = vshrl.u32 %v381, 16
      %v491 = vshll.u32 %v381, 16
      %v493 = vrot.slane %v491, 1
      %v494 = vor.u32 %v489, %v493
      %v496 = vshll.u32 %v399, 16
      %v498 = vrot.slane %v496, 1
      %v499 = vsel %vm415, %v494, %v498
      %v501 = vshrl.u32 %v382, 16
      %v503 = vshll.u32 %v382, 16
      %v505 = vrot.slane %v503, 1
      %v506 = vor.u32 %v501, %v505
      %v508 = vshll.u32 %v400, 16
      %v510 = vrot.slane %v508, 1
      %v511 = vsel %vm415, %v506, %v510
      %v513 = vshrl.u32 %v383, 16
      %v515 = vshll.u32 %v383, 16
      %v517 = vrot.slane %v515, 1
      %v518 = vor.u32 %v513, %v517
      %v520 = vshll.u32 %v401, 16
      %v522 = vrot.slane %v520, 1
      %v523 = vsel %vm415, %v518, %v522
      %v525 = vshrl.u32 %v384, 16
      %v527 = vshll.u32 %v384, 16
      %v529 = vrot.slane %v527, 1
      %v530 = vor.u32 %v525, %v529
      %v532 = vshll.u32 %v402, 16
      %v534 = vrot.slane %v532, 1
      %v535 = vsel %vm415, %v530, %v534
      %v537 = vshrl.u32 %v385, 16
      %v539 = vshll.u32 %v385, 16
      %v541 = vrot.slane %v539, 1
      %v542 = vor.u32 %v537, %v541
      %v544 = vshll.u32 %v403, 16
      %v546 = vrot.slane %v544, 1
      %v547 = vsel %vm415, %v542, %v546
      %v549 = vshrl.u32 %v386, 16
      %v551 = vshll.u32 %v386, 16
      %v553 = vrot.slane %v551, 1
      %v554 = vor.u32 %v549, %v553
      %v556 = vshll.u32 %v404, 16
      %v558 = vrot.slane %v556, 1
      %v559 = vsel %vm415, %v554, %v558
      %v561 = vshrl.u32 %v387, 16
      %v563 = vshll.u32 %v387, 16
      %v565 = vrot.slane %v563, 1
      %v566 = vor.u32 %v561, %v565
      %v568 = vshll.u32 %v405, 16
      %v570 = vrot.slane %v568, 1
      %v571 = vsel %vm415, %v566, %v570
      %v573 = vshrl.u32 %v388, 16
      %v575 = vshll.u32 %v388, 16
      %v577 = vrot.slane %v575, 1
      %v578 = vor.u32 %v573, %v577
      %v580 = vshll.u32 %v406, 16
      %v582 = vrot.slane %v580, 1
      %v583 = vsel %vm415, %v578, %v582
      %v585 = vshrl.u32 %v389, 16
      %v587 = vshll.u32 %v389, 16
      %v589 = vrot.slane %v587, 1
      %v590 = vor.u32 %v585, %v589
      %v592 = vshll.u32 %v407, 16
      %v594 = vrot.slane %v592, 1
      %v595 = vsel %vm415, %v590, %v594
      %v597 = vshrl.u32 %v390, 16
      %v599 = vshll.u32 %v390, 16
      %v601 = vrot.slane %v599, 1
      %v602 = vor.u32 %v597, %v601
      %v604 = vshll.u32 %v408, 16
      %v606 = vrot.slane %v604, 1
      %v607 = vsel %vm415, %v602, %v606
      %vm608 = vcmask 31744
      %v610 = vsel %vm608, %v427, 0
      %v613 = vsel %vm608, %v439, 0
      %v616 = vsel %vm608, %v451, 0
      %v619 = vsel %vm608, %v463, 0
      %v622 = vsel %vm608, %v475, 0
      %v625 = vsel %vm608, %v487, 0
      %v628 = vsel %vm608, %v499, 0
      %v631 = vsel %vm608, %v511, 0
      %v634 = vsel %vm608, %v523, 0
      %v637 = vsel %vm608, %v535, 0
      %v640 = vsel %vm608, %v547, 0
      %v643 = vsel %vm608, %v559, 0
      %v646 = vsel %vm608, %v571, 0
      %v649 = vsel %vm608, %v583, 0
      %v652 = vsel %vm608, %v595, 0
      %v655 = vsel %vm608, %v607, 0
      %vm657 = vcmask 1041408
      %v659 = vsel %vm657, %v414, 0
      %661 = vmatprep.subr.bf16.mxu0 0
      %662 = vmatpush1.bf16.msra.mxu0 %v659
      %663 = vmatprep.subr.bf16.mxu0 0
      %664 = vmatpush1.bf16.msra.mxu0 0
      %665 = vmatprep.subr.bf16.mxu0 0
      %666 = vmatpush1.bf16.msra.mxu0 0
      %667 = vmatprep.subr.bf16.mxu0 0
      %668 = vmatpush1.bf16.msra.mxu0 0
      %669 = vmatprep.subr.bf16.mxu0 0
      %670 = vmatpush1.bf16.msra.mxu0 0
      %671 = vmatprep.subr.bf16.mxu0 0
      %672 = vmatpush1.bf16.msra.mxu0 0
      %673 = vmatprep.subr.bf16.mxu0 0
      %674 = vmatpush1.bf16.msra.mxu0 0
      %675 = vmatprep.subr.bf16.mxu0 0
      %676 = vmatpush1.bf16.msra.mxu0 0
      %677 = vmatprep.subr.bf16.mxu0 0
      %678 = vmatpush1.bf16.msra.mxu0 0
      %679 = vmatprep.subr.bf16.mxu0 0
      %680 = vmatpush1.bf16.msra.mxu0 0
      %681 = vmatprep.subr.bf16.mxu0 0
      %682 = vmatpush1.bf16.msra.mxu0 0
      %683 = vmatprep.subr.bf16.mxu0 0
      %684 = vmatpush1.bf16.msra.mxu0 0
      %685 = vmatprep.subr.bf16.mxu0 0
      %686 = vmatpush1.bf16.msra.mxu0 0
      %687 = vmatprep.subr.bf16.mxu0 0
      %688 = vmatpush1.bf16.msra.mxu0 0
      %689 = vmatprep.subr.bf16.mxu0 0
      %690 = vmatpush1.bf16.msra.mxu0 0
      %691 = vmatprep.subr.bf16.mxu0 0
      %692 = vmatpush1.bf16.msra.mxu0 0
      %693 = vmatprep.mubr.bf16.mxu0 0
      %694 = vmatmul.mubr.bf16.gmra.mrb[0].mxu0 %v610
      %v695 = vpop.f32.mrb[0].mxu0
      %v696 = vadd.f32 0.0, %v695
      %v697 = vpop.f32.mrb[0].mxu0
      %v698 = vpop.f32.mrb[0].mxu0
      %v699 = vadd.f32 0.0, %v698
      %v700 = vpop.f32.mrb[0].mxu0
      %701 = vmatprep.mubr.bf16.mxu0 0
      %702 = vmatmul.mubr.bf16.gmra.mrb[0].mxu0 %v613
      %v703 = vpop.f32.mrb[0].mxu0
      %v704 = vadd.f32 0.0, %v703
      %v705 = vpop.f32.mrb[0].mxu0
      %v706 = vpop.f32.mrb[0].mxu0
      %v707 = vadd.f32 0.0, %v706
      %v708 = vpop.f32.mrb[0].mxu0
      %709 = vmatprep.mubr.bf16.mxu0 0
      %710 = vmatmul.mubr.bf16.gmra.mrb[0].mxu0 %v616
      %v711 = vpop.f32.mrb[0].mxu0
      %v712 = vadd.f32 0.0, %v711
      %v713 = vpop.f32.mrb[0].mxu0
      %v714 = vpop.f32.mrb[0].mxu0
      %v715 = vadd.f32 0.0, %v714
      %v716 = vpop.f32.mrb[0].mxu0
      %717 = vmatprep.mubr.bf16.mxu0 0
      %718 = vmatmul.mubr.bf16.gmra.mrb[0].mxu0 %v619
      %v719 = vpop.f32.mrb[0].mxu0
      %v720 = vadd.f32 0.0, %v719
      %v721 = vpop.f32.mrb[0].mxu0
      %v722 = vpop.f32.mrb[0].mxu0
      %v723 = vadd.f32 0.0, %v722
      %v724 = vpop.f32.mrb[0].mxu0
      %725 = vmatprep.mubr.bf16.mxu0 0
      %726 = vmatmul.mubr.bf16.gmra.mrb[0].mxu0 %v622
      %v727 = vpop.f32.mrb[0].mxu0
      %v728 = vadd.f32 0.0, %v727
      %v729 = vpop.f32.mrb[0].mxu0
      %v730 = vpop.f32.mrb[0].mxu0
      %v731 = vadd.f32 0.0, %v730
      %v732 = vpop.f32.mrb[0].mxu0
      %733 = vmatprep.mubr.bf16.mxu0 0
      %734 = vmatmul.mubr.bf16.gmra.mrb[0].mxu0 %v625
      %v735 = vpop.f32.mrb[0].mxu0
      %v736 = vadd.f32 0.0, %v735
      %v737 = vpop.f32.mrb[0].mxu0
      %v738 = vpop.f32.mrb[0].mxu0
      %v739 = vadd.f32 0.0, %v738
      %v740 = vpop.f32.mrb[0].mxu0
      %741 = vmatprep.mubr.bf16.mxu0 0
      %742 = vmatmul.mubr.bf16.gmra.mrb[0].mxu0 %v628
      %v743 = vpop.f32.mrb[0].mxu0
      %v744 = vadd.f32 0.0, %v743
      %v745 = vpop.f32.mrb[0].mxu0
      %v746 = vpop.f32.mrb[0].mxu0
      %v747 = vadd.f32 0.0, %v746
      %v748 = vpop.f32.mrb[0].mxu0
      %749 = vmatprep.mubr.bf16.mxu0 0
      %750 = vmatmul.mubr.bf16.gmra.mrb[0].mxu0 %v631
      %v751 = vpop.f32.mrb[0].mxu0
      %v752 = vadd.f32 0.0, %v751
      %v753 = vpop.f32.mrb[0].mxu0
      %v754 = vpop.f32.mrb[0].mxu0
      %v755 = vadd.f32 0.0, %v754
      %v756 = vpop.f32.mrb[0].mxu0
      %757 = vmatprep.mubr.bf16.mxu0 0
      %758 = vmatmul.mubr.bf16.gmra.mrb[0].mxu0 %v634
      %v759 = vpop.f32.mrb[0].mxu0
      %v760 = vadd.f32 0.0, %v759
      %v761 = vpop.f32.mrb[0].mxu0
      %v762 = vpop.f32.mrb[0].mxu0
      %v763 = vadd.f32 0.0, %v762
      %v764 = vpop.f32.mrb[0].mxu0
      %765 = vmatprep.mubr.bf16.mxu0 0
      %766 = vmatmul.mubr.bf16.gmra.mrb[0].mxu0 %v637
      %v767 = vpop.f32.mrb[0].mxu0
      %v768 = vadd.f32 0.0, %v767
      %v769 = vpop.f32.mrb[0].mxu0
      %v770 = vpop.f32.mrb[0].mxu0
      %v771 = vadd.f32 0.0, %v770
      %v772 = vpop.f32.mrb[0].mxu0
      %773 = vmatprep.mubr.bf16.mxu0 0
      %774 = vmatmul.mubr.bf16.gmra.mrb[0].mxu0 %v640
      %v775 = vpop.f32.mrb[0].mxu0
      %v776 = vadd.f32 0.0, %v775
      %v777 = vpop.f32.mrb[0].mxu0
      %v778 = vpop.f32.mrb[0].mxu0
      %v779 = vadd.f32 0.0, %v778
      %v780 = vpop.f32.mrb[0].mxu0
      %781 = vmatprep.mubr.bf16.mxu0 0
      %782 = vmatmul.mubr.bf16.gmra.mrb[0].mxu0 %v643
      %v783 = vpop.f32.mrb[0].mxu0
      %v784 = vadd.f32 0.0, %v783
      %v785 = vpop.f32.mrb[0].mxu0
      %v786 = vpop.f32.mrb[0].mxu0
      %v787 = vadd.f32 0.0, %v786
      %v788 = vpop.f32.mrb[0].mxu0
      %789 = vmatprep.mubr.bf16.mxu0 0
      %790 = vmatmul.mubr.bf16.gmra.mrb[0].mxu0 %v646
      %v791 = vpop.f32.mrb[0].mxu0
      %v792 = vadd.f32 0.0, %v791
      %v793 = vpop.f32.mrb[0].mxu0
      %v794 = vpop.f32.mrb[0].mxu0
      %v795 = vadd.f32 0.0, %v794
      %v796 = vpop.f32.mrb[0].mxu0
      %797 = vmatprep.mubr.bf16.mxu0 0
      %798 = vmatmul.mubr.bf16.gmra.mrb[0].mxu0 %v649
      %v799 = vpop.f32.mrb[0].mxu0
      %v800 = vadd.f32 0.0, %v799
      %v801 = vpop.f32.mrb[0].mxu0
      %v802 = vpop.f32.mrb[0].mxu0
      %v803 = vadd.f32 0.0, %v802
      %v804 = vpop.f32.mrb[0].mxu0
      %805 = vmatprep.mubr.bf16.mxu0 0
      %806 = vmatmul.mubr.bf16.gmra.mrb[0].mxu0 %v652
      %v807 = vpop.f32.mrb[0].mxu0
      %v808 = vadd.f32 0.0, %v807
      %v809 = vpop.f32.mrb[0].mxu0
      %v810 = vpop.f32.mrb[0].mxu0
      %v811 = vadd.f32 0.0, %v810
      %v812 = vpop.f32.mrb[0].mxu0
      %813 = vmatprep.mubr.bf16.mxu0 0
      %814 = vmatmul.mubr.bf16.gmra.mrb[0].mxu0 %v655
      %v815 = vpop.f32.mrb[0].mxu0
      %v816 = vadd.f32 0.0, %v815
      %v817 = vpop.f32.mrb[0].mxu0
      %v818 = vpop.f32.mrb[0].mxu0
      %v819 = vadd.f32 0.0, %v818
      %v820 = vpop.f32.mrb[0].mxu0
      %821 = vdwg.mxu0
      %v822 = vsel %vm608, %v375, 0
      %v824 = vsel %vm608, %v376, 0
      %v826 = vsel %vm608, %v377, 0
      %v828 = vsel %vm608, %v378, 0
      %v830 = vsel %vm608, %v379, 0
      %v832 = vsel %vm608, %v380, 0
      %v834 = vsel %vm608, %v381, 0
      %v836 = vsel %vm608, %v382, 0
      %v838 = vsel %vm608, %v383, 0
      %v840 = vsel %vm608, %v384, 0
      %v842 = vsel %vm608, %v385, 0
      %v844 = vsel %vm608, %v386, 0
      %v846 = vsel %vm608, %v387, 0
      %v848 = vsel %vm608, %v388, 0
      %v850 = vsel %vm608, %v389, 0
      %v852 = vsel %vm608, %v390, 0
      %v855 = vsel %vm657, %v412, 0
      %857 = vmatprep.subr.bf16.mxu0 0
      %858 = vmatpush1.bf16.msra.mxu0 %v855
      %859 = vmatprep.subr.bf16.mxu0 0
      %860 = vmatpush1.bf16.msra.mxu0 0
      %861 = vmatprep.subr.bf16.mxu0 0
      %862 = vmatpush1.bf16.msra.mxu0 0
      %863 = vmatprep.subr.bf16.mxu0 0
      %864 = vmatpush1.bf16.msra.mxu0 0
      %865 = vmatprep.subr.bf16.mxu0 0
      %866 = vmatpush1.bf16.msra.mxu0 0
      %867 = vmatprep.subr.bf16.mxu0 0
      %868 = vmatpush1.bf16.msra.mxu0 0
      %869 = vmatprep.subr.bf16.mxu0 0
      %870 = vmatpush1.bf16.msra.mxu0 0
      %871 = vmatprep.subr.bf16.mxu0 0
      %872 = vmatpush1.bf16.msra.mxu0 0
      %873 = vmatprep.subr.bf16.mxu0 0
      %874 = vmatpush1.bf16.msra.mxu0 0
      %875 = vmatprep.subr.bf16.mxu0 0
      %876 = vmatpush1.bf16.msra.mxu0 0
      %877 = vmatprep.subr.bf16.mxu0 0
      %878 = vmatpush1.bf16.msra.mxu0 0
      %879 = vmatprep.subr.bf16.mxu0 0
      %880 = vmatpush1.bf16.msra.mxu0 0
      %881 = vmatprep.subr.bf16.mxu0 0
      %882 = vmatpush1.bf16.msra.mxu0 0
      %883 = vmatprep.subr.bf16.mxu0 0
      %884 = vmatpush1.bf16.msra.mxu0 0
      %885 = vmatprep.subr.bf16.mxu0 0
      %886 = vmatpush1.bf16.msra.mxu0 0
      %887 = vmatprep.subr.bf16.mxu0 0
      %888 = vmatpush1.bf16.msra.mxu0 0
      %889 = vmatprep.mubr.bf16.mxu0 0
      %890 = vmatmul.mubr.bf16.gmra.mrb[0].mxu0 %v822
      %v891 = vpop.f32.mrb[0].mxu0
      %v892 = vadd.f32 %v696, %v891
      %v893 = vpop.f32.mrb[0].mxu0
      %v894 = vpop.f32.mrb[0].mxu0
      %v895 = vadd.f32 %v699, %v894
      %v896 = vpop.f32.mrb[0].mxu0
      %897 = vmatprep.mubr.bf16.mxu0 0
      %898 = vmatmul.mubr.bf16.gmra.mrb[0].mxu0 %v824
      %v899 = vpop.f32.mrb[0].mxu0
      %v900 = vadd.f32 %v704, %v899
      %v901 = vpop.f32.mrb[0].mxu0
      %v902 = vpop.f32.mrb[0].mxu0
      %v903 = vadd.f32 %v707, %v902
      %v904 = vpop.f32.mrb[0].mxu0
      %905 = vmatprep.mubr.bf16.mxu0 0
      %906 = vmatmul.mubr.bf16.gmra.mrb[0].mxu0 %v826
      %v907 = vpop.f32.mrb[0].mxu0
      %v908 = vadd.f32 %v712, %v907
      %v909 = vpop.f32.mrb[0].mxu0
      %v910 = vpop.f32.mrb[0].mxu0
      %v911 = vadd.f32 %v715, %v910
      %v912 = vpop.f32.mrb[0].mxu0
      %913 = vmatprep.mubr.bf16.mxu0 0
      %914 = vmatmul.mubr.bf16.gmra.mrb[0].mxu0 %v828
      %v915 = vpop.f32.mrb[0].mxu0
      %v916 = vadd.f32 %v720, %v915
      %v917 = vpop.f32.mrb[0].mxu0
      %v918 = vpop.f32.mrb[0].mxu0
      %v919 = vadd.f32 %v723, %v918
      %v920 = vpop.f32.mrb[0].mxu0
      %921 = vmatprep.mubr.bf16.mxu0 0
      %922 = vmatmul.mubr.bf16.gmra.mrb[0].mxu0 %v830
      %v923 = vpop.f32.mrb[0].mxu0
      %v924 = vadd.f32 %v728, %v923
      %v925 = vpop.f32.mrb[0].mxu0
      %v926 = vpop.f32.mrb[0].mxu0
      %v927 = vadd.f32 %v731, %v926
      %v928 = vpop.f32.mrb[0].mxu0
      %929 = vmatprep.mubr.bf16.mxu0 0
      %930 = vmatmul.mubr.bf16.gmra.mrb[0].mxu0 %v832
      %v931 = vpop.f32.mrb[0].mxu0
      %v932 = vadd.f32 %v736, %v931
      %v933 = vpop.f32.mrb[0].mxu0
      %v934 = vpop.f32.mrb[0].mxu0
      %v935 = vadd.f32 %v739, %v934
      %v936 = vpop.f32.mrb[0].mxu0
      %937 = vmatprep.mubr.bf16.mxu0 0
      %938 = vmatmul.mubr.bf16.gmra.mrb[0].mxu0 %v834
      %v939 = vpop.f32.mrb[0].mxu0
      %v940 = vadd.f32 %v744, %v939
      %v941 = vpop.f32.mrb[0].mxu0
      %v942 = vpop.f32.mrb[0].mxu0
      %v943 = vadd.f32 %v747, %v942
      %v944 = vpop.f32.mrb[0].mxu0
      %945 = vmatprep.mubr.bf16.mxu0 0
      %946 = vmatmul.mubr.bf16.gmra.mrb[0].mxu0 %v836
      %v947 = vpop.f32.mrb[0].mxu0
      %v948 = vadd.f32 %v752, %v947
      %v949 = vpop.f32.mrb[0].mxu0
      %v950 = vpop.f32.mrb[0].mxu0
      %v951 = vadd.f32 %v755, %v950
      %v952 = vpop.f32.mrb[0].mxu0
      %953 = vmatprep.mubr.bf16.mxu0 0
      %954 = vmatmul.mubr.bf16.gmra.mrb[0].mxu0 %v838
      %v955 = vpop.f32.mrb[0].mxu0
      %v956 = vadd.f32 %v760, %v955
      %v957 = vpop.f32.mrb[0].mxu0
      %v958 = vpop.f32.mrb[0].mxu0
      %v959 = vadd.f32 %v763, %v958
      %v960 = vpop.f32.mrb[0].mxu0
      %961 = vmatprep.mubr.bf16.mxu0 0
      %962 = vmatmul.mubr.bf16.gmra.mrb[0].mxu0 %v840
      %v963 = vpop.f32.mrb[0].mxu0
      %v964 = vadd.f32 %v768, %v963
      %v965 = vpop.f32.mrb[0].mxu0
      %v966 = vpop.f32.mrb[0].mxu0
      %v967 = vadd.f32 %v771, %v966
      %v968 = vpop.f32.mrb[0].mxu0
      %969 = vmatprep.mubr.bf16.mxu0 0
      %970 = vmatmul.mubr.bf16.gmra.mrb[0].mxu0 %v842
      %v971 = vpop.f32.mrb[0].mxu0
      %v972 = vadd.f32 %v776, %v971
      %v973 = vpop.f32.mrb[0].mxu0
      %v974 = vpop.f32.mrb[0].mxu0
      %v975 = vadd.f32 %v779, %v974
      %v976 = vpop.f32.mrb[0].mxu0
      %977 = vmatprep.mubr.bf16.mxu0 0
      %978 = vmatmul.mubr.bf16.gmra.mrb[0].mxu0 %v844
      %v979 = vpop.f32.mrb[0].mxu0
      %v980 = vadd.f32 %v784, %v979
      %v981 = vpop.f32.mrb[0].mxu0
      %v982 = vpop.f32.mrb[0].mxu0
      %v983 = vadd.f32 %v787, %v982
      %v984 = vpop.f32.mrb[0].mxu0
      %985 = vmatprep.mubr.bf16.mxu0 0
      %986 = vmatmul.mubr.bf16.gmra.mrb[0].mxu0 %v846
      %v987 = vpop.f32.mrb[0].mxu0
      %v988 = vadd.f32 %v792, %v987
      %v989 = vpop.f32.mrb[0].mxu0
      %v990 = vpop.f32.mrb[0].mxu0
      %v991 = vadd.f32 %v795, %v990
      %v992 = vpop.f32.mrb[0].mxu0
      %993 = vmatprep.mubr.bf16.mxu0 0
      %994 = vmatmul.mubr.bf16.gmra.mrb[0].mxu0 %v848
      %v995 = vpop.f32.mrb[0].mxu0
      %v996 = vadd.f32 %v800, %v995
      %v997 = vpop.f32.mrb[0].mxu0
      %v998 = vpop.f32.mrb[0].mxu0
      %v999 = vadd.f32 %v803, %v998
      %v1000 = vpop.f32.mrb[0].mxu0
      %1001 = vmatprep.mubr.bf16.mxu0 0
      %1002 = vmatmul.mubr.bf16.gmra.mrb[0].mxu0 %v850
      %v1003 = vpop.f32.mrb[0].mxu0
      %v1004 = vadd.f32 %v808, %v1003
      %v1005 = vpop.f32.mrb[0].mxu0
      %v1006 = vpop.f32.mrb[0].mxu0
      %v1007 = vadd.f32 %v811, %v1006
      %v1008 = vpop.f32.mrb[0].mxu0
      %1009 = vmatprep.mubr.bf16.mxu0 0
      %1010 = vmatmul.mubr.bf16.gmra.mrb[0].mxu0 %v852
      %v1011 = vpop.f32.mrb[0].mxu0
      %v1012 = vadd.f32 %v816, %v1011
      %v1013 = vpop.f32.mrb[0].mxu0
      %v1014 = vpop.f32.mrb[0].mxu0
      %v1015 = vadd.f32 %v819, %v1014
      %v1016 = vpop.f32.mrb[0].mxu0
      %1017 = vdwg.mxu0
      %s1018 = scalar_lea.vmem %s2, 4
      %v1019 = vld [vmem:[%s1018] sm:$0x3]
      %v1021 = vsel %vm608, %v391, 0
      %v1024 = vsel %vm657, %v1019, 0
      %1026 = vmatprep.subr.bf16.mxu0 0
      %1027 = vmatpush1.bf16.msra.mxu0 %v1024
      %1028 = vmatprep.subr.bf16.mxu0 0
      %1029 = vmatpush1.bf16.msra.mxu0 0
      %1030 = vmatprep.subr.bf16.mxu0 0
      %1031 = vmatpush1.bf16.msra.mxu0 0
      %1032 = vmatprep.subr.bf16.mxu0 0
      %1033 = vmatpush1.bf16.msra.mxu0 0
      %1034 = vmatprep.subr.bf16.mxu0 0
      %1035 = vmatpush1.bf16.msra.mxu0 0
      %1036 = vmatprep.subr.bf16.mxu0 0
      %1037 = vmatpush1.bf16.msra.mxu0 0
      %1038 = vmatprep.subr.bf16.mxu0 0
      %1039 = vmatpush1.bf16.msra.mxu0 0
      %1040 = vmatprep.subr.bf16.mxu0 0
      %1041 = vmatpush1.bf16.msra.mxu0 0
      %1042 = vmatprep.subr.bf16.mxu0 0
      %1043 = vmatpush1.bf16.msra.mxu0 0
      %1044 = vmatprep.subr.bf16.mxu0 0
      %1045 = vmatpush1.bf16.msra.mxu0 0
      %1046 = vmatprep.subr.bf16.mxu0 0
      %1047 = vmatpush1.bf16.msra.mxu0 0
      %1048 = vmatprep.subr.bf16.mxu0 0
      %1049 = vmatpush1.bf16.msra.mxu0 0
      %1050 = vmatprep.subr.bf16.mxu0 0
      %1051 = vmatpush1.bf16.msra.mxu0 0
      %1052 = vmatprep.subr.bf16.mxu0 0
      %1053 = vmatpush1.bf16.msra.mxu0 0
      %1054 = vmatprep.subr.bf16.mxu0 0
      %1055 = vmatpush1.bf16.msra.mxu0 0
      %1056 = vmatprep.subr.bf16.mxu0 0
      %1057 = vmatpush1.bf16.msra.mxu0 0
      %1058 = vmatprep.mubr.bf16.mxu0 0
      %1059 = vmatmul.mubr.bf16.gmra.mrb[0].mxu0 %v824
      %v1060 = vpop.f32.mrb[0].mxu0
      %v1061 = vadd.f32 0.0, %v1060
      %v1062 = vpop.f32.mrb[0].mxu0
      %v1063 = vpop.f32.mrb[0].mxu0
      %v1064 = vadd.f32 0.0, %v1063
      %v1065 = vpop.f32.mrb[0].mxu0
      %1066 = vmatprep.mubr.bf16.mxu0 0
      %1067 = vmatmul.mubr.bf16.gmra.mrb[0].mxu0 %v826
      %v1068 = vpop.f32.mrb[0].mxu0
      %v1069 = vadd.f32 0.0, %v1068
      %v1070 = vpop.f32.mrb[0].mxu0
      %v1071 = vpop.f32.mrb[0].mxu0
      %v1072 = vadd.f32 0.0, %v1071
      %v1073 = vpop.f32.mrb[0].mxu0
      %1074 = vmatprep.mubr.bf16.mxu0 0
      %1075 = vmatmul.mubr.bf16.gmra.mrb[0].mxu0 %v828
      %v1076 = vpop.f32.mrb[0].mxu0
      %v1077 = vadd.f32 0.0, %v1076
      %v1078 = vpop.f32.mrb[0].mxu0
      %v1079 = vpop.f32.mrb[0].mxu0
      %v1080 = vadd.f32 0.0, %v1079
      %v1081 = vpop.f32.mrb[0].mxu0
      %1082 = vmatprep.mubr.bf16.mxu0 0
      %1083 = vmatmul.mubr.bf16.gmra.mrb[0].mxu0 %v830
      %v1084 = vpop.f32.mrb[0].mxu0
      %v1085 = vadd.f32 0.0, %v1084
      %v1086 = vpop.f32.mrb[0].mxu0
      %v1087 = vpop.f32.mrb[0].mxu0
      %v1088 = vadd.f32 0.0, %v1087
      %v1089 = vpop.f32.mrb[0].mxu0
      %1090 = vmatprep.mubr.bf16.mxu0 0
      %1091 = vmatmul.mubr.bf16.gmra.mrb[0].mxu0 %v832
      %v1092 = vpop.f32.mrb[0].mxu0
      %v1093 = vadd.f32 0.0, %v1092
      %v1094 = vpop.f32.mrb[0].mxu0
      %v1095 = vpop.f32.mrb[0].mxu0
      %v1096 = vadd.f32 0.0, %v1095
      %v1097 = vpop.f32.mrb[0].mxu0
      %1098 = vmatprep.mubr.bf16.mxu0 0
      %1099 = vmatmul.mubr.bf16.gmra.mrb[0].mxu0 %v834
      %v1100 = vpop.f32.mrb[0].mxu0
      %v1101 = vadd.f32 0.0, %v1100
      %v1102 = vpop.f32.mrb[0].mxu0
      %v1103 = vpop.f32.mrb[0].mxu0
      %v1104 = vadd.f32 0.0, %v1103
      %v1105 = vpop.f32.mrb[0].mxu0
      %1106 = vmatprep.mubr.bf16.mxu0 0
      %1107 = vmatmul.mubr.bf16.gmra.mrb[0].mxu0 %v836
      %v1108 = vpop.f32.mrb[0].mxu0
      %v1109 = vadd.f32 0.0, %v1108
      %v1110 = vpop.f32.mrb[0].mxu0
      %v1111 = vpop.f32.mrb[0].mxu0
      %v1112 = vadd.f32 0.0, %v1111
      %v1113 = vpop.f32.mrb[0].mxu0
      %1114 = vmatprep.mubr.bf16.mxu0 0
      %1115 = vmatmul.mubr.bf16.gmra.mrb[0].mxu0 %v838
      %v1116 = vpop.f32.mrb[0].mxu0
      %v1117 = vadd.f32 0.0, %v1116
      %v1118 = vpop.f32.mrb[0].mxu0
      %v1119 = vpop.f32.mrb[0].mxu0
      %v1120 = vadd.f32 0.0, %v1119
      %v1121 = vpop.f32.mrb[0].mxu0
      %1122 = vmatprep.mubr.bf16.mxu0 0
      %1123 = vmatmul.mubr.bf16.gmra.mrb[0].mxu0 %v840
      %v1124 = vpop.f32.mrb[0].mxu0
      %v1125 = vadd.f32 0.0, %v1124
      %v1126 = vpop.f32.mrb[0].mxu0
      %v1127 = vpop.f32.mrb[0].mxu0
      %v1128 = vadd.f32 0.0, %v1127
      %v1129 = vpop.f32.mrb[0].mxu0
      %1130 = vmatprep.mubr.bf16.mxu0 0
      %1131 = vmatmul.mubr.bf16.gmra.mrb[0].mxu0 %v842
      %v1132 = vpop.f32.mrb[0].mxu0
      %v1133 = vadd.f32 0.0, %v1132
      %v1134 = vpop.f32.mrb[0].mxu0
      %v1135 = vpop.f32.mrb[0].mxu0
      %v1136 = vadd.f32 0.0, %v1135
      %v1137 = vpop.f32.mrb[0].mxu0
      %1138 = vmatprep.mubr.bf16.mxu0 0
      %1139 = vmatmul.mubr.bf16.gmra.mrb[0].mxu0 %v844
      %v1140 = vpop.f32.mrb[0].mxu0
      %v1141 = vadd.f32 0.0, %v1140
      %v1142 = vpop.f32.mrb[0].mxu0
      %v1143 = vpop.f32.mrb[0].mxu0
      %v1144 = vadd.f32 0.0, %v1143
      %v1145 = vpop.f32.mrb[0].mxu0
      %1146 = vmatprep.mubr.bf16.mxu0 0
      %1147 = vmatmul.mubr.bf16.gmra.mrb[0].mxu0 %v846
      %v1148 = vpop.f32.mrb[0].mxu0
      %v1149 = vadd.f32 0.0, %v1148
      %v1150 = vpop.f32.mrb[0].mxu0
      %v1151 = vpop.f32.mrb[0].mxu0
      %v1152 = vadd.f32 0.0, %v1151
      %v1153 = vpop.f32.mrb[0].mxu0
      %1154 = vmatprep.mubr.bf16.mxu0 0
      %1155 = vmatmul.mubr.bf16.gmra.mrb[0].mxu0 %v848
      %v1156 = vpop.f32.mrb[0].mxu0
      %v1157 = vadd.f32 0.0, %v1156
      %v1158 = vpop.f32.mrb[0].mxu0
      %v1159 = vpop.f32.mrb[0].mxu0
      %v1160 = vadd.f32 0.0, %v1159
      %v1161 = vpop.f32.mrb[0].mxu0
      %1162 = vmatprep.mubr.bf16.mxu0 0
      %1163 = vmatmul.mubr.bf16.gmra.mrb[0].mxu0 %v850
      %v1164 = vpop.f32.mrb[0].mxu0
      %v1165 = vadd.f32 0.0, %v1164
      %v1166 = vpop.f32.mrb[0].mxu0
      %v1167 = vpop.f32.mrb[0].mxu0
      %v1168 = vadd.f32 0.0, %v1167
      %v1169 = vpop.f32.mrb[0].mxu0
      %1170 = vmatprep.mubr.bf16.mxu0 0
      %1171 = vmatmul.mubr.bf16.gmra.mrb[0].mxu0 %v852
      %v1172 = vpop.f32.mrb[0].mxu0
      %v1173 = vadd.f32 0.0, %v1172
      %v1174 = vpop.f32.mrb[0].mxu0
      %v1175 = vpop.f32.mrb[0].mxu0
      %v1176 = vadd.f32 0.0, %v1175
      %v1177 = vpop.f32.mrb[0].mxu0
      %1178 = vmatprep.mubr.bf16.mxu0 0
      %1179 = vmatmul.mubr.bf16.gmra.mrb[0].mxu0 %v1021
      %v1180 = vpop.f32.mrb[0].mxu0
      %v1181 = vadd.f32 0.0, %v1180
      %v1182 = vpop.f32.mrb[0].mxu0
      %v1183 = vpop.f32.mrb[0].mxu0
      %v1184 = vadd.f32 0.0, %v1183
      %v1185 = vpop.f32.mrb[0].mxu0
      %1186 = vdwg.mxu0
      %v1187 = vadd.f32 %v892, %v1061
      %v1188 = vadd.f32 %v895, %v1064
      %v1189 = vadd.f32 %v900, %v1069
      %v1190 = vadd.f32 %v903, %v1072
      %v1191 = vadd.f32 %v908, %v1077
      %v1192 = vadd.f32 %v911, %v1080
      %v1193 = vadd.f32 %v916, %v1085
      %v1194 = vadd.f32 %v919, %v1088
      %v1195 = vadd.f32 %v924, %v1093
      %v1196 = vadd.f32 %v927, %v1096
      %v1197 = vadd.f32 %v932, %v1101
      %v1198 = vadd.f32 %v935, %v1104
      %v1199 = vadd.f32 %v940, %v1109
      %v1200 = vadd.f32 %v943, %v1112
      %v1201 = vadd.f32 %v948, %v1117
      %v1202 = vadd.f32 %v951, %v1120
      %v1203 = vadd.f32 %v956, %v1125
      %v1204 = vadd.f32 %v959, %v1128
      %v1205 = vadd.f32 %v964, %v1133
      %v1206 = vadd.f32 %v967, %v1136
      %v1207 = vadd.f32 %v972, %v1141
      %v1208 = vadd.f32 %v975, %v1144
      %v1209 = vadd.f32 %v980, %v1149
      %v1210 = vadd.f32 %v983, %v1152
      %v1211 = vadd.f32 %v988, %v1157
      %v1212 = vadd.f32 %v991, %v1160
      %v1213 = vadd.f32 %v996, %v1165
      %v1214 = vadd.f32 %v999, %v1168
      %v1215 = vadd.f32 %v1004, %v1173
      %v1216 = vadd.f32 %v1007, %v1176
      %v1217 = vadd.f32 %v1012, %v1181
      %v1218 = vadd.f32 %v1015, %v1184
      %s1219 = scalar_lea.vmem %s2, 6
      %v1220 = vld [vmem:[%s1219] sm:$0x3]
      %v1221 = vshrl.u32 %v391, 16
      %v1223 = vshll.u32 %v391, 16
      %v1225 = vrot.slane %v1223, 1
      %v1226 = vor.u32 %v1221, %v1225
      %v1228 = vshll.u32 %v409, 16
      %v1230 = vrot.slane %v1228, 1
      %v1231 = vsel %vm415, %v1226, %v1230
      %v1233 = vsel %vm608, %v1231, 0
      %v1236 = vsel %vm657, %v1220, 0
      %1238 = vmatprep.subr.bf16.mxu0 0
      %1239 = vmatpush1.bf16.msra.mxu0 %v1236
      %1240 = vmatprep.subr.bf16.mxu0 0
      %1241 = vmatpush1.bf16.msra.mxu0 0
      %1242 = vmatprep.subr.bf16.mxu0 0
      %1243 = vmatpush1.bf16.msra.mxu0 0
      %1244 = vmatprep.subr.bf16.mxu0 0
      %1245 = vmatpush1.bf16.msra.mxu0 0
      %1246 = vmatprep.subr.bf16.mxu0 0
      %1247 = vmatpush1.bf16.msra.mxu0 0
      %1248 = vmatprep.subr.bf16.mxu0 0
      %1249 = vmatpush1.bf16.msra.mxu0 0
      %1250 = vmatprep.subr.bf16.mxu0 0
      %1251 = vmatpush1.bf16.msra.mxu0 0
      %1252 = vmatprep.subr.bf16.mxu0 0
      %1253 = vmatpush1.bf16.msra.mxu0 0
      %1254 = vmatprep.subr.bf16.mxu0 0
      %1255 = vmatpush1.bf16.msra.mxu0 0
      %1256 = vmatprep.subr.bf16.mxu0 0
      %1257 = vmatpush1.bf16.msra.mxu0 0
      %1258 = vmatprep.subr.bf16.mxu0 0
      %1259 = vmatpush1.bf16.msra.mxu0 0
      %1260 = vmatprep.subr.bf16.mxu0 0
      %1261 = vmatpush1.bf16.msra.mxu0 0
      %1262 = vmatprep.subr.bf16.mxu0 0
      %1263 = vmatpush1.bf16.msra.mxu0 0
      %1264 = vmatprep.subr.bf16.mxu0 0
      %1265 = vmatpush1.bf16.msra.mxu0 0
      %1266 = vmatprep.subr.bf16.mxu0 0
      %1267 = vmatpush1.bf16.msra.mxu0 0
      %1268 = vmatprep.subr.bf16.mxu0 0
      %1269 = vmatpush1.bf16.msra.mxu0 0
      %1270 = vmatprep.mubr.bf16.mxu0 0
      %1271 = vmatmul.mubr.bf16.gmra.mrb[0].mxu0 %v613
      %v1272 = vpop.f32.mrb[0].mxu0
      %v1273 = vadd.f32 0.0, %v1272
      %v1274 = vpop.f32.mrb[0].mxu0
      %v1275 = vpop.f32.mrb[0].mxu0
      %v1276 = vadd.f32 0.0, %v1275
      %v1277 = vpop.f32.mrb[0].mxu0
      %1278 = vmatprep.mubr.bf16.mxu0 0
      %1279 = vmatmul.mubr.bf16.gmra.mrb[0].mxu0 %v616
      %v1280 = vpop.f32.mrb[0].mxu0
      %v1281 = vadd.f32 0.0, %v1280
      %v1282 = vpop.f32.mrb[0].mxu0
      %v1283 = vpop.f32.mrb[0].mxu0
      %v1284 = vadd.f32 0.0, %v1283
      %v1285 = vpop.f32.mrb[0].mxu0
      %1286 = vmatprep.mubr.bf16.mxu0 0
      %1287 = vmatmul.mubr.bf16.gmra.mrb[0].mxu0 %v619
      %v1288 = vpop.f32.mrb[0].mxu0
      %v1289 = vadd.f32 0.0, %v1288
      %v1290 = vpop.f32.mrb[0].mxu0
      %v1291 = vpop.f32.mrb[0].mxu0
      %v1292 = vadd.f32 0.0, %v1291
      %v1293 = vpop.f32.mrb[0].mxu0
      %1294 = vmatprep.mubr.bf16.mxu0 0
      %1295 = vmatmul.mubr.bf16.gmra.mrb[0].mxu0 %v622
      %v1296 = vpop.f32.mrb[0].mxu0
      %v1297 = vadd.f32 0.0, %v1296
      %v1298 = vpop.f32.mrb[0].mxu0
      %v1299 = vpop.f32.mrb[0].mxu0
      %v1300 = vadd.f32 0.0, %v1299
      %v1301 = vpop.f32.mrb[0].mxu0
      %1302 = vmatprep.mubr.bf16.mxu0 0
      %1303 = vmatmul.mubr.bf16.gmra.mrb[0].mxu0 %v625
      %v1304 = vpop.f32.mrb[0].mxu0
      %v1305 = vadd.f32 0.0, %v1304
      %v1306 = vpop.f32.mrb[0].mxu0
      %v1307 = vpop.f32.mrb[0].mxu0
      %v1308 = vadd.f32 0.0, %v1307
      %v1309 = vpop.f32.mrb[0].mxu0
      %1310 = vmatprep.mubr.bf16.mxu0 0
      %1311 = vmatmul.mubr.bf16.gmra.mrb[0].mxu0 %v628
      %v1312 = vpop.f32.mrb[0].mxu0
      %v1313 = vadd.f32 0.0, %v1312
      %v1314 = vpop.f32.mrb[0].mxu0
      %v1315 = vpop.f32.mrb[0].mxu0
      %v1316 = vadd.f32 0.0, %v1315
      %v1317 = vpop.f32.mrb[0].mxu0
      %1318 = vmatprep.mubr.bf16.mxu0 0
      %1319 = vmatmul.mubr.bf16.gmra.mrb[0].mxu0 %v631
      %v1320 = vpop.f32.mrb[0].mxu0
      %v1321 = vadd.f32 0.0, %v1320
      %v1322 = vpop.f32.mrb[0].mxu0
      %v1323 = vpop.f32.mrb[0].mxu0
      %v1324 = vadd.f32 0.0, %v1323
      %v1325 = vpop.f32.mrb[0].mxu0
      %1326 = vmatprep.mubr.bf16.mxu0 0
      %1327 = vmatmul.mubr.bf16.gmra.mrb[0].mxu0 %v634
      %v1328 = vpop.f32.mrb[0].mxu0
      %v1329 = vadd.f32 0.0, %v1328
      %v1330 = vpop.f32.mrb[0].mxu0
      %v1331 = vpop.f32.mrb[0].mxu0
      %v1332 = vadd.f32 0.0, %v1331
      %v1333 = vpop.f32.mrb[0].mxu0
      %1334 = vmatprep.mubr.bf16.mxu0 0
      %1335 = vmatmul.mubr.bf16.gmra.mrb[0].mxu0 %v637
      %v1336 = vpop.f32.mrb[0].mxu0
      %v1337 = vadd.f32 0.0, %v1336
      %v1338 = vpop.f32.mrb[0].mxu0
      %v1339 = vpop.f32.mrb[0].mxu0
      %v1340 = vadd.f32 0.0, %v1339
      %v1341 = vpop.f32.mrb[0].mxu0
      %1342 = vmatprep.mubr.bf16.mxu0 0
      %1343 = vmatmul.mubr.bf16.gmra.mrb[0].mxu0 %v640
      %v1344 = vpop.f32.mrb[0].mxu0
      %v1345 = vadd.f32 0.0, %v1344
      %v1346 = vpop.f32.mrb[0].mxu0
      %v1347 = vpop.f32.mrb[0].mxu0
      %v1348 = vadd.f32 0.0, %v1347
      %v1349 = vpop.f32.mrb[0].mxu0
      %1350 = vmatprep.mubr.bf16.mxu0 0
      %1351 = vmatmul.mubr.bf16.gmra.mrb[0].mxu0 %v643
      %v1352 = vpop.f32.mrb[0].mxu0
      %v1353 = vadd.f32 0.0, %v1352
      %v1354 = vpop.f32.mrb[0].mxu0
      %v1355 = vpop.f32.mrb[0].mxu0
      %v1356 = vadd.f32 0.0, %v1355
      %v1357 = vpop.f32.mrb[0].mxu0
      %1358 = vmatprep.mubr.bf16.mxu0 0
      %1359 = vmatmul.mubr.bf16.gmra.mrb[0].mxu0 %v646
      %v1360 = vpop.f32.mrb[0].mxu0
      %v1361 = vadd.f32 0.0, %v1360
      %v1362 = vpop.f32.mrb[0].mxu0
      %v1363 = vpop.f32.mrb[0].mxu0
      %v1364 = vadd.f32 0.0, %v1363
      %v1365 = vpop.f32.mrb[0].mxu0
      %1366 = vmatprep.mubr.bf16.mxu0 0
      %1367 = vmatmul.mubr.bf16.gmra.mrb[0].mxu0 %v649
      %v1368 = vpop.f32.mrb[0].mxu0
      %v1369 = vadd.f32 0.0, %v1368
      %v1370 = vpop.f32.mrb[0].mxu0
      %v1371 = vpop.f32.mrb[0].mxu0
      %v1372 = vadd.f32 0.0, %v1371
      %v1373 = vpop.f32.mrb[0].mxu0
      %1374 = vmatprep.mubr.bf16.mxu0 0
      %1375 = vmatmul.mubr.bf16.gmra.mrb[0].mxu0 %v652
      %v1376 = vpop.f32.mrb[0].mxu0
      %v1377 = vadd.f32 0.0, %v1376
      %v1378 = vpop.f32.mrb[0].mxu0
      %v1379 = vpop.f32.mrb[0].mxu0
      %v1380 = vadd.f32 0.0, %v1379
      %v1381 = vpop.f32.mrb[0].mxu0
      %1382 = vmatprep.mubr.bf16.mxu0 0
      %1383 = vmatmul.mubr.bf16.gmra.mrb[0].mxu0 %v655
      %v1384 = vpop.f32.mrb[0].mxu0
      %v1385 = vadd.f32 0.0, %v1384
      %v1386 = vpop.f32.mrb[0].mxu0
      %v1387 = vpop.f32.mrb[0].mxu0
      %v1388 = vadd.f32 0.0, %v1387
      %v1389 = vpop.f32.mrb[0].mxu0
      %1390 = vmatprep.mubr.bf16.mxu0 0
      %1391 = vmatmul.mubr.bf16.gmra.mrb[0].mxu0 %v1233
      %v1392 = vpop.f32.mrb[0].mxu0
      %v1393 = vadd.f32 0.0, %v1392
      %v1394 = vpop.f32.mrb[0].mxu0
      %v1395 = vpop.f32.mrb[0].mxu0
      %v1396 = vadd.f32 0.0, %v1395
      %v1397 = vpop.f32.mrb[0].mxu0
      %1398 = vdwg.mxu0
      %v1399 = vadd.f32 %v1187, %v1273
      %v1400 = vadd.f32 %v1188, %v1276
      %v1401 = vadd.f32 %v1189, %v1281
      %v1402 = vadd.f32 %v1190, %v1284
      %v1403 = vadd.f32 %v1191, %v1289
      %v1404 = vadd.f32 %v1192, %v1292
      %v1405 = vadd.f32 %v1193, %v1297
      %v1406 = vadd.f32 %v1194, %v1300
      %v1407 = vadd.f32 %v1195, %v1305
      %v1408 = vadd.f32 %v1196, %v1308
      %v1409 = vadd.f32 %v1197, %v1313
      %v1410 = vadd.f32 %v1198, %v1316
      %v1411 = vadd.f32 %v1199, %v1321
      %v1412 = vadd.f32 %v1200, %v1324
      %v1413 = vadd.f32 %v1201, %v1329
      %v1414 = vadd.f32 %v1202, %v1332
      %v1415 = vadd.f32 %v1203, %v1337
      %v1416 = vadd.f32 %v1204, %v1340
      %v1417 = vadd.f32 %v1205, %v1345
      %v1418 = vadd.f32 %v1206, %v1348
      %v1419 = vadd.f32 %v1207, %v1353
      %v1420 = vadd.f32 %v1208, %v1356
      %v1421 = vadd.f32 %v1209, %v1361
      %v1422 = vadd.f32 %v1210, %v1364
      %v1423 = vadd.f32 %v1211, %v1369
      %v1424 = vadd.f32 %v1212, %v1372
      %v1425 = vadd.f32 %v1213, %v1377
      %v1426 = vadd.f32 %v1214, %v1380
      %v1427 = vadd.f32 %v1215, %v1385
      %v1428 = vadd.f32 %v1216, %v1388
      %v1429 = vadd.f32 %v1217, %v1393
      %v1430 = vadd.f32 %v1218, %v1396
      %v1432 = vlaneseq
      %v1433 = vshrl.u32 %v1432, 7
      %v1434 = vsub.s32 0, %v1433
      %v1435 = vrot.slane %v411, %v1434
      %v1437 = vadd.f32 %v1399, %v1435
      %v1438 = vadd.f32 %v1400, %v1435
      %v1439 = vadd.f32 %v1401, %v1435
      %v1440 = vadd.f32 %v1402, %v1435
      %v1441 = vadd.f32 %v1403, %v1435
      %v1442 = vadd.f32 %v1404, %v1435
      %v1443 = vadd.f32 %v1405, %v1435
      %v1444 = vadd.f32 %v1406, %v1435
      %v1445 = vadd.f32 %v1407, %v1435
      %v1446 = vadd.f32 %v1408, %v1435
      %v1447 = vadd.f32 %v1409, %v1435
      %v1448 = vadd.f32 %v1410, %v1435
      %v1449 = vadd.f32 %v1411, %v1435
      %v1450 = vadd.f32 %v1412, %v1435
      %v1451 = vadd.f32 %v1413, %v1435
      %v1452 = vadd.f32 %v1414, %v1435
      %v1453 = vadd.f32 %v1415, %v1435
      %v1454 = vadd.f32 %v1416, %v1435
      %v1455 = vadd.f32 %v1417, %v1435
      %v1456 = vadd.f32 %v1418, %v1435
      %v1457 = vadd.f32 %v1419, %v1435
      %v1458 = vadd.f32 %v1420, %v1435
      %v1459 = vadd.f32 %v1421, %v1435
      %v1460 = vadd.f32 %v1422, %v1435
      %v1461 = vadd.f32 %v1423, %v1435
      %v1462 = vadd.f32 %v1424, %v1435
      %v1463 = vadd.f32 %v1425, %v1435
      %v1464 = vadd.f32 %v1426, %v1435
      %v1465 = vadd.f32 %v1427, %v1435
      %v1466 = vadd.f32 %v1428, %v1435
      %v1467 = vadd.f32 %v1429, %v1435
      %v1468 = vadd.f32 %v1430, %v1435
      %1469 = vst.msk [vmem:[%s318] sm:$0xff] %vm608, %v1437
      %1470 = vst.msk [vmem:[%s318 + $0x8] sm:$0xff] %vm608, %v1438
      %1471 = vst.msk [vmem:[%s318 + $0x10] sm:$0xff] %vm608, %v1439
      %1472 = vst.msk [vmem:[%s318 + $0x18] sm:$0xff] %vm608, %v1440
      %1473 = vst.msk [vmem:[%s318 + $0x20] sm:$0xff] %vm608, %v1441
      %1474 = vst.msk [vmem:[%s318 + $0x28] sm:$0xff] %vm608, %v1442
      %1475 = vst.msk [vmem:[%s318 + $0x30] sm:$0xff] %vm608, %v1443
      %1476 = vst.msk [vmem:[%s318 + $0x38] sm:$0xff] %vm608, %v1444
      %1477 = vst.msk [vmem:[%s318 + $0x40] sm:$0xff] %vm608, %v1445
      %1478 = vst.msk [vmem:[%s318 + $0x48] sm:$0xff] %vm608, %v1446
      %1479 = vst.msk [vmem:[%s318 + $0x50] sm:$0xff] %vm608, %v1447
      %1480 = vst.msk [vmem:[%s318 + $0x58] sm:$0xff] %vm608, %v1448
      %1481 = vst.msk [vmem:[%s318 + $0x60] sm:$0xff] %vm608, %v1449
      %1482 = vst.msk [vmem:[%s318 + $0x68] sm:$0xff] %vm608, %v1450
      %1483 = vst.msk [vmem:[%s318 + $0x70] sm:$0xff] %vm608, %v1451
      %1484 = vst.msk [vmem:[%s318 + $0x78] sm:$0xff] %vm608, %v1452
      %1485 = vst.msk [vmem:[%s318 + $0x80] sm:$0xff] %vm608, %v1453
      %1486 = vst.msk [vmem:[%s318 + $0x88] sm:$0xff] %vm608, %v1454
      %1487 = vst.msk [vmem:[%s318 + $0x90] sm:$0xff] %vm608, %v1455
      %1488 = vst.msk [vmem:[%s318 + $0x98] sm:$0xff] %vm608, %v1456
      %1489 = vst.msk [vmem:[%s318 + $0xa0] sm:$0xff] %vm608, %v1457
      %1490 = vst.msk [vmem:[%s318 + $0xa8] sm:$0xff] %vm608, %v1458
      %1491 = vst.msk [vmem:[%s318 + $0xb0] sm:$0xff] %vm608, %v1459
      %1492 = vst.msk [vmem:[%s318 + $0xb8] sm:$0xff] %vm608, %v1460
      %1493 = vst.msk [vmem:[%s318 + $0xc0] sm:$0xff] %vm608, %v1461
      %1494 = vst.msk [vmem:[%s318 + $0xc8] sm:$0xff] %vm608, %v1462
      %1495 = vst.msk [vmem:[%s318 + $0xd0] sm:$0xff] %vm608, %v1463
      %1496 = vst.msk [vmem:[%s318 + $0xd8] sm:$0xff] %vm608, %v1464
      %1497 = vst.msk [vmem:[%s318 + $0xe0] sm:$0xff] %vm608, %v1465
      %1498 = vst.msk [vmem:[%s318 + $0xe8] sm:$0xff] %vm608, %v1466
      %1499 = vst.msk [vmem:[%s318 + $0xf0] sm:$0xff] %vm608, %v1467
      %1500 = vst.msk [vmem:[%s318 + $0xf8] sm:$0xff] %vm608, %v1468
      %s1501 = scalar_lea.vmem %s2, 8
      %v1502 = vld [vmem:[%s1501] sm:$0x3]
      %s1503 = scalar_lea.vmem %s2, 10
      %v1504 = vld [vmem:[%s1503] sm:$0x3]
      %vm1537 = vcmask 1046528
      %v1538 = vrot.slane %v375, 1
      %v1539 = vrot.slane %v393, 1
      %v1540 = vsel %vm1537, %v1538, %v1539
      %v1541 = vrot.slane %v376, 1
      %v1542 = vrot.slane %v394, 1
      %v1543 = vsel %vm1537, %v1541, %v1542
      %v1544 = vrot.slane %v377, 1
      %v1545 = vrot.slane %v395, 1
      %v1546 = vsel %vm1537, %v1544, %v1545
      %v1547 = vrot.slane %v378, 1
      %v1548 = vrot.slane %v396, 1
      %v1549 = vsel %vm1537, %v1547, %v1548
      %v1550 = vrot.slane %v379, 1
      %v1551 = vrot.slane %v397, 1
      %v1552 = vsel %vm1537, %v1550, %v1551
      %v1553 = vrot.slane %v380, 1
      %v1554 = vrot.slane %v398, 1
      %v1555 = vsel %vm1537, %v1553, %v1554
      %v1556 = vrot.slane %v381, 1
      %v1557 = vrot.slane %v399, 1
      %v1558 = vsel %vm1537, %v1556, %v1557
      %v1559 = vrot.slane %v382, 1
      %v1560 = vrot.slane %v400, 1
      %v1561 = vsel %vm1537, %v1559, %v1560
      %v1562 = vrot.slane %v383, 1
      %v1563 = vrot.slane %v401, 1
      %v1564 = vsel %vm1537, %v1562, %v1563
      %v1565 = vrot.slane %v384, 1
      %v1566 = vrot.slane %v402, 1
      %v1567 = vsel %vm1537, %v1565, %v1566
      %v1568 = vrot.slane %v385, 1
      %v1569 = vrot.slane %v403, 1
      %v1570 = vsel %vm1537, %v1568, %v1569
      %v1571 = vrot.slane %v386, 1
      %v1572 = vrot.slane %v404, 1
      %v1573 = vsel %vm1537, %v1571, %v1572
      %v1574 = vrot.slane %v387, 1
      %v1575 = vrot.slane %v405, 1
      %v1576 = vsel %vm1537, %v1574, %v1575
      %v1577 = vrot.slane %v388, 1
      %v1578 = vrot.slane %v406, 1
      %v1579 = vsel %vm1537, %v1577, %v1578
      %v1580 = vrot.slane %v389, 1
      %v1581 = vrot.slane %v407, 1
      %v1582 = vsel %vm1537, %v1580, %v1581
      %v1583 = vrot.slane %v390, 1
      %v1584 = vrot.slane %v408, 1
      %v1585 = vsel %vm1537, %v1583, %v1584
      %v1587 = vsel %vm608, %v1540, 0
      %v1590 = vsel %vm608, %v1543, 0
      %v1593 = vsel %vm608, %v1546, 0
      %v1596 = vsel %vm608, %v1549, 0
      %v1599 = vsel %vm608, %v1552, 0
      %v1602 = vsel %vm608, %v1555, 0
      %v1605 = vsel %vm608, %v1558, 0
      %v1608 = vsel %vm608, %v1561, 0
      %v1611 = vsel %vm608, %v1564, 0
      %v1614 = vsel %vm608, %v1567, 0
      %v1617 = vsel %vm608, %v1570, 0
      %v1620 = vsel %vm608, %v1573, 0
      %v1623 = vsel %vm608, %v1576, 0
      %v1626 = vsel %vm608, %v1579, 0
      %v1629 = vsel %vm608, %v1582, 0
      %v1632 = vsel %vm608, %v1585, 0
      %v1635 = vsel %vm657, %v1504, 0
      %1637 = vmatprep.subr.bf16.mxu0 0
      %1638 = vmatpush1.bf16.msra.mxu0 %v1635
      %1639 = vmatprep.subr.bf16.mxu0 0
      %1640 = vmatpush1.bf16.msra.mxu0 0
      %1641 = vmatprep.subr.bf16.mxu0 0
      %1642 = vmatpush1.bf16.msra.mxu0 0
      %1643 = vmatprep.subr.bf16.mxu0 0
      %1644 = vmatpush1.bf16.msra.mxu0 0
      %1645 = vmatprep.subr.bf16.mxu0 0
      %1646 = vmatpush1.bf16.msra.mxu0 0
      %1647 = vmatprep.subr.bf16.mxu0 0
      %1648 = vmatpush1.bf16.msra.mxu0 0
      %1649 = vmatprep.subr.bf16.mxu0 0
      %1650 = vmatpush1.bf16.msra.mxu0 0
      %1651 = vmatprep.subr.bf16.mxu0 0
      %1652 = vmatpush1.bf16.msra.mxu0 0
      %1653 = vmatprep.subr.bf16.mxu0 0
      %1654 = vmatpush1.bf16.msra.mxu0 0
      %1655 = vmatprep.subr.bf16.mxu0 0
      %1656 = vmatpush1.bf16.msra.mxu0 0
      %1657 = vmatprep.subr.bf16.mxu0 0
      %1658 = vmatpush1.bf16.msra.mxu0 0
      %1659 = vmatprep.subr.bf16.mxu0 0
      %1660 = vmatpush1.bf16.msra.mxu0 0
      %1661 = vmatprep.subr.bf16.mxu0 0
      %1662 = vmatpush1.bf16.msra.mxu0 0
      %1663 = vmatprep.subr.bf16.mxu0 0
      %1664 = vmatpush1.bf16.msra.mxu0 0
      %1665 = vmatprep.subr.bf16.mxu0 0
      %1666 = vmatpush1.bf16.msra.mxu0 0
      %1667 = vmatprep.subr.bf16.mxu0 0
      %1668 = vmatpush1.bf16.msra.mxu0 0
      %1669 = vmatprep.mubr.bf16.mxu0 0
      %1670 = vmatmul.mubr.bf16.gmra.mrb[0].mxu0 %v1587
      %v1671 = vpop.f32.mrb[0].mxu0
      %v1672 = vadd.f32 0.0, %v1671
      %v1673 = vpop.f32.mrb[0].mxu0
      %v1674 = vpop.f32.mrb[0].mxu0
      %v1675 = vadd.f32 0.0, %v1674
      %v1676 = vpop.f32.mrb[0].mxu0
      %1677 = vmatprep.mubr.bf16.mxu0 0
      %1678 = vmatmul.mubr.bf16.gmra.mrb[0].mxu0 %v1590
      %v1679 = vpop.f32.mrb[0].mxu0
      %v1680 = vadd.f32 0.0, %v1679
      %v1681 = vpop.f32.mrb[0].mxu0
      %v1682 = vpop.f32.mrb[0].mxu0
      %v1683 = vadd.f32 0.0, %v1682
      %v1684 = vpop.f32.mrb[0].mxu0
      %1685 = vmatprep.mubr.bf16.mxu0 0
      %1686 = vmatmul.mubr.bf16.gmra.mrb[0].mxu0 %v1593
      %v1687 = vpop.f32.mrb[0].mxu0
      %v1688 = vadd.f32 0.0, %v1687
      %v1689 = vpop.f32.mrb[0].mxu0
      %v1690 = vpop.f32.mrb[0].mxu0
      %v1691 = vadd.f32 0.0, %v1690
      %v1692 = vpop.f32.mrb[0].mxu0
      %1693 = vmatprep.mubr.bf16.mxu0 0
      %1694 = vmatmul.mubr.bf16.gmra.mrb[0].mxu0 %v1596
      %v1695 = vpop.f32.mrb[0].mxu0
      %v1696 = vadd.f32 0.0, %v1695
      %v1697 = vpop.f32.mrb[0].mxu0
      %v1698 = vpop.f32.mrb[0].mxu0
      %v1699 = vadd.f32 0.0, %v1698
      %v1700 = vpop.f32.mrb[0].mxu0
      %1701 = vmatprep.mubr.bf16.mxu0 0
      %1702 = vmatmul.mubr.bf16.gmra.mrb[0].mxu0 %v1599
      %v1703 = vpop.f32.mrb[0].mxu0
      %v1704 = vadd.f32 0.0, %v1703
      %v1705 = vpop.f32.mrb[0].mxu0
      %v1706 = vpop.f32.mrb[0].mxu0
      %v1707 = vadd.f32 0.0, %v1706
      %v1708 = vpop.f32.mrb[0].mxu0
      %1709 = vmatprep.mubr.bf16.mxu0 0
      %1710 = vmatmul.mubr.bf16.gmra.mrb[0].mxu0 %v1602
      %v1711 = vpop.f32.mrb[0].mxu0
      %v1712 = vadd.f32 0.0, %v1711
      %v1713 = vpop.f32.mrb[0].mxu0
      %v1714 = vpop.f32.mrb[0].mxu0
      %v1715 = vadd.f32 0.0, %v1714
      %v1716 = vpop.f32.mrb[0].mxu0
      %1717 = vmatprep.mubr.bf16.mxu0 0
      %1718 = vmatmul.mubr.bf16.gmra.mrb[0].mxu0 %v1605
      %v1719 = vpop.f32.mrb[0].mxu0
      %v1720 = vadd.f32 0.0, %v1719
      %v1721 = vpop.f32.mrb[0].mxu0
      %v1722 = vpop.f32.mrb[0].mxu0
      %v1723 = vadd.f32 0.0, %v1722
      %v1724 = vpop.f32.mrb[0].mxu0
      %1725 = vmatprep.mubr.bf16.mxu0 0
      %1726 = vmatmul.mubr.bf16.gmra.mrb[0].mxu0 %v1608
      %v1727 = vpop.f32.mrb[0].mxu0
      %v1728 = vadd.f32 0.0, %v1727
      %v1729 = vpop.f32.mrb[0].mxu0
      %v1730 = vpop.f32.mrb[0].mxu0
      %v1731 = vadd.f32 0.0, %v1730
      %v1732 = vpop.f32.mrb[0].mxu0
      %1733 = vmatprep.mubr.bf16.mxu0 0
      %1734 = vmatmul.mubr.bf16.gmra.mrb[0].mxu0 %v1611
      %v1735 = vpop.f32.mrb[0].mxu0
      %v1736 = vadd.f32 0.0, %v1735
      %v1737 = vpop.f32.mrb[0].mxu0
      %v1738 = vpop.f32.mrb[0].mxu0
      %v1739 = vadd.f32 0.0, %v1738
      %v1740 = vpop.f32.mrb[0].mxu0
      %1741 = vmatprep.mubr.bf16.mxu0 0
      %1742 = vmatmul.mubr.bf16.gmra.mrb[0].mxu0 %v1614
      %v1743 = vpop.f32.mrb[0].mxu0
      %v1744 = vadd.f32 0.0, %v1743
      %v1745 = vpop.f32.mrb[0].mxu0
      %v1746 = vpop.f32.mrb[0].mxu0
      %v1747 = vadd.f32 0.0, %v1746
      %v1748 = vpop.f32.mrb[0].mxu0
      %1749 = vmatprep.mubr.bf16.mxu0 0
      %1750 = vmatmul.mubr.bf16.gmra.mrb[0].mxu0 %v1617
      %v1751 = vpop.f32.mrb[0].mxu0
      %v1752 = vadd.f32 0.0, %v1751
      %v1753 = vpop.f32.mrb[0].mxu0
      %v1754 = vpop.f32.mrb[0].mxu0
      %v1755 = vadd.f32 0.0, %v1754
      %v1756 = vpop.f32.mrb[0].mxu0
      %1757 = vmatprep.mubr.bf16.mxu0 0
      %1758 = vmatmul.mubr.bf16.gmra.mrb[0].mxu0 %v1620
      %v1759 = vpop.f32.mrb[0].mxu0
      %v1760 = vadd.f32 0.0, %v1759
      %v1761 = vpop.f32.mrb[0].mxu0
      %v1762 = vpop.f32.mrb[0].mxu0
      %v1763 = vadd.f32 0.0, %v1762
      %v1764 = vpop.f32.mrb[0].mxu0
      %1765 = vmatprep.mubr.bf16.mxu0 0
      %1766 = vmatmul.mubr.bf16.gmra.mrb[0].mxu0 %v1623
      %v1767 = vpop.f32.mrb[0].mxu0
      %v1768 = vadd.f32 0.0, %v1767
      %v1769 = vpop.f32.mrb[0].mxu0
      %v1770 = vpop.f32.mrb[0].mxu0
      %v1771 = vadd.f32 0.0, %v1770
      %v1772 = vpop.f32.mrb[0].mxu0
      %1773 = vmatprep.mubr.bf16.mxu0 0
      %1774 = vmatmul.mubr.bf16.gmra.mrb[0].mxu0 %v1626
      %v1775 = vpop.f32.mrb[0].mxu0
      %v1776 = vadd.f32 0.0, %v1775
      %v1777 = vpop.f32.mrb[0].mxu0
      %v1778 = vpop.f32.mrb[0].mxu0
      %v1779 = vadd.f32 0.0, %v1778
      %v1780 = vpop.f32.mrb[0].mxu0
      %1781 = vmatprep.mubr.bf16.mxu0 0
      %1782 = vmatmul.mubr.bf16.gmra.mrb[0].mxu0 %v1629
      %v1783 = vpop.f32.mrb[0].mxu0
      %v1784 = vadd.f32 0.0, %v1783
      %v1785 = vpop.f32.mrb[0].mxu0
      %v1786 = vpop.f32.mrb[0].mxu0
      %v1787 = vadd.f32 0.0, %v1786
      %v1788 = vpop.f32.mrb[0].mxu0
      %1789 = vmatprep.mubr.bf16.mxu0 0
      %1790 = vmatmul.mubr.bf16.gmra.mrb[0].mxu0 %v1632
      %v1791 = vpop.f32.mrb[0].mxu0
      %v1792 = vadd.f32 0.0, %v1791
      %v1793 = vpop.f32.mrb[0].mxu0
      %v1794 = vpop.f32.mrb[0].mxu0
      %v1795 = vadd.f32 0.0, %v1794
      %v1796 = vpop.f32.mrb[0].mxu0
      %1797 = vdwg.mxu0
      %v1799 = vsel %vm657, %v1502, 0
      %1801 = vmatprep.subr.bf16.mxu0 0
      %1802 = vmatpush1.bf16.msra.mxu0 %v1799
      %1803 = vmatprep.subr.bf16.mxu0 0
      %1804 = vmatpush1.bf16.msra.mxu0 0
      %1805 = vmatprep.subr.bf16.mxu0 0
      %1806 = vmatpush1.bf16.msra.mxu0 0
      %1807 = vmatprep.subr.bf16.mxu0 0
      %1808 = vmatpush1.bf16.msra.mxu0 0
      %1809 = vmatprep.subr.bf16.mxu0 0
      %1810 = vmatpush1.bf16.msra.mxu0 0
      %1811 = vmatprep.subr.bf16.mxu0 0
      %1812 = vmatpush1.bf16.msra.mxu0 0
      %1813 = vmatprep.subr.bf16.mxu0 0
      %1814 = vmatpush1.bf16.msra.mxu0 0
      %1815 = vmatprep.subr.bf16.mxu0 0
      %1816 = vmatpush1.bf16.msra.mxu0 0
      %1817 = vmatprep.subr.bf16.mxu0 0
      %1818 = vmatpush1.bf16.msra.mxu0 0
      %1819 = vmatprep.subr.bf16.mxu0 0
      %1820 = vmatpush1.bf16.msra.mxu0 0
      %1821 = vmatprep.subr.bf16.mxu0 0
      %1822 = vmatpush1.bf16.msra.mxu0 0
      %1823 = vmatprep.subr.bf16.mxu0 0
      %1824 = vmatpush1.bf16.msra.mxu0 0
      %1825 = vmatprep.subr.bf16.mxu0 0
      %1826 = vmatpush1.bf16.msra.mxu0 0
      %1827 = vmatprep.subr.bf16.mxu0 0
      %1828 = vmatpush1.bf16.msra.mxu0 0
      %1829 = vmatprep.subr.bf16.mxu0 0
      %1830 = vmatpush1.bf16.msra.mxu0 0
      %1831 = vmatprep.subr.bf16.mxu0 0
      %1832 = vmatpush1.bf16.msra.mxu0 0
      %1833 = vmatprep.mubr.bf16.mxu0 0
      %1834 = vmatmul.mubr.bf16.gmra.mrb[0].mxu0 %v610
      %v1835 = vpop.f32.mrb[0].mxu0
      %v1836 = vadd.f32 %v1672, %v1835
      %v1837 = vpop.f32.mrb[0].mxu0
      %v1838 = vpop.f32.mrb[0].mxu0
      %v1839 = vadd.f32 %v1675, %v1838
      %v1840 = vpop.f32.mrb[0].mxu0
      %1841 = vmatprep.mubr.bf16.mxu0 0
      %1842 = vmatmul.mubr.bf16.gmra.mrb[0].mxu0 %v613
      %v1843 = vpop.f32.mrb[0].mxu0
      %v1844 = vadd.f32 %v1680, %v1843
      %v1845 = vpop.f32.mrb[0].mxu0
      %v1846 = vpop.f32.mrb[0].mxu0
      %v1847 = vadd.f32 %v1683, %v1846
      %v1848 = vpop.f32.mrb[0].mxu0
      %1849 = vmatprep.mubr.bf16.mxu0 0
      %1850 = vmatmul.mubr.bf16.gmra.mrb[0].mxu0 %v616
      %v1851 = vpop.f32.mrb[0].mxu0
      %v1852 = vadd.f32 %v1688, %v1851
      %v1853 = vpop.f32.mrb[0].mxu0
      %v1854 = vpop.f32.mrb[0].mxu0
      %v1855 = vadd.f32 %v1691, %v1854
      %v1856 = vpop.f32.mrb[0].mxu0
      %1857 = vmatprep.mubr.bf16.mxu0 0
      %1858 = vmatmul.mubr.bf16.gmra.mrb[0].mxu0 %v619
      %v1859 = vpop.f32.mrb[0].mxu0
      %v1860 = vadd.f32 %v1696, %v1859
      %v1861 = vpop.f32.mrb[0].mxu0
      %v1862 = vpop.f32.mrb[0].mxu0
      %v1863 = vadd.f32 %v1699, %v1862
      %v1864 = vpop.f32.mrb[0].mxu0
      %1865 = vmatprep.mubr.bf16.mxu0 0
      %1866 = vmatmul.mubr.bf16.gmra.mrb[0].mxu0 %v622
      %v1867 = vpop.f32.mrb[0].mxu0
      %v1868 = vadd.f32 %v1704, %v1867
      %v1869 = vpop.f32.mrb[0].mxu0
      %v1870 = vpop.f32.mrb[0].mxu0
      %v1871 = vadd.f32 %v1707, %v1870
      %v1872 = vpop.f32.mrb[0].mxu0
      %1873 = vmatprep.mubr.bf16.mxu0 0
      %1874 = vmatmul.mubr.bf16.gmra.mrb[0].mxu0 %v625
      %v1875 = vpop.f32.mrb[0].mxu0
      %v1876 = vadd.f32 %v1712, %v1875
      %v1877 = vpop.f32.mrb[0].mxu0
      %v1878 = vpop.f32.mrb[0].mxu0
      %v1879 = vadd.f32 %v1715, %v1878
      %v1880 = vpop.f32.mrb[0].mxu0
      %1881 = vmatprep.mubr.bf16.mxu0 0
      %1882 = vmatmul.mubr.bf16.gmra.mrb[0].mxu0 %v628
      %v1883 = vpop.f32.mrb[0].mxu0
      %v1884 = vadd.f32 %v1720, %v1883
      %v1885 = vpop.f32.mrb[0].mxu0
      %v1886 = vpop.f32.mrb[0].mxu0
      %v1887 = vadd.f32 %v1723, %v1886
      %v1888 = vpop.f32.mrb[0].mxu0
      %1889 = vmatprep.mubr.bf16.mxu0 0
      %1890 = vmatmul.mubr.bf16.gmra.mrb[0].mxu0 %v631
      %v1891 = vpop.f32.mrb[0].mxu0
      %v1892 = vadd.f32 %v1728, %v1891
      %v1893 = vpop.f32.mrb[0].mxu0
      %v1894 = vpop.f32.mrb[0].mxu0
      %v1895 = vadd.f32 %v1731, %v1894
      %v1896 = vpop.f32.mrb[0].mxu0
      %1897 = vmatprep.mubr.bf16.mxu0 0
      %1898 = vmatmul.mubr.bf16.gmra.mrb[0].mxu0 %v634
      %v1899 = vpop.f32.mrb[0].mxu0
      %v1900 = vadd.f32 %v1736, %v1899
      %v1901 = vpop.f32.mrb[0].mxu0
      %v1902 = vpop.f32.mrb[0].mxu0
      %v1903 = vadd.f32 %v1739, %v1902
      %v1904 = vpop.f32.mrb[0].mxu0
      %1905 = vmatprep.mubr.bf16.mxu0 0
      %1906 = vmatmul.mubr.bf16.gmra.mrb[0].mxu0 %v637
      %v1907 = vpop.f32.mrb[0].mxu0
      %v1908 = vadd.f32 %v1744, %v1907
      %v1909 = vpop.f32.mrb[0].mxu0
      %v1910 = vpop.f32.mrb[0].mxu0
      %v1911 = vadd.f32 %v1747, %v1910
      %v1912 = vpop.f32.mrb[0].mxu0
      %1913 = vmatprep.mubr.bf16.mxu0 0
      %1914 = vmatmul.mubr.bf16.gmra.mrb[0].mxu0 %v640
      %v1915 = vpop.f32.mrb[0].mxu0
      %v1916 = vadd.f32 %v1752, %v1915
      %v1917 = vpop.f32.mrb[0].mxu0
      %v1918 = vpop.f32.mrb[0].mxu0
      %v1919 = vadd.f32 %v1755, %v1918
      %v1920 = vpop.f32.mrb[0].mxu0
      %1921 = vmatprep.mubr.bf16.mxu0 0
      %1922 = vmatmul.mubr.bf16.gmra.mrb[0].mxu0 %v643
      %v1923 = vpop.f32.mrb[0].mxu0
      %v1924 = vadd.f32 %v1760, %v1923
      %v1925 = vpop.f32.mrb[0].mxu0
      %v1926 = vpop.f32.mrb[0].mxu0
      %v1927 = vadd.f32 %v1763, %v1926
      %v1928 = vpop.f32.mrb[0].mxu0
      %1929 = vmatprep.mubr.bf16.mxu0 0
      %1930 = vmatmul.mubr.bf16.gmra.mrb[0].mxu0 %v646
      %v1931 = vpop.f32.mrb[0].mxu0
      %v1932 = vadd.f32 %v1768, %v1931
      %v1933 = vpop.f32.mrb[0].mxu0
      %v1934 = vpop.f32.mrb[0].mxu0
      %v1935 = vadd.f32 %v1771, %v1934
      %v1936 = vpop.f32.mrb[0].mxu0
      %1937 = vmatprep.mubr.bf16.mxu0 0
      %1938 = vmatmul.mubr.bf16.gmra.mrb[0].mxu0 %v649
      %v1939 = vpop.f32.mrb[0].mxu0
      %v1940 = vadd.f32 %v1776, %v1939
      %v1941 = vpop.f32.mrb[0].mxu0
      %v1942 = vpop.f32.mrb[0].mxu0
      %v1943 = vadd.f32 %v1779, %v1942
      %v1944 = vpop.f32.mrb[0].mxu0
      %1945 = vmatprep.mubr.bf16.mxu0 0
      %1946 = vmatmul.mubr.bf16.gmra.mrb[0].mxu0 %v652
      %v1947 = vpop.f32.mrb[0].mxu0
      %v1948 = vadd.f32 %v1784, %v1947
      %v1949 = vpop.f32.mrb[0].mxu0
      %v1950 = vpop.f32.mrb[0].mxu0
      %v1951 = vadd.f32 %v1787, %v1950
      %v1952 = vpop.f32.mrb[0].mxu0
      %1953 = vmatprep.mubr.bf16.mxu0 0
      %1954 = vmatmul.mubr.bf16.gmra.mrb[0].mxu0 %v655
      %v1955 = vpop.f32.mrb[0].mxu0
      %v1956 = vadd.f32 %v1792, %v1955
      %v1957 = vpop.f32.mrb[0].mxu0
      %v1958 = vpop.f32.mrb[0].mxu0
      %v1959 = vadd.f32 %v1795, %v1958
      %v1960 = vpop.f32.mrb[0].mxu0
      %1961 = vdwg.mxu0
      %s1962 = scalar_lea.vmem %s2, 12
      %v1963 = vld [vmem:[%s1962] sm:$0x3]
      %v1965 = vsel %vm657, %v1963, 0
      %1967 = vmatprep.subr.bf16.mxu0 0
      %1968 = vmatpush1.bf16.msra.mxu0 %v1965
      %1969 = vmatprep.subr.bf16.mxu0 0
      %1970 = vmatpush1.bf16.msra.mxu0 0
      %1971 = vmatprep.subr.bf16.mxu0 0
      %1972 = vmatpush1.bf16.msra.mxu0 0
      %1973 = vmatprep.subr.bf16.mxu0 0
      %1974 = vmatpush1.bf16.msra.mxu0 0
      %1975 = vmatprep.subr.bf16.mxu0 0
      %1976 = vmatpush1.bf16.msra.mxu0 0
      %1977 = vmatprep.subr.bf16.mxu0 0
      %1978 = vmatpush1.bf16.msra.mxu0 0
      %1979 = vmatprep.subr.bf16.mxu0 0
      %1980 = vmatpush1.bf16.msra.mxu0 0
      %1981 = vmatprep.subr.bf16.mxu0 0
      %1982 = vmatpush1.bf16.msra.mxu0 0
      %1983 = vmatprep.subr.bf16.mxu0 0
      %1984 = vmatpush1.bf16.msra.mxu0 0
      %1985 = vmatprep.subr.bf16.mxu0 0
      %1986 = vmatpush1.bf16.msra.mxu0 0
      %1987 = vmatprep.subr.bf16.mxu0 0
      %1988 = vmatpush1.bf16.msra.mxu0 0
      %1989 = vmatprep.subr.bf16.mxu0 0
      %1990 = vmatpush1.bf16.msra.mxu0 0
      %1991 = vmatprep.subr.bf16.mxu0 0
      %1992 = vmatpush1.bf16.msra.mxu0 0
      %1993 = vmatprep.subr.bf16.mxu0 0
      %1994 = vmatpush1.bf16.msra.mxu0 0
      %1995 = vmatprep.subr.bf16.mxu0 0
      %1996 = vmatpush1.bf16.msra.mxu0 0
      %1997 = vmatprep.subr.bf16.mxu0 0
      %1998 = vmatpush1.bf16.msra.mxu0 0
      %1999 = vmatprep.mubr.bf16.mxu0 0
      %2000 = vmatmul.mubr.bf16.gmra.mrb[0].mxu0 %v613
      %v2001 = vpop.f32.mrb[0].mxu0
      %v2002 = vadd.f32 0.0, %v2001
      %v2003 = vpop.f32.mrb[0].mxu0
      %v2004 = vpop.f32.mrb[0].mxu0
      %v2005 = vadd.f32 0.0, %v2004
      %v2006 = vpop.f32.mrb[0].mxu0
      %2007 = vmatprep.mubr.bf16.mxu0 0
      %2008 = vmatmul.mubr.bf16.gmra.mrb[0].mxu0 %v616
      %v2009 = vpop.f32.mrb[0].mxu0
      %v2010 = vadd.f32 0.0, %v2009
      %v2011 = vpop.f32.mrb[0].mxu0
      %v2012 = vpop.f32.mrb[0].mxu0
      %v2013 = vadd.f32 0.0, %v2012
      %v2014 = vpop.f32.mrb[0].mxu0
      %2015 = vmatprep.mubr.bf16.mxu0 0
      %2016 = vmatmul.mubr.bf16.gmra.mrb[0].mxu0 %v619
      %v2017 = vpop.f32.mrb[0].mxu0
      %v2018 = vadd.f32 0.0, %v2017
      %v2019 = vpop.f32.mrb[0].mxu0
      %v2020 = vpop.f32.mrb[0].mxu0
      %v2021 = vadd.f32 0.0, %v2020
      %v2022 = vpop.f32.mrb[0].mxu0
      %2023 = vmatprep.mubr.bf16.mxu0 0
      %2024 = vmatmul.mubr.bf16.gmra.mrb[0].mxu0 %v622
      %v2025 = vpop.f32.mrb[0].mxu0
      %v2026 = vadd.f32 0.0, %v2025
      %v2027 = vpop.f32.mrb[0].mxu0
      %v2028 = vpop.f32.mrb[0].mxu0
      %v2029 = vadd.f32 0.0, %v2028
      %v2030 = vpop.f32.mrb[0].mxu0
      %2031 = vmatprep.mubr.bf16.mxu0 0
      %2032 = vmatmul.mubr.bf16.gmra.mrb[0].mxu0 %v625
      %v2033 = vpop.f32.mrb[0].mxu0
      %v2034 = vadd.f32 0.0, %v2033
      %v2035 = vpop.f32.mrb[0].mxu0
      %v2036 = vpop.f32.mrb[0].mxu0
      %v2037 = vadd.f32 0.0, %v2036
      %v2038 = vpop.f32.mrb[0].mxu0
      %2039 = vmatprep.mubr.bf16.mxu0 0
      %2040 = vmatmul.mubr.bf16.gmra.mrb[0].mxu0 %v628
      %v2041 = vpop.f32.mrb[0].mxu0
      %v2042 = vadd.f32 0.0, %v2041
      %v2043 = vpop.f32.mrb[0].mxu0
      %v2044 = vpop.f32.mrb[0].mxu0
      %v2045 = vadd.f32 0.0, %v2044
      %v2046 = vpop.f32.mrb[0].mxu0
      %2047 = vmatprep.mubr.bf16.mxu0 0
      %2048 = vmatmul.mubr.bf16.gmra.mrb[0].mxu0 %v631
      %v2049 = vpop.f32.mrb[0].mxu0
      %v2050 = vadd.f32 0.0, %v2049
      %v2051 = vpop.f32.mrb[0].mxu0
      %v2052 = vpop.f32.mrb[0].mxu0
      %v2053 = vadd.f32 0.0, %v2052
      %v2054 = vpop.f32.mrb[0].mxu0
      %2055 = vmatprep.mubr.bf16.mxu0 0
      %2056 = vmatmul.mubr.bf16.gmra.mrb[0].mxu0 %v634
      %v2057 = vpop.f32.mrb[0].mxu0
      %v2058 = vadd.f32 0.0, %v2057
      %v2059 = vpop.f32.mrb[0].mxu0
      %v2060 = vpop.f32.mrb[0].mxu0
      %v2061 = vadd.f32 0.0, %v2060
      %v2062 = vpop.f32.mrb[0].mxu0
      %2063 = vmatprep.mubr.bf16.mxu0 0
      %2064 = vmatmul.mubr.bf16.gmra.mrb[0].mxu0 %v637
      %v2065 = vpop.f32.mrb[0].mxu0
      %v2066 = vadd.f32 0.0, %v2065
      %v2067 = vpop.f32.mrb[0].mxu0
      %v2068 = vpop.f32.mrb[0].mxu0
      %v2069 = vadd.f32 0.0, %v2068
      %v2070 = vpop.f32.mrb[0].mxu0
      %2071 = vmatprep.mubr.bf16.mxu0 0
      %2072 = vmatmul.mubr.bf16.gmra.mrb[0].mxu0 %v640
      %v2073 = vpop.f32.mrb[0].mxu0
      %v2074 = vadd.f32 0.0, %v2073
      %v2075 = vpop.f32.mrb[0].mxu0
      %v2076 = vpop.f32.mrb[0].mxu0
      %v2077 = vadd.f32 0.0, %v2076
      %v2078 = vpop.f32.mrb[0].mxu0
      %2079 = vmatprep.mubr.bf16.mxu0 0
      %2080 = vmatmul.mubr.bf16.gmra.mrb[0].mxu0 %v643
      %v2081 = vpop.f32.mrb[0].mxu0
      %v2082 = vadd.f32 0.0, %v2081
      %v2083 = vpop.f32.mrb[0].mxu0
      %v2084 = vpop.f32.mrb[0].mxu0
      %v2085 = vadd.f32 0.0, %v2084
      %v2086 = vpop.f32.mrb[0].mxu0
      %2087 = vmatprep.mubr.bf16.mxu0 0
      %2088 = vmatmul.mubr.bf16.gmra.mrb[0].mxu0 %v646
      %v2089 = vpop.f32.mrb[0].mxu0
      %v2090 = vadd.f32 0.0, %v2089
      %v2091 = vpop.f32.mrb[0].mxu0
      %v2092 = vpop.f32.mrb[0].mxu0
      %v2093 = vadd.f32 0.0, %v2092
      %v2094 = vpop.f32.mrb[0].mxu0
      %2095 = vmatprep.mubr.bf16.mxu0 0
      %2096 = vmatmul.mubr.bf16.gmra.mrb[0].mxu0 %v649
      %v2097 = vpop.f32.mrb[0].mxu0
      %v2098 = vadd.f32 0.0, %v2097
      %v2099 = vpop.f32.mrb[0].mxu0
      %v2100 = vpop.f32.mrb[0].mxu0
      %v2101 = vadd.f32 0.0, %v2100
      %v2102 = vpop.f32.mrb[0].mxu0
      %2103 = vmatprep.mubr.bf16.mxu0 0
      %2104 = vmatmul.mubr.bf16.gmra.mrb[0].mxu0 %v652
      %v2105 = vpop.f32.mrb[0].mxu0
      %v2106 = vadd.f32 0.0, %v2105
      %v2107 = vpop.f32.mrb[0].mxu0
      %v2108 = vpop.f32.mrb[0].mxu0
      %v2109 = vadd.f32 0.0, %v2108
      %v2110 = vpop.f32.mrb[0].mxu0
      %2111 = vmatprep.mubr.bf16.mxu0 0
      %2112 = vmatmul.mubr.bf16.gmra.mrb[0].mxu0 %v655
      %v2113 = vpop.f32.mrb[0].mxu0
      %v2114 = vadd.f32 0.0, %v2113
      %v2115 = vpop.f32.mrb[0].mxu0
      %v2116 = vpop.f32.mrb[0].mxu0
      %v2117 = vadd.f32 0.0, %v2116
      %v2118 = vpop.f32.mrb[0].mxu0
      %2119 = vmatprep.mubr.bf16.mxu0 0
      %2120 = vmatmul.mubr.bf16.gmra.mrb[0].mxu0 %v1233
      %v2121 = vpop.f32.mrb[0].mxu0
      %v2122 = vadd.f32 0.0, %v2121
      %v2123 = vpop.f32.mrb[0].mxu0
      %v2124 = vpop.f32.mrb[0].mxu0
      %v2125 = vadd.f32 0.0, %v2124
      %v2126 = vpop.f32.mrb[0].mxu0
      %2127 = vdwg.mxu0
      %v2128 = vadd.f32 %v1836, %v2002
      %v2129 = vadd.f32 %v1839, %v2005
      %v2130 = vadd.f32 %v1844, %v2010
      %v2131 = vadd.f32 %v1847, %v2013
      %v2132 = vadd.f32 %v1852, %v2018
      %v2133 = vadd.f32 %v1855, %v2021
      %v2134 = vadd.f32 %v1860, %v2026
      %v2135 = vadd.f32 %v1863, %v2029
      %v2136 = vadd.f32 %v1868, %v2034
      %v2137 = vadd.f32 %v1871, %v2037
      %v2138 = vadd.f32 %v1876, %v2042
      %v2139 = vadd.f32 %v1879, %v2045
      %v2140 = vadd.f32 %v1884, %v2050
      %v2141 = vadd.f32 %v1887, %v2053
      %v2142 = vadd.f32 %v1892, %v2058
      %v2143 = vadd.f32 %v1895, %v2061
      %v2144 = vadd.f32 %v1900, %v2066
      %v2145 = vadd.f32 %v1903, %v2069
      %v2146 = vadd.f32 %v1908, %v2074
      %v2147 = vadd.f32 %v1911, %v2077
      %v2148 = vadd.f32 %v1916, %v2082
      %v2149 = vadd.f32 %v1919, %v2085
      %v2150 = vadd.f32 %v1924, %v2090
      %v2151 = vadd.f32 %v1927, %v2093
      %v2152 = vadd.f32 %v1932, %v2098
      %v2153 = vadd.f32 %v1935, %v2101
      %v2154 = vadd.f32 %v1940, %v2106
      %v2155 = vadd.f32 %v1943, %v2109
      %v2156 = vadd.f32 %v1948, %v2114
      %v2157 = vadd.f32 %v1951, %v2117
      %v2158 = vadd.f32 %v1956, %v2122
      %v2159 = vadd.f32 %v1959, %v2125
      %s2160 = scalar_lea.vmem %s2, 14
      %v2161 = vld [vmem:[%s2160] sm:$0x3]
      %v2164 = vrot.slane %v391, 1
      %v2165 = vrot.slane %v409, 1
      %v2166 = vsel %vm1537, %v2164, %v2165
      %v2168 = vsel %vm608, %v2166, 0
      %v2171 = vsel %vm657, %v2161, 0
      %2173 = vmatprep.subr.bf16.mxu0 0
      %2174 = vmatpush1.bf16.msra.mxu0 %v2171
      %2175 = vmatprep.subr.bf16.mxu0 0
      %2176 = vmatpush1.bf16.msra.mxu0 0
      %2177 = vmatprep.subr.bf16.mxu0 0
      %2178 = vmatpush1.bf16.msra.mxu0 0
      %2179 = vmatprep.subr.bf16.mxu0 0
      %2180 = vmatpush1.bf16.msra.mxu0 0
      %2181 = vmatprep.subr.bf16.mxu0 0
      %2182 = vmatpush1.bf16.msra.mxu0 0
      %2183 = vmatprep.subr.bf16.mxu0 0
      %2184 = vmatpush1.bf16.msra.mxu0 0
      %2185 = vmatprep.subr.bf16.mxu0 0
      %2186 = vmatpush1.bf16.msra.mxu0 0
      %2187 = vmatprep.subr.bf16.mxu0 0
      %2188 = vmatpush1.bf16.msra.mxu0 0
      %2189 = vmatprep.subr.bf16.mxu0 0
      %2190 = vmatpush1.bf16.msra.mxu0 0
      %2191 = vmatprep.subr.bf16.mxu0 0
      %2192 = vmatpush1.bf16.msra.mxu0 0
      %2193 = vmatprep.subr.bf16.mxu0 0
      %2194 = vmatpush1.bf16.msra.mxu0 0
      %2195 = vmatprep.subr.bf16.mxu0 0
      %2196 = vmatpush1.bf16.msra.mxu0 0
      %2197 = vmatprep.subr.bf16.mxu0 0
      %2198 = vmatpush1.bf16.msra.mxu0 0
      %2199 = vmatprep.subr.bf16.mxu0 0
      %2200 = vmatpush1.bf16.msra.mxu0 0
      %2201 = vmatprep.subr.bf16.mxu0 0
      %2202 = vmatpush1.bf16.msra.mxu0 0
      %2203 = vmatprep.subr.bf16.mxu0 0
      %2204 = vmatpush1.bf16.msra.mxu0 0
      %2205 = vmatprep.mubr.bf16.mxu0 0
      %2206 = vmatmul.mubr.bf16.gmra.mrb[0].mxu0 %v1590
      %v2207 = vpop.f32.mrb[0].mxu0
      %v2208 = vadd.f32 0.0, %v2207
      %v2209 = vpop.f32.mrb[0].mxu0
      %v2210 = vpop.f32.mrb[0].mxu0
      %v2211 = vadd.f32 0.0, %v2210
      %v2212 = vpop.f32.mrb[0].mxu0
      %2213 = vmatprep.mubr.bf16.mxu0 0
      %2214 = vmatmul.mubr.bf16.gmra.mrb[0].mxu0 %v1593
      %v2215 = vpop.f32.mrb[0].mxu0
      %v2216 = vadd.f32 0.0, %v2215
      %v2217 = vpop.f32.mrb[0].mxu0
      %v2218 = vpop.f32.mrb[0].mxu0
      %v2219 = vadd.f32 0.0, %v2218
      %v2220 = vpop.f32.mrb[0].mxu0
      %2221 = vmatprep.mubr.bf16.mxu0 0
      %2222 = vmatmul.mubr.bf16.gmra.mrb[0].mxu0 %v1596
      %v2223 = vpop.f32.mrb[0].mxu0
      %v2224 = vadd.f32 0.0, %v2223
      %v2225 = vpop.f32.mrb[0].mxu0
      %v2226 = vpop.f32.mrb[0].mxu0
      %v2227 = vadd.f32 0.0, %v2226
      %v2228 = vpop.f32.mrb[0].mxu0
      %2229 = vmatprep.mubr.bf16.mxu0 0
      %2230 = vmatmul.mubr.bf16.gmra.mrb[0].mxu0 %v1599
      %v2231 = vpop.f32.mrb[0].mxu0
      %v2232 = vadd.f32 0.0, %v2231
      %v2233 = vpop.f32.mrb[0].mxu0
      %v2234 = vpop.f32.mrb[0].mxu0
      %v2235 = vadd.f32 0.0, %v2234
      %v2236 = vpop.f32.mrb[0].mxu0
      %2237 = vmatprep.mubr.bf16.mxu0 0
      %2238 = vmatmul.mubr.bf16.gmra.mrb[0].mxu0 %v1602
      %v2239 = vpop.f32.mrb[0].mxu0
      %v2240 = vadd.f32 0.0, %v2239
      %v2241 = vpop.f32.mrb[0].mxu0
      %v2242 = vpop.f32.mrb[0].mxu0
      %v2243 = vadd.f32 0.0, %v2242
      %v2244 = vpop.f32.mrb[0].mxu0
      %2245 = vmatprep.mubr.bf16.mxu0 0
      %2246 = vmatmul.mubr.bf16.gmra.mrb[0].mxu0 %v1605
      %v2247 = vpop.f32.mrb[0].mxu0
      %v2248 = vadd.f32 0.0, %v2247
      %v2249 = vpop.f32.mrb[0].mxu0
      %v2250 = vpop.f32.mrb[0].mxu0
      %v2251 = vadd.f32 0.0, %v2250
      %v2252 = vpop.f32.mrb[0].mxu0
      %2253 = vmatprep.mubr.bf16.mxu0 0
      %2254 = vmatmul.mubr.bf16.gmra.mrb[0].mxu0 %v1608
      %v2255 = vpop.f32.mrb[0].mxu0
      %v2256 = vadd.f32 0.0, %v2255
      %v2257 = vpop.f32.mrb[0].mxu0
      %v2258 = vpop.f32.mrb[0].mxu0
      %v2259 = vadd.f32 0.0, %v2258
      %v2260 = vpop.f32.mrb[0].mxu0
      %2261 = vmatprep.mubr.bf16.mxu0 0
      %2262 = vmatmul.mubr.bf16.gmra.mrb[0].mxu0 %v1611
      %v2263 = vpop.f32.mrb[0].mxu0
      %v2264 = vadd.f32 0.0, %v2263
      %v2265 = vpop.f32.mrb[0].mxu0
      %v2266 = vpop.f32.mrb[0].mxu0
      %v2267 = vadd.f32 0.0, %v2266
      %v2268 = vpop.f32.mrb[0].mxu0
      %2269 = vmatprep.mubr.bf16.mxu0 0
      %2270 = vmatmul.mubr.bf16.gmra.mrb[0].mxu0 %v1614
      %v2271 = vpop.f32.mrb[0].mxu0
      %v2272 = vadd.f32 0.0, %v2271
      %v2273 = vpop.f32.mrb[0].mxu0
      %v2274 = vpop.f32.mrb[0].mxu0
      %v2275 = vadd.f32 0.0, %v2274
      %v2276 = vpop.f32.mrb[0].mxu0
      %2277 = vmatprep.mubr.bf16.mxu0 0
      %2278 = vmatmul.mubr.bf16.gmra.mrb[0].mxu0 %v1617
      %v2279 = vpop.f32.mrb[0].mxu0
      %v2280 = vadd.f32 0.0, %v2279
      %v2281 = vpop.f32.mrb[0].mxu0
      %v2282 = vpop.f32.mrb[0].mxu0
      %v2283 = vadd.f32 0.0, %v2282
      %v2284 = vpop.f32.mrb[0].mxu0
      %2285 = vmatprep.mubr.bf16.mxu0 0
      %2286 = vmatmul.mubr.bf16.gmra.mrb[0].mxu0 %v1620
      %v2287 = vpop.f32.mrb[0].mxu0
      %v2288 = vadd.f32 0.0, %v2287
      %v2289 = vpop.f32.mrb[0].mxu0
      %v2290 = vpop.f32.mrb[0].mxu0
      %v2291 = vadd.f32 0.0, %v2290
      %v2292 = vpop.f32.mrb[0].mxu0
      %2293 = vmatprep.mubr.bf16.mxu0 0
      %2294 = vmatmul.mubr.bf16.gmra.mrb[0].mxu0 %v1623
      %v2295 = vpop.f32.mrb[0].mxu0
      %v2296 = vadd.f32 0.0, %v2295
      %v2297 = vpop.f32.mrb[0].mxu0
      %v2298 = vpop.f32.mrb[0].mxu0
      %v2299 = vadd.f32 0.0, %v2298
      %v2300 = vpop.f32.mrb[0].mxu0
      %2301 = vmatprep.mubr.bf16.mxu0 0
      %2302 = vmatmul.mubr.bf16.gmra.mrb[0].mxu0 %v1626
      %v2303 = vpop.f32.mrb[0].mxu0
      %v2304 = vadd.f32 0.0, %v2303
      %v2305 = vpop.f32.mrb[0].mxu0
      %v2306 = vpop.f32.mrb[0].mxu0
      %v2307 = vadd.f32 0.0, %v2306
      %v2308 = vpop.f32.mrb[0].mxu0
      %2309 = vmatprep.mubr.bf16.mxu0 0
      %2310 = vmatmul.mubr.bf16.gmra.mrb[0].mxu0 %v1629
      %v2311 = vpop.f32.mrb[0].mxu0
      %v2312 = vadd.f32 0.0, %v2311
      %v2313 = vpop.f32.mrb[0].mxu0
      %v2314 = vpop.f32.mrb[0].mxu0
      %v2315 = vadd.f32 0.0, %v2314
      %v2316 = vpop.f32.mrb[0].mxu0
      %2317 = vmatprep.mubr.bf16.mxu0 0
      %2318 = vmatmul.mubr.bf16.gmra.mrb[0].mxu0 %v1632
      %v2319 = vpop.f32.mrb[0].mxu0
      %v2320 = vadd.f32 0.0, %v2319
      %v2321 = vpop.f32.mrb[0].mxu0
      %v2322 = vpop.f32.mrb[0].mxu0
      %v2323 = vadd.f32 0.0, %v2322
      %v2324 = vpop.f32.mrb[0].mxu0
      %2325 = vmatprep.mubr.bf16.mxu0 0
      %2326 = vmatmul.mubr.bf16.gmra.mrb[0].mxu0 %v2168
      %v2327 = vpop.f32.mrb[0].mxu0
      %v2328 = vadd.f32 0.0, %v2327
      %v2329 = vpop.f32.mrb[0].mxu0
      %v2330 = vpop.f32.mrb[0].mxu0
      %v2331 = vadd.f32 0.0, %v2330
      %v2332 = vpop.f32.mrb[0].mxu0
      %2333 = vdwg.mxu0
      %v2334 = vadd.f32 %v2128, %v2208
      %v2335 = vadd.f32 %v2129, %v2211
      %v2336 = vadd.f32 %v2130, %v2216
      %v2337 = vadd.f32 %v2131, %v2219
      %v2338 = vadd.f32 %v2132, %v2224
      %v2339 = vadd.f32 %v2133, %v2227
      %v2340 = vadd.f32 %v2134, %v2232
      %v2341 = vadd.f32 %v2135, %v2235
      %v2342 = vadd.f32 %v2136, %v2240
      %v2343 = vadd.f32 %v2137, %v2243
      %v2344 = vadd.f32 %v2138, %v2248
      %v2345 = vadd.f32 %v2139, %v2251
      %v2346 = vadd.f32 %v2140, %v2256
      %v2347 = vadd.f32 %v2141, %v2259
      %v2348 = vadd.f32 %v2142, %v2264
      %v2349 = vadd.f32 %v2143, %v2267
      %v2350 = vadd.f32 %v2144, %v2272
      %v2351 = vadd.f32 %v2145, %v2275
      %v2352 = vadd.f32 %v2146, %v2280
      %v2353 = vadd.f32 %v2147, %v2283
      %v2354 = vadd.f32 %v2148, %v2288
      %v2355 = vadd.f32 %v2149, %v2291
      %v2356 = vadd.f32 %v2150, %v2296
      %v2357 = vadd.f32 %v2151, %v2299
      %v2358 = vadd.f32 %v2152, %v2304
      %v2359 = vadd.f32 %v2153, %v2307
      %v2360 = vadd.f32 %v2154, %v2312
      %v2361 = vadd.f32 %v2155, %v2315
      %v2362 = vadd.f32 %v2156, %v2320
      %v2363 = vadd.f32 %v2157, %v2323
      %v2364 = vadd.f32 %v2158, %v2328
      %v2365 = vadd.f32 %v2159, %v2331
      %v2366 = vadd.f32 %v2334, %v1435
      %v2367 = vadd.f32 %v2335, %v1435
      %v2368 = vadd.f32 %v2336, %v1435
      %v2369 = vadd.f32 %v2337, %v1435
      %v2370 = vadd.f32 %v2338, %v1435
      %v2371 = vadd.f32 %v2339, %v1435
      %v2372 = vadd.f32 %v2340, %v1435
      %v2373 = vadd.f32 %v2341, %v1435
      %v2374 = vadd.f32 %v2342, %v1435
      %v2375 = vadd.f32 %v2343, %v1435
      %v2376 = vadd.f32 %v2344, %v1435
      %v2377 = vadd.f32 %v2345, %v1435
      %v2378 = vadd.f32 %v2346, %v1435
      %v2379 = vadd.f32 %v2347, %v1435
      %v2380 = vadd.f32 %v2348, %v1435
      %v2381 = vadd.f32 %v2349, %v1435
      %v2382 = vadd.f32 %v2350, %v1435
      %v2383 = vadd.f32 %v2351, %v1435
      %v2384 = vadd.f32 %v2352, %v1435
      %v2385 = vadd.f32 %v2353, %v1435
      %v2386 = vadd.f32 %v2354, %v1435
      %v2387 = vadd.f32 %v2355, %v1435
      %v2388 = vadd.f32 %v2356, %v1435
      %v2389 = vadd.f32 %v2357, %v1435
      %v2390 = vadd.f32 %v2358, %v1435
      %v2391 = vadd.f32 %v2359, %v1435
      %v2392 = vadd.f32 %v2360, %v1435
      %v2393 = vadd.f32 %v2361, %v1435
      %v2394 = vadd.f32 %v2362, %v1435
      %v2395 = vadd.f32 %v2363, %v1435
      %v2396 = vadd.f32 %v2364, %v1435
      %v2397 = vadd.f32 %v2365, %v1435
      %s2398 = scalar_lea.vmem %s318, 256
      %2399 = vst.msk [vmem:[%s2398] sm:$0xff] %vm608, %v2366
      %2400 = vst.msk [vmem:[%s2398 + $0x8] sm:$0xff] %vm608, %v2367
      %2401 = vst.msk [vmem:[%s2398 + $0x10] sm:$0xff] %vm608, %v2368
      %2402 = vst.msk [vmem:[%s2398 + $0x18] sm:$0xff] %vm608, %v2369
      %2403 = vst.msk [vmem:[%s2398 + $0x20] sm:$0xff] %vm608, %v2370
      %2404 = vst.msk [vmem:[%s2398 + $0x28] sm:$0xff] %vm608, %v2371
      %2405 = vst.msk [vmem:[%s2398 + $0x30] sm:$0xff] %vm608, %v2372
      %2406 = vst.msk [vmem:[%s2398 + $0x38] sm:$0xff] %vm608, %v2373
      %2407 = vst.msk [vmem:[%s2398 + $0x40] sm:$0xff] %vm608, %v2374
      %2408 = vst.msk [vmem:[%s2398 + $0x48] sm:$0xff] %vm608, %v2375
      %2409 = vst.msk [vmem:[%s2398 + $0x50] sm:$0xff] %vm608, %v2376
      %2410 = vst.msk [vmem:[%s2398 + $0x58] sm:$0xff] %vm608, %v2377
      %2411 = vst.msk [vmem:[%s2398 + $0x60] sm:$0xff] %vm608, %v2378
      %2412 = vst.msk [vmem:[%s2398 + $0x68] sm:$0xff] %vm608, %v2379
      %2413 = vst.msk [vmem:[%s2398 + $0x70] sm:$0xff] %vm608, %v2380
      %2414 = vst.msk [vmem:[%s2398 + $0x78] sm:$0xff] %vm608, %v2381
      %2415 = vst.msk [vmem:[%s2398 + $0x80] sm:$0xff] %vm608, %v2382
      %2416 = vst.msk [vmem:[%s2398 + $0x88] sm:$0xff] %vm608, %v2383
      %2417 = vst.msk [vmem:[%s2398 + $0x90] sm:$0xff] %vm608, %v2384
      %2418 = vst.msk [vmem:[%s2398 + $0x98] sm:$0xff] %vm608, %v2385
      %2419 = vst.msk [vmem:[%s2398 + $0xa0] sm:$0xff] %vm608, %v2386
      %2420 = vst.msk [vmem:[%s2398 + $0xa8] sm:$0xff] %vm608, %v2387
      %2421 = vst.msk [vmem:[%s2398 + $0xb0] sm:$0xff] %vm608, %v2388
      %2422 = vst.msk [vmem:[%s2398 + $0xb8] sm:$0xff] %vm608, %v2389
      %2423 = vst.msk [vmem:[%s2398 + $0xc0] sm:$0xff] %vm608, %v2390
      %2424 = vst.msk [vmem:[%s2398 + $0xc8] sm:$0xff] %vm608, %v2391
      %2425 = vst.msk [vmem:[%s2398 + $0xd0] sm:$0xff] %vm608, %v2392
      %2426 = vst.msk [vmem:[%s2398 + $0xd8] sm:$0xff] %vm608, %v2393
      %2427 = vst.msk [vmem:[%s2398 + $0xe0] sm:$0xff] %vm608, %v2394
      %2428 = vst.msk [vmem:[%s2398 + $0xe8] sm:$0xff] %vm608, %v2395
      %2429 = vst.msk [vmem:[%s2398 + $0xf0] sm:$0xff] %vm608, %v2396
      %2430 = vst.msk [vmem:[%s2398 + $0xf8] sm:$0xff] %vm608, %v2397
      %s2431 = scalar_lea.vmem %s2, 16
      %v2432 = vld [vmem:[%s2431] sm:$0x3]
      %s2433 = scalar_lea.vmem %s2, 18
      %v2434 = vld [vmem:[%s2433] sm:$0x3]
      %v2436 = vsel %vm657, %v2434, 0
      %2438 = vmatprep.subr.bf16.mxu0 0
      %2439 = vmatpush1.bf16.msra.mxu0 %v2436
      %2440 = vmatprep.subr.bf16.mxu0 0
      %2441 = vmatpush1.bf16.msra.mxu0 0
      %2442 = vmatprep.subr.bf16.mxu0 0
      %2443 = vmatpush1.bf16.msra.mxu0 0
      %2444 = vmatprep.subr.bf16.mxu0 0
      %2445 = vmatpush1.bf16.msra.mxu0 0
      %2446 = vmatprep.subr.bf16.mxu0 0
      %2447 = vmatpush1.bf16.msra.mxu0 0
      %2448 = vmatprep.subr.bf16.mxu0 0
      %2449 = vmatpush1.bf16.msra.mxu0 0
      %2450 = vmatprep.subr.bf16.mxu0 0
      %2451 = vmatpush1.bf16.msra.mxu0 0
      %2452 = vmatprep.subr.bf16.mxu0 0
      %2453 = vmatpush1.bf16.msra.mxu0 0
      %2454 = vmatprep.subr.bf16.mxu0 0
      %2455 = vmatpush1.bf16.msra.mxu0 0
      %2456 = vmatprep.subr.bf16.mxu0 0
      %2457 = vmatpush1.bf16.msra.mxu0 0
      %2458 = vmatprep.subr.bf16.mxu0 0
      %2459 = vmatpush1.bf16.msra.mxu0 0
      %2460 = vmatprep.subr.bf16.mxu0 0
      %2461 = vmatpush1.bf16.msra.mxu0 0
      %2462 = vmatprep.subr.bf16.mxu0 0
      %2463 = vmatpush1.bf16.msra.mxu0 0
      %2464 = vmatprep.subr.bf16.mxu0 0
      %2465 = vmatpush1.bf16.msra.mxu0 0
      %2466 = vmatprep.subr.bf16.mxu0 0
      %2467 = vmatpush1.bf16.msra.mxu0 0
      %2468 = vmatprep.subr.bf16.mxu0 0
      %2469 = vmatpush1.bf16.msra.mxu0 0
      %2470 = vmatprep.mubr.bf16.mxu0 0
      %2471 = vmatmul.mubr.bf16.gmra.mrb[0].mxu0 %v613
      %v2472 = vpop.f32.mrb[0].mxu0
      %v2473 = vadd.f32 0.0, %v2472
      %v2474 = vpop.f32.mrb[0].mxu0
      %v2475 = vpop.f32.mrb[0].mxu0
      %v2476 = vadd.f32 0.0, %v2475
      %v2477 = vpop.f32.mrb[0].mxu0
      %2478 = vmatprep.mubr.bf16.mxu0 0
      %2479 = vmatmul.mubr.bf16.gmra.mrb[0].mxu0 %v616
      %v2480 = vpop.f32.mrb[0].mxu0
      %v2481 = vadd.f32 0.0, %v2480
      %v2482 = vpop.f32.mrb[0].mxu0
      %v2483 = vpop.f32.mrb[0].mxu0
      %v2484 = vadd.f32 0.0, %v2483
      %v2485 = vpop.f32.mrb[0].mxu0
      %2486 = vmatprep.mubr.bf16.mxu0 0
      %2487 = vmatmul.mubr.bf16.gmra.mrb[0].mxu0 %v619
      %v2488 = vpop.f32.mrb[0].mxu0
      %v2489 = vadd.f32 0.0, %v2488
      %v2490 = vpop.f32.mrb[0].mxu0
      %v2491 = vpop.f32.mrb[0].mxu0
      %v2492 = vadd.f32 0.0, %v2491
      %v2493 = vpop.f32.mrb[0].mxu0
      %2494 = vmatprep.mubr.bf16.mxu0 0
      %2495 = vmatmul.mubr.bf16.gmra.mrb[0].mxu0 %v622
      %v2496 = vpop.f32.mrb[0].mxu0
      %v2497 = vadd.f32 0.0, %v2496
      %v2498 = vpop.f32.mrb[0].mxu0
      %v2499 = vpop.f32.mrb[0].mxu0
      %v2500 = vadd.f32 0.0, %v2499
      %v2501 = vpop.f32.mrb[0].mxu0
      %2502 = vmatprep.mubr.bf16.mxu0 0
      %2503 = vmatmul.mubr.bf16.gmra.mrb[0].mxu0 %v625
      %v2504 = vpop.f32.mrb[0].mxu0
      %v2505 = vadd.f32 0.0, %v2504
      %v2506 = vpop.f32.mrb[0].mxu0
      %v2507 = vpop.f32.mrb[0].mxu0
      %v2508 = vadd.f32 0.0, %v2507
      %v2509 = vpop.f32.mrb[0].mxu0
      %2510 = vmatprep.mubr.bf16.mxu0 0
      %2511 = vmatmul.mubr.bf16.gmra.mrb[0].mxu0 %v628
      %v2512 = vpop.f32.mrb[0].mxu0
      %v2513 = vadd.f32 0.0, %v2512
      %v2514 = vpop.f32.mrb[0].mxu0
      %v2515 = vpop.f32.mrb[0].mxu0
      %v2516 = vadd.f32 0.0, %v2515
      %v2517 = vpop.f32.mrb[0].mxu0
      %2518 = vmatprep.mubr.bf16.mxu0 0
      %2519 = vmatmul.mubr.bf16.gmra.mrb[0].mxu0 %v631
      %v2520 = vpop.f32.mrb[0].mxu0
      %v2521 = vadd.f32 0.0, %v2520
      %v2522 = vpop.f32.mrb[0].mxu0
      %v2523 = vpop.f32.mrb[0].mxu0
      %v2524 = vadd.f32 0.0, %v2523
      %v2525 = vpop.f32.mrb[0].mxu0
      %2526 = vmatprep.mubr.bf16.mxu0 0
      %2527 = vmatmul.mubr.bf16.gmra.mrb[0].mxu0 %v634
      %v2528 = vpop.f32.mrb[0].mxu0
      %v2529 = vadd.f32 0.0, %v2528
      %v2530 = vpop.f32.mrb[0].mxu0
      %v2531 = vpop.f32.mrb[0].mxu0
      %v2532 = vadd.f32 0.0, %v2531
      %v2533 = vpop.f32.mrb[0].mxu0
      %2534 = vmatprep.mubr.bf16.mxu0 0
      %2535 = vmatmul.mubr.bf16.gmra.mrb[0].mxu0 %v637
      %v2536 = vpop.f32.mrb[0].mxu0
      %v2537 = vadd.f32 0.0, %v2536
      %v2538 = vpop.f32.mrb[0].mxu0
      %v2539 = vpop.f32.mrb[0].mxu0
      %v2540 = vadd.f32 0.0, %v2539
      %v2541 = vpop.f32.mrb[0].mxu0
      %2542 = vmatprep.mubr.bf16.mxu0 0
      %2543 = vmatmul.mubr.bf16.gmra.mrb[0].mxu0 %v640
      %v2544 = vpop.f32.mrb[0].mxu0
      %v2545 = vadd.f32 0.0, %v2544
      %v2546 = vpop.f32.mrb[0].mxu0
      %v2547 = vpop.f32.mrb[0].mxu0
      %v2548 = vadd.f32 0.0, %v2547
      %v2549 = vpop.f32.mrb[0].mxu0
      %2550 = vmatprep.mubr.bf16.mxu0 0
      %2551 = vmatmul.mubr.bf16.gmra.mrb[0].mxu0 %v643
      %v2552 = vpop.f32.mrb[0].mxu0
      %v2553 = vadd.f32 0.0, %v2552
      %v2554 = vpop.f32.mrb[0].mxu0
      %v2555 = vpop.f32.mrb[0].mxu0
      %v2556 = vadd.f32 0.0, %v2555
      %v2557 = vpop.f32.mrb[0].mxu0
      %2558 = vmatprep.mubr.bf16.mxu0 0
      %2559 = vmatmul.mubr.bf16.gmra.mrb[0].mxu0 %v646
      %v2560 = vpop.f32.mrb[0].mxu0
      %v2561 = vadd.f32 0.0, %v2560
      %v2562 = vpop.f32.mrb[0].mxu0
      %v2563 = vpop.f32.mrb[0].mxu0
      %v2564 = vadd.f32 0.0, %v2563
      %v2565 = vpop.f32.mrb[0].mxu0
      %2566 = vmatprep.mubr.bf16.mxu0 0
      %2567 = vmatmul.mubr.bf16.gmra.mrb[0].mxu0 %v649
      %v2568 = vpop.f32.mrb[0].mxu0
      %v2569 = vadd.f32 0.0, %v2568
      %v2570 = vpop.f32.mrb[0].mxu0
      %v2571 = vpop.f32.mrb[0].mxu0
      %v2572 = vadd.f32 0.0, %v2571
      %v2573 = vpop.f32.mrb[0].mxu0
      %2574 = vmatprep.mubr.bf16.mxu0 0
      %2575 = vmatmul.mubr.bf16.gmra.mrb[0].mxu0 %v652
      %v2576 = vpop.f32.mrb[0].mxu0
      %v2577 = vadd.f32 0.0, %v2576
      %v2578 = vpop.f32.mrb[0].mxu0
      %v2579 = vpop.f32.mrb[0].mxu0
      %v2580 = vadd.f32 0.0, %v2579
      %v2581 = vpop.f32.mrb[0].mxu0
      %2582 = vmatprep.mubr.bf16.mxu0 0
      %2583 = vmatmul.mubr.bf16.gmra.mrb[0].mxu0 %v655
      %v2584 = vpop.f32.mrb[0].mxu0
      %v2585 = vadd.f32 0.0, %v2584
      %v2586 = vpop.f32.mrb[0].mxu0
      %v2587 = vpop.f32.mrb[0].mxu0
      %v2588 = vadd.f32 0.0, %v2587
      %v2589 = vpop.f32.mrb[0].mxu0
      %2590 = vmatprep.mubr.bf16.mxu0 0
      %2591 = vmatmul.mubr.bf16.gmra.mrb[0].mxu0 %v1233
      %v2592 = vpop.f32.mrb[0].mxu0
      %v2593 = vadd.f32 0.0, %v2592
      %v2594 = vpop.f32.mrb[0].mxu0
      %v2595 = vpop.f32.mrb[0].mxu0
      %v2596 = vadd.f32 0.0, %v2595
      %v2597 = vpop.f32.mrb[0].mxu0
      %2598 = vdwg.mxu0
      %v2600 = vsel %vm657, %v2432, 0
      %2602 = vmatprep.subr.bf16.mxu0 0
      %2603 = vmatpush1.bf16.msra.mxu0 %v2600
      %2604 = vmatprep.subr.bf16.mxu0 0
      %2605 = vmatpush1.bf16.msra.mxu0 0
      %2606 = vmatprep.subr.bf16.mxu0 0
      %2607 = vmatpush1.bf16.msra.mxu0 0
      %2608 = vmatprep.subr.bf16.mxu0 0
      %2609 = vmatpush1.bf16.msra.mxu0 0
      %2610 = vmatprep.subr.bf16.mxu0 0
      %2611 = vmatpush1.bf16.msra.mxu0 0
      %2612 = vmatprep.subr.bf16.mxu0 0
      %2613 = vmatpush1.bf16.msra.mxu0 0
      %2614 = vmatprep.subr.bf16.mxu0 0
      %2615 = vmatpush1.bf16.msra.mxu0 0
      %2616 = vmatprep.subr.bf16.mxu0 0
      %2617 = vmatpush1.bf16.msra.mxu0 0
      %2618 = vmatprep.subr.bf16.mxu0 0
      %2619 = vmatpush1.bf16.msra.mxu0 0
      %2620 = vmatprep.subr.bf16.mxu0 0
      %2621 = vmatpush1.bf16.msra.mxu0 0
      %2622 = vmatprep.subr.bf16.mxu0 0
      %2623 = vmatpush1.bf16.msra.mxu0 0
      %2624 = vmatprep.subr.bf16.mxu0 0
      %2625 = vmatpush1.bf16.msra.mxu0 0
      %2626 = vmatprep.subr.bf16.mxu0 0
      %2627 = vmatpush1.bf16.msra.mxu0 0
      %2628 = vmatprep.subr.bf16.mxu0 0
      %2629 = vmatpush1.bf16.msra.mxu0 0
      %2630 = vmatprep.subr.bf16.mxu0 0
      %2631 = vmatpush1.bf16.msra.mxu0 0
      %2632 = vmatprep.subr.bf16.mxu0 0
      %2633 = vmatpush1.bf16.msra.mxu0 0
      %2634 = vmatprep.mubr.bf16.mxu0 0
      %2635 = vmatmul.mubr.bf16.gmra.mrb[0].mxu0 %v824
      %v2636 = vpop.f32.mrb[0].mxu0
      %v2637 = vadd.f32 %v2473, %v2636
      %v2638 = vpop.f32.mrb[0].mxu0
      %v2639 = vpop.f32.mrb[0].mxu0
      %v2640 = vadd.f32 %v2476, %v2639
      %v2641 = vpop.f32.mrb[0].mxu0
      %2642 = vmatprep.mubr.bf16.mxu0 0
      %2643 = vmatmul.mubr.bf16.gmra.mrb[0].mxu0 %v826
      %v2644 = vpop.f32.mrb[0].mxu0
      %v2645 = vadd.f32 %v2481, %v2644
      %v2646 = vpop.f32.mrb[0].mxu0
      %v2647 = vpop.f32.mrb[0].mxu0
      %v2648 = vadd.f32 %v2484, %v2647
      %v2649 = vpop.f32.mrb[0].mxu0
      %2650 = vmatprep.mubr.bf16.mxu0 0
      %2651 = vmatmul.mubr.bf16.gmra.mrb[0].mxu0 %v828
      %v2652 = vpop.f32.mrb[0].mxu0
      %v2653 = vadd.f32 %v2489, %v2652
      %v2654 = vpop.f32.mrb[0].mxu0
      %v2655 = vpop.f32.mrb[0].mxu0
      %v2656 = vadd.f32 %v2492, %v2655
      %v2657 = vpop.f32.mrb[0].mxu0
      %2658 = vmatprep.mubr.bf16.mxu0 0
      %2659 = vmatmul.mubr.bf16.gmra.mrb[0].mxu0 %v830
      %v2660 = vpop.f32.mrb[0].mxu0
      %v2661 = vadd.f32 %v2497, %v2660
      %v2662 = vpop.f32.mrb[0].mxu0
      %v2663 = vpop.f32.mrb[0].mxu0
      %v2664 = vadd.f32 %v2500, %v2663
      %v2665 = vpop.f32.mrb[0].mxu0
      %2666 = vmatprep.mubr.bf16.mxu0 0
      %2667 = vmatmul.mubr.bf16.gmra.mrb[0].mxu0 %v832
      %v2668 = vpop.f32.mrb[0].mxu0
      %v2669 = vadd.f32 %v2505, %v2668
      %v2670 = vpop.f32.mrb[0].mxu0
      %v2671 = vpop.f32.mrb[0].mxu0
      %v2672 = vadd.f32 %v2508, %v2671
      %v2673 = vpop.f32.mrb[0].mxu0
      %2674 = vmatprep.mubr.bf16.mxu0 0
      %2675 = vmatmul.mubr.bf16.gmra.mrb[0].mxu0 %v834
      %v2676 = vpop.f32.mrb[0].mxu0
      %v2677 = vadd.f32 %v2513, %v2676
      %v2678 = vpop.f32.mrb[0].mxu0
      %v2679 = vpop.f32.mrb[0].mxu0
      %v2680 = vadd.f32 %v2516, %v2679
      %v2681 = vpop.f32.mrb[0].mxu0
      %2682 = vmatprep.mubr.bf16.mxu0 0
      %2683 = vmatmul.mubr.bf16.gmra.mrb[0].mxu0 %v836
      %v2684 = vpop.f32.mrb[0].mxu0
      %v2685 = vadd.f32 %v2521, %v2684
      %v2686 = vpop.f32.mrb[0].mxu0
      %v2687 = vpop.f32.mrb[0].mxu0
      %v2688 = vadd.f32 %v2524, %v2687
      %v2689 = vpop.f32.mrb[0].mxu0
      %2690 = vmatprep.mubr.bf16.mxu0 0
      %2691 = vmatmul.mubr.bf16.gmra.mrb[0].mxu0 %v838
      %v2692 = vpop.f32.mrb[0].mxu0
      %v2693 = vadd.f32 %v2529, %v2692
      %v2694 = vpop.f32.mrb[0].mxu0
      %v2695 = vpop.f32.mrb[0].mxu0
      %v2696 = vadd.f32 %v2532, %v2695
      %v2697 = vpop.f32.mrb[0].mxu0
      %2698 = vmatprep.mubr.bf16.mxu0 0
      %2699 = vmatmul.mubr.bf16.gmra.mrb[0].mxu0 %v840
      %v2700 = vpop.f32.mrb[0].mxu0
      %v2701 = vadd.f32 %v2537, %v2700
      %v2702 = vpop.f32.mrb[0].mxu0
      %v2703 = vpop.f32.mrb[0].mxu0
      %v2704 = vadd.f32 %v2540, %v2703
      %v2705 = vpop.f32.mrb[0].mxu0
      %2706 = vmatprep.mubr.bf16.mxu0 0
      %2707 = vmatmul.mubr.bf16.gmra.mrb[0].mxu0 %v842
      %v2708 = vpop.f32.mrb[0].mxu0
      %v2709 = vadd.f32 %v2545, %v2708
      %v2710 = vpop.f32.mrb[0].mxu0
      %v2711 = vpop.f32.mrb[0].mxu0
      %v2712 = vadd.f32 %v2548, %v2711
      %v2713 = vpop.f32.mrb[0].mxu0
      %2714 = vmatprep.mubr.bf16.mxu0 0
      %2715 = vmatmul.mubr.bf16.gmra.mrb[0].mxu0 %v844
      %v2716 = vpop.f32.mrb[0].mxu0
      %v2717 = vadd.f32 %v2553, %v2716
      %v2718 = vpop.f32.mrb[0].mxu0
      %v2719 = vpop.f32.mrb[0].mxu0
      %v2720 = vadd.f32 %v2556, %v2719
      %v2721 = vpop.f32.mrb[0].mxu0
      %2722 = vmatprep.mubr.bf16.mxu0 0
      %2723 = vmatmul.mubr.bf16.gmra.mrb[0].mxu0 %v846
      %v2724 = vpop.f32.mrb[0].mxu0
      %v2725 = vadd.f32 %v2561, %v2724
      %v2726 = vpop.f32.mrb[0].mxu0
      %v2727 = vpop.f32.mrb[0].mxu0
      %v2728 = vadd.f32 %v2564, %v2727
      %v2729 = vpop.f32.mrb[0].mxu0
      %2730 = vmatprep.mubr.bf16.mxu0 0
      %2731 = vmatmul.mubr.bf16.gmra.mrb[0].mxu0 %v848
      %v2732 = vpop.f32.mrb[0].mxu0
      %v2733 = vadd.f32 %v2569, %v2732
      %v2734 = vpop.f32.mrb[0].mxu0
      %v2735 = vpop.f32.mrb[0].mxu0
      %v2736 = vadd.f32 %v2572, %v2735
      %v2737 = vpop.f32.mrb[0].mxu0
      %2738 = vmatprep.mubr.bf16.mxu0 0
      %2739 = vmatmul.mubr.bf16.gmra.mrb[0].mxu0 %v850
      %v2740 = vpop.f32.mrb[0].mxu0
      %v2741 = vadd.f32 %v2577, %v2740
      %v2742 = vpop.f32.mrb[0].mxu0
      %v2743 = vpop.f32.mrb[0].mxu0
      %v2744 = vadd.f32 %v2580, %v2743
      %v2745 = vpop.f32.mrb[0].mxu0
      %2746 = vmatprep.mubr.bf16.mxu0 0
      %2747 = vmatmul.mubr.bf16.gmra.mrb[0].mxu0 %v852
      %v2748 = vpop.f32.mrb[0].mxu0
      %v2749 = vadd.f32 %v2585, %v2748
      %v2750 = vpop.f32.mrb[0].mxu0
      %v2751 = vpop.f32.mrb[0].mxu0
      %v2752 = vadd.f32 %v2588, %v2751
      %v2753 = vpop.f32.mrb[0].mxu0
      %2754 = vmatprep.mubr.bf16.mxu0 0
      %2755 = vmatmul.mubr.bf16.gmra.mrb[0].mxu0 %v1021
      %v2756 = vpop.f32.mrb[0].mxu0
      %v2757 = vadd.f32 %v2593, %v2756
      %v2758 = vpop.f32.mrb[0].mxu0
      %v2759 = vpop.f32.mrb[0].mxu0
      %v2760 = vadd.f32 %v2596, %v2759
      %v2761 = vpop.f32.mrb[0].mxu0
      %2762 = vdwg.mxu0
      %s2763 = scalar_lea.vmem %s2, 20
      %v2764 = vld [vmem:[%s2763] sm:$0x3]
      %v2766 = vsel %vm608, %v392, 0
      %v2769 = vsel %vm657, %v2764, 0
      %2771 = vmatprep.subr.bf16.mxu0 0
      %2772 = vmatpush1.bf16.msra.mxu0 %v2769
      %2773 = vmatprep.subr.bf16.mxu0 0
      %2774 = vmatpush1.bf16.msra.mxu0 0
      %2775 = vmatprep.subr.bf16.mxu0 0
      %2776 = vmatpush1.bf16.msra.mxu0 0
      %2777 = vmatprep.subr.bf16.mxu0 0
      %2778 = vmatpush1.bf16.msra.mxu0 0
      %2779 = vmatprep.subr.bf16.mxu0 0
      %2780 = vmatpush1.bf16.msra.mxu0 0
      %2781 = vmatprep.subr.bf16.mxu0 0
      %2782 = vmatpush1.bf16.msra.mxu0 0
      %2783 = vmatprep.subr.bf16.mxu0 0
      %2784 = vmatpush1.bf16.msra.mxu0 0
      %2785 = vmatprep.subr.bf16.mxu0 0
      %2786 = vmatpush1.bf16.msra.mxu0 0
      %2787 = vmatprep.subr.bf16.mxu0 0
      %2788 = vmatpush1.bf16.msra.mxu0 0
      %2789 = vmatprep.subr.bf16.mxu0 0
      %2790 = vmatpush1.bf16.msra.mxu0 0
      %2791 = vmatprep.subr.bf16.mxu0 0
      %2792 = vmatpush1.bf16.msra.mxu0 0
      %2793 = vmatprep.subr.bf16.mxu0 0
      %2794 = vmatpush1.bf16.msra.mxu0 0
      %2795 = vmatprep.subr.bf16.mxu0 0
      %2796 = vmatpush1.bf16.msra.mxu0 0
      %2797 = vmatprep.subr.bf16.mxu0 0
      %2798 = vmatpush1.bf16.msra.mxu0 0
      %2799 = vmatprep.subr.bf16.mxu0 0
      %2800 = vmatpush1.bf16.msra.mxu0 0
      %2801 = vmatprep.subr.bf16.mxu0 0
      %2802 = vmatpush1.bf16.msra.mxu0 0
      %2803 = vmatprep.mubr.bf16.mxu0 0
      %2804 = vmatmul.mubr.bf16.gmra.mrb[0].mxu0 %v826
      %v2805 = vpop.f32.mrb[0].mxu0
      %v2806 = vadd.f32 0.0, %v2805
      %v2807 = vpop.f32.mrb[0].mxu0
      %v2808 = vpop.f32.mrb[0].mxu0
      %v2809 = vadd.f32 0.0, %v2808
      %v2810 = vpop.f32.mrb[0].mxu0
      %2811 = vmatprep.mubr.bf16.mxu0 0
      %2812 = vmatmul.mubr.bf16.gmra.mrb[0].mxu0 %v828
      %v2813 = vpop.f32.mrb[0].mxu0
      %v2814 = vadd.f32 0.0, %v2813
      %v2815 = vpop.f32.mrb[0].mxu0
      %v2816 = vpop.f32.mrb[0].mxu0
      %v2817 = vadd.f32 0.0, %v2816
      %v2818 = vpop.f32.mrb[0].mxu0
      %2819 = vmatprep.mubr.bf16.mxu0 0
      %2820 = vmatmul.mubr.bf16.gmra.mrb[0].mxu0 %v830
      %v2821 = vpop.f32.mrb[0].mxu0
      %v2822 = vadd.f32 0.0, %v2821
      %v2823 = vpop.f32.mrb[0].mxu0
      %v2824 = vpop.f32.mrb[0].mxu0
      %v2825 = vadd.f32 0.0, %v2824
      %v2826 = vpop.f32.mrb[0].mxu0
      %2827 = vmatprep.mubr.bf16.mxu0 0
      %2828 = vmatmul.mubr.bf16.gmra.mrb[0].mxu0 %v832
      %v2829 = vpop.f32.mrb[0].mxu0
      %v2830 = vadd.f32 0.0, %v2829
      %v2831 = vpop.f32.mrb[0].mxu0
      %v2832 = vpop.f32.mrb[0].mxu0
      %v2833 = vadd.f32 0.0, %v2832
      %v2834 = vpop.f32.mrb[0].mxu0
      %2835 = vmatprep.mubr.bf16.mxu0 0
      %2836 = vmatmul.mubr.bf16.gmra.mrb[0].mxu0 %v834
      %v2837 = vpop.f32.mrb[0].mxu0
      %v2838 = vadd.f32 0.0, %v2837
      %v2839 = vpop.f32.mrb[0].mxu0
      %v2840 = vpop.f32.mrb[0].mxu0
      %v2841 = vadd.f32 0.0, %v2840
      %v2842 = vpop.f32.mrb[0].mxu0
      %2843 = vmatprep.mubr.bf16.mxu0 0
      %2844 = vmatmul.mubr.bf16.gmra.mrb[0].mxu0 %v836
      %v2845 = vpop.f32.mrb[0].mxu0
      %v2846 = vadd.f32 0.0, %v2845
      %v2847 = vpop.f32.mrb[0].mxu0
      %v2848 = vpop.f32.mrb[0].mxu0
      %v2849 = vadd.f32 0.0, %v2848
      %v2850 = vpop.f32.mrb[0].mxu0
      %2851 = vmatprep.mubr.bf16.mxu0 0
      %2852 = vmatmul.mubr.bf16.gmra.mrb[0].mxu0 %v838
      %v2853 = vpop.f32.mrb[0].mxu0
      %v2854 = vadd.f32 0.0, %v2853
      %v2855 = vpop.f32.mrb[0].mxu0
      %v2856 = vpop.f32.mrb[0].mxu0
      %v2857 = vadd.f32 0.0, %v2856
      %v2858 = vpop.f32.mrb[0].mxu0
      %2859 = vmatprep.mubr.bf16.mxu0 0
      %2860 = vmatmul.mubr.bf16.gmra.mrb[0].mxu0 %v840
      %v2861 = vpop.f32.mrb[0].mxu0
      %v2862 = vadd.f32 0.0, %v2861
      %v2863 = vpop.f32.mrb[0].mxu0
      %v2864 = vpop.f32.mrb[0].mxu0
      %v2865 = vadd.f32 0.0, %v2864
      %v2866 = vpop.f32.mrb[0].mxu0
      %2867 = vmatprep.mubr.bf16.mxu0 0
      %2868 = vmatmul.mubr.bf16.gmra.mrb[0].mxu0 %v842
      %v2869 = vpop.f32.mrb[0].mxu0
      %v2870 = vadd.f32 0.0, %v2869
      %v2871 = vpop.f32.mrb[0].mxu0
      %v2872 = vpop.f32.mrb[0].mxu0
      %v2873 = vadd.f32 0.0, %v2872
      %v2874 = vpop.f32.mrb[0].mxu0
      %2875 = vmatprep.mubr.bf16.mxu0 0
      %2876 = vmatmul.mubr.bf16.gmra.mrb[0].mxu0 %v844
      %v2877 = vpop.f32.mrb[0].mxu0
      %v2878 = vadd.f32 0.0, %v2877
      %v2879 = vpop.f32.mrb[0].mxu0
      %v2880 = vpop.f32.mrb[0].mxu0
      %v2881 = vadd.f32 0.0, %v2880
      %v2882 = vpop.f32.mrb[0].mxu0
      %2883 = vmatprep.mubr.bf16.mxu0 0
      %2884 = vmatmul.mubr.bf16.gmra.mrb[0].mxu0 %v846
      %v2885 = vpop.f32.mrb[0].mxu0
      %v2886 = vadd.f32 0.0, %v2885
      %v2887 = vpop.f32.mrb[0].mxu0
      %v2888 = vpop.f32.mrb[0].mxu0
      %v2889 = vadd.f32 0.0, %v2888
      %v2890 = vpop.f32.mrb[0].mxu0
      %2891 = vmatprep.mubr.bf16.mxu0 0
      %2892 = vmatmul.mubr.bf16.gmra.mrb[0].mxu0 %v848
      %v2893 = vpop.f32.mrb[0].mxu0
      %v2894 = vadd.f32 0.0, %v2893
      %v2895 = vpop.f32.mrb[0].mxu0
      %v2896 = vpop.f32.mrb[0].mxu0
      %v2897 = vadd.f32 0.0, %v2896
      %v2898 = vpop.f32.mrb[0].mxu0
      %2899 = vmatprep.mubr.bf16.mxu0 0
      %2900 = vmatmul.mubr.bf16.gmra.mrb[0].mxu0 %v850
      %v2901 = vpop.f32.mrb[0].mxu0
      %v2902 = vadd.f32 0.0, %v2901
      %v2903 = vpop.f32.mrb[0].mxu0
      %v2904 = vpop.f32.mrb[0].mxu0
      %v2905 = vadd.f32 0.0, %v2904
      %v2906 = vpop.f32.mrb[0].mxu0
      %2907 = vmatprep.mubr.bf16.mxu0 0
      %2908 = vmatmul.mubr.bf16.gmra.mrb[0].mxu0 %v852
      %v2909 = vpop.f32.mrb[0].mxu0
      %v2910 = vadd.f32 0.0, %v2909
      %v2911 = vpop.f32.mrb[0].mxu0
      %v2912 = vpop.f32.mrb[0].mxu0
      %v2913 = vadd.f32 0.0, %v2912
      %v2914 = vpop.f32.mrb[0].mxu0
      %2915 = vmatprep.mubr.bf16.mxu0 0
      %2916 = vmatmul.mubr.bf16.gmra.mrb[0].mxu0 %v1021
      %v2917 = vpop.f32.mrb[0].mxu0
      %v2918 = vadd.f32 0.0, %v2917
      %v2919 = vpop.f32.mrb[0].mxu0
      %v2920 = vpop.f32.mrb[0].mxu0
      %v2921 = vadd.f32 0.0, %v2920
      %v2922 = vpop.f32.mrb[0].mxu0
      %2923 = vmatprep.mubr.bf16.mxu0 0
      %2924 = vmatmul.mubr.bf16.gmra.mrb[0].mxu0 %v2766
      %v2925 = vpop.f32.mrb[0].mxu0
      %v2926 = vadd.f32 0.0, %v2925
      %v2927 = vpop.f32.mrb[0].mxu0
      %v2928 = vpop.f32.mrb[0].mxu0
      %v2929 = vadd.f32 0.0, %v2928
      %v2930 = vpop.f32.mrb[0].mxu0
      %2931 = vdwg.mxu0
      %v2932 = vadd.f32 %v2637, %v2806
      %v2933 = vadd.f32 %v2640, %v2809
      %v2934 = vadd.f32 %v2645, %v2814
      %v2935 = vadd.f32 %v2648, %v2817
      %v2936 = vadd.f32 %v2653, %v2822
      %v2937 = vadd.f32 %v2656, %v2825
      %v2938 = vadd.f32 %v2661, %v2830
      %v2939 = vadd.f32 %v2664, %v2833
      %v2940 = vadd.f32 %v2669, %v2838
      %v2941 = vadd.f32 %v2672, %v2841
      %v2942 = vadd.f32 %v2677, %v2846
      %v2943 = vadd.f32 %v2680, %v2849
      %v2944 = vadd.f32 %v2685, %v2854
      %v2945 = vadd.f32 %v2688, %v2857
      %v2946 = vadd.f32 %v2693, %v2862
      %v2947 = vadd.f32 %v2696, %v2865
      %v2948 = vadd.f32 %v2701, %v2870
      %v2949 = vadd.f32 %v2704, %v2873
      %v2950 = vadd.f32 %v2709, %v2878
      %v2951 = vadd.f32 %v2712, %v2881
      %v2952 = vadd.f32 %v2717, %v2886
      %v2953 = vadd.f32 %v2720, %v2889
      %v2954 = vadd.f32 %v2725, %v2894
      %v2955 = vadd.f32 %v2728, %v2897
      %v2956 = vadd.f32 %v2733, %v2902
      %v2957 = vadd.f32 %v2736, %v2905
      %v2958 = vadd.f32 %v2741, %v2910
      %v2959 = vadd.f32 %v2744, %v2913
      %v2960 = vadd.f32 %v2749, %v2918
      %v2961 = vadd.f32 %v2752, %v2921
      %v2962 = vadd.f32 %v2757, %v2926
      %v2963 = vadd.f32 %v2760, %v2929
      %s2964 = scalar_lea.vmem %s2, 22
      %v2965 = vld [vmem:[%s2964] sm:$0x3]
      %v2966 = vshrl.u32 %v392, 16
      %v2968 = vshll.u32 %v392, 16
      %v2970 = vrot.slane %v2968, 1
      %v2971 = vor.u32 %v2966, %v2970
      %v2973 = vshll.u32 %v410, 16
      %v2975 = vrot.slane %v2973, 1
      %v2976 = vsel %vm415, %v2971, %v2975
      %v2978 = vsel %vm608, %v2976, 0
      %v2981 = vsel %vm657, %v2965, 0
      %2983 = vmatprep.subr.bf16.mxu0 0
      %2984 = vmatpush1.bf16.msra.mxu0 %v2981
      %2985 = vmatprep.subr.bf16.mxu0 0
      %2986 = vmatpush1.bf16.msra.mxu0 0
      %2987 = vmatprep.subr.bf16.mxu0 0
      %2988 = vmatpush1.bf16.msra.mxu0 0
      %2989 = vmatprep.subr.bf16.mxu0 0
      %2990 = vmatpush1.bf16.msra.mxu0 0
      %2991 = vmatprep.subr.bf16.mxu0 0
      %2992 = vmatpush1.bf16.msra.mxu0 0
      %2993 = vmatprep.subr.bf16.mxu0 0
      %2994 = vmatpush1.bf16.msra.mxu0 0
      %2995 = vmatprep.subr.bf16.mxu0 0
      %2996 = vmatpush1.bf16.msra.mxu0 0
      %2997 = vmatprep.subr.bf16.mxu0 0
      %2998 = vmatpush1.bf16.msra.mxu0 0
      %2999 = vmatprep.subr.bf16.mxu0 0
      %3000 = vmatpush1.bf16.msra.mxu0 0
      %3001 = vmatprep.subr.bf16.mxu0 0
      %3002 = vmatpush1.bf16.msra.mxu0 0
      %3003 = vmatprep.subr.bf16.mxu0 0
      %3004 = vmatpush1.bf16.msra.mxu0 0
      %3005 = vmatprep.subr.bf16.mxu0 0
      %3006 = vmatpush1.bf16.msra.mxu0 0
      %3007 = vmatprep.subr.bf16.mxu0 0
      %3008 = vmatpush1.bf16.msra.mxu0 0
      %3009 = vmatprep.subr.bf16.mxu0 0
      %3010 = vmatpush1.bf16.msra.mxu0 0
      %3011 = vmatprep.subr.bf16.mxu0 0
      %3012 = vmatpush1.bf16.msra.mxu0 0
      %3013 = vmatprep.subr.bf16.mxu0 0
      %3014 = vmatpush1.bf16.msra.mxu0 0
      %3015 = vmatprep.mubr.bf16.mxu0 0
      %3016 = vmatmul.mubr.bf16.gmra.mrb[0].mxu0 %v616
      %v3017 = vpop.f32.mrb[0].mxu0
      %v3018 = vadd.f32 0.0, %v3017
      %v3019 = vpop.f32.mrb[0].mxu0
      %v3020 = vpop.f32.mrb[0].mxu0
      %v3021 = vadd.f32 0.0, %v3020
      %v3022 = vpop.f32.mrb[0].mxu0
      %3023 = vmatprep.mubr.bf16.mxu0 0
      %3024 = vmatmul.mubr.bf16.gmra.mrb[0].mxu0 %v619
      %v3025 = vpop.f32.mrb[0].mxu0
      %v3026 = vadd.f32 0.0, %v3025
      %v3027 = vpop.f32.mrb[0].mxu0
      %v3028 = vpop.f32.mrb[0].mxu0
      %v3029 = vadd.f32 0.0, %v3028
      %v3030 = vpop.f32.mrb[0].mxu0
      %3031 = vmatprep.mubr.bf16.mxu0 0
      %3032 = vmatmul.mubr.bf16.gmra.mrb[0].mxu0 %v622
      %v3033 = vpop.f32.mrb[0].mxu0
      %v3034 = vadd.f32 0.0, %v3033
      %v3035 = vpop.f32.mrb[0].mxu0
      %v3036 = vpop.f32.mrb[0].mxu0
      %v3037 = vadd.f32 0.0, %v3036
      %v3038 = vpop.f32.mrb[0].mxu0
      %3039 = vmatprep.mubr.bf16.mxu0 0
      %3040 = vmatmul.mubr.bf16.gmra.mrb[0].mxu0 %v625
      %v3041 = vpop.f32.mrb[0].mxu0
      %v3042 = vadd.f32 0.0, %v3041
      %v3043 = vpop.f32.mrb[0].mxu0
      %v3044 = vpop.f32.mrb[0].mxu0
      %v3045 = vadd.f32 0.0, %v3044
      %v3046 = vpop.f32.mrb[0].mxu0
      %3047 = vmatprep.mubr.bf16.mxu0 0
      %3048 = vmatmul.mubr.bf16.gmra.mrb[0].mxu0 %v628
      %v3049 = vpop.f32.mrb[0].mxu0
      %v3050 = vadd.f32 0.0, %v3049
      %v3051 = vpop.f32.mrb[0].mxu0
      %v3052 = vpop.f32.mrb[0].mxu0
      %v3053 = vadd.f32 0.0, %v3052
      %v3054 = vpop.f32.mrb[0].mxu0
      %3055 = vmatprep.mubr.bf16.mxu0 0
      %3056 = vmatmul.mubr.bf16.gmra.mrb[0].mxu0 %v631
      %v3057 = vpop.f32.mrb[0].mxu0
      %v3058 = vadd.f32 0.0, %v3057
      %v3059 = vpop.f32.mrb[0].mxu0
      %v3060 = vpop.f32.mrb[0].mxu0
      %v3061 = vadd.f32 0.0, %v3060
      %v3062 = vpop.f32.mrb[0].mxu0
      %3063 = vmatprep.mubr.bf16.mxu0 0
      %3064 = vmatmul.mubr.bf16.gmra.mrb[0].mxu0 %v634
      %v3065 = vpop.f32.mrb[0].mxu0
      %v3066 = vadd.f32 0.0, %v3065
      %v3067 = vpop.f32.mrb[0].mxu0
      %v3068 = vpop.f32.mrb[0].mxu0
      %v3069 = vadd.f32 0.0, %v3068
      %v3070 = vpop.f32.mrb[0].mxu0
      %3071 = vmatprep.mubr.bf16.mxu0 0
      %3072 = vmatmul.mubr.bf16.gmra.mrb[0].mxu0 %v637
      %v3073 = vpop.f32.mrb[0].mxu0
      %v3074 = vadd.f32 0.0, %v3073
      %v3075 = vpop.f32.mrb[0].mxu0
      %v3076 = vpop.f32.mrb[0].mxu0
      %v3077 = vadd.f32 0.0, %v3076
      %v3078 = vpop.f32.mrb[0].mxu0
      %3079 = vmatprep.mubr.bf16.mxu0 0
      %3080 = vmatmul.mubr.bf16.gmra.mrb[0].mxu0 %v640
      %v3081 = vpop.f32.mrb[0].mxu0
      %v3082 = vadd.f32 0.0, %v3081
      %v3083 = vpop.f32.mrb[0].mxu0
      %v3084 = vpop.f32.mrb[0].mxu0
      %v3085 = vadd.f32 0.0, %v3084
      %v3086 = vpop.f32.mrb[0].mxu0
      %3087 = vmatprep.mubr.bf16.mxu0 0
      %3088 = vmatmul.mubr.bf16.gmra.mrb[0].mxu0 %v643
      %v3089 = vpop.f32.mrb[0].mxu0
      %v3090 = vadd.f32 0.0, %v3089
      %v3091 = vpop.f32.mrb[0].mxu0
      %v3092 = vpop.f32.mrb[0].mxu0
      %v3093 = vadd.f32 0.0, %v3092
      %v3094 = vpop.f32.mrb[0].mxu0
      %3095 = vmatprep.mubr.bf16.mxu0 0
      %3096 = vmatmul.mubr.bf16.gmra.mrb[0].mxu0 %v646
      %v3097 = vpop.f32.mrb[0].mxu0
      %v3098 = vadd.f32 0.0, %v3097
      %v3099 = vpop.f32.mrb[0].mxu0
      %v3100 = vpop.f32.mrb[0].mxu0
      %v3101 = vadd.f32 0.0, %v3100
      %v3102 = vpop.f32.mrb[0].mxu0
      %3103 = vmatprep.mubr.bf16.mxu0 0
      %3104 = vmatmul.mubr.bf16.gmra.mrb[0].mxu0 %v649
      %v3105 = vpop.f32.mrb[0].mxu0
      %v3106 = vadd.f32 0.0, %v3105
      %v3107 = vpop.f32.mrb[0].mxu0
      %v3108 = vpop.f32.mrb[0].mxu0
      %v3109 = vadd.f32 0.0, %v3108
      %v3110 = vpop.f32.mrb[0].mxu0
      %3111 = vmatprep.mubr.bf16.mxu0 0
      %3112 = vmatmul.mubr.bf16.gmra.mrb[0].mxu0 %v652
      %v3113 = vpop.f32.mrb[0].mxu0
      %v3114 = vadd.f32 0.0, %v3113
      %v3115 = vpop.f32.mrb[0].mxu0
      %v3116 = vpop.f32.mrb[0].mxu0
      %v3117 = vadd.f32 0.0, %v3116
      %v3118 = vpop.f32.mrb[0].mxu0
      %3119 = vmatprep.mubr.bf16.mxu0 0
      %3120 = vmatmul.mubr.bf16.gmra.mrb[0].mxu0 %v655
      %v3121 = vpop.f32.mrb[0].mxu0
      %v3122 = vadd.f32 0.0, %v3121
      %v3123 = vpop.f32.mrb[0].mxu0
      %v3124 = vpop.f32.mrb[0].mxu0
      %v3125 = vadd.f32 0.0, %v3124
      %v3126 = vpop.f32.mrb[0].mxu0
      %3127 = vmatprep.mubr.bf16.mxu0 0
      %3128 = vmatmul.mubr.bf16.gmra.mrb[0].mxu0 %v1233
      %v3129 = vpop.f32.mrb[0].mxu0
      %v3130 = vadd.f32 0.0, %v3129
      %v3131 = vpop.f32.mrb[0].mxu0
      %v3132 = vpop.f32.mrb[0].mxu0
      %v3133 = vadd.f32 0.0, %v3132
      %v3134 = vpop.f32.mrb[0].mxu0
      %3135 = vmatprep.mubr.bf16.mxu0 0
      %3136 = vmatmul.mubr.bf16.gmra.mrb[0].mxu0 %v2978
      %v3137 = vpop.f32.mrb[0].mxu0
      %v3138 = vadd.f32 0.0, %v3137
      %v3139 = vpop.f32.mrb[0].mxu0
      %v3140 = vpop.f32.mrb[0].mxu0
      %v3141 = vadd.f32 0.0, %v3140
      %v3142 = vpop.f32.mrb[0].mxu0
      %3143 = vdwg.mxu0
      %v3144 = vadd.f32 %v2932, %v3018
      %v3145 = vadd.f32 %v2933, %v3021
      %v3146 = vadd.f32 %v2934, %v3026
      %v3147 = vadd.f32 %v2935, %v3029
      %v3148 = vadd.f32 %v2936, %v3034
      %v3149 = vadd.f32 %v2937, %v3037
      %v3150 = vadd.f32 %v2938, %v3042
      %v3151 = vadd.f32 %v2939, %v3045
      %v3152 = vadd.f32 %v2940, %v3050
      %v3153 = vadd.f32 %v2941, %v3053
      %v3154 = vadd.f32 %v2942, %v3058
      %v3155 = vadd.f32 %v2943, %v3061
      %v3156 = vadd.f32 %v2944, %v3066
      %v3157 = vadd.f32 %v2945, %v3069
      %v3158 = vadd.f32 %v2946, %v3074
      %v3159 = vadd.f32 %v2947, %v3077
      %v3160 = vadd.f32 %v2948, %v3082
      %v3161 = vadd.f32 %v2949, %v3085
      %v3162 = vadd.f32 %v2950, %v3090
      %v3163 = vadd.f32 %v2951, %v3093
      %v3164 = vadd.f32 %v2952, %v3098
      %v3165 = vadd.f32 %v2953, %v3101
      %v3166 = vadd.f32 %v2954, %v3106
      %v3167 = vadd.f32 %v2955, %v3109
      %v3168 = vadd.f32 %v2956, %v3114
      %v3169 = vadd.f32 %v2957, %v3117
      %v3170 = vadd.f32 %v2958, %v3122
      %v3171 = vadd.f32 %v2959, %v3125
      %v3172 = vadd.f32 %v2960, %v3130
      %v3173 = vadd.f32 %v2961, %v3133
      %v3174 = vadd.f32 %v2962, %v3138
      %v3175 = vadd.f32 %v2963, %v3141
      %v3176 = vadd.f32 %v3144, %v1435
      %v3177 = vadd.f32 %v3145, %v1435
      %v3178 = vadd.f32 %v3146, %v1435
      %v3179 = vadd.f32 %v3147, %v1435
      %v3180 = vadd.f32 %v3148, %v1435
      %v3181 = vadd.f32 %v3149, %v1435
      %v3182 = vadd.f32 %v3150, %v1435
      %v3183 = vadd.f32 %v3151, %v1435
      %v3184 = vadd.f32 %v3152, %v1435
      %v3185 = vadd.f32 %v3153, %v1435
      %v3186 = vadd.f32 %v3154, %v1435
      %v3187 = vadd.f32 %v3155, %v1435
      %v3188 = vadd.f32 %v3156, %v1435
      %v3189 = vadd.f32 %v3157, %v1435
      %v3190 = vadd.f32 %v3158, %v1435
      %v3191 = vadd.f32 %v3159, %v1435
      %v3192 = vadd.f32 %v3160, %v1435
      %v3193 = vadd.f32 %v3161, %v1435
      %v3194 = vadd.f32 %v3162, %v1435
      %v3195 = vadd.f32 %v3163, %v1435
      %v3196 = vadd.f32 %v3164, %v1435
      %v3197 = vadd.f32 %v3165, %v1435
      %v3198 = vadd.f32 %v3166, %v1435
      %v3199 = vadd.f32 %v3167, %v1435
      %v3200 = vadd.f32 %v3168, %v1435
      %v3201 = vadd.f32 %v3169, %v1435
      %v3202 = vadd.f32 %v3170, %v1435
      %v3203 = vadd.f32 %v3171, %v1435
      %v3204 = vadd.f32 %v3172, %v1435
      %v3205 = vadd.f32 %v3173, %v1435
      %v3206 = vadd.f32 %v3174, %v1435
      %v3207 = vadd.f32 %v3175, %v1435
      %s3208 = scalar_lea.vmem %s318, 512
      %3209 = vst.msk [vmem:[%s3208] sm:$0xff] %vm608, %v3176
      %3210 = vst.msk [vmem:[%s3208 + $0x8] sm:$0xff] %vm608, %v3177
      %3211 = vst.msk [vmem:[%s3208 + $0x10] sm:$0xff] %vm608, %v3178
      %3212 = vst.msk [vmem:[%s3208 + $0x18] sm:$0xff] %vm608, %v3179
      %3213 = vst.msk [vmem:[%s3208 + $0x20] sm:$0xff] %vm608, %v3180
      %3214 = vst.msk [vmem:[%s3208 + $0x28] sm:$0xff] %vm608, %v3181
      %3215 = vst.msk [vmem:[%s3208 + $0x30] sm:$0xff] %vm608, %v3182
      %3216 = vst.msk [vmem:[%s3208 + $0x38] sm:$0xff] %vm608, %v3183
      %3217 = vst.msk [vmem:[%s3208 + $0x40] sm:$0xff] %vm608, %v3184
      %3218 = vst.msk [vmem:[%s3208 + $0x48] sm:$0xff] %vm608, %v3185
      %3219 = vst.msk [vmem:[%s3208 + $0x50] sm:$0xff] %vm608, %v3186
      %3220 = vst.msk [vmem:[%s3208 + $0x58] sm:$0xff] %vm608, %v3187
      %3221 = vst.msk [vmem:[%s3208 + $0x60] sm:$0xff] %vm608, %v3188
      %3222 = vst.msk [vmem:[%s3208 + $0x68] sm:$0xff] %vm608, %v3189
      %3223 = vst.msk [vmem:[%s3208 + $0x70] sm:$0xff] %vm608, %v3190
      %3224 = vst.msk [vmem:[%s3208 + $0x78] sm:$0xff] %vm608, %v3191
      %3225 = vst.msk [vmem:[%s3208 + $0x80] sm:$0xff] %vm608, %v3192
      %3226 = vst.msk [vmem:[%s3208 + $0x88] sm:$0xff] %vm608, %v3193
      %3227 = vst.msk [vmem:[%s3208 + $0x90] sm:$0xff] %vm608, %v3194
      %3228 = vst.msk [vmem:[%s3208 + $0x98] sm:$0xff] %vm608, %v3195
      %3229 = vst.msk [vmem:[%s3208 + $0xa0] sm:$0xff] %vm608, %v3196
      %3230 = vst.msk [vmem:[%s3208 + $0xa8] sm:$0xff] %vm608, %v3197
      %3231 = vst.msk [vmem:[%s3208 + $0xb0] sm:$0xff] %vm608, %v3198
      %3232 = vst.msk [vmem:[%s3208 + $0xb8] sm:$0xff] %vm608, %v3199
      %3233 = vst.msk [vmem:[%s3208 + $0xc0] sm:$0xff] %vm608, %v3200
      %3234 = vst.msk [vmem:[%s3208 + $0xc8] sm:$0xff] %vm608, %v3201
      %3235 = vst.msk [vmem:[%s3208 + $0xd0] sm:$0xff] %vm608, %v3202
      %3236 = vst.msk [vmem:[%s3208 + $0xd8] sm:$0xff] %vm608, %v3203
      %3237 = vst.msk [vmem:[%s3208 + $0xe0] sm:$0xff] %vm608, %v3204
      %3238 = vst.msk [vmem:[%s3208 + $0xe8] sm:$0xff] %vm608, %v3205
      %3239 = vst.msk [vmem:[%s3208 + $0xf0] sm:$0xff] %vm608, %v3206
      %3240 = vst.msk [vmem:[%s3208 + $0xf8] sm:$0xff] %vm608, %v3207
      %s3241 = scalar_lea.vmem %s2, 24
      %v3242 = vld [vmem:[%s3241] sm:$0x3]
      %s3243 = scalar_lea.vmem %s2, 26
      %v3244 = vld [vmem:[%s3243] sm:$0x3]
      %v3246 = vsel %vm657, %v3244, 0
      %3248 = vmatprep.subr.bf16.mxu0 0
      %3249 = vmatpush1.bf16.msra.mxu0 %v3246
      %3250 = vmatprep.subr.bf16.mxu0 0
      %3251 = vmatpush1.bf16.msra.mxu0 0
      %3252 = vmatprep.subr.bf16.mxu0 0
      %3253 = vmatpush1.bf16.msra.mxu0 0
      %3254 = vmatprep.subr.bf16.mxu0 0
      %3255 = vmatpush1.bf16.msra.mxu0 0
      %3256 = vmatprep.subr.bf16.mxu0 0
      %3257 = vmatpush1.bf16.msra.mxu0 0
      %3258 = vmatprep.subr.bf16.mxu0 0
      %3259 = vmatpush1.bf16.msra.mxu0 0
      %3260 = vmatprep.subr.bf16.mxu0 0
      %3261 = vmatpush1.bf16.msra.mxu0 0
      %3262 = vmatprep.subr.bf16.mxu0 0
      %3263 = vmatpush1.bf16.msra.mxu0 0
      %3264 = vmatprep.subr.bf16.mxu0 0
      %3265 = vmatpush1.bf16.msra.mxu0 0
      %3266 = vmatprep.subr.bf16.mxu0 0
      %3267 = vmatpush1.bf16.msra.mxu0 0
      %3268 = vmatprep.subr.bf16.mxu0 0
      %3269 = vmatpush1.bf16.msra.mxu0 0
      %3270 = vmatprep.subr.bf16.mxu0 0
      %3271 = vmatpush1.bf16.msra.mxu0 0
      %3272 = vmatprep.subr.bf16.mxu0 0
      %3273 = vmatpush1.bf16.msra.mxu0 0
      %3274 = vmatprep.subr.bf16.mxu0 0
      %3275 = vmatpush1.bf16.msra.mxu0 0
      %3276 = vmatprep.subr.bf16.mxu0 0
      %3277 = vmatpush1.bf16.msra.mxu0 0
      %3278 = vmatprep.subr.bf16.mxu0 0
      %3279 = vmatpush1.bf16.msra.mxu0 0
      %3280 = vmatprep.mubr.bf16.mxu0 0
      %3281 = vmatmul.mubr.bf16.gmra.mrb[0].mxu0 %v1590
      %v3282 = vpop.f32.mrb[0].mxu0
      %v3283 = vadd.f32 0.0, %v3282
      %v3284 = vpop.f32.mrb[0].mxu0
      %v3285 = vpop.f32.mrb[0].mxu0
      %v3286 = vadd.f32 0.0, %v3285
      %v3287 = vpop.f32.mrb[0].mxu0
      %3288 = vmatprep.mubr.bf16.mxu0 0
      %3289 = vmatmul.mubr.bf16.gmra.mrb[0].mxu0 %v1593
      %v3290 = vpop.f32.mrb[0].mxu0
      %v3291 = vadd.f32 0.0, %v3290
      %v3292 = vpop.f32.mrb[0].mxu0
      %v3293 = vpop.f32.mrb[0].mxu0
      %v3294 = vadd.f32 0.0, %v3293
      %v3295 = vpop.f32.mrb[0].mxu0
      %3296 = vmatprep.mubr.bf16.mxu0 0
      %3297 = vmatmul.mubr.bf16.gmra.mrb[0].mxu0 %v1596
      %v3298 = vpop.f32.mrb[0].mxu0
      %v3299 = vadd.f32 0.0, %v3298
      %v3300 = vpop.f32.mrb[0].mxu0
      %v3301 = vpop.f32.mrb[0].mxu0
      %v3302 = vadd.f32 0.0, %v3301
      %v3303 = vpop.f32.mrb[0].mxu0
      %3304 = vmatprep.mubr.bf16.mxu0 0
      %3305 = vmatmul.mubr.bf16.gmra.mrb[0].mxu0 %v1599
      %v3306 = vpop.f32.mrb[0].mxu0
      %v3307 = vadd.f32 0.0, %v3306
      %v3308 = vpop.f32.mrb[0].mxu0
      %v3309 = vpop.f32.mrb[0].mxu0
      %v3310 = vadd.f32 0.0, %v3309
      %v3311 = vpop.f32.mrb[0].mxu0
      %3312 = vmatprep.mubr.bf16.mxu0 0
      %3313 = vmatmul.mubr.bf16.gmra.mrb[0].mxu0 %v1602
      %v3314 = vpop.f32.mrb[0].mxu0
      %v3315 = vadd.f32 0.0, %v3314
      %v3316 = vpop.f32.mrb[0].mxu0
      %v3317 = vpop.f32.mrb[0].mxu0
      %v3318 = vadd.f32 0.0, %v3317
      %v3319 = vpop.f32.mrb[0].mxu0
      %3320 = vmatprep.mubr.bf16.mxu0 0
      %3321 = vmatmul.mubr.bf16.gmra.mrb[0].mxu0 %v1605
      %v3322 = vpop.f32.mrb[0].mxu0
      %v3323 = vadd.f32 0.0, %v3322
      %v3324 = vpop.f32.mrb[0].mxu0
      %v3325 = vpop.f32.mrb[0].mxu0
      %v3326 = vadd.f32 0.0, %v3325
      %v3327 = vpop.f32.mrb[0].mxu0
      %3328 = vmatprep.mubr.bf16.mxu0 0
      %3329 = vmatmul.mubr.bf16.gmra.mrb[0].mxu0 %v1608
      %v3330 = vpop.f32.mrb[0].mxu0
      %v3331 = vadd.f32 0.0, %v3330
      %v3332 = vpop.f32.mrb[0].mxu0
      %v3333 = vpop.f32.mrb[0].mxu0
      %v3334 = vadd.f32 0.0, %v3333
      %v3335 = vpop.f32.mrb[0].mxu0
      %3336 = vmatprep.mubr.bf16.mxu0 0
      %3337 = vmatmul.mubr.bf16.gmra.mrb[0].mxu0 %v1611
      %v3338 = vpop.f32.mrb[0].mxu0
      %v3339 = vadd.f32 0.0, %v3338
      %v3340 = vpop.f32.mrb[0].mxu0
      %v3341 = vpop.f32.mrb[0].mxu0
      %v3342 = vadd.f32 0.0, %v3341
      %v3343 = vpop.f32.mrb[0].mxu0
      %3344 = vmatprep.mubr.bf16.mxu0 0
      %3345 = vmatmul.mubr.bf16.gmra.mrb[0].mxu0 %v1614
      %v3346 = vpop.f32.mrb[0].mxu0
      %v3347 = vadd.f32 0.0, %v3346
      %v3348 = vpop.f32.mrb[0].mxu0
      %v3349 = vpop.f32.mrb[0].mxu0
      %v3350 = vadd.f32 0.0, %v3349
      %v3351 = vpop.f32.mrb[0].mxu0
      %3352 = vmatprep.mubr.bf16.mxu0 0
      %3353 = vmatmul.mubr.bf16.gmra.mrb[0].mxu0 %v1617
      %v3354 = vpop.f32.mrb[0].mxu0
      %v3355 = vadd.f32 0.0, %v3354
      %v3356 = vpop.f32.mrb[0].mxu0
      %v3357 = vpop.f32.mrb[0].mxu0
      %v3358 = vadd.f32 0.0, %v3357
      %v3359 = vpop.f32.mrb[0].mxu0
      %3360 = vmatprep.mubr.bf16.mxu0 0
      %3361 = vmatmul.mubr.bf16.gmra.mrb[0].mxu0 %v1620
      %v3362 = vpop.f32.mrb[0].mxu0
      %v3363 = vadd.f32 0.0, %v3362
      %v3364 = vpop.f32.mrb[0].mxu0
      %v3365 = vpop.f32.mrb[0].mxu0
      %v3366 = vadd.f32 0.0, %v3365
      %v3367 = vpop.f32.mrb[0].mxu0
      %3368 = vmatprep.mubr.bf16.mxu0 0
      %3369 = vmatmul.mubr.bf16.gmra.mrb[0].mxu0 %v1623
      %v3370 = vpop.f32.mrb[0].mxu0
      %v3371 = vadd.f32 0.0, %v3370
      %v3372 = vpop.f32.mrb[0].mxu0
      %v3373 = vpop.f32.mrb[0].mxu0
      %v3374 = vadd.f32 0.0, %v3373
      %v3375 = vpop.f32.mrb[0].mxu0
      %3376 = vmatprep.mubr.bf16.mxu0 0
      %3377 = vmatmul.mubr.bf16.gmra.mrb[0].mxu0 %v1626
      %v3378 = vpop.f32.mrb[0].mxu0
      %v3379 = vadd.f32 0.0, %v3378
      %v3380 = vpop.f32.mrb[0].mxu0
      %v3381 = vpop.f32.mrb[0].mxu0
      %v3382 = vadd.f32 0.0, %v3381
      %v3383 = vpop.f32.mrb[0].mxu0
      %3384 = vmatprep.mubr.bf16.mxu0 0
      %3385 = vmatmul.mubr.bf16.gmra.mrb[0].mxu0 %v1629
      %v3386 = vpop.f32.mrb[0].mxu0
      %v3387 = vadd.f32 0.0, %v3386
      %v3388 = vpop.f32.mrb[0].mxu0
      %v3389 = vpop.f32.mrb[0].mxu0
      %v3390 = vadd.f32 0.0, %v3389
      %v3391 = vpop.f32.mrb[0].mxu0
      %3392 = vmatprep.mubr.bf16.mxu0 0
      %3393 = vmatmul.mubr.bf16.gmra.mrb[0].mxu0 %v1632
      %v3394 = vpop.f32.mrb[0].mxu0
      %v3395 = vadd.f32 0.0, %v3394
      %v3396 = vpop.f32.mrb[0].mxu0
      %v3397 = vpop.f32.mrb[0].mxu0
      %v3398 = vadd.f32 0.0, %v3397
      %v3399 = vpop.f32.mrb[0].mxu0
      %3400 = vmatprep.mubr.bf16.mxu0 0
      %3401 = vmatmul.mubr.bf16.gmra.mrb[0].mxu0 %v2168
      %v3402 = vpop.f32.mrb[0].mxu0
      %v3403 = vadd.f32 0.0, %v3402
      %v3404 = vpop.f32.mrb[0].mxu0
      %v3405 = vpop.f32.mrb[0].mxu0
      %v3406 = vadd.f32 0.0, %v3405
      %v3407 = vpop.f32.mrb[0].mxu0
      %3408 = vdwg.mxu0
      %v3410 = vsel %vm657, %v3242, 0
      %3412 = vmatprep.subr.bf16.mxu0 0
      %3413 = vmatpush1.bf16.msra.mxu0 %v3410
      %3414 = vmatprep.subr.bf16.mxu0 0
      %3415 = vmatpush1.bf16.msra.mxu0 0
      %3416 = vmatprep.subr.bf16.mxu0 0
      %3417 = vmatpush1.bf16.msra.mxu0 0
      %3418 = vmatprep.subr.bf16.mxu0 0
      %3419 = vmatpush1.bf16.msra.mxu0 0
      %3420 = vmatprep.subr.bf16.mxu0 0
      %3421 = vmatpush1.bf16.msra.mxu0 0
      %3422 = vmatprep.subr.bf16.mxu0 0
      %3423 = vmatpush1.bf16.msra.mxu0 0
      %3424 = vmatprep.subr.bf16.mxu0 0
      %3425 = vmatpush1.bf16.msra.mxu0 0
      %3426 = vmatprep.subr.bf16.mxu0 0
      %3427 = vmatpush1.bf16.msra.mxu0 0
      %3428 = vmatprep.subr.bf16.mxu0 0
      %3429 = vmatpush1.bf16.msra.mxu0 0
      %3430 = vmatprep.subr.bf16.mxu0 0
      %3431 = vmatpush1.bf16.msra.mxu0 0
      %3432 = vmatprep.subr.bf16.mxu0 0
      %3433 = vmatpush1.bf16.msra.mxu0 0
      %3434 = vmatprep.subr.bf16.mxu0 0
      %3435 = vmatpush1.bf16.msra.mxu0 0
      %3436 = vmatprep.subr.bf16.mxu0 0
      %3437 = vmatpush1.bf16.msra.mxu0 0
      %3438 = vmatprep.subr.bf16.mxu0 0
      %3439 = vmatpush1.bf16.msra.mxu0 0
      %3440 = vmatprep.subr.bf16.mxu0 0
      %3441 = vmatpush1.bf16.msra.mxu0 0
      %3442 = vmatprep.subr.bf16.mxu0 0
      %3443 = vmatpush1.bf16.msra.mxu0 0
      %3444 = vmatprep.mubr.bf16.mxu0 0
      %3445 = vmatmul.mubr.bf16.gmra.mrb[0].mxu0 %v613
      %v3446 = vpop.f32.mrb[0].mxu0
      %v3447 = vadd.f32 %v3283, %v3446
      %v3448 = vpop.f32.mrb[0].mxu0
      %v3449 = vpop.f32.mrb[0].mxu0
      %v3450 = vadd.f32 %v3286, %v3449
      %v3451 = vpop.f32.mrb[0].mxu0
      %3452 = vmatprep.mubr.bf16.mxu0 0
      %3453 = vmatmul.mubr.bf16.gmra.mrb[0].mxu0 %v616
      %v3454 = vpop.f32.mrb[0].mxu0
      %v3455 = vadd.f32 %v3291, %v3454
      %v3456 = vpop.f32.mrb[0].mxu0
      %v3457 = vpop.f32.mrb[0].mxu0
      %v3458 = vadd.f32 %v3294, %v3457
      %v3459 = vpop.f32.mrb[0].mxu0
      %3460 = vmatprep.mubr.bf16.mxu0 0
      %3461 = vmatmul.mubr.bf16.gmra.mrb[0].mxu0 %v619
      %v3462 = vpop.f32.mrb[0].mxu0
      %v3463 = vadd.f32 %v3299, %v3462
      %v3464 = vpop.f32.mrb[0].mxu0
      %v3465 = vpop.f32.mrb[0].mxu0
      %v3466 = vadd.f32 %v3302, %v3465
      %v3467 = vpop.f32.mrb[0].mxu0
      %3468 = vmatprep.mubr.bf16.mxu0 0
      %3469 = vmatmul.mubr.bf16.gmra.mrb[0].mxu0 %v622
      %v3470 = vpop.f32.mrb[0].mxu0
      %v3471 = vadd.f32 %v3307, %v3470
      %v3472 = vpop.f32.mrb[0].mxu0
      %v3473 = vpop.f32.mrb[0].mxu0
      %v3474 = vadd.f32 %v3310, %v3473
      %v3475 = vpop.f32.mrb[0].mxu0
      %3476 = vmatprep.mubr.bf16.mxu0 0
      %3477 = vmatmul.mubr.bf16.gmra.mrb[0].mxu0 %v625
      %v3478 = vpop.f32.mrb[0].mxu0
      %v3479 = vadd.f32 %v3315, %v3478
      %v3480 = vpop.f32.mrb[0].mxu0
      %v3481 = vpop.f32.mrb[0].mxu0
      %v3482 = vadd.f32 %v3318, %v3481
      %v3483 = vpop.f32.mrb[0].mxu0
      %3484 = vmatprep.mubr.bf16.mxu0 0
      %3485 = vmatmul.mubr.bf16.gmra.mrb[0].mxu0 %v628
      %v3486 = vpop.f32.mrb[0].mxu0
      %v3487 = vadd.f32 %v3323, %v3486
      %v3488 = vpop.f32.mrb[0].mxu0
      %v3489 = vpop.f32.mrb[0].mxu0
      %v3490 = vadd.f32 %v3326, %v3489
      %v3491 = vpop.f32.mrb[0].mxu0
      %3492 = vmatprep.mubr.bf16.mxu0 0
      %3493 = vmatmul.mubr.bf16.gmra.mrb[0].mxu0 %v631
      %v3494 = vpop.f32.mrb[0].mxu0
      %v3495 = vadd.f32 %v3331, %v3494
      %v3496 = vpop.f32.mrb[0].mxu0
      %v3497 = vpop.f32.mrb[0].mxu0
      %v3498 = vadd.f32 %v3334, %v3497
      %v3499 = vpop.f32.mrb[0].mxu0
      %3500 = vmatprep.mubr.bf16.mxu0 0
      %3501 = vmatmul.mubr.bf16.gmra.mrb[0].mxu0 %v634
      %v3502 = vpop.f32.mrb[0].mxu0
      %v3503 = vadd.f32 %v3339, %v3502
      %v3504 = vpop.f32.mrb[0].mxu0
      %v3505 = vpop.f32.mrb[0].mxu0
      %v3506 = vadd.f32 %v3342, %v3505
      %v3507 = vpop.f32.mrb[0].mxu0
      %3508 = vmatprep.mubr.bf16.mxu0 0
      %3509 = vmatmul.mubr.bf16.gmra.mrb[0].mxu0 %v637
      %v3510 = vpop.f32.mrb[0].mxu0
      %v3511 = vadd.f32 %v3347, %v3510
      %v3512 = vpop.f32.mrb[0].mxu0
      %v3513 = vpop.f32.mrb[0].mxu0
      %v3514 = vadd.f32 %v3350, %v3513
      %v3515 = vpop.f32.mrb[0].mxu0
      %3516 = vmatprep.mubr.bf16.mxu0 0
      %3517 = vmatmul.mubr.bf16.gmra.mrb[0].mxu0 %v640
      %v3518 = vpop.f32.mrb[0].mxu0
      %v3519 = vadd.f32 %v3355, %v3518
      %v3520 = vpop.f32.mrb[0].mxu0
      %v3521 = vpop.f32.mrb[0].mxu0
      %v3522 = vadd.f32 %v3358, %v3521
      %v3523 = vpop.f32.mrb[0].mxu0
      %3524 = vmatprep.mubr.bf16.mxu0 0
      %3525 = vmatmul.mubr.bf16.gmra.mrb[0].mxu0 %v643
      %v3526 = vpop.f32.mrb[0].mxu0
      %v3527 = vadd.f32 %v3363, %v3526
      %v3528 = vpop.f32.mrb[0].mxu0
      %v3529 = vpop.f32.mrb[0].mxu0
      %v3530 = vadd.f32 %v3366, %v3529
      %v3531 = vpop.f32.mrb[0].mxu0
      %3532 = vmatprep.mubr.bf16.mxu0 0
      %3533 = vmatmul.mubr.bf16.gmra.mrb[0].mxu0 %v646
      %v3534 = vpop.f32.mrb[0].mxu0
      %v3535 = vadd.f32 %v3371, %v3534
      %v3536 = vpop.f32.mrb[0].mxu0
      %v3537 = vpop.f32.mrb[0].mxu0
      %v3538 = vadd.f32 %v3374, %v3537
      %v3539 = vpop.f32.mrb[0].mxu0
      %3540 = vmatprep.mubr.bf16.mxu0 0
      %3541 = vmatmul.mubr.bf16.gmra.mrb[0].mxu0 %v649
      %v3542 = vpop.f32.mrb[0].mxu0
      %v3543 = vadd.f32 %v3379, %v3542
      %v3544 = vpop.f32.mrb[0].mxu0
      %v3545 = vpop.f32.mrb[0].mxu0
      %v3546 = vadd.f32 %v3382, %v3545
      %v3547 = vpop.f32.mrb[0].mxu0
      %3548 = vmatprep.mubr.bf16.mxu0 0
      %3549 = vmatmul.mubr.bf16.gmra.mrb[0].mxu0 %v652
      %v3550 = vpop.f32.mrb[0].mxu0
      %v3551 = vadd.f32 %v3387, %v3550
      %v3552 = vpop.f32.mrb[0].mxu0
      %v3553 = vpop.f32.mrb[0].mxu0
      %v3554 = vadd.f32 %v3390, %v3553
      %v3555 = vpop.f32.mrb[0].mxu0
      %3556 = vmatprep.mubr.bf16.mxu0 0
      %3557 = vmatmul.mubr.bf16.gmra.mrb[0].mxu0 %v655
      %v3558 = vpop.f32.mrb[0].mxu0
      %v3559 = vadd.f32 %v3395, %v3558
      %v3560 = vpop.f32.mrb[0].mxu0
      %v3561 = vpop.f32.mrb[0].mxu0
      %v3562 = vadd.f32 %v3398, %v3561
      %v3563 = vpop.f32.mrb[0].mxu0
      %3564 = vmatprep.mubr.bf16.mxu0 0
      %3565 = vmatmul.mubr.bf16.gmra.mrb[0].mxu0 %v1233
      %v3566 = vpop.f32.mrb[0].mxu0
      %v3567 = vadd.f32 %v3403, %v3566
      %v3568 = vpop.f32.mrb[0].mxu0
      %v3569 = vpop.f32.mrb[0].mxu0
      %v3570 = vadd.f32 %v3406, %v3569
      %v3571 = vpop.f32.mrb[0].mxu0
      %3572 = vdwg.mxu0
      %s3573 = scalar_lea.vmem %s2, 28
      %v3574 = vld [vmem:[%s3573] sm:$0x3]
      %v3576 = vsel %vm657, %v3574, 0
      %3578 = vmatprep.subr.bf16.mxu0 0
      %3579 = vmatpush1.bf16.msra.mxu0 %v3576
      %3580 = vmatprep.subr.bf16.mxu0 0
      %3581 = vmatpush1.bf16.msra.mxu0 0
      %3582 = vmatprep.subr.bf16.mxu0 0
      %3583 = vmatpush1.bf16.msra.mxu0 0
      %3584 = vmatprep.subr.bf16.mxu0 0
      %3585 = vmatpush1.bf16.msra.mxu0 0
      %3586 = vmatprep.subr.bf16.mxu0 0
      %3587 = vmatpush1.bf16.msra.mxu0 0
      %3588 = vmatprep.subr.bf16.mxu0 0
      %3589 = vmatpush1.bf16.msra.mxu0 0
      %3590 = vmatprep.subr.bf16.mxu0 0
      %3591 = vmatpush1.bf16.msra.mxu0 0
      %3592 = vmatprep.subr.bf16.mxu0 0
      %3593 = vmatpush1.bf16.msra.mxu0 0
      %3594 = vmatprep.subr.bf16.mxu0 0
      %3595 = vmatpush1.bf16.msra.mxu0 0
      %3596 = vmatprep.subr.bf16.mxu0 0
      %3597 = vmatpush1.bf16.msra.mxu0 0
      %3598 = vmatprep.subr.bf16.mxu0 0
      %3599 = vmatpush1.bf16.msra.mxu0 0
      %3600 = vmatprep.subr.bf16.mxu0 0
      %3601 = vmatpush1.bf16.msra.mxu0 0
      %3602 = vmatprep.subr.bf16.mxu0 0
      %3603 = vmatpush1.bf16.msra.mxu0 0
      %3604 = vmatprep.subr.bf16.mxu0 0
      %3605 = vmatpush1.bf16.msra.mxu0 0
      %3606 = vmatprep.subr.bf16.mxu0 0
      %3607 = vmatpush1.bf16.msra.mxu0 0
      %3608 = vmatprep.subr.bf16.mxu0 0
      %3609 = vmatpush1.bf16.msra.mxu0 0
      %3610 = vmatprep.mubr.bf16.mxu0 0
      %3611 = vmatmul.mubr.bf16.gmra.mrb[0].mxu0 %v616
      %v3612 = vpop.f32.mrb[0].mxu0
      %v3613 = vadd.f32 0.0, %v3612
      %v3614 = vpop.f32.mrb[0].mxu0
      %v3615 = vpop.f32.mrb[0].mxu0
      %v3616 = vadd.f32 0.0, %v3615
      %v3617 = vpop.f32.mrb[0].mxu0
      %3618 = vmatprep.mubr.bf16.mxu0 0
      %3619 = vmatmul.mubr.bf16.gmra.mrb[0].mxu0 %v619
      %v3620 = vpop.f32.mrb[0].mxu0
      %v3621 = vadd.f32 0.0, %v3620
      %v3622 = vpop.f32.mrb[0].mxu0
      %v3623 = vpop.f32.mrb[0].mxu0
      %v3624 = vadd.f32 0.0, %v3623
      %v3625 = vpop.f32.mrb[0].mxu0
      %3626 = vmatprep.mubr.bf16.mxu0 0
      %3627 = vmatmul.mubr.bf16.gmra.mrb[0].mxu0 %v622
      %v3628 = vpop.f32.mrb[0].mxu0
      %v3629 = vadd.f32 0.0, %v3628
      %v3630 = vpop.f32.mrb[0].mxu0
      %v3631 = vpop.f32.mrb[0].mxu0
      %v3632 = vadd.f32 0.0, %v3631
      %v3633 = vpop.f32.mrb[0].mxu0
      %3634 = vmatprep.mubr.bf16.mxu0 0
      %3635 = vmatmul.mubr.bf16.gmra.mrb[0].mxu0 %v625
      %v3636 = vpop.f32.mrb[0].mxu0
      %v3637 = vadd.f32 0.0, %v3636
      %v3638 = vpop.f32.mrb[0].mxu0
      %v3639 = vpop.f32.mrb[0].mxu0
      %v3640 = vadd.f32 0.0, %v3639
      %v3641 = vpop.f32.mrb[0].mxu0
      %3642 = vmatprep.mubr.bf16.mxu0 0
      %3643 = vmatmul.mubr.bf16.gmra.mrb[0].mxu0 %v628
      %v3644 = vpop.f32.mrb[0].mxu0
      %v3645 = vadd.f32 0.0, %v3644
      %v3646 = vpop.f32.mrb[0].mxu0
      %v3647 = vpop.f32.mrb[0].mxu0
      %v3648 = vadd.f32 0.0, %v3647
      %v3649 = vpop.f32.mrb[0].mxu0
      %3650 = vmatprep.mubr.bf16.mxu0 0
      %3651 = vmatmul.mubr.bf16.gmra.mrb[0].mxu0 %v631
      %v3652 = vpop.f32.mrb[0].mxu0
      %v3653 = vadd.f32 0.0, %v3652
      %v3654 = vpop.f32.mrb[0].mxu0
      %v3655 = vpop.f32.mrb[0].mxu0
      %v3656 = vadd.f32 0.0, %v3655
      %v3657 = vpop.f32.mrb[0].mxu0
      %3658 = vmatprep.mubr.bf16.mxu0 0
      %3659 = vmatmul.mubr.bf16.gmra.mrb[0].mxu0 %v634
      %v3660 = vpop.f32.mrb[0].mxu0
      %v3661 = vadd.f32 0.0, %v3660
      %v3662 = vpop.f32.mrb[0].mxu0
      %v3663 = vpop.f32.mrb[0].mxu0
      %v3664 = vadd.f32 0.0, %v3663
      %v3665 = vpop.f32.mrb[0].mxu0
      %3666 = vmatprep.mubr.bf16.mxu0 0
      %3667 = vmatmul.mubr.bf16.gmra.mrb[0].mxu0 %v637
      %v3668 = vpop.f32.mrb[0].mxu0
      %v3669 = vadd.f32 0.0, %v3668
      %v3670 = vpop.f32.mrb[0].mxu0
      %v3671 = vpop.f32.mrb[0].mxu0
      %v3672 = vadd.f32 0.0, %v3671
      %v3673 = vpop.f32.mrb[0].mxu0
      %3674 = vmatprep.mubr.bf16.mxu0 0
      %3675 = vmatmul.mubr.bf16.gmra.mrb[0].mxu0 %v640
      %v3676 = vpop.f32.mrb[0].mxu0
      %v3677 = vadd.f32 0.0, %v3676
      %v3678 = vpop.f32.mrb[0].mxu0
      %v3679 = vpop.f32.mrb[0].mxu0
      %v3680 = vadd.f32 0.0, %v3679
      %v3681 = vpop.f32.mrb[0].mxu0
      %3682 = vmatprep.mubr.bf16.mxu0 0
      %3683 = vmatmul.mubr.bf16.gmra.mrb[0].mxu0 %v643
      %v3684 = vpop.f32.mrb[0].mxu0
      %v3685 = vadd.f32 0.0, %v3684
      %v3686 = vpop.f32.mrb[0].mxu0
      %v3687 = vpop.f32.mrb[0].mxu0
      %v3688 = vadd.f32 0.0, %v3687
      %v3689 = vpop.f32.mrb[0].mxu0
      %3690 = vmatprep.mubr.bf16.mxu0 0
      %3691 = vmatmul.mubr.bf16.gmra.mrb[0].mxu0 %v646
      %v3692 = vpop.f32.mrb[0].mxu0
      %v3693 = vadd.f32 0.0, %v3692
      %v3694 = vpop.f32.mrb[0].mxu0
      %v3695 = vpop.f32.mrb[0].mxu0
      %v3696 = vadd.f32 0.0, %v3695
      %v3697 = vpop.f32.mrb[0].mxu0
      %3698 = vmatprep.mubr.bf16.mxu0 0
      %3699 = vmatmul.mubr.bf16.gmra.mrb[0].mxu0 %v649
      %v3700 = vpop.f32.mrb[0].mxu0
      %v3701 = vadd.f32 0.0, %v3700
      %v3702 = vpop.f32.mrb[0].mxu0
      %v3703 = vpop.f32.mrb[0].mxu0
      %v3704 = vadd.f32 0.0, %v3703
      %v3705 = vpop.f32.mrb[0].mxu0
      %3706 = vmatprep.mubr.bf16.mxu0 0
      %3707 = vmatmul.mubr.bf16.gmra.mrb[0].mxu0 %v652
      %v3708 = vpop.f32.mrb[0].mxu0
      %v3709 = vadd.f32 0.0, %v3708
      %v3710 = vpop.f32.mrb[0].mxu0
      %v3711 = vpop.f32.mrb[0].mxu0
      %v3712 = vadd.f32 0.0, %v3711
      %v3713 = vpop.f32.mrb[0].mxu0
      %3714 = vmatprep.mubr.bf16.mxu0 0
      %3715 = vmatmul.mubr.bf16.gmra.mrb[0].mxu0 %v655
      %v3716 = vpop.f32.mrb[0].mxu0
      %v3717 = vadd.f32 0.0, %v3716
      %v3718 = vpop.f32.mrb[0].mxu0
      %v3719 = vpop.f32.mrb[0].mxu0
      %v3720 = vadd.f32 0.0, %v3719
      %v3721 = vpop.f32.mrb[0].mxu0
      %3722 = vmatprep.mubr.bf16.mxu0 0
      %3723 = vmatmul.mubr.bf16.gmra.mrb[0].mxu0 %v1233
      %v3724 = vpop.f32.mrb[0].mxu0
      %v3725 = vadd.f32 0.0, %v3724
      %v3726 = vpop.f32.mrb[0].mxu0
      %v3727 = vpop.f32.mrb[0].mxu0
      %v3728 = vadd.f32 0.0, %v3727
      %v3729 = vpop.f32.mrb[0].mxu0
      %3730 = vmatprep.mubr.bf16.mxu0 0
      %3731 = vmatmul.mubr.bf16.gmra.mrb[0].mxu0 %v2978
      %v3732 = vpop.f32.mrb[0].mxu0
      %v3733 = vadd.f32 0.0, %v3732
      %v3734 = vpop.f32.mrb[0].mxu0
      %v3735 = vpop.f32.mrb[0].mxu0
      %v3736 = vadd.f32 0.0, %v3735
      %v3737 = vpop.f32.mrb[0].mxu0
      %3738 = vdwg.mxu0
      %v3739 = vadd.f32 %v3447, %v3613
      %v3740 = vadd.f32 %v3450, %v3616
      %v3741 = vadd.f32 %v3455, %v3621
      %v3742 = vadd.f32 %v3458, %v3624
      %v3743 = vadd.f32 %v3463, %v3629
      %v3744 = vadd.f32 %v3466, %v3632
      %v3745 = vadd.f32 %v3471, %v3637
      %v3746 = vadd.f32 %v3474, %v3640
      %v3747 = vadd.f32 %v3479, %v3645
      %v3748 = vadd.f32 %v3482, %v3648
      %v3749 = vadd.f32 %v3487, %v3653
      %v3750 = vadd.f32 %v3490, %v3656
      %v3751 = vadd.f32 %v3495, %v3661
      %v3752 = vadd.f32 %v3498, %v3664
      %v3753 = vadd.f32 %v3503, %v3669
      %v3754 = vadd.f32 %v3506, %v3672
      %v3755 = vadd.f32 %v3511, %v3677
      %v3756 = vadd.f32 %v3514, %v3680
      %v3757 = vadd.f32 %v3519, %v3685
      %v3758 = vadd.f32 %v3522, %v3688
      %v3759 = vadd.f32 %v3527, %v3693
      %v3760 = vadd.f32 %v3530, %v3696
      %v3761 = vadd.f32 %v3535, %v3701
      %v3762 = vadd.f32 %v3538, %v3704
      %v3763 = vadd.f32 %v3543, %v3709
      %v3764 = vadd.f32 %v3546, %v3712
      %v3765 = vadd.f32 %v3551, %v3717
      %v3766 = vadd.f32 %v3554, %v3720
      %v3767 = vadd.f32 %v3559, %v3725
      %v3768 = vadd.f32 %v3562, %v3728
      %v3769 = vadd.f32 %v3567, %v3733
      %v3770 = vadd.f32 %v3570, %v3736
      %s3771 = scalar_lea.vmem %s2, 30
      %v3772 = vld [vmem:[%s3771] sm:$0x3]
      %v3775 = vrot.slane %v392, 1
      %v3776 = vrot.slane %v410, 1
      %v3777 = vsel %vm1537, %v3775, %v3776
      %v3779 = vsel %vm608, %v3777, 0
      %v3782 = vsel %vm657, %v3772, 0
      %3784 = vmatprep.subr.bf16.mxu0 0
      %3785 = vmatpush1.bf16.msra.mxu0 %v3782
      %3786 = vmatprep.subr.bf16.mxu0 0
      %3787 = vmatpush1.bf16.msra.mxu0 0
      %3788 = vmatprep.subr.bf16.mxu0 0
      %3789 = vmatpush1.bf16.msra.mxu0 0
      %3790 = vmatprep.subr.bf16.mxu0 0
      %3791 = vmatpush1.bf16.msra.mxu0 0
      %3792 = vmatprep.subr.bf16.mxu0 0
      %3793 = vmatpush1.bf16.msra.mxu0 0
      %3794 = vmatprep.subr.bf16.mxu0 0
      %3795 = vmatpush1.bf16.msra.mxu0 0
      %3796 = vmatprep.subr.bf16.mxu0 0
      %3797 = vmatpush1.bf16.msra.mxu0 0
      %3798 = vmatprep.subr.bf16.mxu0 0
      %3799 = vmatpush1.bf16.msra.mxu0 0
      %3800 = vmatprep.subr.bf16.mxu0 0
      %3801 = vmatpush1.bf16.msra.mxu0 0
      %3802 = vmatprep.subr.bf16.mxu0 0
      %3803 = vmatpush1.bf16.msra.mxu0 0
      %3804 = vmatprep.subr.bf16.mxu0 0
      %3805 = vmatpush1.bf16.msra.mxu0 0
      %3806 = vmatprep.subr.bf16.mxu0 0
      %3807 = vmatpush1.bf16.msra.mxu0 0
      %3808 = vmatprep.subr.bf16.mxu0 0
      %3809 = vmatpush1.bf16.msra.mxu0 0
      %3810 = vmatprep.subr.bf16.mxu0 0
      %3811 = vmatpush1.bf16.msra.mxu0 0
      %3812 = vmatprep.subr.bf16.mxu0 0
      %3813 = vmatpush1.bf16.msra.mxu0 0
      %3814 = vmatprep.subr.bf16.mxu0 0
      %3815 = vmatpush1.bf16.msra.mxu0 0
      %3816 = vmatprep.mubr.bf16.mxu0 0
      %3817 = vmatmul.mubr.bf16.gmra.mrb[0].mxu0 %v1593
      %v3818 = vpop.f32.mrb[0].mxu0
      %v3819 = vadd.f32 0.0, %v3818
      %v3820 = vpop.f32.mrb[0].mxu0
      %v3821 = vpop.f32.mrb[0].mxu0
      %v3822 = vadd.f32 0.0, %v3821
      %v3823 = vpop.f32.mrb[0].mxu0
      %3824 = vmatprep.mubr.bf16.mxu0 0
      %3825 = vmatmul.mubr.bf16.gmra.mrb[0].mxu0 %v1596
      %v3826 = vpop.f32.mrb[0].mxu0
      %v3827 = vadd.f32 0.0, %v3826
      %v3828 = vpop.f32.mrb[0].mxu0
      %v3829 = vpop.f32.mrb[0].mxu0
      %v3830 = vadd.f32 0.0, %v3829
      %v3831 = vpop.f32.mrb[0].mxu0
      %3832 = vmatprep.mubr.bf16.mxu0 0
      %3833 = vmatmul.mubr.bf16.gmra.mrb[0].mxu0 %v1599
      %v3834 = vpop.f32.mrb[0].mxu0
      %v3835 = vadd.f32 0.0, %v3834
      %v3836 = vpop.f32.mrb[0].mxu0
      %v3837 = vpop.f32.mrb[0].mxu0
      %v3838 = vadd.f32 0.0, %v3837
      %v3839 = vpop.f32.mrb[0].mxu0
      %3840 = vmatprep.mubr.bf16.mxu0 0
      %3841 = vmatmul.mubr.bf16.gmra.mrb[0].mxu0 %v1602
      %v3842 = vpop.f32.mrb[0].mxu0
      %v3843 = vadd.f32 0.0, %v3842
      %v3844 = vpop.f32.mrb[0].mxu0
      %v3845 = vpop.f32.mrb[0].mxu0
      %v3846 = vadd.f32 0.0, %v3845
      %v3847 = vpop.f32.mrb[0].mxu0
      %3848 = vmatprep.mubr.bf16.mxu0 0
      %3849 = vmatmul.mubr.bf16.gmra.mrb[0].mxu0 %v1605
      %v3850 = vpop.f32.mrb[0].mxu0
      %v3851 = vadd.f32 0.0, %v3850
      %v3852 = vpop.f32.mrb[0].mxu0
      %v3853 = vpop.f32.mrb[0].mxu0
      %v3854 = vadd.f32 0.0, %v3853
      %v3855 = vpop.f32.mrb[0].mxu0
      %3856 = vmatprep.mubr.bf16.mxu0 0
      %3857 = vmatmul.mubr.bf16.gmra.mrb[0].mxu0 %v1608
      %v3858 = vpop.f32.mrb[0].mxu0
      %v3859 = vadd.f32 0.0, %v3858
      %v3860 = vpop.f32.mrb[0].mxu0
      %v3861 = vpop.f32.mrb[0].mxu0
      %v3862 = vadd.f32 0.0, %v3861
      %v3863 = vpop.f32.mrb[0].mxu0
      %3864 = vmatprep.mubr.bf16.mxu0 0
      %3865 = vmatmul.mubr.bf16.gmra.mrb[0].mxu0 %v1611
      %v3866 = vpop.f32.mrb[0].mxu0
      %v3867 = vadd.f32 0.0, %v3866
      %v3868 = vpop.f32.mrb[0].mxu0
      %v3869 = vpop.f32.mrb[0].mxu0
      %v3870 = vadd.f32 0.0, %v3869
      %v3871 = vpop.f32.mrb[0].mxu0
      %3872 = vmatprep.mubr.bf16.mxu0 0
      %3873 = vmatmul.mubr.bf16.gmra.mrb[0].mxu0 %v1614
      %v3874 = vpop.f32.mrb[0].mxu0
      %v3875 = vadd.f32 0.0, %v3874
      %v3876 = vpop.f32.mrb[0].mxu0
      %v3877 = vpop.f32.mrb[0].mxu0
      %v3878 = vadd.f32 0.0, %v3877
      %v3879 = vpop.f32.mrb[0].mxu0
      %3880 = vmatprep.mubr.bf16.mxu0 0
      %3881 = vmatmul.mubr.bf16.gmra.mrb[0].mxu0 %v1617
      %v3882 = vpop.f32.mrb[0].mxu0
      %v3883 = vadd.f32 0.0, %v3882
      %v3884 = vpop.f32.mrb[0].mxu0
      %v3885 = vpop.f32.mrb[0].mxu0
      %v3886 = vadd.f32 0.0, %v3885
      %v3887 = vpop.f32.mrb[0].mxu0
      %3888 = vmatprep.mubr.bf16.mxu0 0
      %3889 = vmatmul.mubr.bf16.gmra.mrb[0].mxu0 %v1620
      %v3890 = vpop.f32.mrb[0].mxu0
      %v3891 = vadd.f32 0.0, %v3890
      %v3892 = vpop.f32.mrb[0].mxu0
      %v3893 = vpop.f32.mrb[0].mxu0
      %v3894 = vadd.f32 0.0, %v3893
      %v3895 = vpop.f32.mrb[0].mxu0
      %3896 = vmatprep.mubr.bf16.mxu0 0
      %3897 = vmatmul.mubr.bf16.gmra.mrb[0].mxu0 %v1623
      %v3898 = vpop.f32.mrb[0].mxu0
      %v3899 = vadd.f32 0.0, %v3898
      %v3900 = vpop.f32.mrb[0].mxu0
      %v3901 = vpop.f32.mrb[0].mxu0
      %v3902 = vadd.f32 0.0, %v3901
      %v3903 = vpop.f32.mrb[0].mxu0
      %3904 = vmatprep.mubr.bf16.mxu0 0
      %3905 = vmatmul.mubr.bf16.gmra.mrb[0].mxu0 %v1626
      %v3906 = vpop.f32.mrb[0].mxu0
      %v3907 = vadd.f32 0.0, %v3906
      %v3908 = vpop.f32.mrb[0].mxu0
      %v3909 = vpop.f32.mrb[0].mxu0
      %v3910 = vadd.f32 0.0, %v3909
      %v3911 = vpop.f32.mrb[0].mxu0
      %3912 = vmatprep.mubr.bf16.mxu0 0
      %3913 = vmatmul.mubr.bf16.gmra.mrb[0].mxu0 %v1629
      %v3914 = vpop.f32.mrb[0].mxu0
      %v3915 = vadd.f32 0.0, %v3914
      %v3916 = vpop.f32.mrb[0].mxu0
      %v3917 = vpop.f32.mrb[0].mxu0
      %v3918 = vadd.f32 0.0, %v3917
      %v3919 = vpop.f32.mrb[0].mxu0
      %3920 = vmatprep.mubr.bf16.mxu0 0
      %3921 = vmatmul.mubr.bf16.gmra.mrb[0].mxu0 %v1632
      %v3922 = vpop.f32.mrb[0].mxu0
      %v3923 = vadd.f32 0.0, %v3922
      %v3924 = vpop.f32.mrb[0].mxu0
      %v3925 = vpop.f32.mrb[0].mxu0
      %v3926 = vadd.f32 0.0, %v3925
      %v3927 = vpop.f32.mrb[0].mxu0
      %3928 = vmatprep.mubr.bf16.mxu0 0
      %3929 = vmatmul.mubr.bf16.gmra.mrb[0].mxu0 %v2168
      %v3930 = vpop.f32.mrb[0].mxu0
      %v3931 = vadd.f32 0.0, %v3930
      %v3932 = vpop.f32.mrb[0].mxu0
      %v3933 = vpop.f32.mrb[0].mxu0
      %v3934 = vadd.f32 0.0, %v3933
      %v3935 = vpop.f32.mrb[0].mxu0
      %3936 = vmatprep.mubr.bf16.mxu0 0
      %3937 = vmatmul.mubr.bf16.gmra.mrb[0].mxu0 %v3779
      %v3938 = vpop.f32.mrb[0].mxu0
      %v3939 = vadd.f32 0.0, %v3938
      %v3940 = vpop.f32.mrb[0].mxu0
      %v3941 = vpop.f32.mrb[0].mxu0
      %v3942 = vadd.f32 0.0, %v3941
      %v3943 = vpop.f32.mrb[0].mxu0
      %3944 = vdwg.mxu0
      %v3945 = vadd.f32 %v3739, %v3819
      %v3946 = vadd.f32 %v3740, %v3822
      %v3947 = vadd.f32 %v3741, %v3827
      %v3948 = vadd.f32 %v3742, %v3830
      %v3949 = vadd.f32 %v3743, %v3835
      %v3950 = vadd.f32 %v3744, %v3838
      %v3951 = vadd.f32 %v3745, %v3843
      %v3952 = vadd.f32 %v3746, %v3846
      %v3953 = vadd.f32 %v3747, %v3851
      %v3954 = vadd.f32 %v3748, %v3854
      %v3955 = vadd.f32 %v3749, %v3859
      %v3956 = vadd.f32 %v3750, %v3862
      %v3957 = vadd.f32 %v3751, %v3867
      %v3958 = vadd.f32 %v3752, %v3870
      %v3959 = vadd.f32 %v3753, %v3875
      %v3960 = vadd.f32 %v3754, %v3878
      %v3961 = vadd.f32 %v3755, %v3883
      %v3962 = vadd.f32 %v3756, %v3886
      %v3963 = vadd.f32 %v3757, %v3891
      %v3964 = vadd.f32 %v3758, %v3894
      %v3965 = vadd.f32 %v3759, %v3899
      %v3966 = vadd.f32 %v3760, %v3902
      %v3967 = vadd.f32 %v3761, %v3907
      %v3968 = vadd.f32 %v3762, %v3910
      %v3969 = vadd.f32 %v3763, %v3915
      %v3970 = vadd.f32 %v3764, %v3918
      %v3971 = vadd.f32 %v3765, %v3923
      %v3972 = vadd.f32 %v3766, %v3926
      %v3973 = vadd.f32 %v3767, %v3931
      %v3974 = vadd.f32 %v3768, %v3934
      %v3975 = vadd.f32 %v3769, %v3939
      %v3976 = vadd.f32 %v3770, %v3942
      %v3977 = vadd.f32 %v3945, %v1435
      %v3978 = vadd.f32 %v3946, %v1435
      %v3979 = vadd.f32 %v3947, %v1435
      %v3980 = vadd.f32 %v3948, %v1435
      %v3981 = vadd.f32 %v3949, %v1435
      %v3982 = vadd.f32 %v3950, %v1435
      %v3983 = vadd.f32 %v3951, %v1435
      %v3984 = vadd.f32 %v3952, %v1435
      %v3985 = vadd.f32 %v3953, %v1435
      %v3986 = vadd.f32 %v3954, %v1435
      %v3987 = vadd.f32 %v3955, %v1435
      %v3988 = vadd.f32 %v3956, %v1435
      %v3989 = vadd.f32 %v3957, %v1435
      %v3990 = vadd.f32 %v3958, %v1435
      %v3991 = vadd.f32 %v3959, %v1435
      %v3992 = vadd.f32 %v3960, %v1435
      %v3993 = vadd.f32 %v3961, %v1435
      %v3994 = vadd.f32 %v3962, %v1435
      %v3995 = vadd.f32 %v3963, %v1435
      %v3996 = vadd.f32 %v3964, %v1435
      %v3997 = vadd.f32 %v3965, %v1435
      %v3998 = vadd.f32 %v3966, %v1435
      %v3999 = vadd.f32 %v3967, %v1435
      %v4000 = vadd.f32 %v3968, %v1435
      %v4001 = vadd.f32 %v3969, %v1435
      %v4002 = vadd.f32 %v3970, %v1435
      %v4003 = vadd.f32 %v3971, %v1435
      %v4004 = vadd.f32 %v3972, %v1435
      %v4005 = vadd.f32 %v3973, %v1435
      %v4006 = vadd.f32 %v3974, %v1435
      %v4007 = vadd.f32 %v3975, %v1435
      %v4008 = vadd.f32 %v3976, %v1435
      %s4009 = scalar_lea.vmem %s318, 768
      %4010 = vst.msk [vmem:[%s4009] sm:$0xff] %vm608, %v3977
      %4011 = vst.msk [vmem:[%s4009 + $0x8] sm:$0xff] %vm608, %v3978
      %4012 = vst.msk [vmem:[%s4009 + $0x10] sm:$0xff] %vm608, %v3979
      %4013 = vst.msk [vmem:[%s4009 + $0x18] sm:$0xff] %vm608, %v3980
      %4014 = vst.msk [vmem:[%s4009 + $0x20] sm:$0xff] %vm608, %v3981
      %4015 = vst.msk [vmem:[%s4009 + $0x28] sm:$0xff] %vm608, %v3982
      %4016 = vst.msk [vmem:[%s4009 + $0x30] sm:$0xff] %vm608, %v3983
      %4017 = vst.msk [vmem:[%s4009 + $0x38] sm:$0xff] %vm608, %v3984
      %4018 = vst.msk [vmem:[%s4009 + $0x40] sm:$0xff] %vm608, %v3985
      %4019 = vst.msk [vmem:[%s4009 + $0x48] sm:$0xff] %vm608, %v3986
      %4020 = vst.msk [vmem:[%s4009 + $0x50] sm:$0xff] %vm608, %v3987
      %4021 = vst.msk [vmem:[%s4009 + $0x58] sm:$0xff] %vm608, %v3988
      %4022 = vst.msk [vmem:[%s4009 + $0x60] sm:$0xff] %vm608, %v3989
      %4023 = vst.msk [vmem:[%s4009 + $0x68] sm:$0xff] %vm608, %v3990
      %4024 = vst.msk [vmem:[%s4009 + $0x70] sm:$0xff] %vm608, %v3991
      %4025 = vst.msk [vmem:[%s4009 + $0x78] sm:$0xff] %vm608, %v3992
      %4026 = vst.msk [vmem:[%s4009 + $0x80] sm:$0xff] %vm608, %v3993
      %4027 = vst.msk [vmem:[%s4009 + $0x88] sm:$0xff] %vm608, %v3994
      %4028 = vst.msk [vmem:[%s4009 + $0x90] sm:$0xff] %vm608, %v3995
      %4029 = vst.msk [vmem:[%s4009 + $0x98] sm:$0xff] %vm608, %v3996
      %4030 = vst.msk [vmem:[%s4009 + $0xa0] sm:$0xff] %vm608, %v3997
      %4031 = vst.msk [vmem:[%s4009 + $0xa8] sm:$0xff] %vm608, %v3998
      %4032 = vst.msk [vmem:[%s4009 + $0xb0] sm:$0xff] %vm608, %v3999
      %4033 = vst.msk [vmem:[%s4009 + $0xb8] sm:$0xff] %vm608, %v4000
      %4034 = vst.msk [vmem:[%s4009 + $0xc0] sm:$0xff] %vm608, %v4001
      %4035 = vst.msk [vmem:[%s4009 + $0xc8] sm:$0xff] %vm608, %v4002
      %4036 = vst.msk [vmem:[%s4009 + $0xd0] sm:$0xff] %vm608, %v4003
      %4037 = vst.msk [vmem:[%s4009 + $0xd8] sm:$0xff] %vm608, %v4004
      %4038 = vst.msk [vmem:[%s4009 + $0xe0] sm:$0xff] %vm608, %v4005
      %4039 = vst.msk [vmem:[%s4009 + $0xe8] sm:$0xff] %vm608, %v4006
      %4040 = vst.msk [vmem:[%s4009 + $0xf0] sm:$0xff] %vm608, %v4007
      %4041 = vst.msk [vmem:[%s4009 + $0xf8] sm:$0xff] %vm608, %v4008
      %s4042 = smul.u32 16, %s20
      %p4043 = scmp.lt.s32.totalorder %s19, 1
      %s4044 = scalar_select %p4043, %s19, 1
      %p4045 = scmp.lt.s32.totalorder %s4042, 15
      %s4046 = scalar_select %p4045, %s4042, 15
      %s4047 = smul.addr %s4046, 2
      %s4048 = smul.addr %s4044, 128
      %s4049 = sadd.s32 %s4047, %s4048
      %s4050 = smul.addr %s4049, 8
      %s4051 = scalar_lea.vmem %s4, %s4050
      // Predicated region
      $region37: #{tpu_custom_call.1} parent=35 // pred_check
        %p4052 = pneg %p149
      $region38: #{tpu_custom_call.1} parent=35 // pred_check_branch
        %4054 = sbr.rel (%p4052) target = $region40
      $region39: #{tpu_custom_call.1} parent=35 // pred_region
        %s4055 = smul.u32 16, %s20
      $region40: #{tpu_custom_call.1} parent=35 // pred_fallthru
        _
    $region36: #{tpu_custom_call.1} parent=5 // pred_fallthru
      _
    %p4056 = scmp.le.s32.totalorder 2, %s10
    // Predicated region
    $region41: #{tpu_custom_call.1} parent=5 // pred_check
      %p4057 = pneg %p4056
    $region42: #{tpu_custom_call.1} parent=5 // pred_check_branch
      %4059 = sbr.rel (%p4057) target = $region44
    $region43: #{tpu_custom_call.1} parent=5 // pred_region
      %s4060 = ssub.s32 %s10, 2
      // Predicated region
      $region45: #{tpu_custom_call.1} parent=43 // pred_check
        %p4061 = pneg %p155
      $region46: #{tpu_custom_call.1} parent=43 // pred_check_branch
        %4063 = sbr.rel (%p4061) target = $region48
      $region47: #{tpu_custom_call.1} parent=43 // pred_region
        %s4064 = smul.u32 16, %s22
        %p4065 = scmp.lt.s32.totalorder %s21, 1
        %s4066 = scalar_select %p4065, %s21, 1
        %p4067 = scmp.lt.s32.totalorder %s4064, 15
        %s4068 = scalar_select %p4067, %s4064, 15
        %s4069 = smul.addr %s4068, 2
        %s4070 = smul.addr %s4066, 128
        %s4071 = sadd.s32 %s4069, %s4070
        %s4072 = smul.addr %s4071, 8
        %s4073 = scalar_lea.vmem %s4, %s4072
      $region48: #{tpu_custom_call.1} parent=43 // pred_fallthru
        _
    $region44: #{tpu_custom_call.1} parent=5 // pred_fallthru
      _
  $region6: #{tpu_custom_call.1} parent=0 // loop_footer
    %s14 = sadd.s32 1, %s10
  $region7: #{tpu_custom_call.1} parent=0 // loop_footer_branch
    %9 = sbr.rel target = $region3
  $region8: #{tpu_custom_call.1} parent=0 // loop_exit
    _

// kernel: tpu_custom_call.1
$region0: #{tpu_custom_call.1}
  #allocation0 [shape = 'u32[]', space=smem, size = 0x4, offset = 0x4, fixed_abs, tag = 'smem constant byte address 0x4 - core index']
  #allocation1 [shape = 'u32[144,128]{1,0:T(1,128)}', space=vmem, size = 0x12000, scoped, tag = 'internal scratch']
  %s0 = inlined_call_operand.vmem [shape: f32[2,18,18,4], index: 0, kind: input, shape index: {}]
  %s1 = inlined_call_operand.vmem [shape: f32[2,18,18,4], index: 1, kind: input, shape index: {}]
  %s2 = inlined_call_operand.vmem [shape: bf16[16,4,4], index: 2, kind: input, shape index: {}]
  %s3 = inlined_call_operand.vmem [shape: f32[1,4], index: 3, kind: input, shape index: {}]
  %s4 = inlined_call_operand.vmem [shape: f32[2,4,16,16,4], index: 4, kind: output, shape index: {}]
  %s5 = sld [smem:[#allocation0]]
  $region49: #{tpu_custom_call.1} parent=0
    _
  %s7 = ssub.s32 1, %s5
  %s8 = scalar_select 0, %s7, %s5
  loop: start=0, step=1, limit=4
  $region2: #{tpu_custom_call.1} parent=0 // loop_pre_header
    _
  $region3: #{tpu_custom_call.1} parent=0 // loop_header
    %s10 = sphi 0, %s14
    %p11 = scmp.ge.s32.totalorder %s10, 4
    %s17 = sphi 0, %s29
    %s18 = sphi 0, %s25
    %s19 = sphi 0, %s17
    %s20 = sphi 0, %s18
    %s21 = sphi 0, %s19
    %s22 = sphi 0, %s20
    %s34 = sphi 0, %s36
    %s37 = sphi 0, %s34
    %s38 = sphi 0, %s37
    %s54 = sphi 0, %s38
    %s66 = sphi 0, %s68
    %s69 = sphi 0, %s66
    %s70 = sphi 0, %s69
    %s86 = sphi 0, %s70
    %s90 = sphi 0, %s90
    %s92 = sphi 0, %s90
    %s93 = sphi 0, %s92
    %s107 = sphi 0, %s93
    %s111 = sphi 0, %s111
    %s113 = sphi 0, %s111
    %s114 = sphi 0, %s113
    %s128 = sphi 0, %s114
    %s136 = sphi 0, %s138
    %s139 = sphi 0, %s136
    %s140 = sphi 0, %s139
    %s156 = sphi 0, %s140
  $region4: #{tpu_custom_call.1} parent=0 // loop_header_branch
    %13 = sbr.rel (%p11) target = $region8
  $region5: #{tpu_custom_call.1} parent=0 // loop_body
    %s15 = ssub.s32 %s10, 1
    %s16 = ssub.s32 %s10, 2
    %s23 = sadd.s32 1, %s18
    %p24 = scmp.ge.s32.totalorder %s23, 1
    %s25 = scalar_select %p24, 0, %s23
    %s26 = sadd.s32 1, %s17
    %s27 = scalar_select %p24, %s26, %s17
    %p28 = scmp.ge.s32.totalorder %s27, 2
    %s29 = scalar_select %p28, 0, %s27
    %s30 = ssub.s32 %s17, %s29
    %s31 = ssub.s32 %s18, %s25
    %s32 = sor.u32 %s30, %s31
    %p33 = scmp.eq.s32.totalorder %s32, 0
    %s35 = sadd.s32 %s34, 1
    %s36 = scalar_select %p33, %s34, %s35
    %p39 = pneg %p33
    %p40 = scmp.eq.s32.totalorder %s10, 1
    %p41 = por %p39, %p40
    %p42 = scmp.ne.s32.totalorder %s34, %s37
    %p43 = scmp.eq.s32.totalorder %s10, 0
    %p44 = por %p42, %p43
    %p45 = scmp.ne.s32.totalorder %s34, %s37
    %p46 = scmp.eq.s32.totalorder %s15, 1
    %p47 = por %p45, %p46
    %p48 = scmp.ne.s32.totalorder %s37, %s38
    %p49 = scmp.eq.s32.totalorder %s15, 0
    %p50 = por %p48, %p49
    %p51 = scmp.ne.s32.totalorder %s37, %s38
    %p52 = scmp.eq.s32.totalorder %s16, 1
    %p53 = por %p51, %p52
    %p55 = scmp.ne.s32.totalorder %s38, %s54
    %p56 = scmp.eq.s32.totalorder %s16, 0
    %p57 = por %p55, %p56
    %s58 = sadd.s32 %s18, 1
    %s59 = smul.u32 %s58, 8
    %s60 = sadd.s32 %s25, 1
    %s61 = smul.u32 %s60, 8
    %s62 = ssub.s32 %s17, %s29
    %s63 = ssub.s32 %s59, %s61
    %s64 = sor.u32 %s62, %s63
    %p65 = scmp.eq.s32.totalorder %s64, 0
    %s67 = sadd.s32 %s66, 1
    %s68 = scalar_select %p65, %s66, %s67
    %p71 = pneg %p65
    %p72 = scmp.eq.s32.totalorder %s10, 1
    %p73 = por %p71, %p72
    %p74 = scmp.ne.s32.totalorder %s66, %s69
    %p75 = scmp.eq.s32.totalorder %s10, 0
    %p76 = por %p74, %p75
    %p77 = scmp.ne.s32.totalorder %s66, %s69
    %p78 = scmp.eq.s32.totalorder %s15, 1
    %p79 = por %p77, %p78
    %p80 = scmp.ne.s32.totalorder %s69, %s70
    %p81 = scmp.eq.s32.totalorder %s15, 0
    %p82 = por %p80, %p81
    %p83 = scmp.ne.s32.totalorder %s69, %s70
    %p84 = scmp.eq.s32.totalorder %s16, 1
    %p85 = por %p83, %p84
    %p87 = scmp.ne.s32.totalorder %s70, %s86
    %p88 = scmp.eq.s32.totalorder %s16, 0
    %p89 = por %p87, %p88
    %s91 = sadd.s32 %s90, 1
    %p94 = scmp.eq.s32.totalorder %s10, 1
    %p95 = scmp.ne.s32.totalorder %s90, %s92
    %p96 = scmp.eq.s32.totalorder %s10, 0
    %p97 = por %p95, %p96
    %p98 = scmp.ne.s32.totalorder %s90, %s92
    %p99 = scmp.eq.s32.totalorder %s15, 1
    %p100 = por %p98, %p99
    %p101 = scmp.ne.s32.totalorder %s92, %s93
    %p102 = scmp.eq.s32.totalorder %s15, 0
    %p103 = por %p101, %p102
    %p104 = scmp.ne.s32.totalorder %s92, %s93
    %p105 = scmp.eq.s32.totalorder %s16, 1
    %p106 = por %p104, %p105
    %p108 = scmp.ne.s32.totalorder %s93, %s107
    %p109 = scmp.eq.s32.totalorder %s16, 0
    %p110 = por %p108, %p109
    %s112 = sadd.s32 %s111, 1
    %p115 = scmp.eq.s32.totalorder %s10, 1
    %p116 = scmp.ne.s32.totalorder %s111, %s113
    %p117 = scmp.eq.s32.totalorder %s10, 0
    %p118 = por %p116, %p117
    %p119 = scmp.ne.s32.totalorder %s111, %s113
    %p120 = scmp.eq.s32.totalorder %s15, 1
    %p121 = por %p119, %p120
    %p122 = scmp.ne.s32.totalorder %s113, %s114
    %p123 = scmp.eq.s32.totalorder %s15, 0
    %p124 = por %p122, %p123
    %p125 = scmp.ne.s32.totalorder %s113, %s114
    %p126 = scmp.eq.s32.totalorder %s16, 1
    %p127 = por %p125, %p126
    %p129 = scmp.ne.s32.totalorder %s114, %s128
    %p130 = scmp.eq.s32.totalorder %s16, 0
    %p131 = por %p129, %p130
    %s132 = ssub.s32 %s17, %s29
    %s133 = ssub.s32 %s18, %s25
    %s134 = sor.u32 %s132, %s133
    %p135 = scmp.eq.s32.totalorder %s134, 0
    %s137 = sadd.s32 %s136, 1
    %s138 = scalar_select %p135, %s136, %s137
    %p141 = pneg %p135
    %p142 = scmp.eq.s32.totalorder %s10, 1
    %p143 = por %p141, %p142
    %p144 = scmp.ne.s32.totalorder %s136, %s139
    %p145 = scmp.eq.s32.totalorder %s10, 0
    %p146 = por %p144, %p145
    %p147 = scmp.ne.s32.totalorder %s136, %s139
    %p148 = scmp.eq.s32.totalorder %s15, 1
    %p149 = por %p147, %p148
    %p150 = scmp.ne.s32.totalorder %s139, %s140
    %p151 = scmp.eq.s32.totalorder %s15, 0
    %p152 = por %p150, %p151
    %p153 = scmp.ne.s32.totalorder %s139, %s140
    %p154 = scmp.eq.s32.totalorder %s16, 1
    %p155 = por %p153, %p154
    %p157 = scmp.ne.s32.totalorder %s140, %s156
    %p158 = scmp.eq.s32.totalorder %s16, 0
    %p159 = por %p157, %p158
    %p160 = scmp.le.s32.totalorder 1, %s10
    %p161 = scmp.lt.s32.totalorder %s10, 3
    %p162 = pnand %p160, %p161
    %p163 = pneg %p162
    // Predicated region
    $region9: #{tpu_custom_call.1} parent=5 // pred_check
      _
    $region10: #{tpu_custom_call.1} parent=5 // pred_check_branch
      %165 = sbr.rel (%p162) target = $region12
    $region11: #{tpu_custom_call.1} parent=5 // pred_region
      %s166 = ssub.s32 %s10, 1
      // Predicated region
      $region13: #{tpu_custom_call.1} parent=11 // pred_check
        %p167 = pneg %p103
      $region14: #{tpu_custom_call.1} parent=11 // pred_check_branch
        %169 = sbr.rel (%p167) target = $region16
      $region15: #{tpu_custom_call.1} parent=11 // pred_region
        _
      $region16: #{tpu_custom_call.1} parent=11 // pred_fallthru
        _
      // Predicated region
      $region17: #{tpu_custom_call.1} parent=11 // pred_check
        %p170 = pneg %p124
      $region18: #{tpu_custom_call.1} parent=11 // pred_check_branch
        %172 = sbr.rel (%p170) target = $region20
      $region19: #{tpu_custom_call.1} parent=11 // pred_region
        _
      $region20: #{tpu_custom_call.1} parent=11 // pred_fallthru
        _
    $region12: #{tpu_custom_call.1} parent=5 // pred_fallthru
      _
    %p173 = scmp.lt.s32.totalorder %s10, 2
    // Predicated region
    $region21: #{tpu_custom_call.1} parent=5 // pred_check
      %p174 = pneg %p173
    $region22: #{tpu_custom_call.1} parent=5 // pred_check_branch
      %176 = sbr.rel (%p174) target = $region24
    $region23: #{tpu_custom_call.1} parent=5 // pred_region
      // Predicated region
      $region25: #{tpu_custom_call.1} parent=23 // pred_check
        %p177 = pneg %p44
      $region26: #{tpu_custom_call.1} parent=23 // pred_check_branch
        %179 = sbr.rel (%p177) target = $region28
      $region27: #{tpu_custom_call.1} parent=23 // pred_region
        %s180 = smul.u32 16, %s18
        %s181 = ssub.s32 18, %s180
        %p182 = scmp.lt.s32.totalorder %s181, 16
        %s183 = scalar_select %p182, %s181, 16
        %s184 = smul.u32 128, %s183
        %s185 = smul.u32 %s184, 3
        %p186 = scmp.lt.s32.totalorder %s17, 1
        %s187 = scalar_select %p186, %s17, 1
        %p188 = scmp.lt.s32.totalorder %s180, 17
        %s189 = scalar_select %p188, %s180, 17
        %s190 = smul.addr %s189, 3
        %s191 = smul.addr %s187, 54
        %s192 = sadd.s32 %s190, %s191
        %s193 = smul.addr %s192, 8
        %s194 = scalar_lea.vmem %s0, %s193
        %s195 = smul.u32 16, %s18
        %s196 = ssub.s32 18, %s195
        %p197 = scmp.lt.s32.totalorder %s196, 16
        %s198 = scalar_select %p197, %s196, 16
        %s199 = smul.u32 128, %s198
        %s200 = smul.u32 %s199, 3
      $region28: #{tpu_custom_call.1} parent=23 // pred_fallthru
        _
      // Predicated region
      $region29: #{tpu_custom_call.1} parent=23 // pred_check
        %p201 = pneg %p76
      $region30: #{tpu_custom_call.1} parent=23 // pred_check_branch
        %203 = sbr.rel (%p201) target = $region32
      $region31: #{tpu_custom_call.1} parent=23 // pred_region
        %s204 = sadd.s32 %s18, 1
        %s205 = smul.u32 %s204, 8
        %s206 = smul.u32 2, %s205
        %p207 = scmp.lt.s32.totalorder %s17, 1
        %s208 = scalar_select %p207, %s17, 1
        %p209 = scmp.lt.s32.totalorder %s206, 17
        %s210 = scalar_select %p209, %s206, 17
        %s211 = smul.addr %s210, 3
        %s212 = smul.addr %s208, 54
        %s213 = sadd.s32 %s211, %s212
        %s214 = smul.addr %s213, 8
        %s215 = scalar_lea.vmem %s1, %s214
        %s216 = sadd.s32 %s18, 1
        %s217 = smul.u32 %s216, 8
        %s218 = smul.u32 2, %s217
      $region32: #{tpu_custom_call.1} parent=23 // pred_fallthru
        _
    $region24: #{tpu_custom_call.1} parent=5 // pred_fallthru
      _
    %p219 = scmp.le.s32.totalorder 1, %s10
    %p220 = scmp.lt.s32.totalorder %s10, 3
    %p221 = pnand %p219, %p220
    %p222 = pneg %p221
    // Predicated region
    $region33: #{tpu_custom_call.1} parent=5 // pred_check
      _
    $region34: #{tpu_custom_call.1} parent=5 // pred_check_branch
      %224 = sbr.rel (%p221) target = $region36
    $region35: #{tpu_custom_call.1} parent=5 // pred_region
      %s225 = ssub.s32 %s10, 1
      %s226 = smul.u32 16, %s20
      %s227 = ssub.s32 18, %s226
      %p228 = scmp.lt.s32.totalorder %s227, 16
      %s229 = scalar_select %p228, %s227, 16
      %s230 = smul.u32 128, %s229
      %s231 = smul.u32 %s230, 3
      %p232 = scmp.lt.s32.totalorder %s19, 1
      %s233 = scalar_select %p232, %s19, 1
      %p234 = scmp.lt.s32.totalorder %s226, 17
      %s235 = scalar_select %p234, %s226, 17
      %s236 = smul.addr %s235, 3
      %s237 = smul.addr %s233, 54
      %s238 = sadd.s32 %s236, %s237
      %s239 = smul.addr %s238, 8
      %s240 = scalar_lea.vmem %s0, %s239
      %p241 = pneg %p50
      %p242 = pneg %p47
      %s243 = sadd.s32 %s20, 1
      %s244 = smul.u32 %s243, 8
      %s245 = smul.u32 2, %s244
      %p246 = scmp.lt.s32.totalorder %s19, 1
      %s247 = scalar_select %p246, %s19, 1
      %p248 = scmp.lt.s32.totalorder %s245, 17
      %s249 = scalar_select %p248, %s245, 17
      %s250 = smul.addr %s249, 3
      %s251 = smul.addr %s247, 54
      %s252 = sadd.s32 %s250, %s251
      %s253 = smul.addr %s252, 8
      %s254 = scalar_lea.vmem %s1, %s253
      %p255 = pneg %p82
      %p256 = pneg %p79
      %p257 = pneg %p103
      %p258 = pneg %p100
      %p259 = pneg %p124
      %p260 = pneg %p121
      %p261 = pneg %p152
      %p262 = pneg %p149
      %s263 = smul.u32 16, %s20
      %p264 = scmp.lt.s32.totalorder %s19, 1
      %s265 = scalar_select %p264, %s19, 1
      %p266 = scmp.lt.s32.totalorder %s263, 15
      %s267 = scalar_select %p266, %s263, 15
      %s268 = smul.addr %s267, 2
      %s269 = smul.addr %s265, 128
      %s270 = sadd.s32 %s268, %s269
      %s271 = smul.addr %s270, 8
      %s272 = scalar_lea.vmem %s4, %s271
      %s273 = smul.u32 16, %s20
      %s274 = ssub.s32 18, %s273
      %p275 = scmp.lt.s32.totalorder %s274, 16
      %s276 = scalar_select %p275, %s274, 16
      %s277 = smul.u32 128, %s276
      %s278 = smul.u32 %s277, 3
      %p279 = scmp.lt.s32.totalorder %s19, 1
      %s280 = scalar_select %p279, %s19, 1
      %p281 = scmp.lt.s32.totalorder %s273, 17
      %s282 = scalar_select %p281, %s273, 17
      %s283 = smul.addr %s282, 3
      %s284 = smul.addr %s280, 54
      %s285 = sadd.s32 %s283, %s284
      %s286 = smul.addr %s285, 8
      %s287 = scalar_lea.vmem %s0, %s286
      %s288 = smul.u32 16, %s20
      %s289 = ssub.s32 18, %s288
      %p290 = scmp.lt.s32.totalorder %s289, 16
      %s291 = scalar_select %p290, %s289, 16
      %s292 = smul.u32 128, %s291
      %s293 = smul.u32 %s292, 3
      %s294 = sadd.s32 %s20, 1
      %s295 = smul.u32 %s294, 8
      %s296 = smul.u32 2, %s295
      %p297 = scmp.lt.s32.totalorder %s19, 1
      %s298 = scalar_select %p297, %s19, 1
      %p299 = scmp.lt.s32.totalorder %s296, 17
      %s300 = scalar_select %p299, %s296, 17
      %s301 = smul.addr %s300, 3
      %s302 = smul.addr %s298, 54
      %s303 = sadd.s32 %s301, %s302
      %s304 = smul.addr %s303, 8
      %s305 = scalar_lea.vmem %s1, %s304
      %s306 = sadd.s32 %s20, 1
      %s307 = smul.u32 %s306, 8
      %s308 = smul.u32 2, %s307
      %s309 = smul.u32 16, %s20
      %p310 = scmp.lt.s32.totalorder %s19, 1
      %s311 = scalar_select %p310, %s19, 1
      %p312 = scmp.lt.s32.totalorder %s309, 15
      %s313 = scalar_select %p312, %s309, 15
      %s314 = smul.addr %s313, 2
      %s315 = smul.addr %s311, 128
      %s316 = sadd.s32 %s314, %s315
      %s317 = smul.addr %s316, 8
      %s318 = scalar_lea.vmem %s4, %s317
      %s319 = smul.u32 16, %s20
      %v321 = vld [vmem:[%s287] sm:$0xff]
      %v322 = vld [vmem:[%s287 + $0x8] sm:$0xff]
      %v323 = vld [vmem:[%s287 + $0x10] sm:$0x3]
      %v324 = vld [vmem:[%s287 + $0x18] sm:$0xff]
      %v325 = vld [vmem:[%s287 + $0x20] sm:$0xff]
      %v326 = vld [vmem:[%s287 + $0x28] sm:$0x3]
      %v327 = vld [vmem:[%s287 + $0x30] sm:$0xff]
      %v328 = vld [vmem:[%s287 + $0x38] sm:$0xff]
      %v329 = vld [vmem:[%s287 + $0x40] sm:$0x3]
      %v330 = vld [vmem:[%s287 + $0x48] sm:$0xff]
      %v331 = vld [vmem:[%s287 + $0x50] sm:$0xff]
      %v332 = vld [vmem:[%s287 + $0x58] sm:$0x3]
      %v333 = vld [vmem:[%s287 + $0x60] sm:$0xff]
      %v334 = vld [vmem:[%s287 + $0x68] sm:$0xff]
      %v335 = vld [vmem:[%s287 + $0x70] sm:$0x3]
      %v336 = vld [vmem:[%s287 + $0x78] sm:$0xff]
      %v337 = vld [vmem:[%s287 + $0x80] sm:$0xff]
      %v338 = vld [vmem:[%s287 + $0x88] sm:$0x3]
      %v339 = vld [vmem:[%s287 + $0x90] sm:$0xff]
      %v340 = vld [vmem:[%s287 + $0x98] sm:$0xff]
      %v341 = vld [vmem:[%s287 + $0xa0] sm:$0x3]
      %v342 = vld [vmem:[%s287 + $0xa8] sm:$0xff]
      %v343 = vld [vmem:[%s287 + $0xb0] sm:$0xff]
      %v344 = vld [vmem:[%s287 + $0xb8] sm:$0x3]
      %v345 = vld [vmem:[%s287 + $0xc0] sm:$0xff]
      %v346 = vld [vmem:[%s287 + $0xc8] sm:$0xff]
      %v347 = vld [vmem:[%s287 + $0xd0] sm:$0x3]
      %v348 = vld [vmem:[%s287 + $0xd8] sm:$0xff]
      %v349 = vld [vmem:[%s287 + $0xe0] sm:$0xff]
      %v350 = vld [vmem:[%s287 + $0xe8] sm:$0x3]
      %v351 = vld [vmem:[%s287 + $0xf0] sm:$0xff]
      %v352 = vld [vmem:[%s287 + $0xf8] sm:$0xff]
      %v353 = vld [vmem:[%s287 + $0x100] sm:$0x3]
      %v354 = vld [vmem:[%s287 + $0x108] sm:$0xff]
      %v355 = vld [vmem:[%s287 + $0x110] sm:$0xff]
      %v356 = vld [vmem:[%s287 + $0x118] sm:$0x3]
      %v357 = vld [vmem:[%s287 + $0x120] sm:$0xff]
      %v358 = vld [vmem:[%s287 + $0x128] sm:$0xff]
      %v359 = vld [vmem:[%s287 + $0x130] sm:$0x3]
      %v360 = vld [vmem:[%s287 + $0x138] sm:$0xff]
      %v361 = vld [vmem:[%s287 + $0x140] sm:$0xff]
      %v362 = vld [vmem:[%s287 + $0x148] sm:$0x3]
      %v363 = vld [vmem:[%s287 + $0x150] sm:$0xff]
      %v364 = vld [vmem:[%s287 + $0x158] sm:$0xff]
      %v365 = vld [vmem:[%s287 + $0x160] sm:$0x3]
      %v366 = vld [vmem:[%s287 + $0x168] sm:$0xff]
      %v367 = vld [vmem:[%s287 + $0x170] sm:$0xff]
      %v368 = vld [vmem:[%s287 + $0x178] sm:$0x3]
      %v369 = vld [vmem:[%s305] sm:$0xff]
      %v370 = vld [vmem:[%s305 + $0x8] sm:$0xff]
      %v371 = vld [vmem:[%s305 + $0x10] sm:$0x3]
      %v372 = vld [vmem:[%s305 + $0x18] sm:$0xff]
      %v373 = vld [vmem:[%s305 + $0x20] sm:$0xff]
      %v374 = vld [vmem:[%s305 + $0x28] sm:$0x3]
      %v375 = vpack.c.bf16 %v322, %v321
      %v376 = vpack.c.bf16 %v325, %v324
      %v377 = vpack.c.bf16 %v328, %v327
      %v378 = vpack.c.bf16 %v331, %v330
      %v379 = vpack.c.bf16 %v334, %v333
      %v380 = vpack.c.bf16 %v337, %v336
      %v381 = vpack.c.bf16 %v340, %v339
      %v382 = vpack.c.bf16 %v343, %v342
      %v383 = vpack.c.bf16 %v346, %v345
      %v384 = vpack.c.bf16 %v349, %v348
      %v385 = vpack.c.bf16 %v352, %v351
      %v386 = vpack.c.bf16 %v355, %v354
      %v387 = vpack.c.bf16 %v358, %v357
      %v388 = vpack.c.bf16 %v361, %v360
      %v389 = vpack.c.bf16 %v364, %v363
      %v390 = vpack.c.bf16 %v367, %v366
      %v391 = vpack.c.bf16 %v370, %v369
      %v392 = vpack.c.bf16 %v373, %v372
      %v393 = vpack.c.bf16 %v323, %v323
      %v394 = vpack.c.bf16 %v326, %v326
      %v395 = vpack.c.bf16 %v329, %v329
      %v396 = vpack.c.bf16 %v332, %v332
      %v397 = vpack.c.bf16 %v335, %v335
      %v398 = vpack.c.bf16 %v338, %v338
      %v399 = vpack.c.bf16 %v341, %v341
      %v400 = vpack.c.bf16 %v344, %v344
      %v401 = vpack.c.bf16 %v347, %v347
      %v402 = vpack.c.bf16 %v350, %v350
      %v403 = vpack.c.bf16 %v353, %v353
      %v404 = vpack.c.bf16 %v356, %v356
      %v405 = vpack.c.bf16 %v359, %v359
      %v406 = vpack.c.bf16 %v362, %v362
      %v407 = vpack.c.bf16 %v365, %v365
      %v408 = vpack.c.bf16 %v368, %v368
      %v409 = vpack.c.bf16 %v371, %v371
      %v410 = vpack.c.bf16 %v374, %v374
      %v411 = vld [vmem:[%s3] sm:$0x1]
      %v412 = vld [vmem:[%s2] sm:$0x3]
      %s413 = scalar_lea.vmem %s2, 2
      %v414 = vld [vmem:[%s413] sm:$0x3]
      %vm415 = vsmask.f32 7424
      %v417 = vshrl.u32 %v375, 16
      %v419 = vshll.u32 %v375, 16
      %v421 = vrot.slane %v419, 1
      %v422 = vor.u32 %v417, %v421
      %v424 = vshll.u32 %v393, 16
      %v426 = vrot.slane %v424, 1
      %v427 = vsel %vm415, %v422, %v426
      %v429 = vshrl.u32 %v376, 16
      %v431 = vshll.u32 %v376, 16
      %v433 = vrot.slane %v431, 1
      %v434 = vor.u32 %v429, %v433
      %v436 = vshll.u32 %v394, 16
      %v438 = vrot.slane %v436, 1
      %v439 = vsel %vm415, %v434, %v438
      %v441 = vshrl.u32 %v377, 16
      %v443 = vshll.u32 %v377, 16
      %v445 = vrot.slane %v443, 1
      %v446 = vor.u32 %v441, %v445
      %v448 = vshll.u32 %v395, 16
      %v450 = vrot.slane %v448, 1
      %v451 = vsel %vm415, %v446, %v450
      %v453 = vshrl.u32 %v378, 16
      %v455 = vshll.u32 %v378, 16
      %v457 = vrot.slane %v455, 1
      %v458 = vor.u32 %v453, %v457
      %v460 = vshll.u32 %v396, 16
      %v462 = vrot.slane %v460, 1
      %v463 = vsel %vm415, %v458, %v462
      %v465 = vshrl.u32 %v379, 16
      %v467 = vshll.u32 %v379, 16
      %v469 = vrot.slane %v467, 1
      %v470 = vor.u32 %v465, %v469
      %v472 = vshll.u32 %v397, 16
      %v474 = vrot.slane %v472, 1
      %v475 = vsel %vm415, %v470, %v474
      %v477 = vshrl.u32 %v380, 16
      %v479 = vshll.u32 %v380, 16
      %v481 = vrot.slane %v479, 1
      %v482 = vor.u32 %v477, %v481
      %v484 = vshll.u32 %v398, 16
      %v486 = vrot.slane %v484, 1
      %v487 = vsel %vm415, %v482, %v486
      %v489 = vshrl.u32 %v381, 16
      %v491 = vshll.u32 %v381, 16
      %v493 = vrot.slane %v491, 1
      %v494 = vor.u32 %v489, %v493
      %v496 = vshll.u32 %v399, 16
      %v498 = vrot.slane %v496, 1
      %v499 = vsel %vm415, %v494, %v498
      %v501 = vshrl.u32 %v382, 16
      %v503 = vshll.u32 %v382, 16
      %v505 = vrot.slane %v503, 1
      %v506 = vor.u32 %v501, %v505
      %v508 = vshll.u32 %v400, 16
      %v510 = vrot.slane %v508, 1
      %v511 = vsel %vm415, %v506, %v510
      %v513 = vshrl.u32 %v383, 16
      %v515 = vshll.u32 %v383, 16
      %v517 = vrot.slane %v515, 1
      %v518 = vor.u32 %v513, %v517
      %v520 = vshll.u32 %v401, 16
      %v522 = vrot.slane %v520, 1
      %v523 = vsel %vm415, %v518, %v522
      %v525 = vshrl.u32 %v384, 16
      %v527 = vshll.u32 %v384, 16
      %v529 = vrot.slane %v527, 1
      %v530 = vor.u32 %v525, %v529
      %v532 = vshll.u32 %v402, 16
      %v534 = vrot.slane %v532, 1
      %v535 = vsel %vm415, %v530, %v534
      %v537 = vshrl.u32 %v385, 16
      %v539 = vshll.u32 %v385, 16
      %v541 = vrot.slane %v539, 1
      %v542 = vor.u32 %v537, %v541
      %v544 = vshll.u32 %v403, 16
      %v546 = vrot.slane %v544, 1
      %v547 = vsel %vm415, %v542, %v546
      %v549 = vshrl.u32 %v386, 16
      %v551 = vshll.u32 %v386, 16
      %v553 = vrot.slane %v551, 1
      %v554 = vor.u32 %v549, %v553
      %v556 = vshll.u32 %v404, 16
      %v558 = vrot.slane %v556, 1
      %v559 = vsel %vm415, %v554, %v558
      %v561 = vshrl.u32 %v387, 16
      %v563 = vshll.u32 %v387, 16
      %v565 = vrot.slane %v563, 1
      %v566 = vor.u32 %v561, %v565
      %v568 = vshll.u32 %v405, 16
      %v570 = vrot.slane %v568, 1
      %v571 = vsel %vm415, %v566, %v570
      %v573 = vshrl.u32 %v388, 16
      %v575 = vshll.u32 %v388, 16
      %v577 = vrot.slane %v575, 1
      %v578 = vor.u32 %v573, %v577
      %v580 = vshll.u32 %v406, 16
      %v582 = vrot.slane %v580, 1
      %v583 = vsel %vm415, %v578, %v582
      %v585 = vshrl.u32 %v389, 16
      %v587 = vshll.u32 %v389, 16
      %v589 = vrot.slane %v587, 1
      %v590 = vor.u32 %v585, %v589
      %v592 = vshll.u32 %v407, 16
      %v594 = vrot.slane %v592, 1
      %v595 = vsel %vm415, %v590, %v594
      %v597 = vshrl.u32 %v390, 16
      %v599 = vshll.u32 %v390, 16
      %v601 = vrot.slane %v599, 1
      %v602 = vor.u32 %v597, %v601
      %v604 = vshll.u32 %v408, 16
      %v606 = vrot.slane %v604, 1
      %v607 = vsel %vm415, %v602, %v606
      %vm608 = vcmask 31744
      %v610 = vsel %vm608, %v427, 0
      %v613 = vsel %vm608, %v439, 0
      %v616 = vsel %vm608, %v451, 0
      %v619 = vsel %vm608, %v463, 0
      %v622 = vsel %vm608, %v475, 0
      %v625 = vsel %vm608, %v487, 0
      %v628 = vsel %vm608, %v499, 0
      %v631 = vsel %vm608, %v511, 0
      %v634 = vsel %vm608, %v523, 0
      %v637 = vsel %vm608, %v535, 0
      %v640 = vsel %vm608, %v547, 0
      %v643 = vsel %vm608, %v559, 0
      %v646 = vsel %vm608, %v571, 0
      %v649 = vsel %vm608, %v583, 0
      %v652 = vsel %vm608, %v595, 0
      %v655 = vsel %vm608, %v607, 0
      %vm657 = vcmask 1041408
      %v659 = vsel %vm657, %v414, 0
      %661 = vmatprep.subr.bf16.mxu0 0
      %662 = vmatpush1.bf16.msra.mxu0 %v659
      %663 = vmatprep.subr.bf16.mxu0 0
      %664 = vmatpush1.bf16.msra.mxu0 0
      %665 = vmatprep.subr.bf16.mxu0 0
      %666 = vmatpush1.bf16.msra.mxu0 0
      %667 = vmatprep.subr.bf16.mxu0 0
      %668 = vmatpush1.bf16.msra.mxu0 0
      %669 = vmatprep.subr.bf16.mxu0 0
      %670 = vmatpush1.bf16.msra.mxu0 0
      %671 = vmatprep.subr.bf16.mxu0 0
      %672 = vmatpush1.bf16.msra.mxu0 0
      %673 = vmatprep.subr.bf16.mxu0 0
      %674 = vmatpush1.bf16.msra.mxu0 0
      %675 = vmatprep.subr.bf16.mxu0 0
      %676 = vmatpush1.bf16.msra.mxu0 0
      %677 = vmatprep.subr.bf16.mxu0 0
      %678 = vmatpush1.bf16.msra.mxu0 0
      %679 = vmatprep.subr.bf16.mxu0 0
      %680 = vmatpush1.bf16.msra.mxu0 0
      %681 = vmatprep.subr.bf16.mxu0 0
      %682 = vmatpush1.bf16.msra.mxu0 0
      %683 = vmatprep.subr.bf16.mxu0 0
      %684 = vmatpush1.bf16.msra.mxu0 0
      %685 = vmatprep.subr.bf16.mxu0 0
      %686 = vmatpush1.bf16.msra.mxu0 0
      %687 = vmatprep.subr.bf16.mxu0 0
      %688 = vmatpush1.bf16.msra.mxu0 0
      %689 = vmatprep.subr.bf16.mxu0 0
      %690 = vmatpush1.bf16.msra.mxu0 0
      %691 = vmatprep.subr.bf16.mxu0 0
      %692 = vmatpush1.bf16.msra.mxu0 0
      %693 = vmatprep.mubr.bf16.mxu0 0
      %694 = vmatmul.mubr.bf16.gmra.mrb[0].mxu0 %v610
      %v695 = vpop.f32.mrb[0].mxu0
      %v696 = vadd.f32 0.0, %v695
      %v697 = vpop.f32.mrb[0].mxu0
      %v698 = vpop.f32.mrb[0].mxu0
      %v699 = vadd.f32 0.0, %v698
      %v700 = vpop.f32.mrb[0].mxu0
      %701 = vmatprep.mubr.bf16.mxu0 0
      %702 = vmatmul.mubr.bf16.gmra.mrb[0].mxu0 %v613
      %v703 = vpop.f32.mrb[0].mxu0
      %v704 = vadd.f32 0.0, %v703
      %v705 = vpop.f32.mrb[0].mxu0
      %v706 = vpop.f32.mrb[0].mxu0
      %v707 = vadd.f32 0.0, %v706
      %v708 = vpop.f32.mrb[0].mxu0
      %709 = vmatprep.mubr.bf16.mxu0 0
      %710 = vmatmul.mubr.bf16.gmra.mrb[0].mxu0 %v616
      %v711 = vpop.f32.mrb[0].mxu0
      %v712 = vadd.f32 0.0, %v711
      %v713 = vpop.f32.mrb[0].mxu0
      %v714 = vpop.f32.mrb[0].mxu0
      %v715 = vadd.f32 0.0, %v714
      %v716 = vpop.f32.mrb[0].mxu0
      %717 = vmatprep.mubr.bf16.mxu0 0
      %718 = vmatmul.mubr.bf16.gmra.mrb[0].mxu0 %v619
      %v719 = vpop.f32.mrb[0].mxu0
      %v720 = vadd.f32 0.0, %v719
      %v721 = vpop.f32.mrb[0].mxu0
      %v722 = vpop.f32.mrb[0].mxu0
      %v723 = vadd.f32 0.0, %v722
      %v724 = vpop.f32.mrb[0].mxu0
      %725 = vmatprep.mubr.bf16.mxu0 0
      %726 = vmatmul.mubr.bf16.gmra.mrb[0].mxu0 %v622
      %v727 = vpop.f32.mrb[0].mxu0
      %v728 = vadd.f32 0.0, %v727
      %v729 = vpop.f32.mrb[0].mxu0
      %v730 = vpop.f32.mrb[0].mxu0
      %v731 = vadd.f32 0.0, %v730
      %v732 = vpop.f32.mrb[0].mxu0
      %733 = vmatprep.mubr.bf16.mxu0 0
      %734 = vmatmul.mubr.bf16.gmra.mrb[0].mxu0 %v625
      %v735 = vpop.f32.mrb[0].mxu0
      %v736 = vadd.f32 0.0, %v735
      %v737 = vpop.f32.mrb[0].mxu0
      %v738 = vpop.f32.mrb[0].mxu0
      %v739 = vadd.f32 0.0, %v738
      %v740 = vpop.f32.mrb[0].mxu0
      %741 = vmatprep.mubr.bf16.mxu0 0
      %742 = vmatmul.mubr.bf16.gmra.mrb[0].mxu0 %v628
      %v743 = vpop.f32.mrb[0].mxu0
      %v744 = vadd.f32 0.0, %v743
      %v745 = vpop.f32.mrb[0].mxu0
      %v746 = vpop.f32.mrb[0].mxu0
      %v747 = vadd.f32 0.0, %v746
      %v748 = vpop.f32.mrb[0].mxu0
      %749 = vmatprep.mubr.bf16.mxu0 0
      %750 = vmatmul.mubr.bf16.gmra.mrb[0].mxu0 %v631
      %v751 = vpop.f32.mrb[0].mxu0
      %v752 = vadd.f32 0.0, %v751
      %v753 = vpop.f32.mrb[0].mxu0
      %v754 = vpop.f32.mrb[0].mxu0
      %v755 = vadd.f32 0.0, %v754
      %v756 = vpop.f32.mrb[0].mxu0
      %757 = vmatprep.mubr.bf16.mxu0 0
      %758 = vmatmul.mubr.bf16.gmra.mrb[0].mxu0 %v634
      %v759 = vpop.f32.mrb[0].mxu0
      %v760 = vadd.f32 0.0, %v759
      %v761 = vpop.f32.mrb[0].mxu0
      %v762 = vpop.f32.mrb[0].mxu0
      %v763 = vadd.f32 0.0, %v762
      %v764 = vpop.f32.mrb[0].mxu0
      %765 = vmatprep.mubr.bf16.mxu0 0
      %766 = vmatmul.mubr.bf16.gmra.mrb[0].mxu0 %v637
      %v767 = vpop.f32.mrb[0].mxu0
      %v768 = vadd.f32 0.0, %v767
      %v769 = vpop.f32.mrb[0].mxu0
      %v770 = vpop.f32.mrb[0].mxu0
      %v771 = vadd.f32 0.0, %v770
      %v772 = vpop.f32.mrb[0].mxu0
      %773 = vmatprep.mubr.bf16.mxu0 0
      %774 = vmatmul.mubr.bf16.gmra.mrb[0].mxu0 %v640
      %v775 = vpop.f32.mrb[0].mxu0
      %v776 = vadd.f32 0.0, %v775
      %v777 = vpop.f32.mrb[0].mxu0
      %v778 = vpop.f32.mrb[0].mxu0
      %v779 = vadd.f32 0.0, %v778
      %v780 = vpop.f32.mrb[0].mxu0
      %781 = vmatprep.mubr.bf16.mxu0 0
      %782 = vmatmul.mubr.bf16.gmra.mrb[0].mxu0 %v643
      %v783 = vpop.f32.mrb[0].mxu0
      %v784 = vadd.f32 0.0, %v783
      %v785 = vpop.f32.mrb[0].mxu0
      %v786 = vpop.f32.mrb[0].mxu0
      %v787 = vadd.f32 0.0, %v786
      %v788 = vpop.f32.mrb[0].mxu0
      %789 = vmatprep.mubr.bf16.mxu0 0
      %790 = vmatmul.mubr.bf16.gmra.mrb[0].mxu0 %v646
      %v791 = vpop.f32.mrb[0].mxu0
      %v792 = vadd.f32 0.0, %v791
      %v793 = vpop.f32.mrb[0].mxu0
      %v794 = vpop.f32.mrb[0].mxu0
      %v795 = vadd.f32 0.0, %v794
      %v796 = vpop.f32.mrb[0].mxu0
      %797 = vmatprep.mubr.bf16.mxu0 0
      %798 = vmatmul.mubr.bf16.gmra.mrb[0].mxu0 %v649
      %v799 = vpop.f32.mrb[0].mxu0
      %v800 = vadd.f32 0.0, %v799
      %v801 = vpop.f32.mrb[0].mxu0
      %v802 = vpop.f32.mrb[0].mxu0
      %v803 = vadd.f32 0.0, %v802
      %v804 = vpop.f32.mrb[0].mxu0
      %805 = vmatprep.mubr.bf16.mxu0 0
      %806 = vmatmul.mubr.bf16.gmra.mrb[0].mxu0 %v652
      %v807 = vpop.f32.mrb[0].mxu0
      %v808 = vadd.f32 0.0, %v807
      %v809 = vpop.f32.mrb[0].mxu0
      %v810 = vpop.f32.mrb[0].mxu0
      %v811 = vadd.f32 0.0, %v810
      %v812 = vpop.f32.mrb[0].mxu0
      %813 = vmatprep.mubr.bf16.mxu0 0
      %814 = vmatmul.mubr.bf16.gmra.mrb[0].mxu0 %v655
      %v815 = vpop.f32.mrb[0].mxu0
      %v816 = vadd.f32 0.0, %v815
      %v817 = vpop.f32.mrb[0].mxu0
      %v818 = vpop.f32.mrb[0].mxu0
      %v819 = vadd.f32 0.0, %v818
      %v820 = vpop.f32.mrb[0].mxu0
      %821 = vdwg.mxu0
      %v822 = vsel %vm608, %v375, 0
      %v824 = vsel %vm608, %v376, 0
      %v826 = vsel %vm608, %v377, 0
      %v828 = vsel %vm608, %v378, 0
      %v830 = vsel %vm608, %v379, 0
      %v832 = vsel %vm608, %v380, 0
      %v834 = vsel %vm608, %v381, 0
      %v836 = vsel %vm608, %v382, 0
      %v838 = vsel %vm608, %v383, 0
      %v840 = vsel %vm608, %v384, 0
      %v842 = vsel %vm608, %v385, 0
      %v844 = vsel %vm608, %v386, 0
      %v846 = vsel %vm608, %v387, 0
      %v848 = vsel %vm608, %v388, 0
      %v850 = vsel %vm608, %v389, 0
      %v852 = vsel %vm608, %v390, 0
      %v855 = vsel %vm657, %v412, 0
      %857 = vmatprep.subr.bf16.mxu0 0
      %858 = vmatpush1.bf16.msra.mxu0 %v855
      %859 = vmatprep.subr.bf16.mxu0 0
      %860 = vmatpush1.bf16.msra.mxu0 0
      %861 = vmatprep.subr.bf16.mxu0 0
      %862 = vmatpush1.bf16.msra.mxu0 0
      %863 = vmatprep.subr.bf16.mxu0 0
      %864 = vmatpush1.bf16.msra.mxu0 0
      %865 = vmatprep.subr.bf16.mxu0 0
      %866 = vmatpush1.bf16.msra.mxu0 0
      %867 = vmatprep.subr.bf16.mxu0 0
      %868 = vmatpush1.bf16.msra.mxu0 0
      %869 = vmatprep.subr.bf16.mxu0 0
      %870 = vmatpush1.bf16.msra.mxu0 0
      %871 = vmatprep.subr.bf16.mxu0 0
      %872 = vmatpush1.bf16.msra.mxu0 0
      %873 = vmatprep.subr.bf16.mxu0 0
      %874 = vmatpush1.bf16.msra.mxu0 0
      %875 = vmatprep.subr.bf16.mxu0 0
      %876 = vmatpush1.bf16.msra.mxu0 0
      %877 = vmatprep.subr.bf16.mxu0 0
      %878 = vmatpush1.bf16.msra.mxu0 0
      %879 = vmatprep.subr.bf16.mxu0 0
      %880 = vmatpush1.bf16.msra.mxu0 0
      %881 = vmatprep.subr.bf16.mxu0 0
      %882 = vmatpush1.bf16.msra.mxu0 0
      %883 = vmatprep.subr.bf16.mxu0 0
      %884 = vmatpush1.bf16.msra.mxu0 0
      %885 = vmatprep.subr.bf16.mxu0 0
      %886 = vmatpush1.bf16.msra.mxu0 0
      %887 = vmatprep.subr.bf16.mxu0 0
      %888 = vmatpush1.bf16.msra.mxu0 0
      %889 = vmatprep.mubr.bf16.mxu0 0
      %890 = vmatmul.mubr.bf16.gmra.mrb[0].mxu0 %v822
      %v891 = vpop.f32.mrb[0].mxu0
      %v892 = vadd.f32 %v696, %v891
      %v893 = vpop.f32.mrb[0].mxu0
      %v894 = vpop.f32.mrb[0].mxu0
      %v895 = vadd.f32 %v699, %v894
      %v896 = vpop.f32.mrb[0].mxu0
      %897 = vmatprep.mubr.bf16.mxu0 0
      %898 = vmatmul.mubr.bf16.gmra.mrb[0].mxu0 %v824
      %v899 = vpop.f32.mrb[0].mxu0
      %v900 = vadd.f32 %v704, %v899
      %v901 = vpop.f32.mrb[0].mxu0
      %v902 = vpop.f32.mrb[0].mxu0
      %v903 = vadd.f32 %v707, %v902
      %v904 = vpop.f32.mrb[0].mxu0
      %905 = vmatprep.mubr.bf16.mxu0 0
      %906 = vmatmul.mubr.bf16.gmra.mrb[0].mxu0 %v826
      %v907 = vpop.f32.mrb[0].mxu0
      %v908 = vadd.f32 %v712, %v907
      %v909 = vpop.f32.mrb[0].mxu0
      %v910 = vpop.f32.mrb[0].mxu0
      %v911 = vadd.f32 %v715, %v910
      %v912 = vpop.f32.mrb[0].mxu0
      %913 = vmatprep.mubr.bf16.mxu0 0
      %914 = vmatmul.mubr.bf16.gmra.mrb[0].mxu0 %v828
      %v915 = vpop.f32.mrb[0].mxu0
      %v916 = vadd.f32 %v720, %v915
      %v917 = vpop.f32.mrb[0].mxu0
      %v918 = vpop.f32.mrb[0].mxu0
      %v919 = vadd.f32 %v723, %v918
      %v920 = vpop.f32.mrb[0].mxu0
      %921 = vmatprep.mubr.bf16.mxu0 0
      %922 = vmatmul.mubr.bf16.gmra.mrb[0].mxu0 %v830
      %v923 = vpop.f32.mrb[0].mxu0
      %v924 = vadd.f32 %v728, %v923
      %v925 = vpop.f32.mrb[0].mxu0
      %v926 = vpop.f32.mrb[0].mxu0
      %v927 = vadd.f32 %v731, %v926
      %v928 = vpop.f32.mrb[0].mxu0
      %929 = vmatprep.mubr.bf16.mxu0 0
      %930 = vmatmul.mubr.bf16.gmra.mrb[0].mxu0 %v832
      %v931 = vpop.f32.mrb[0].mxu0
      %v932 = vadd.f32 %v736, %v931
      %v933 = vpop.f32.mrb[0].mxu0
      %v934 = vpop.f32.mrb[0].mxu0
      %v935 = vadd.f32 %v739, %v934
      %v936 = vpop.f32.mrb[0].mxu0
      %937 = vmatprep.mubr.bf16.mxu0 0
      %938 = vmatmul.mubr.bf16.gmra.mrb[0].mxu0 %v834
      %v939 = vpop.f32.mrb[0].mxu0
      %v940 = vadd.f32 %v744, %v939
      %v941 = vpop.f32.mrb[0].mxu0
      %v942 = vpop.f32.mrb[0].mxu0
      %v943 = vadd.f32 %v747, %v942
      %v944 = vpop.f32.mrb[0].mxu0
      %945 = vmatprep.mubr.bf16.mxu0 0
      %946 = vmatmul.mubr.bf16.gmra.mrb[0].mxu0 %v836
      %v947 = vpop.f32.mrb[0].mxu0
      %v948 = vadd.f32 %v752, %v947
      %v949 = vpop.f32.mrb[0].mxu0
      %v950 = vpop.f32.mrb[0].mxu0
      %v951 = vadd.f32 %v755, %v950
      %v952 = vpop.f32.mrb[0].mxu0
      %953 = vmatprep.mubr.bf16.mxu0 0
      %954 = vmatmul.mubr.bf16.gmra.mrb[0].mxu0 %v838
      %v955 = vpop.f32.mrb[0].mxu0
      %v956 = vadd.f32 %v760, %v955
      %v957 = vpop.f32.mrb[0].mxu0
      %v958 = vpop.f32.mrb[0].mxu0
      %v959 = vadd.f32 %v763, %v958
      %v960 = vpop.f32.mrb[0].mxu0
      %961 = vmatprep.mubr.bf16.mxu0 0
      %962 = vmatmul.mubr.bf16.gmra.mrb[0].mxu0 %v840
      %v963 = vpop.f32.mrb[0].mxu0
      %v964 = vadd.f32 %v768, %v963
      %v965 = vpop.f32.mrb[0].mxu0
      %v966 = vpop.f32.mrb[0].mxu0
      %v967 = vadd.f32 %v771, %v966
      %v968 = vpop.f32.mrb[0].mxu0
      %969 = vmatprep.mubr.bf16.mxu0 0
      %970 = vmatmul.mubr.bf16.gmra.mrb[0].mxu0 %v842
      %v971 = vpop.f32.mrb[0].mxu0
      %v972 = vadd.f32 %v776, %v971
      %v973 = vpop.f32.mrb[0].mxu0
      %v974 = vpop.f32.mrb[0].mxu0
      %v975 = vadd.f32 %v779, %v974
      %v976 = vpop.f32.mrb[0].mxu0
      %977 = vmatprep.mubr.bf16.mxu0 0
      %978 = vmatmul.mubr.bf16.gmra.mrb[0].mxu0 %v844
      %v979 = vpop.f32.mrb[0].mxu0
      %v980 = vadd.f32 %v784, %v979
      %v981 = vpop.f32.mrb[0].mxu0
      %v982 = vpop.f32.mrb[0].mxu0
      %v983 = vadd.f32 %v787, %v982
      %v984 = vpop.f32.mrb[0].mxu0
      %985 = vmatprep.mubr.bf16.mxu0 0
      %986 = vmatmul.mubr.bf16.gmra.mrb[0].mxu0 %v846
      %v987 = vpop.f32.mrb[0].mxu0
      %v988 = vadd.f32 %v792, %v987
      %v989 = vpop.f32.mrb[0].mxu0
      %v990 = vpop.f32.mrb[0].mxu0
      %v991 = vadd.f32 %v795, %v990
      %v992 = vpop.f32.mrb[0].mxu0
      %993 = vmatprep.mubr.bf16.mxu0 0
      %994 = vmatmul.mubr.bf16.gmra.mrb[0].mxu0 %v848
      %v995 = vpop.f32.mrb[0].mxu0
      %v996 = vadd.f32 %v800, %v995
      %v997 = vpop.f32.mrb[0].mxu0
      %v998 = vpop.f32.mrb[0].mxu0
      %v999 = vadd.f32 %v803, %v998
      %v1000 = vpop.f32.mrb[0].mxu0
      %1001 = vmatprep.mubr.bf16.mxu0 0
      %1002 = vmatmul.mubr.bf16.gmra.mrb[0].mxu0 %v850
      %v1003 = vpop.f32.mrb[0].mxu0
      %v1004 = vadd.f32 %v808, %v1003
      %v1005 = vpop.f32.mrb[0].mxu0
      %v1006 = vpop.f32.mrb[0].mxu0
      %v1007 = vadd.f32 %v811, %v1006
      %v1008 = vpop.f32.mrb[0].mxu0
      %1009 = vmatprep.mubr.bf16.mxu0 0
      %1010 = vmatmul.mubr.bf16.gmra.mrb[0].mxu0 %v852
      %v1011 = vpop.f32.mrb[0].mxu0
      %v1012 = vadd.f32 %v816, %v1011
      %v1013 = vpop.f32.mrb[0].mxu0
      %v1014 = vpop.f32.mrb[0].mxu0
      %v1015 = vadd.f32 %v819, %v1014
      %v1016 = vpop.f32.mrb[0].mxu0
      %1017 = vdwg.mxu0
      %s1018 = scalar_lea.vmem %s2, 4
      %v1019 = vld [vmem:[%s1018] sm:$0x3]
      %v1021 = vsel %vm608, %v391, 0
      %v1024 = vsel %vm657, %v1019, 0
      %1026 = vmatprep.subr.bf16.mxu0 0
      %1027 = vmatpush1.bf16.msra.mxu0 %v1024
      %1028 = vmatprep.subr.bf16.mxu0 0
      %1029 = vmatpush1.bf16.msra.mxu0 0
      %1030 = vmatprep.subr.bf16.mxu0 0
      %1031 = vmatpush1.bf16.msra.mxu0 0
      %1032 = vmatprep.subr.bf16.mxu0 0
      %1033 = vmatpush1.bf16.msra.mxu0 0
      %1034 = vmatprep.subr.bf16.mxu0 0
      %1035 = vmatpush1.bf16.msra.mxu0 0
      %1036 = vmatprep.subr.bf16.mxu0 0
      %1037 = vmatpush1.bf16.msra.mxu0 0
      %1038 = vmatprep.subr.bf16.mxu0 0
      %1039 = vmatpush1.bf16.msra.mxu0 0
      %1040 = vmatprep.subr.bf16.mxu0 0
      %1041 = vmatpush1.bf16.msra.mxu0 0
      %1042 = vmatprep.subr.bf16.mxu0 0
      %1043 = vmatpush1.bf16.msra.mxu0 0
      %1044 = vmatprep.subr.bf16.mxu0 0
      %1045 = vmatpush1.bf16.msra.mxu0 0
      %1046 = vmatprep.subr.bf16.mxu0 0
      %1047 = vmatpush1.bf16.msra.mxu0 0
      %1048 = vmatprep.subr.bf16.mxu0 0
      %1049 = vmatpush1.bf16.msra.mxu0 0
      %1050 = vmatprep.subr.bf16.mxu0 0
      %1051 = vmatpush1.bf16.msra.mxu0 0
      %1052 = vmatprep.subr.bf16.mxu0 0
      %1053 = vmatpush1.bf16.msra.mxu0 0
      %1054 = vmatprep.subr.bf16.mxu0 0
      %1055 = vmatpush1.bf16.msra.mxu0 0
      %1056 = vmatprep.subr.bf16.mxu0 0
      %1057 = vmatpush1.bf16.msra.mxu0 0
      %1058 = vmatprep.mubr.bf16.mxu0 0
      %1059 = vmatmul.mubr.bf16.gmra.mrb[0].mxu0 %v824
      %v1060 = vpop.f32.mrb[0].mxu0
      %v1061 = vadd.f32 0.0, %v1060
      %v1062 = vpop.f32.mrb[0].mxu0
      %v1063 = vpop.f32.mrb[0].mxu0
      %v1064 = vadd.f32 0.0, %v1063
      %v1065 = vpop.f32.mrb[0].mxu0
      %1066 = vmatprep.mubr.bf16.mxu0 0
      %1067 = vmatmul.mubr.bf16.gmra.mrb[0].mxu0 %v826
      %v1068 = vpop.f32.mrb[0].mxu0
      %v1069 = vadd.f32 0.0, %v1068
      %v1070 = vpop.f32.mrb[0].mxu0
      %v1071 = vpop.f32.mrb[0].mxu0
      %v1072 = vadd.f32 0.0, %v1071
      %v1073 = vpop.f32.mrb[0].mxu0
      %1074 = vmatprep.mubr.bf16.mxu0 0
      %1075 = vmatmul.mubr.bf16.gmra.mrb[0].mxu0 %v828
      %v1076 = vpop.f32.mrb[0].mxu0
      %v1077 = vadd.f32 0.0, %v1076
      %v1078 = vpop.f32.mrb[0].mxu0
      %v1079 = vpop.f32.mrb[0].mxu0
      %v1080 = vadd.f32 0.0, %v1079
      %v1081 = vpop.f32.mrb[0].mxu0
      %1082 = vmatprep.mubr.bf16.mxu0 0
      %1083 = vmatmul.mubr.bf16.gmra.mrb[0].mxu0 %v830
      %v1084 = vpop.f32.mrb[0].mxu0
      %v1085 = vadd.f32 0.0, %v1084
      %v1086 = vpop.f32.mrb[0].mxu0
      %v1087 = vpop.f32.mrb[0].mxu0
      %v1088 = vadd.f32 0.0, %v1087
      %v1089 = vpop.f32.mrb[0].mxu0
      %1090 = vmatprep.mubr.bf16.mxu0 0
      %1091 = vmatmul.mubr.bf16.gmra.mrb[0].mxu0 %v832
      %v1092 = vpop.f32.mrb[0].mxu0
      %v1093 = vadd.f32 0.0, %v1092
      %v1094 = vpop.f32.mrb[0].mxu0
      %v1095 = vpop.f32.mrb[0].mxu0
      %v1096 = vadd.f32 0.0, %v1095
      %v1097 = vpop.f32.mrb[0].mxu0
      %1098 = vmatprep.mubr.bf16.mxu0 0
      %1099 = vmatmul.mubr.bf16.gmra.mrb[0].mxu0 %v834
      %v1100 = vpop.f32.mrb[0].mxu0
      %v1101 = vadd.f32 0.0, %v1100
      %v1102 = vpop.f32.mrb[0].mxu0
      %v1103 = vpop.f32.mrb[0].mxu0
      %v1104 = vadd.f32 0.0, %v1103
      %v1105 = vpop.f32.mrb[0].mxu0
      %1106 = vmatprep.mubr.bf16.mxu0 0
      %1107 = vmatmul.mubr.bf16.gmra.mrb[0].mxu0 %v836
      %v1108 = vpop.f32.mrb[0].mxu0
      %v1109 = vadd.f32 0.0, %v1108
      %v1110 = vpop.f32.mrb[0].mxu0
      %v1111 = vpop.f32.mrb[0].mxu0
      %v1112 = vadd.f32 0.0, %v1111
      %v1113 = vpop.f32.mrb[0].mxu0
      %1114 = vmatprep.mubr.bf16.mxu0 0
      %1115 = vmatmul.mubr.bf16.gmra.mrb[0].mxu0 %v838
      %v1116 = vpop.f32.mrb[0].mxu0
      %v1117 = vadd.f32 0.0, %v1116
      %v1118 = vpop.f32.mrb[0].mxu0
      %v1119 = vpop.f32.mrb[0].mxu0
      %v1120 = vadd.f32 0.0, %v1119
      %v1121 = vpop.f32.mrb[0].mxu0
      %1122 = vmatprep.mubr.bf16.mxu0 0
      %1123 = vmatmul.mubr.bf16.gmra.mrb[0].mxu0 %v840
      %v1124 = vpop.f32.mrb[0].mxu0
      %v1125 = vadd.f32 0.0, %v1124
      %v1126 = vpop.f32.mrb[0].mxu0
      %v1127 = vpop.f32.mrb[0].mxu0
      %v1128 = vadd.f32 0.0, %v1127
      %v1129 = vpop.f32.mrb[0].mxu0
      %1130 = vmatprep.mubr.bf16.mxu0 0
      %1131 = vmatmul.mubr.bf16.gmra.mrb[0].mxu0 %v842
      %v1132 = vpop.f32.mrb[0].mxu0
      %v1133 = vadd.f32 0.0, %v1132
      %v1134 = vpop.f32.mrb[0].mxu0
      %v1135 = vpop.f32.mrb[0].mxu0
      %v1136 = vadd.f32 0.0, %v1135
      %v1137 = vpop.f32.mrb[0].mxu0
      %1138 = vmatprep.mubr.bf16.mxu0 0
      %1139 = vmatmul.mubr.bf16.gmra.mrb[0].mxu0 %v844
      %v1140 = vpop.f32.mrb[0].mxu0
      %v1141 = vadd.f32 0.0, %v1140
      %v1142 = vpop.f32.mrb[0].mxu0
      %v1143 = vpop.f32.mrb[0].mxu0
      %v1144 = vadd.f32 0.0, %v1143
      %v1145 = vpop.f32.mrb[0].mxu0
      %1146 = vmatprep.mubr.bf16.mxu0 0
      %1147 = vmatmul.mubr.bf16.gmra.mrb[0].mxu0 %v846
      %v1148 = vpop.f32.mrb[0].mxu0
      %v1149 = vadd.f32 0.0, %v1148
      %v1150 = vpop.f32.mrb[0].mxu0
      %v1151 = vpop.f32.mrb[0].mxu0
      %v1152 = vadd.f32 0.0, %v1151
      %v1153 = vpop.f32.mrb[0].mxu0
      %1154 = vmatprep.mubr.bf16.mxu0 0
      %1155 = vmatmul.mubr.bf16.gmra.mrb[0].mxu0 %v848
      %v1156 = vpop.f32.mrb[0].mxu0
      %v1157 = vadd.f32 0.0, %v1156
      %v1158 = vpop.f32.mrb[0].mxu0
      %v1159 = vpop.f32.mrb[0].mxu0
      %v1160 = vadd.f32 0.0, %v1159
      %v1161 = vpop.f32.mrb[0].mxu0
      %1162 = vmatprep.mubr.bf16.mxu0 0
      %1163 = vmatmul.mubr.bf16.gmra.mrb[0].mxu0 %v850
      %v1164 = vpop.f32.mrb[0].mxu0
      %v1165 = vadd.f32 0.0, %v1164
      %v1166 = vpop.f32.mrb[0].mxu0
      %v1167 = vpop.f32.mrb[0].mxu0
      %v1168 = vadd.f32 0.0, %v1167
      %v1169 = vpop.f32.mrb[0].mxu0
      %1170 = vmatprep.mubr.bf16.mxu0 0
      %1171 = vmatmul.mubr.bf16.gmra.mrb[0].mxu0 %v852
      %v1172 = vpop.f32.mrb[0].mxu0
      %v1173 = vadd.f32 0.0, %v1172
      %v1174 = vpop.f32.mrb[0].mxu0
      %v1175 = vpop.f32.mrb[0].mxu0
      %v1176 = vadd.f32 0.0, %v1175
      %v1177 = vpop.f32.mrb[0].mxu0
      %1178 = vmatprep.mubr.bf16.mxu0 0
      %1179 = vmatmul.mubr.bf16.gmra.mrb[0].mxu0 %v1021
      %v1180 = vpop.f32.mrb[0].mxu0
      %v1181 = vadd.f32 0.0, %v1180
      %v1182 = vpop.f32.mrb[0].mxu0
      %v1183 = vpop.f32.mrb[0].mxu0
      %v1184 = vadd.f32 0.0, %v1183
      %v1185 = vpop.f32.mrb[0].mxu0
      %1186 = vdwg.mxu0
      %v1187 = vadd.f32 %v892, %v1061
      %v1188 = vadd.f32 %v895, %v1064
      %v1189 = vadd.f32 %v900, %v1069
      %v1190 = vadd.f32 %v903, %v1072
      %v1191 = vadd.f32 %v908, %v1077
      %v1192 = vadd.f32 %v911, %v1080
      %v1193 = vadd.f32 %v916, %v1085
      %v1194 = vadd.f32 %v919, %v1088
      %v1195 = vadd.f32 %v924, %v1093
      %v1196 = vadd.f32 %v927, %v1096
      %v1197 = vadd.f32 %v932, %v1101
      %v1198 = vadd.f32 %v935, %v1104
      %v1199 = vadd.f32 %v940, %v1109
      %v1200 = vadd.f32 %v943, %v1112
      %v1201 = vadd.f32 %v948, %v1117
      %v1202 = vadd.f32 %v951, %v1120
      %v1203 = vadd.f32 %v956, %v1125
      %v1204 = vadd.f32 %v959, %v1128
      %v1205 = vadd.f32 %v964, %v1133
      %v1206 = vadd.f32 %v967, %v1136
      %v1207 = vadd.f32 %v972, %v1141
      %v1208 = vadd.f32 %v975, %v1144
      %v1209 = vadd.f32 %v980, %v1149
      %v1210 = vadd.f32 %v983, %v1152
      %v1211 = vadd.f32 %v988, %v1157
      %v1212 = vadd.f32 %v991, %v1160
      %v1213 = vadd.f32 %v996, %v1165
      %v1214 = vadd.f32 %v999, %v1168
      %v1215 = vadd.f32 %v1004, %v1173
      %v1216 = vadd.f32 %v1007, %v1176
      %v1217 = vadd.f32 %v1012, %v1181
      %v1218 = vadd.f32 %v1015, %v1184
      %s1219 = scalar_lea.vmem %s2, 6
      %v1220 = vld [vmem:[%s1219] sm:$0x3]
      %v1221 = vshrl.u32 %v391, 16
      %v1223 = vshll.u32 %v391, 16
      %v1225 = vrot.slane %v1223, 1
      %v1226 = vor.u32 %v1221, %v1225
      %v1228 = vshll.u32 %v409, 16
      %v1230 = vrot.slane %v1228, 1
      %v1231 = vsel %vm415, %v1226, %v1230
      %v1233 = vsel %vm608, %v1231, 0
      %v1236 = vsel %vm657, %v1220, 0
      %1238 = vmatprep.subr.bf16.mxu0 0
      %1239 = vmatpush1.bf16.msra.mxu0 %v1236
      %1240 = vmatprep.subr.bf16.mxu0 0
      %1241 = vmatpush1.bf16.msra.mxu0 0
      %1242 = vmatprep.subr.bf16.mxu0 0
      %1243 = vmatpush1.bf16.msra.mxu0 0
      %1244 = vmatprep.subr.bf16.mxu0 0
      %1245 = vmatpush1.bf16.msra.mxu0 0
      %1246 = vmatprep.subr.bf16.mxu0 0
      %1247 = vmatpush1.bf16.msra.mxu0 0
      %1248 = vmatprep.subr.bf16.mxu0 0
      %1249 = vmatpush1.bf16.msra.mxu0 0
      %1250 = vmatprep.subr.bf16.mxu0 0
      %1251 = vmatpush1.bf16.msra.mxu0 0
      %1252 = vmatprep.subr.bf16.mxu0 0
      %1253 = vmatpush1.bf16.msra.mxu0 0
      %1254 = vmatprep.subr.bf16.mxu0 0
      %1255 = vmatpush1.bf16.msra.mxu0 0
      %1256 = vmatprep.subr.bf16.mxu0 0
      %1257 = vmatpush1.bf16.msra.mxu0 0
      %1258 = vmatprep.subr.bf16.mxu0 0
      %1259 = vmatpush1.bf16.msra.mxu0 0
      %1260 = vmatprep.subr.bf16.mxu0 0
      %1261 = vmatpush1.bf16.msra.mxu0 0
      %1262 = vmatprep.subr.bf16.mxu0 0
      %1263 = vmatpush1.bf16.msra.mxu0 0
      %1264 = vmatprep.subr.bf16.mxu0 0
      %1265 = vmatpush1.bf16.msra.mxu0 0
      %1266 = vmatprep.subr.bf16.mxu0 0
      %1267 = vmatpush1.bf16.msra.mxu0 0
      %1268 = vmatprep.subr.bf16.mxu0 0
      %1269 = vmatpush1.bf16.msra.mxu0 0
      %1270 = vmatprep.mubr.bf16.mxu0 0
      %1271 = vmatmul.mubr.bf16.gmra.mrb[0].mxu0 %v613
      %v1272 = vpop.f32.mrb[0].mxu0
      %v1273 = vadd.f32 0.0, %v1272
      %v1274 = vpop.f32.mrb[0].mxu0
      %v1275 = vpop.f32.mrb[0].mxu0
      %v1276 = vadd.f32 0.0, %v1275
      %v1277 = vpop.f32.mrb[0].mxu0
      %1278 = vmatprep.mubr.bf16.mxu0 0
      %1279 = vmatmul.mubr.bf16.gmra.mrb[0].mxu0 %v616
      %v1280 = vpop.f32.mrb[0].mxu0
      %v1281 = vadd.f32 0.0, %v1280
      %v1282 = vpop.f32.mrb[0].mxu0
      %v1283 = vpop.f32.mrb[0].mxu0
      %v1284 = vadd.f32 0.0, %v1283
      %v1285 = vpop.f32.mrb[0].mxu0
      %1286 = vmatprep.mubr.bf16.mxu0 0
      %1287 = vmatmul.mubr.bf16.gmra.mrb[0].mxu0 %v619
      %v1288 = vpop.f32.mrb[0].mxu0
      %v1289 = vadd.f32 0.0, %v1288
      %v1290 = vpop.f32.mrb[0].mxu0
      %v1291 = vpop.f32.mrb[0].mxu0
      %v1292 = vadd.f32 0.0, %v1291
      %v1293 = vpop.f32.mrb[0].mxu0
      %1294 = vmatprep.mubr.bf16.mxu0 0
      %1295 = vmatmul.mubr.bf16.gmra.mrb[0].mxu0 %v622
      %v1296 = vpop.f32.mrb[0].mxu0
      %v1297 = vadd.f32 0.0, %v1296
      %v1298 = vpop.f32.mrb[0].mxu0
      %v1299 = vpop.f32.mrb[0].mxu0
      %v1300 = vadd.f32 0.0, %v1299
      %v1301 = vpop.f32.mrb[0].mxu0
      %1302 = vmatprep.mubr.bf16.mxu0 0
      %1303 = vmatmul.mubr.bf16.gmra.mrb[0].mxu0 %v625
      %v1304 = vpop.f32.mrb[0].mxu0
      %v1305 = vadd.f32 0.0, %v1304
      %v1306 = vpop.f32.mrb[0].mxu0
      %v1307 = vpop.f32.mrb[0].mxu0
      %v1308 = vadd.f32 0.0, %v1307
      %v1309 = vpop.f32.mrb[0].mxu0
      %1310 = vmatprep.mubr.bf16.mxu0 0
      %1311 = vmatmul.mubr.bf16.gmra.mrb[0].mxu0 %v628
      %v1312 = vpop.f32.mrb[0].mxu0
      %v1313 = vadd.f32 0.0, %v1312
      %v1314 = vpop.f32.mrb[0].mxu0
      %v1315 = vpop.f32.mrb[0].mxu0
      %v1316 = vadd.f32 0.0, %v1315
      %v1317 = vpop.f32.mrb[0].mxu0
      %1318 = vmatprep.mubr.bf16.mxu0 0
      %1319 = vmatmul.mubr.bf16.gmra.mrb[0].mxu0 %v631
      %v1320 = vpop.f32.mrb[0].mxu0
      %v1321 = vadd.f32 0.0, %v1320
      %v1322 = vpop.f32.mrb[0].mxu0
      %v1323 = vpop.f32.mrb[0].mxu0
      %v1324 = vadd.f32 0.0, %v1323
      %v1325 = vpop.f32.mrb[0].mxu0
      %1326 = vmatprep.mubr.bf16.mxu0 0
      %1327 = vmatmul.mubr.bf16.gmra.mrb[0].mxu0 %v634
      %v1328 = vpop.f32.mrb[0].mxu0
      %v1329 = vadd.f32 0.0, %v1328
      %v1330 = vpop.f32.mrb[0].mxu0
      %v1331 = vpop.f32.mrb[0].mxu0
      %v1332 = vadd.f32 0.0, %v1331
      %v1333 = vpop.f32.mrb[0].mxu0
      %1334 = vmatprep.mubr.bf16.mxu0 0
      %1335 = vmatmul.mubr.bf16.gmra.mrb[0].mxu0 %v637
      %v1336 = vpop.f32.mrb[0].mxu0
      %v1337 = vadd.f32 0.0, %v1336
      %v1338 = vpop.f32.mrb[0].mxu0
      %v1339 = vpop.f32.mrb[0].mxu0
      %v1340 = vadd.f32 0.0, %v1339
      %v1341 = vpop.f32.mrb[0].mxu0
      %1342 = vmatprep.mubr.bf16.mxu0 0
      %1343 = vmatmul.mubr.bf16.gmra.mrb[0].mxu0 %v640
      %v1344 = vpop.f32.mrb[0].mxu0
      %v1345 = vadd.f32 0.0, %v1344
      %v1346 = vpop.f32.mrb[0].mxu0
      %v1347 = vpop.f32.mrb[0].mxu0
      %v1348 = vadd.f32 0.0, %v1347
      %v1349 = vpop.f32.mrb[0].mxu0
      %1350 = vmatprep.mubr.bf16.mxu0 0
      %1351 = vmatmul.mubr.bf16.gmra.mrb[0].mxu0 %v643
      %v1352 = vpop.f32.mrb[0].mxu0
      %v1353 = vadd.f32 0.0, %v1352
      %v1354 = vpop.f32.mrb[0].mxu0
      %v1355 = vpop.f32.mrb[0].mxu0
      %v1356 = vadd.f32 0.0, %v1355
      %v1357 = vpop.f32.mrb[0].mxu0
      %1358 = vmatprep.mubr.bf16.mxu0 0
      %1359 = vmatmul.mubr.bf16.gmra.mrb[0].mxu0 %v646
      %v1360 = vpop.f32.mrb[0].mxu0
      %v1361 = vadd.f32 0.0, %v1360
      %v1362 = vpop.f32.mrb[0].mxu0
      %v1363 = vpop.f32.mrb[0].mxu0
      %v1364 = vadd.f32 0.0, %v1363
      %v1365 = vpop.f32.mrb[0].mxu0
      %1366 = vmatprep.mubr.bf16.mxu0 0
      %1367 = vmatmul.mubr.bf16.gmra.mrb[0].mxu0 %v649
      %v1368 = vpop.f32.mrb[0].mxu0
      %v1369 = vadd.f32 0.0, %v1368
      %v1370 = vpop.f32.mrb[0].mxu0
      %v1371 = vpop.f32.mrb[0].mxu0
      %v1372 = vadd.f32 0.0, %v1371
      %v1373 = vpop.f32.mrb[0].mxu0
      %1374 = vmatprep.mubr.bf16.mxu0 0
      %1375 = vmatmul.mubr.bf16.gmra.mrb[0].mxu0 %v652
      %v1376 = vpop.f32.mrb[0].mxu0
      %v1377 = vadd.f32 0.0, %v1376
      %v1378 = vpop.f32.mrb[0].mxu0
      %v1379 = vpop.f32.mrb[0].mxu0
      %v1380 = vadd.f32 0.0, %v1379
      %v1381 = vpop.f32.mrb[0].mxu0
      %1382 = vmatprep.mubr.bf16.mxu0 0
      %1383 = vmatmul.mubr.bf16.gmra.mrb[0].mxu0 %v655
      %v1384 = vpop.f32.mrb[0].mxu0
      %v1385 = vadd.f32 0.0, %v1384
      %v1386 = vpop.f32.mrb[0].mxu0
      %v1387 = vpop.f32.mrb[0].mxu0
      %v1388 = vadd.f32 0.0, %v1387
      %v1389 = vpop.f32.mrb[0].mxu0
      %1390 = vmatprep.mubr.bf16.mxu0 0
      %1391 = vmatmul.mubr.bf16.gmra.mrb[0].mxu0 %v1233
      %v1392 = vpop.f32.mrb[0].mxu0
      %v1393 = vadd.f32 0.0, %v1392
      %v1394 = vpop.f32.mrb[0].mxu0
      %v1395 = vpop.f32.mrb[0].mxu0
      %v1396 = vadd.f32 0.0, %v1395
      %v1397 = vpop.f32.mrb[0].mxu0
      %1398 = vdwg.mxu0
      %v1399 = vadd.f32 %v1187, %v1273
      %v1400 = vadd.f32 %v1188, %v1276
      %v1401 = vadd.f32 %v1189, %v1281
      %v1402 = vadd.f32 %v1190, %v1284
      %v1403 = vadd.f32 %v1191, %v1289
      %v1404 = vadd.f32 %v1192, %v1292
      %v1405 = vadd.f32 %v1193, %v1297
      %v1406 = vadd.f32 %v1194, %v1300
      %v1407 = vadd.f32 %v1195, %v1305
      %v1408 = vadd.f32 %v1196, %v1308
      %v1409 = vadd.f32 %v1197, %v1313
      %v1410 = vadd.f32 %v1198, %v1316
      %v1411 = vadd.f32 %v1199, %v1321
      %v1412 = vadd.f32 %v1200, %v1324
      %v1413 = vadd.f32 %v1201, %v1329
      %v1414 = vadd.f32 %v1202, %v1332
      %v1415 = vadd.f32 %v1203, %v1337
      %v1416 = vadd.f32 %v1204, %v1340
      %v1417 = vadd.f32 %v1205, %v1345
      %v1418 = vadd.f32 %v1206, %v1348
      %v1419 = vadd.f32 %v1207, %v1353
      %v1420 = vadd.f32 %v1208, %v1356
      %v1421 = vadd.f32 %v1209, %v1361
      %v1422 = vadd.f32 %v1210, %v1364
      %v1423 = vadd.f32 %v1211, %v1369
      %v1424 = vadd.f32 %v1212, %v1372
      %v1425 = vadd.f32 %v1213, %v1377
      %v1426 = vadd.f32 %v1214, %v1380
      %v1427 = vadd.f32 %v1215, %v1385
      %v1428 = vadd.f32 %v1216, %v1388
      %v1429 = vadd.f32 %v1217, %v1393
      %v1430 = vadd.f32 %v1218, %v1396
      %v1432 = vlaneseq
      %v1433 = vshrl.u32 %v1432, 7
      %v1434 = vsub.s32 0, %v1433
      %v1435 = vrot.slane %v411, %v1434
      %v1437 = vadd.f32 %v1399, %v1435
      %v1438 = vadd.f32 %v1400, %v1435
      %v1439 = vadd.f32 %v1401, %v1435
      %v1440 = vadd.f32 %v1402, %v1435
      %v1441 = vadd.f32 %v1403, %v1435
      %v1442 = vadd.f32 %v1404, %v1435
      %v1443 = vadd.f32 %v1405, %v1435
      %v1444 = vadd.f32 %v1406, %v1435
      %v1445 = vadd.f32 %v1407, %v1435
      %v1446 = vadd.f32 %v1408, %v1435
      %v1447 = vadd.f32 %v1409, %v1435
      %v1448 = vadd.f32 %v1410, %v1435
      %v1449 = vadd.f32 %v1411, %v1435
      %v1450 = vadd.f32 %v1412, %v1435
      %v1451 = vadd.f32 %v1413, %v1435
      %v1452 = vadd.f32 %v1414, %v1435
      %v1453 = vadd.f32 %v1415, %v1435
      %v1454 = vadd.f32 %v1416, %v1435
      %v1455 = vadd.f32 %v1417, %v1435
      %v1456 = vadd.f32 %v1418, %v1435
      %v1457 = vadd.f32 %v1419, %v1435
      %v1458 = vadd.f32 %v1420, %v1435
      %v1459 = vadd.f32 %v1421, %v1435
      %v1460 = vadd.f32 %v1422, %v1435
      %v1461 = vadd.f32 %v1423, %v1435
      %v1462 = vadd.f32 %v1424, %v1435
      %v1463 = vadd.f32 %v1425, %v1435
      %v1464 = vadd.f32 %v1426, %v1435
      %v1465 = vadd.f32 %v1427, %v1435
      %v1466 = vadd.f32 %v1428, %v1435
      %v1467 = vadd.f32 %v1429, %v1435
      %v1468 = vadd.f32 %v1430, %v1435
      %1469 = vst.msk [vmem:[%s318] sm:$0xff] %vm608, %v1437
      %1470 = vst.msk [vmem:[%s318 + $0x8] sm:$0xff] %vm608, %v1438
      %1471 = vst.msk [vmem:[%s318 + $0x10] sm:$0xff] %vm608, %v1439
      %1472 = vst.msk [vmem:[%s318 + $0x18] sm:$0xff] %vm608, %v1440
      %1473 = vst.msk [vmem:[%s318 + $0x20] sm:$0xff] %vm608, %v1441
      %1474 = vst.msk [vmem:[%s318 + $0x28] sm:$0xff] %vm608, %v1442
      %1475 = vst.msk [vmem:[%s318 + $0x30] sm:$0xff] %vm608, %v1443
      %1476 = vst.msk [vmem:[%s318 + $0x38] sm:$0xff] %vm608, %v1444
      %1477 = vst.msk [vmem:[%s318 + $0x40] sm:$0xff] %vm608, %v1445
      %1478 = vst.msk [vmem:[%s318 + $0x48] sm:$0xff] %vm608, %v1446
      %1479 = vst.msk [vmem:[%s318 + $0x50] sm:$0xff] %vm608, %v1447
      %1480 = vst.msk [vmem:[%s318 + $0x58] sm:$0xff] %vm608, %v1448
      %1481 = vst.msk [vmem:[%s318 + $0x60] sm:$0xff] %vm608, %v1449
      %1482 = vst.msk [vmem:[%s318 + $0x68] sm:$0xff] %vm608, %v1450
      %1483 = vst.msk [vmem:[%s318 + $0x70] sm:$0xff] %vm608, %v1451
      %1484 = vst.msk [vmem:[%s318 + $0x78] sm:$0xff] %vm608, %v1452
      %1485 = vst.msk [vmem:[%s318 + $0x80] sm:$0xff] %vm608, %v1453
      %1486 = vst.msk [vmem:[%s318 + $0x88] sm:$0xff] %vm608, %v1454
      %1487 = vst.msk [vmem:[%s318 + $0x90] sm:$0xff] %vm608, %v1455
      %1488 = vst.msk [vmem:[%s318 + $0x98] sm:$0xff] %vm608, %v1456
      %1489 = vst.msk [vmem:[%s318 + $0xa0] sm:$0xff] %vm608, %v1457
      %1490 = vst.msk [vmem:[%s318 + $0xa8] sm:$0xff] %vm608, %v1458
      %1491 = vst.msk [vmem:[%s318 + $0xb0] sm:$0xff] %vm608, %v1459
      %1492 = vst.msk [vmem:[%s318 + $0xb8] sm:$0xff] %vm608, %v1460
      %1493 = vst.msk [vmem:[%s318 + $0xc0] sm:$0xff] %vm608, %v1461
      %1494 = vst.msk [vmem:[%s318 + $0xc8] sm:$0xff] %vm608, %v1462
      %1495 = vst.msk [vmem:[%s318 + $0xd0] sm:$0xff] %vm608, %v1463
      %1496 = vst.msk [vmem:[%s318 + $0xd8] sm:$0xff] %vm608, %v1464
      %1497 = vst.msk [vmem:[%s318 + $0xe0] sm:$0xff] %vm608, %v1465
      %1498 = vst.msk [vmem:[%s318 + $0xe8] sm:$0xff] %vm608, %v1466
      %1499 = vst.msk [vmem:[%s318 + $0xf0] sm:$0xff] %vm608, %v1467
      %1500 = vst.msk [vmem:[%s318 + $0xf8] sm:$0xff] %vm608, %v1468
      %s1501 = scalar_lea.vmem %s2, 8
      %v1502 = vld [vmem:[%s1501] sm:$0x3]
      %s1503 = scalar_lea.vmem %s2, 10
      %v1504 = vld [vmem:[%s1503] sm:$0x3]
      %vm1537 = vcmask 1046528
      %v1538 = vrot.slane %v375, 1
      %v1539 = vrot.slane %v393, 1
      %v1540 = vsel %vm1537, %v1538, %v1539
      %v1541 = vrot.slane %v376, 1
      %v1542 = vrot.slane %v394, 1
      %v1543 = vsel %vm1537, %v1541, %v1542
      %v1544 = vrot.slane %v377, 1
      %v1545 = vrot.slane %v395, 1
      %v1546 = vsel %vm1537, %v1544, %v1545
      %v1547 = vrot.slane %v378, 1
      %v1548 = vrot.slane %v396, 1
      %v1549 = vsel %vm1537, %v1547, %v1548
      %v1550 = vrot.slane %v379, 1
      %v1551 = vrot.slane %v397, 1
      %v1552 = vsel %vm1537, %v1550, %v1551
      %v1553 = vrot.slane %v380, 1
      %v1554 = vrot.slane %v398, 1
      %v1555 = vsel %vm1537, %v1553, %v1554
      %v1556 = vrot.slane %v381, 1
      %v1557 = vrot.slane %v399, 1
      %v1558 = vsel %vm1537, %v1556, %v1557
      %v1559 = vrot.slane %v382, 1
      %v1560 = vrot.slane %v400, 1
      %v1561 = vsel %vm1537, %v1559, %v1560
      %v1562 = vrot.slane %v383, 1
      %v1563 = vrot.slane %v401, 1
      %v1564 = vsel %vm1537, %v1562, %v1563
      %v1565 = vrot.slane %v384, 1
      %v1566 = vrot.slane %v402, 1
      %v1567 = vsel %vm1537, %v1565, %v1566
      %v1568 = vrot.slane %v385, 1
      %v1569 = vrot.slane %v403, 1
      %v1570 = vsel %vm1537, %v1568, %v1569
      %v1571 = vrot.slane %v386, 1
      %v1572 = vrot.slane %v404, 1
      %v1573 = vsel %vm1537, %v1571, %v1572
      %v1574 = vrot.slane %v387, 1
      %v1575 = vrot.slane %v405, 1
      %v1576 = vsel %vm1537, %v1574, %v1575
      %v1577 = vrot.slane %v388, 1
      %v1578 = vrot.slane %v406, 1
      %v1579 = vsel %vm1537, %v1577, %v1578
      %v1580 = vrot.slane %v389, 1
      %v1581 = vrot.slane %v407, 1
      %v1582 = vsel %vm1537, %v1580, %v1581
      %v1583 = vrot.slane %v390, 1
      %v1584 = vrot.slane %v408, 1
      %v1585 = vsel %vm1537, %v1583, %v1584
      %v1587 = vsel %vm608, %v1540, 0
      %v1590 = vsel %vm608, %v1543, 0
      %v1593 = vsel %vm608, %v1546, 0
      %v1596 = vsel %vm608, %v1549, 0
      %v1599 = vsel %vm608, %v1552, 0
      %v1602 = vsel %vm608, %v1555, 0
      %v1605 = vsel %vm608, %v1558, 0
      %v1608 = vsel %vm608, %v1561, 0
      %v1611 = vsel %vm608, %v1564, 0
      %v1614 = vsel %vm608, %v1567, 0
      %v1617 = vsel %vm608, %v1570, 0
      %v1620 = vsel %vm608, %v1573, 0
      %v1623 = vsel %vm608, %v1576, 0
      %v1626 = vsel %vm608, %v1579, 0
      %v1629 = vsel %vm608, %v1582, 0
      %v1632 = vsel %vm608, %v1585, 0
      %v1635 = vsel %vm657, %v1504, 0
      %1637 = vmatprep.subr.bf16.mxu0 0
      %1638 = vmatpush1.bf16.msra.mxu0 %v1635
      %1639 = vmatprep.subr.bf16.mxu0 0
      %1640 = vmatpush1.bf16.msra.mxu0 0
      %1641 = vmatprep.subr.bf16.mxu0 0
      %1642 = vmatpush1.bf16.msra.mxu0 0
      %1643 = vmatprep.subr.bf16.mxu0 0
      %1644 = vmatpush1.bf16.msra.mxu0 0
      %1645 = vmatprep.subr.bf16.mxu0 0
      %1646 = vmatpush1.bf16.msra.mxu0 0
      %1647 = vmatprep.subr.bf16.mxu0 0
      %1648 = vmatpush1.bf16.msra.mxu0 0
      %1649 = vmatprep.subr.bf16.mxu0 0
      %1650 = vmatpush1.bf16.msra.mxu0 0
      %1651 = vmatprep.subr.bf16.mxu0 0
      %1652 = vmatpush1.bf16.msra.mxu0 0
      %1653 = vmatprep.subr.bf16.mxu0 0
      %1654 = vmatpush1.bf16.msra.mxu0 0
      %1655 = vmatprep.subr.bf16.mxu0 0
      %1656 = vmatpush1.bf16.msra.mxu0 0
      %1657 = vmatprep.subr.bf16.mxu0 0
      %1658 = vmatpush1.bf16.msra.mxu0 0
      %1659 = vmatprep.subr.bf16.mxu0 0
      %1660 = vmatpush1.bf16.msra.mxu0 0
      %1661 = vmatprep.subr.bf16.mxu0 0
      %1662 = vmatpush1.bf16.msra.mxu0 0
      %1663 = vmatprep.subr.bf16.mxu0 0
      %1664 = vmatpush1.bf16.msra.mxu0 0
      %1665 = vmatprep.subr.bf16.mxu0 0
      %1666 = vmatpush1.bf16.msra.mxu0 0
      %1667 = vmatprep.subr.bf16.mxu0 0
      %1668 = vmatpush1.bf16.msra.mxu0 0
      %1669 = vmatprep.mubr.bf16.mxu0 0
      %1670 = vmatmul.mubr.bf16.gmra.mrb[0].mxu0 %v1587
      %v1671 = vpop.f32.mrb[0].mxu0
      %v1672 = vadd.f32 0.0, %v1671
      %v1673 = vpop.f32.mrb[0].mxu0
      %v1674 = vpop.f32.mrb[0].mxu0
      %v1675 = vadd.f32 0.0, %v1674
      %v1676 = vpop.f32.mrb[0].mxu0
      %1677 = vmatprep.mubr.bf16.mxu0 0
      %1678 = vmatmul.mubr.bf16.gmra.mrb[0].mxu0 %v1590
      %v1679 = vpop.f32.mrb[0].mxu0
      %v1680 = vadd.f32 0.0, %v1679
      %v1681 = vpop.f32.mrb[0].mxu0
      %v1682 = vpop.f32.mrb[0].mxu0
      %v1683 = vadd.f32 0.0, %v1682
      %v1684 = vpop.f32.mrb[0].mxu0
      %1685 = vmatprep.mubr.bf16.mxu0 0
      %1686 = vmatmul.mubr.bf16.gmra.mrb[0].mxu0 %v1593
      %v1687 = vpop.f32.mrb[0].mxu0
      %v1688 = vadd.f32 0.0, %v1687
      %v1689 = vpop.f32.mrb[0].mxu0
      %v1690 = vpop.f32.mrb[0].mxu0
      %v1691 = vadd.f32 0.0, %v1690
      %v1692 = vpop.f32.mrb[0].mxu0
      %1693 = vmatprep.mubr.bf16.mxu0 0
      %1694 = vmatmul.mubr.bf16.gmra.mrb[0].mxu0 %v1596
      %v1695 = vpop.f32.mrb[0].mxu0
      %v1696 = vadd.f32 0.0, %v1695
      %v1697 = vpop.f32.mrb[0].mxu0
      %v1698 = vpop.f32.mrb[0].mxu0
      %v1699 = vadd.f32 0.0, %v1698
      %v1700 = vpop.f32.mrb[0].mxu0
      %1701 = vmatprep.mubr.bf16.mxu0 0
      %1702 = vmatmul.mubr.bf16.gmra.mrb[0].mxu0 %v1599
      %v1703 = vpop.f32.mrb[0].mxu0
      %v1704 = vadd.f32 0.0, %v1703
      %v1705 = vpop.f32.mrb[0].mxu0
      %v1706 = vpop.f32.mrb[0].mxu0
      %v1707 = vadd.f32 0.0, %v1706
      %v1708 = vpop.f32.mrb[0].mxu0
      %1709 = vmatprep.mubr.bf16.mxu0 0
      %1710 = vmatmul.mubr.bf16.gmra.mrb[0].mxu0 %v1602
      %v1711 = vpop.f32.mrb[0].mxu0
      %v1712 = vadd.f32 0.0, %v1711
      %v1713 = vpop.f32.mrb[0].mxu0
      %v1714 = vpop.f32.mrb[0].mxu0
      %v1715 = vadd.f32 0.0, %v1714
      %v1716 = vpop.f32.mrb[0].mxu0
      %1717 = vmatprep.mubr.bf16.mxu0 0
      %1718 = vmatmul.mubr.bf16.gmra.mrb[0].mxu0 %v1605
      %v1719 = vpop.f32.mrb[0].mxu0
      %v1720 = vadd.f32 0.0, %v1719
      %v1721 = vpop.f32.mrb[0].mxu0
      %v1722 = vpop.f32.mrb[0].mxu0
      %v1723 = vadd.f32 0.0, %v1722
      %v1724 = vpop.f32.mrb[0].mxu0
      %1725 = vmatprep.mubr.bf16.mxu0 0
      %1726 = vmatmul.mubr.bf16.gmra.mrb[0].mxu0 %v1608
      %v1727 = vpop.f32.mrb[0].mxu0
      %v1728 = vadd.f32 0.0, %v1727
      %v1729 = vpop.f32.mrb[0].mxu0
      %v1730 = vpop.f32.mrb[0].mxu0
      %v1731 = vadd.f32 0.0, %v1730
      %v1732 = vpop.f32.mrb[0].mxu0
      %1733 = vmatprep.mubr.bf16.mxu0 0
      %1734 = vmatmul.mubr.bf16.gmra.mrb[0].mxu0 %v1611
      %v1735 = vpop.f32.mrb[0].mxu0
      %v1736 = vadd.f32 0.0, %v1735
      %v1737 = vpop.f32.mrb[0].mxu0
      %v1738 = vpop.f32.mrb[0].mxu0
      %v1739 = vadd.f32 0.0, %v1738
      %v1740 = vpop.f32.mrb[0].mxu0
      %1741 = vmatprep.mubr.bf16.mxu0 0
      %1742 = vmatmul.mubr.bf16.gmra.mrb[0].mxu0 %v1614
      %v1743 = vpop.f32.mrb[0].mxu0
      %v1744 = vadd.f32 0.0, %v1743
      %v1745 = vpop.f32.mrb[0].mxu0
      %v1746 = vpop.f32.mrb[0].mxu0
      %v1747 = vadd.f32 0.0, %v1746
      %v1748 = vpop.f32.mrb[0].mxu0
      %1749 = vmatprep.mubr.bf16.mxu0 0
      %1750 = vmatmul.mubr.bf16.gmra.mrb[0].mxu0 %v1617
      %v1751 = vpop.f32.mrb[0].mxu0
      %v1752 = vadd.f32 0.0, %v1751
      %v1753 = vpop.f32.mrb[0].mxu0
      %v1754 = vpop.f32.mrb[0].mxu0
      %v1755 = vadd.f32 0.0, %v1754
      %v1756 = vpop.f32.mrb[0].mxu0
      %1757 = vmatprep.mubr.bf16.mxu0 0
      %1758 = vmatmul.mubr.bf16.gmra.mrb[0].mxu0 %v1620
      %v1759 = vpop.f32.mrb[0].mxu0
      %v1760 = vadd.f32 0.0, %v1759
      %v1761 = vpop.f32.mrb[0].mxu0
      %v1762 = vpop.f32.mrb[0].mxu0
      %v1763 = vadd.f32 0.0, %v1762
      %v1764 = vpop.f32.mrb[0].mxu0
      %1765 = vmatprep.mubr.bf16.mxu0 0
      %1766 = vmatmul.mubr.bf16.gmra.mrb[0].mxu0 %v1623
      %v1767 = vpop.f32.mrb[0].mxu0
      %v1768 = vadd.f32 0.0, %v1767
      %v1769 = vpop.f32.mrb[0].mxu0
      %v1770 = vpop.f32.mrb[0].mxu0
      %v1771 = vadd.f32 0.0, %v1770
      %v1772 = vpop.f32.mrb[0].mxu0
      %1773 = vmatprep.mubr.bf16.mxu0 0
      %1774 = vmatmul.mubr.bf16.gmra.mrb[0].mxu0 %v1626
      %v1775 = vpop.f32.mrb[0].mxu0
      %v1776 = vadd.f32 0.0, %v1775
      %v1777 = vpop.f32.mrb[0].mxu0
      %v1778 = vpop.f32.mrb[0].mxu0
      %v1779 = vadd.f32 0.0, %v1778
      %v1780 = vpop.f32.mrb[0].mxu0
      %1781 = vmatprep.mubr.bf16.mxu0 0
      %1782 = vmatmul.mubr.bf16.gmra.mrb[0].mxu0 %v1629
      %v1783 = vpop.f32.mrb[0].mxu0
      %v1784 = vadd.f32 0.0, %v1783
      %v1785 = vpop.f32.mrb[0].mxu0
      %v1786 = vpop.f32.mrb[0].mxu0
      %v1787 = vadd.f32 0.0, %v1786
      %v1788 = vpop.f32.mrb[0].mxu0
      %1789 = vmatprep.mubr.bf16.mxu0 0
      %1790 = vmatmul.mubr.bf16.gmra.mrb[0].mxu0 %v1632
      %v1791 = vpop.f32.mrb[0].mxu0
      %v1792 = vadd.f32 0.0, %v1791
      %v1793 = vpop.f32.mrb[0].mxu0
      %v1794 = vpop.f32.mrb[0].mxu0
      %v1795 = vadd.f32 0.0, %v1794
      %v1796 = vpop.f32.mrb[0].mxu0
      %1797 = vdwg.mxu0
      %v1799 = vsel %vm657, %v1502, 0
      %1801 = vmatprep.subr.bf16.mxu0 0
      %1802 = vmatpush1.bf16.msra.mxu0 %v1799
      %1803 = vmatprep.subr.bf16.mxu0 0
      %1804 = vmatpush1.bf16.msra.mxu0 0
      %1805 = vmatprep.subr.bf16.mxu0 0
      %1806 = vmatpush1.bf16.msra.mxu0 0
      %1807 = vmatprep.subr.bf16.mxu0 0
      %1808 = vmatpush1.bf16.msra.mxu0 0
      %1809 = vmatprep.subr.bf16.mxu0 0
      %1810 = vmatpush1.bf16.msra.mxu0 0
      %1811 = vmatprep.subr.bf16.mxu0 0
      %1812 = vmatpush1.bf16.msra.mxu0 0
      %1813 = vmatprep.subr.bf16.mxu0 0
      %1814 = vmatpush1.bf16.msra.mxu0 0
      %1815 = vmatprep.subr.bf16.mxu0 0
      %1816 = vmatpush1.bf16.msra.mxu0 0
      %1817 = vmatprep.subr.bf16.mxu0 0
      %1818 = vmatpush1.bf16.msra.mxu0 0
      %1819 = vmatprep.subr.bf16.mxu0 0
      %1820 = vmatpush1.bf16.msra.mxu0 0
      %1821 = vmatprep.subr.bf16.mxu0 0
      %1822 = vmatpush1.bf16.msra.mxu0 0
      %1823 = vmatprep.subr.bf16.mxu0 0
      %1824 = vmatpush1.bf16.msra.mxu0 0
      %1825 = vmatprep.subr.bf16.mxu0 0
      %1826 = vmatpush1.bf16.msra.mxu0 0
      %1827 = vmatprep.subr.bf16.mxu0 0
      %1828 = vmatpush1.bf16.msra.mxu0 0
      %1829 = vmatprep.subr.bf16.mxu0 0
      %1830 = vmatpush1.bf16.msra.mxu0 0
      %1831 = vmatprep.subr.bf16.mxu0 0
      %1832 = vmatpush1.bf16.msra.mxu0 0
      %1833 = vmatprep.mubr.bf16.mxu0 0
      %1834 = vmatmul.mubr.bf16.gmra.mrb[0].mxu0 %v610
      %v1835 = vpop.f32.mrb[0].mxu0
      %v1836 = vadd.f32 %v1672, %v1835
      %v1837 = vpop.f32.mrb[0].mxu0
      %v1838 = vpop.f32.mrb[0].mxu0
      %v1839 = vadd.f32 %v1675, %v1838
      %v1840 = vpop.f32.mrb[0].mxu0
      %1841 = vmatprep.mubr.bf16.mxu0 0
      %1842 = vmatmul.mubr.bf16.gmra.mrb[0].mxu0 %v613
      %v1843 = vpop.f32.mrb[0].mxu0
      %v1844 = vadd.f32 %v1680, %v1843
      %v1845 = vpop.f32.mrb[0].mxu0
      %v1846 = vpop.f32.mrb[0].mxu0
      %v1847 = vadd.f32 %v1683, %v1846
      %v1848 = vpop.f32.mrb[0].mxu0
      %1849 = vmatprep.mubr.bf16.mxu0 0
      %1850 = vmatmul.mubr.bf16.gmra.mrb[0].mxu0 %v616
      %v1851 = vpop.f32.mrb[0].mxu0
      %v1852 = vadd.f32 %v1688, %v1851
      %v1853 = vpop.f32.mrb[0].mxu0
      %v1854 = vpop.f32.mrb[0].mxu0
      %v1855 = vadd.f32 %v1691, %v1854
      %v1856 = vpop.f32.mrb[0].mxu0
      %1857 = vmatprep.mubr.bf16.mxu0 0
      %1858 = vmatmul.mubr.bf16.gmra.mrb[0].mxu0 %v619
      %v1859 = vpop.f32.mrb[0].mxu0
      %v1860 = vadd.f32 %v1696, %v1859
      %v1861 = vpop.f32.mrb[0].mxu0
      %v1862 = vpop.f32.mrb[0].mxu0
      %v1863 = vadd.f32 %v1699, %v1862
      %v1864 = vpop.f32.mrb[0].mxu0
      %1865 = vmatprep.mubr.bf16.mxu0 0
      %1866 = vmatmul.mubr.bf16.gmra.mrb[0].mxu0 %v622
      %v1867 = vpop.f32.mrb[0].mxu0
      %v1868 = vadd.f32 %v1704, %v1867
      %v1869 = vpop.f32.mrb[0].mxu0
      %v1870 = vpop.f32.mrb[0].mxu0
      %v1871 = vadd.f32 %v1707, %v1870
      %v1872 = vpop.f32.mrb[0].mxu0
      %1873 = vmatprep.mubr.bf16.mxu0 0
      %1874 = vmatmul.mubr.bf16.gmra.mrb[0].mxu0 %v625
      %v1875 = vpop.f32.mrb[0].mxu0
      %v1876 = vadd.f32 %v1712, %v1875
      %v1877 = vpop.f32.mrb[0].mxu0
      %v1878 = vpop.f32.mrb[0].mxu0
      %v1879 = vadd.f32 %v1715, %v1878
      %v1880 = vpop.f32.mrb[0].mxu0
      %1881 = vmatprep.mubr.bf16.mxu0 0
      %1882 = vmatmul.mubr.bf16.gmra.mrb[0].mxu0 %v628
      %v1883 = vpop.f32.mrb[0].mxu0
      %v1884 = vadd.f32 %v1720, %v1883
      %v1885 = vpop.f32.mrb[0].mxu0
      %v1886 = vpop.f32.mrb[0].mxu0
      %v1887 = vadd.f32 %v1723, %v1886
      %v1888 = vpop.f32.mrb[0].mxu0
      %1889 = vmatprep.mubr.bf16.mxu0 0
      %1890 = vmatmul.mubr.bf16.gmra.mrb[0].mxu0 %v631
      %v1891 = vpop.f32.mrb[0].mxu0
      %v1892 = vadd.f32 %v1728, %v1891
      %v1893 = vpop.f32.mrb[0].mxu0
      %v1894 = vpop.f32.mrb[0].mxu0
      %v1895 = vadd.f32 %v1731, %v1894
      %v1896 = vpop.f32.mrb[0].mxu0
      %1897 = vmatprep.mubr.bf16.mxu0 0
      %1898 = vmatmul.mubr.bf16.gmra.mrb[0].mxu0 %v634
      %v1899 = vpop.f32.mrb[0].mxu0
      %v1900 = vadd.f32 %v1736, %v1899
      %v1901 = vpop.f32.mrb[0].mxu0
      %v1902 = vpop.f32.mrb[0].mxu0
      %v1903 = vadd.f32 %v1739, %v1902
      %v1904 = vpop.f32.mrb[0].mxu0
      %1905 = vmatprep.mubr.bf16.mxu0 0
      %1906 = vmatmul.mubr.bf16.gmra.mrb[0].mxu0 %v637
      %v1907 = vpop.f32.mrb[0].mxu0
      %v1908 = vadd.f32 %v1744, %v1907
      %v1909 = vpop.f32.mrb[0].mxu0
      %v1910 = vpop.f32.mrb[0].mxu0
      %v1911 = vadd.f32 %v1747, %v1910
      %v1912 = vpop.f32.mrb[0].mxu0
      %1913 = vmatprep.mubr.bf16.mxu0 0
      %1914 = vmatmul.mubr.bf16.gmra.mrb[0].mxu0 %v640
      %v1915 = vpop.f32.mrb[0].mxu0
      %v1916 = vadd.f32 %v1752, %v1915
      %v1917 = vpop.f32.mrb[0].mxu0
      %v1918 = vpop.f32.mrb[0].mxu0
      %v1919 = vadd.f32 %v1755, %v1918
      %v1920 = vpop.f32.mrb[0].mxu0
      %1921 = vmatprep.mubr.bf16.mxu0 0
      %1922 = vmatmul.mubr.bf16.gmra.mrb[0].mxu0 %v643
      %v1923 = vpop.f32.mrb[0].mxu0
      %v1924 = vadd.f32 %v1760, %v1923
      %v1925 = vpop.f32.mrb[0].mxu0
      %v1926 = vpop.f32.mrb[0].mxu0
      %v1927 = vadd.f32 %v1763, %v1926
      %v1928 = vpop.f32.mrb[0].mxu0
      %1929 = vmatprep.mubr.bf16.mxu0 0
      %1930 = vmatmul.mubr.bf16.gmra.mrb[0].mxu0 %v646
      %v1931 = vpop.f32.mrb[0].mxu0
      %v1932 = vadd.f32 %v1768, %v1931
      %v1933 = vpop.f32.mrb[0].mxu0
      %v1934 = vpop.f32.mrb[0].mxu0
      %v1935 = vadd.f32 %v1771, %v1934
      %v1936 = vpop.f32.mrb[0].mxu0
      %1937 = vmatprep.mubr.bf16.mxu0 0
      %1938 = vmatmul.mubr.bf16.gmra.mrb[0].mxu0 %v649
      %v1939 = vpop.f32.mrb[0].mxu0
      %v1940 = vadd.f32 %v1776, %v1939
      %v1941 = vpop.f32.mrb[0].mxu0
      %v1942 = vpop.f32.mrb[0].mxu0
      %v1943 = vadd.f32 %v1779, %v1942
      %v1944 = vpop.f32.mrb[0].mxu0
      %1945 = vmatprep.mubr.bf16.mxu0 0
      %1946 = vmatmul.mubr.bf16.gmra.mrb[0].mxu0 %v652
      %v1947 = vpop.f32.mrb[0].mxu0
      %v1948 = vadd.f32 %v1784, %v1947
      %v1949 = vpop.f32.mrb[0].mxu0
      %v1950 = vpop.f32.mrb[0].mxu0
      %v1951 = vadd.f32 %v1787, %v1950
      %v1952 = vpop.f32.mrb[0].mxu0
      %1953 = vmatprep.mubr.bf16.mxu0 0
      %1954 = vmatmul.mubr.bf16.gmra.mrb[0].mxu0 %v655
      %v1955 = vpop.f32.mrb[0].mxu0
      %v1956 = vadd.f32 %v1792, %v1955
      %v1957 = vpop.f32.mrb[0].mxu0
      %v1958 = vpop.f32.mrb[0].mxu0
      %v1959 = vadd.f32 %v1795, %v1958
      %v1960 = vpop.f32.mrb[0].mxu0
      %1961 = vdwg.mxu0
      %s1962 = scalar_lea.vmem %s2, 12
      %v1963 = vld [vmem:[%s1962] sm:$0x3]
      %v1965 = vsel %vm657, %v1963, 0
      %1967 = vmatprep.subr.bf16.mxu0 0
      %1968 = vmatpush1.bf16.msra.mxu0 %v1965
      %1969 = vmatprep.subr.bf16.mxu0 0
      %1970 = vmatpush1.bf16.msra.mxu0 0
      %1971 = vmatprep.subr.bf16.mxu0 0
      %1972 = vmatpush1.bf16.msra.mxu0 0
      %1973 = vmatprep.subr.bf16.mxu0 0
      %1974 = vmatpush1.bf16.msra.mxu0 0
      %1975 = vmatprep.subr.bf16.mxu0 0
      %1976 = vmatpush1.bf16.msra.mxu0 0
      %1977 = vmatprep.subr.bf16.mxu0 0
      %1978 = vmatpush1.bf16.msra.mxu0 0
      %1979 = vmatprep.subr.bf16.mxu0 0
      %1980 = vmatpush1.bf16.msra.mxu0 0
      %1981 = vmatprep.subr.bf16.mxu0 0
      %1982 = vmatpush1.bf16.msra.mxu0 0
      %1983 = vmatprep.subr.bf16.mxu0 0
      %1984 = vmatpush1.bf16.msra.mxu0 0
      %1985 = vmatprep.subr.bf16.mxu0 0
      %1986 = vmatpush1.bf16.msra.mxu0 0
      %1987 = vmatprep.subr.bf16.mxu0 0
      %1988 = vmatpush1.bf16.msra.mxu0 0
      %1989 = vmatprep.subr.bf16.mxu0 0
      %1990 = vmatpush1.bf16.msra.mxu0 0
      %1991 = vmatprep.subr.bf16.mxu0 0
      %1992 = vmatpush1.bf16.msra.mxu0 0
      %1993 = vmatprep.subr.bf16.mxu0 0
      %1994 = vmatpush1.bf16.msra.mxu0 0
      %1995 = vmatprep.subr.bf16.mxu0 0
      %1996 = vmatpush1.bf16.msra.mxu0 0
      %1997 = vmatprep.subr.bf16.mxu0 0
      %1998 = vmatpush1.bf16.msra.mxu0 0
      %1999 = vmatprep.mubr.bf16.mxu0 0
      %2000 = vmatmul.mubr.bf16.gmra.mrb[0].mxu0 %v613
      %v2001 = vpop.f32.mrb[0].mxu0
      %v2002 = vadd.f32 0.0, %v2001
      %v2003 = vpop.f32.mrb[0].mxu0
      %v2004 = vpop.f32.mrb[0].mxu0
      %v2005 = vadd.f32 0.0, %v2004
      %v2006 = vpop.f32.mrb[0].mxu0
      %2007 = vmatprep.mubr.bf16.mxu0 0
      %2008 = vmatmul.mubr.bf16.gmra.mrb[0].mxu0 %v616
      %v2009 = vpop.f32.mrb[0].mxu0
      %v2010 = vadd.f32 0.0, %v2009
      %v2011 = vpop.f32.mrb[0].mxu0
      %v2012 = vpop.f32.mrb[0].mxu0
      %v2013 = vadd.f32 0.0, %v2012
      %v2014 = vpop.f32.mrb[0].mxu0
      %2015 = vmatprep.mubr.bf16.mxu0 0
      %2016 = vmatmul.mubr.bf16.gmra.mrb[0].mxu0 %v619
      %v2017 = vpop.f32.mrb[0].mxu0
      %v2018 = vadd.f32 0.0, %v2017
      %v2019 = vpop.f32.mrb[0].mxu0
      %v2020 = vpop.f32.mrb[0].mxu0
      %v2021 = vadd.f32 0.0, %v2020
      %v2022 = vpop.f32.mrb[0].mxu0
      %2023 = vmatprep.mubr.bf16.mxu0 0
      %2024 = vmatmul.mubr.bf16.gmra.mrb[0].mxu0 %v622
      %v2025 = vpop.f32.mrb[0].mxu0
      %v2026 = vadd.f32 0.0, %v2025
      %v2027 = vpop.f32.mrb[0].mxu0
      %v2028 = vpop.f32.mrb[0].mxu0
      %v2029 = vadd.f32 0.0, %v2028
      %v2030 = vpop.f32.mrb[0].mxu0
      %2031 = vmatprep.mubr.bf16.mxu0 0
      %2032 = vmatmul.mubr.bf16.gmra.mrb[0].mxu0 %v625
      %v2033 = vpop.f32.mrb[0].mxu0
      %v2034 = vadd.f32 0.0, %v2033
      %v2035 = vpop.f32.mrb[0].mxu0
      %v2036 = vpop.f32.mrb[0].mxu0
      %v2037 = vadd.f32 0.0, %v2036
      %v2038 = vpop.f32.mrb[0].mxu0
      %2039 = vmatprep.mubr.bf16.mxu0 0
      %2040 = vmatmul.mubr.bf16.gmra.mrb[0].mxu0 %v628
      %v2041 = vpop.f32.mrb[0].mxu0
      %v2042 = vadd.f32 0.0, %v2041
      %v2043 = vpop.f32.mrb[0].mxu0
      %v2044 = vpop.f32.mrb[0].mxu0
      %v2045 = vadd.f32 0.0, %v2044
      %v2046 = vpop.f32.mrb[0].mxu0
      %2047 = vmatprep.mubr.bf16.mxu0 0
      %2048 = vmatmul.mubr.bf16.gmra.mrb[0].mxu0 %v631
      %v2049 = vpop.f32.mrb[0].mxu0
      %v2050 = vadd.f32 0.0, %v2049
      %v2051 = vpop.f32.mrb[0].mxu0
      %v2052 = vpop.f32.mrb[0].mxu0
      %v2053 = vadd.f32 0.0, %v2052
      %v2054 = vpop.f32.mrb[0].mxu0
      %2055 = vmatprep.mubr.bf16.mxu0 0
      %2056 = vmatmul.mubr.bf16.gmra.mrb[0].mxu0 %v634
      %v2057 = vpop.f32.mrb[0].mxu0
      %v2058 = vadd.f32 0.0, %v2057
      %v2059 = vpop.f32.mrb[0].mxu0
      %v2060 = vpop.f32.mrb[0].mxu0
      %v2061 = vadd.f32 0.0, %v2060
      %v2062 = vpop.f32.mrb[0].mxu0
      %2063 = vmatprep.mubr.bf16.mxu0 0
      %2064 = vmatmul.mubr.bf16.gmra.mrb[0].mxu0 %v637
      %v2065 = vpop.f32.mrb[0].mxu0
      %v2066 = vadd.f32 0.0, %v2065
      %v2067 = vpop.f32.mrb[0].mxu0
      %v2068 = vpop.f32.mrb[0].mxu0
      %v2069 = vadd.f32 0.0, %v2068
      %v2070 = vpop.f32.mrb[0].mxu0
      %2071 = vmatprep.mubr.bf16.mxu0 0
      %2072 = vmatmul.mubr.bf16.gmra.mrb[0].mxu0 %v640
      %v2073 = vpop.f32.mrb[0].mxu0
      %v2074 = vadd.f32 0.0, %v2073
      %v2075 = vpop.f32.mrb[0].mxu0
      %v2076 = vpop.f32.mrb[0].mxu0
      %v2077 = vadd.f32 0.0, %v2076
      %v2078 = vpop.f32.mrb[0].mxu0
      %2079 = vmatprep.mubr.bf16.mxu0 0
      %2080 = vmatmul.mubr.bf16.gmra.mrb[0].mxu0 %v643
      %v2081 = vpop.f32.mrb[0].mxu0
      %v2082 = vadd.f32 0.0, %v2081
      %v2083 = vpop.f32.mrb[0].mxu0
      %v2084 = vpop.f32.mrb[0].mxu0
      %v2085 = vadd.f32 0.0, %v2084
      %v2086 = vpop.f32.mrb[0].mxu0
      %2087 = vmatprep.mubr.bf16.mxu0 0
      %2088 = vmatmul.mubr.bf16.gmra.mrb[0].mxu0 %v646
      %v2089 = vpop.f32.mrb[0].mxu0
      %v2090 = vadd.f32 0.0, %v2089
      %v2091 = vpop.f32.mrb[0].mxu0
      %v2092 = vpop.f32.mrb[0].mxu0
      %v2093 = vadd.f32 0.0, %v2092
      %v2094 = vpop.f32.mrb[0].mxu0
      %2095 = vmatprep.mubr.bf16.mxu0 0
      %2096 = vmatmul.mubr.bf16.gmra.mrb[0].mxu0 %v649
      %v2097 = vpop.f32.mrb[0].mxu0
      %v2098 = vadd.f32 0.0, %v2097
      %v2099 = vpop.f32.mrb[0].mxu0
      %v2100 = vpop.f32.mrb[0].mxu0
      %v2101 = vadd.f32 0.0, %v2100
      %v2102 = vpop.f32.mrb[0].mxu0
      %2103 = vmatprep.mubr.bf16.mxu0 0
      %2104 = vmatmul.mubr.bf16.gmra.mrb[0].mxu0 %v652
      %v2105 = vpop.f32.mrb[0].mxu0
      %v2106 = vadd.f32 0.0, %v2105
      %v2107 = vpop.f32.mrb[0].mxu0
      %v2108 = vpop.f32.mrb[0].mxu0
      %v2109 = vadd.f32 0.0, %v2108
      %v2110 = vpop.f32.mrb[0].mxu0
      %2111 = vmatprep.mubr.bf16.mxu0 0
      %2112 = vmatmul.mubr.bf16.gmra.mrb[0].mxu0 %v655
      %v2113 = vpop.f32.mrb[0].mxu0
      %v2114 = vadd.f32 0.0, %v2113
      %v2115 = vpop.f32.mrb[0].mxu0
      %v2116 = vpop.f32.mrb[0].mxu0
      %v2117 = vadd.f32 0.0, %v2116
      %v2118 = vpop.f32.mrb[0].mxu0
      %2119 = vmatprep.mubr.bf16.mxu0 0
      %2120 = vmatmul.mubr.bf16.gmra.mrb[0].mxu0 %v1233
      %v2121 = vpop.f32.mrb[0].mxu0
      %v2122 = vadd.f32 0.0, %v2121
      %v2123 = vpop.f32.mrb[0].mxu0
      %v2124 = vpop.f32.mrb[0].mxu0
      %v2125 = vadd.f32 0.0, %v2124
      %v2126 = vpop.f32.mrb[0].mxu0
      %2127 = vdwg.mxu0
      %v2128 = vadd.f32 %v1836, %v2002
      %v2129 = vadd.f32 %v1839, %v2005
      %v2130 = vadd.f32 %v1844, %v2010
      %v2131 = vadd.f32 %v1847, %v2013
      %v2132 = vadd.f32 %v1852, %v2018
      %v2133 = vadd.f32 %v1855, %v2021
      %v2134 = vadd.f32 %v1860, %v2026
      %v2135 = vadd.f32 %v1863, %v2029
      %v2136 = vadd.f32 %v1868, %v2034
      %v2137 = vadd.f32 %v1871, %v2037
      %v2138 = vadd.f32 %v1876, %v2042
      %v2139 = vadd.f32 %v1879, %v2045
      %v2140 = vadd.f32 %v1884, %v2050
      %v2141 = vadd.f32 %v1887, %v2053
      %v2142 = vadd.f32 %v1892, %v2058
      %v2143 = vadd.f32 %v1895, %v2061
      %v2144 = vadd.f32 %v1900, %v2066
      %v2145 = vadd.f32 %v1903, %v2069
      %v2146 = vadd.f32 %v1908, %v2074
      %v2147 = vadd.f32 %v1911, %v2077
      %v2148 = vadd.f32 %v1916, %v2082
      %v2149 = vadd.f32 %v1919, %v2085
      %v2150 = vadd.f32 %v1924, %v2090
      %v2151 = vadd.f32 %v1927, %v2093
      %v2152 = vadd.f32 %v1932, %v2098
      %v2153 = vadd.f32 %v1935, %v2101
      %v2154 = vadd.f32 %v1940, %v2106
      %v2155 = vadd.f32 %v1943, %v2109
      %v2156 = vadd.f32 %v1948, %v2114
      %v2157 = vadd.f32 %v1951, %v2117
      %v2158 = vadd.f32 %v1956, %v2122
      %v2159 = vadd.f32 %v1959, %v2125
      %s2160 = scalar_lea.vmem %s2, 14
      %v2161 = vld [vmem:[%s2160] sm:$0x3]
      %v2164 = vrot.slane %v391, 1
      %v2165 = vrot.slane %v409, 1
      %v2166 = vsel %vm1537, %v2164, %v2165
      %v2168 = vsel %vm608, %v2166, 0
      %v2171 = vsel %vm657, %v2161, 0
      %2173 = vmatprep.subr.bf16.mxu0 0
      %2174 = vmatpush1.bf16.msra.mxu0 %v2171
      %2175 = vmatprep.subr.bf16.mxu0 0
      %2176 = vmatpush1.bf16.msra.mxu0 0
      %2177 = vmatprep.subr.bf16.mxu0 0
      %2178 = vmatpush1.bf16.msra.mxu0 0
      %2179 = vmatprep.subr.bf16.mxu0 0
      %2180 = vmatpush1.bf16.msra.mxu0 0
      %2181 = vmatprep.subr.bf16.mxu0 0
      %2182 = vmatpush1.bf16.msra.mxu0 0
      %2183 = vmatprep.subr.bf16.mxu0 0
      %2184 = vmatpush1.bf16.msra.mxu0 0
      %2185 = vmatprep.subr.bf16.mxu0 0
      %2186 = vmatpush1.bf16.msra.mxu0 0
      %2187 = vmatprep.subr.bf16.mxu0 0
      %2188 = vmatpush1.bf16.msra.mxu0 0
      %2189 = vmatprep.subr.bf16.mxu0 0
      %2190 = vmatpush1.bf16.msra.mxu0 0
      %2191 = vmatprep.subr.bf16.mxu0 0
      %2192 = vmatpush1.bf16.msra.mxu0 0
      %2193 = vmatprep.subr.bf16.mxu0 0
      %2194 = vmatpush1.bf16.msra.mxu0 0
      %2195 = vmatprep.subr.bf16.mxu0 0
      %2196 = vmatpush1.bf16.msra.mxu0 0
      %2197 = vmatprep.subr.bf16.mxu0 0
      %2198 = vmatpush1.bf16.msra.mxu0 0
      %2199 = vmatprep.subr.bf16.mxu0 0
      %2200 = vmatpush1.bf16.msra.mxu0 0
      %2201 = vmatprep.subr.bf16.mxu0 0
      %2202 = vmatpush1.bf16.msra.mxu0 0
      %2203 = vmatprep.subr.bf16.mxu0 0
      %2204 = vmatpush1.bf16.msra.mxu0 0
      %2205 = vmatprep.mubr.bf16.mxu0 0
      %2206 = vmatmul.mubr.bf16.gmra.mrb[0].mxu0 %v1590
      %v2207 = vpop.f32.mrb[0].mxu0
      %v2208 = vadd.f32 0.0, %v2207
      %v2209 = vpop.f32.mrb[0].mxu0
      %v2210 = vpop.f32.mrb[0].mxu0
      %v2211 = vadd.f32 0.0, %v2210
      %v2212 = vpop.f32.mrb[0].mxu0
      %2213 = vmatprep.mubr.bf16.mxu0 0
      %2214 = vmatmul.mubr.bf16.gmra.mrb[0].mxu0 %v1593
      %v2215 = vpop.f32.mrb[0].mxu0
      %v2216 = vadd.f32 0.0, %v2215
      %v2217 = vpop.f32.mrb[0].mxu0
      %v2218 = vpop.f32.mrb[0].mxu0
      %v2219 = vadd.f32 0.0, %v2218
      %v2220 = vpop.f32.mrb[0].mxu0
      %2221 = vmatprep.mubr.bf16.mxu0 0
      %2222 = vmatmul.mubr.bf16.gmra.mrb[0].mxu0 %v1596
      %v2223 = vpop.f32.mrb[0].mxu0
      %v2224 = vadd.f32 0.0, %v2223
      %v2225 = vpop.f32.mrb[0].mxu0
      %v2226 = vpop.f32.mrb[0].mxu0
      %v2227 = vadd.f32 0.0, %v2226
      %v2228 = vpop.f32.mrb[0].mxu0
      %2229 = vmatprep.mubr.bf16.mxu0 0
      %2230 = vmatmul.mubr.bf16.gmra.mrb[0].mxu0 %v1599
      %v2231 = vpop.f32.mrb[0].mxu0
      %v2232 = vadd.f32 0.0, %v2231
      %v2233 = vpop.f32.mrb[0].mxu0
      %v2234 = vpop.f32.mrb[0].mxu0
      %v2235 = vadd.f32 0.0, %v2234
      %v2236 = vpop.f32.mrb[0].mxu0
      %2237 = vmatprep.mubr.bf16.mxu0 0
      %2238 = vmatmul.mubr.bf16.gmra.mrb[0].mxu0 %v1602
      %v2239 = vpop.f32.mrb[0].mxu0
      %v2240 = vadd.f32 0.0, %v2239
      %v2241 = vpop.f32.mrb[0].mxu0
      %v2242 = vpop.f32.mrb[0].mxu0
      %v2243 = vadd.f32 0.0, %v2242
      %v2244 = vpop.f32.mrb[0].mxu0
      %2245 = vmatprep.mubr.bf16.mxu0 0
      %2246 = vmatmul.mubr.bf16.gmra.mrb[0].mxu0 %v1605
      %v2247 = vpop.f32.mrb[0].mxu0
      %v2248 = vadd.f32 0.0, %v2247
      %v2249 = vpop.f32.mrb[0].mxu0
      %v2250 = vpop.f32.mrb[0].mxu0
      %v2251 = vadd.f32 0.0, %v2250
      %v2252 = vpop.f32.mrb[0].mxu0
      %2253 = vmatprep.mubr.bf16.mxu0 0
      %2254 = vmatmul.mubr.bf16.gmra.mrb[0].mxu0 %v1608
      %v2255 = vpop.f32.mrb[0].mxu0
      %v2256 = vadd.f32 0.0, %v2255
      %v2257 = vpop.f32.mrb[0].mxu0
      %v2258 = vpop.f32.mrb[0].mxu0
      %v2259 = vadd.f32 0.0, %v2258
      %v2260 = vpop.f32.mrb[0].mxu0
      %2261 = vmatprep.mubr.bf16.mxu0 0
      %2262 = vmatmul.mubr.bf16.gmra.mrb[0].mxu0 %v1611
      %v2263 = vpop.f32.mrb[0].mxu0
      %v2264 = vadd.f32 0.0, %v2263
      %v2265 = vpop.f32.mrb[0].mxu0
      %v2266 = vpop.f32.mrb[0].mxu0
      %v2267 = vadd.f32 0.0, %v2266
      %v2268 = vpop.f32.mrb[0].mxu0
      %2269 = vmatprep.mubr.bf16.mxu0 0
      %2270 = vmatmul.mubr.bf16.gmra.mrb[0].mxu0 %v1614
      %v2271 = vpop.f32.mrb[0].mxu0
      %v2272 = vadd.f32 0.0, %v2271
      %v2273 = vpop.f32.mrb[0].mxu0
      %v2274 = vpop.f32.mrb[0].mxu0
      %v2275 = vadd.f32 0.0, %v2274
      %v2276 = vpop.f32.mrb[0].mxu0
      %2277 = vmatprep.mubr.bf16.mxu0 0
      %2278 = vmatmul.mubr.bf16.gmra.mrb[0].mxu0 %v1617
      %v2279 = vpop.f32.mrb[0].mxu0
      %v2280 = vadd.f32 0.0, %v2279
      %v2281 = vpop.f32.mrb[0].mxu0
      %v2282 = vpop.f32.mrb[0].mxu0
      %v2283 = vadd.f32 0.0, %v2282
      %v2284 = vpop.f32.mrb[0].mxu0
      %2285 = vmatprep.mubr.bf16.mxu0 0
      %2286 = vmatmul.mubr.bf16.gmra.mrb[0].mxu0 %v1620
      %v2287 = vpop.f32.mrb[0].mxu0
      %v2288 = vadd.f32 0.0, %v2287
      %v2289 = vpop.f32.mrb[0].mxu0
      %v2290 = vpop.f32.mrb[0].mxu0
      %v2291 = vadd.f32 0.0, %v2290
      %v2292 = vpop.f32.mrb[0].mxu0
      %2293 = vmatprep.mubr.bf16.mxu0 0
      %2294 = vmatmul.mubr.bf16.gmra.mrb[0].mxu0 %v1623
      %v2295 = vpop.f32.mrb[0].mxu0
      %v2296 = vadd.f32 0.0, %v2295
      %v2297 = vpop.f32.mrb[0].mxu0
      %v2298 = vpop.f32.mrb[0].mxu0
      %v2299 = vadd.f32 0.0, %v2298
      %v2300 = vpop.f32.mrb[0].mxu0
      %2301 = vmatprep.mubr.bf16.mxu0 0
      %2302 = vmatmul.mubr.bf16.gmra.mrb[0].mxu0 %v1626
      %v2303 = vpop.f32.mrb[0].mxu0
      %v2304 = vadd.f32 0.0, %v2303
      %v2305 = vpop.f32.mrb[0].mxu0
      %v2306 = vpop.f32.mrb[0].mxu0
      %v2307 = vadd.f32 0.0, %v2306
      %v2308 = vpop.f32.mrb[0].mxu0
      %2309 = vmatprep.mubr.bf16.mxu0 0
      %2310 = vmatmul.mubr.bf16.gmra.mrb[0].mxu0 %v1629
      %v2311 = vpop.f32.mrb[0].mxu0
      %v2312 = vadd.f32 0.0, %v2311
      %v2313 = vpop.f32.mrb[0].mxu0
      %v2314 = vpop.f32.mrb[0].mxu0
      %v2315 = vadd.f32 0.0, %v2314
      %v2316 = vpop.f32.mrb[0].mxu0
      %2317 = vmatprep.mubr.bf16.mxu0 0
      %2318 = vmatmul.mubr.bf16.gmra.mrb[0].mxu0 %v1632
      %v2319 = vpop.f32.mrb[0].mxu0
      %v2320 = vadd.f32 0.0, %v2319
      %v2321 = vpop.f32.mrb[0].mxu0
      %v2322 = vpop.f32.mrb[0].mxu0
      %v2323 = vadd.f32 0.0, %v2322
      %v2324 = vpop.f32.mrb[0].mxu0
      %2325 = vmatprep.mubr.bf16.mxu0 0
      %2326 = vmatmul.mubr.bf16.gmra.mrb[0].mxu0 %v2168
      %v2327 = vpop.f32.mrb[0].mxu0
      %v2328 = vadd.f32 0.0, %v2327
      %v2329 = vpop.f32.mrb[0].mxu0
      %v2330 = vpop.f32.mrb[0].mxu0
      %v2331 = vadd.f32 0.0, %v2330
      %v2332 = vpop.f32.mrb[0].mxu0
      %2333 = vdwg.mxu0
      %v2334 = vadd.f32 %v2128, %v2208
      %v2335 = vadd.f32 %v2129, %v2211
      %v2336 = vadd.f32 %v2130, %v2216
      %v2337 = vadd.f32 %v2131, %v2219
      %v2338 = vadd.f32 %v2132, %v2224
      %v2339 = vadd.f32 %v2133, %v2227
      %v2340 = vadd.f32 %v2134, %v2232
      %v2341 = vadd.f32 %v2135, %v2235
      %v2342 = vadd.f32 %v2136, %v2240
      %v2343 = vadd.f32 %v2137, %v2243
      %v2344 = vadd.f32 %v2138, %v2248
      %v2345 = vadd.f32 %v2139, %v2251
      %v2346 = vadd.f32 %v2140, %v2256
      %v2347 = vadd.f32 %v2141, %v2259
      %v2348 = vadd.f32 %v2142, %v2264
      %v2349 = vadd.f32 %v2143, %v2267
      %v2350 = vadd.f32 %v2144, %v2272
      %v2351 = vadd.f32 %v2145, %v2275
      %v2352 = vadd.f32 %v2146, %v2280
      %v2353 = vadd.f32 %v2147, %v2283
      %v2354 = vadd.f32 %v2148, %v2288
      %v2355 = vadd.f32 %v2149, %v2291
      %v2356 = vadd.f32 %v2150, %v2296
      %v2357 = vadd.f32 %v2151, %v2299
      %v2358 = vadd.f32 %v2152, %v2304
      %v2359 = vadd.f32 %v2153, %v2307
      %v2360 = vadd.f32 %v2154, %v2312
      %v2361 = vadd.f32 %v2155, %v2315
      %v2362 = vadd.f32 %v2156, %v2320
      %v2363 = vadd.f32 %v2157, %v2323
      %v2364 = vadd.f32 %v2158, %v2328
      %v2365 = vadd.f32 %v2159, %v2331
      %v2366 = vadd.f32 %v2334, %v1435
      %v2367 = vadd.f32 %v2335, %v1435
      %v2368 = vadd.f32 %v2336, %v1435
      %v2369 = vadd.f32 %v2337, %v1435
      %v2370 = vadd.f32 %v2338, %v1435
      %v2371 = vadd.f32 %v2339, %v1435
      %v2372 = vadd.f32 %v2340, %v1435
      %v2373 = vadd.f32 %v2341, %v1435
      %v2374 = vadd.f32 %v2342, %v1435
      %v2375 = vadd.f32 %v2343, %v1435
      %v2376 = vadd.f32 %v2344, %v1435
      %v2377 = vadd.f32 %v2345, %v1435
      %v2378 = vadd.f32 %v2346, %v1435
      %v2379 = vadd.f32 %v2347, %v1435
      %v2380 = vadd.f32 %v2348, %v1435
      %v2381 = vadd.f32 %v2349, %v1435
      %v2382 = vadd.f32 %v2350, %v1435
      %v2383 = vadd.f32 %v2351, %v1435
      %v2384 = vadd.f32 %v2352, %v1435
      %v2385 = vadd.f32 %v2353, %v1435
      %v2386 = vadd.f32 %v2354, %v1435
      %v2387 = vadd.f32 %v2355, %v1435
      %v2388 = vadd.f32 %v2356, %v1435
      %v2389 = vadd.f32 %v2357, %v1435
      %v2390 = vadd.f32 %v2358, %v1435
      %v2391 = vadd.f32 %v2359, %v1435
      %v2392 = vadd.f32 %v2360, %v1435
      %v2393 = vadd.f32 %v2361, %v1435
      %v2394 = vadd.f32 %v2362, %v1435
      %v2395 = vadd.f32 %v2363, %v1435
      %v2396 = vadd.f32 %v2364, %v1435
      %v2397 = vadd.f32 %v2365, %v1435
      %s2398 = scalar_lea.vmem %s318, 256
      %2399 = vst.msk [vmem:[%s2398] sm:$0xff] %vm608, %v2366
      %2400 = vst.msk [vmem:[%s2398 + $0x8] sm:$0xff] %vm608, %v2367
      %2401 = vst.msk [vmem:[%s2398 + $0x10] sm:$0xff] %vm608, %v2368
      %2402 = vst.msk [vmem:[%s2398 + $0x18] sm:$0xff] %vm608, %v2369
      %2403 = vst.msk [vmem:[%s2398 + $0x20] sm:$0xff] %vm608, %v2370
      %2404 = vst.msk [vmem:[%s2398 + $0x28] sm:$0xff] %vm608, %v2371
      %2405 = vst.msk [vmem:[%s2398 + $0x30] sm:$0xff] %vm608, %v2372
      %2406 = vst.msk [vmem:[%s2398 + $0x38] sm:$0xff] %vm608, %v2373
      %2407 = vst.msk [vmem:[%s2398 + $0x40] sm:$0xff] %vm608, %v2374
      %2408 = vst.msk [vmem:[%s2398 + $0x48] sm:$0xff] %vm608, %v2375
      %2409 = vst.msk [vmem:[%s2398 + $0x50] sm:$0xff] %vm608, %v2376
      %2410 = vst.msk [vmem:[%s2398 + $0x58] sm:$0xff] %vm608, %v2377
      %2411 = vst.msk [vmem:[%s2398 + $0x60] sm:$0xff] %vm608, %v2378
      %2412 = vst.msk [vmem:[%s2398 + $0x68] sm:$0xff] %vm608, %v2379
      %2413 = vst.msk [vmem:[%s2398 + $0x70] sm:$0xff] %vm608, %v2380
      %2414 = vst.msk [vmem:[%s2398 + $0x78] sm:$0xff] %vm608, %v2381
      %2415 = vst.msk [vmem:[%s2398 + $0x80] sm:$0xff] %vm608, %v2382
      %2416 = vst.msk [vmem:[%s2398 + $0x88] sm:$0xff] %vm608, %v2383
      %2417 = vst.msk [vmem:[%s2398 + $0x90] sm:$0xff] %vm608, %v2384
      %2418 = vst.msk [vmem:[%s2398 + $0x98] sm:$0xff] %vm608, %v2385
      %2419 = vst.msk [vmem:[%s2398 + $0xa0] sm:$0xff] %vm608, %v2386
      %2420 = vst.msk [vmem:[%s2398 + $0xa8] sm:$0xff] %vm608, %v2387
      %2421 = vst.msk [vmem:[%s2398 + $0xb0] sm:$0xff] %vm608, %v2388
      %2422 = vst.msk [vmem:[%s2398 + $0xb8] sm:$0xff] %vm608, %v2389
      %2423 = vst.msk [vmem:[%s2398 + $0xc0] sm:$0xff] %vm608, %v2390
      %2424 = vst.msk [vmem:[%s2398 + $0xc8] sm:$0xff] %vm608, %v2391
      %2425 = vst.msk [vmem:[%s2398 + $0xd0] sm:$0xff] %vm608, %v2392
      %2426 = vst.msk [vmem:[%s2398 + $0xd8] sm:$0xff] %vm608, %v2393
      %2427 = vst.msk [vmem:[%s2398 + $0xe0] sm:$0xff] %vm608, %v2394
      %2428 = vst.msk [vmem:[%s2398 + $0xe8] sm:$0xff] %vm608, %v2395
      %2429 = vst.msk [vmem:[%s2398 + $0xf0] sm:$0xff] %vm608, %v2396
      %2430 = vst.msk [vmem:[%s2398 + $0xf8] sm:$0xff] %vm608, %v2397
      %s2431 = scalar_lea.vmem %s2, 16
      %v2432 = vld [vmem:[%s2431] sm:$0x3]
      %s2433 = scalar_lea.vmem %s2, 18
      %v2434 = vld [vmem:[%s2433] sm:$0x3]
      %v2436 = vsel %vm657, %v2434, 0
      %2438 = vmatprep.subr.bf16.mxu0 0
      %2439 = vmatpush1.bf16.msra.mxu0 %v2436
      %2440 = vmatprep.subr.bf16.mxu0 0
      %2441 = vmatpush1.bf16.msra.mxu0 0
      %2442 = vmatprep.subr.bf16.mxu0 0
      %2443 = vmatpush1.bf16.msra.mxu0 0
      %2444 = vmatprep.subr.bf16.mxu0 0
      %2445 = vmatpush1.bf16.msra.mxu0 0
      %2446 = vmatprep.subr.bf16.mxu0 0
      %2447 = vmatpush1.bf16.msra.mxu0 0
      %2448 = vmatprep.subr.bf16.mxu0 0
      %2449 = vmatpush1.bf16.msra.mxu0 0
      %2450 = vmatprep.subr.bf16.mxu0 0
      %2451 = vmatpush1.bf16.msra.mxu0 0
      %2452 = vmatprep.subr.bf16.mxu0 0
      %2453 = vmatpush1.bf16.msra.mxu0 0
      %2454 = vmatprep.subr.bf16.mxu0 0
      %2455 = vmatpush1.bf16.msra.mxu0 0
      %2456 = vmatprep.subr.bf16.mxu0 0
      %2457 = vmatpush1.bf16.msra.mxu0 0
      %2458 = vmatprep.subr.bf16.mxu0 0
      %2459 = vmatpush1.bf16.msra.mxu0 0
      %2460 = vmatprep.subr.bf16.mxu0 0
      %2461 = vmatpush1.bf16.msra.mxu0 0
      %2462 = vmatprep.subr.bf16.mxu0 0
      %2463 = vmatpush1.bf16.msra.mxu0 0
      %2464 = vmatprep.subr.bf16.mxu0 0
      %2465 = vmatpush1.bf16.msra.mxu0 0
      %2466 = vmatprep.subr.bf16.mxu0 0
      %2467 = vmatpush1.bf16.msra.mxu0 0
      %2468 = vmatprep.subr.bf16.mxu0 0
      %2469 = vmatpush1.bf16.msra.mxu0 0
      %2470 = vmatprep.mubr.bf16.mxu0 0
      %2471 = vmatmul.mubr.bf16.gmra.mrb[0].mxu0 %v613
      %v2472 = vpop.f32.mrb[0].mxu0
      %v2473 = vadd.f32 0.0, %v2472
      %v2474 = vpop.f32.mrb[0].mxu0
      %v2475 = vpop.f32.mrb[0].mxu0
      %v2476 = vadd.f32 0.0, %v2475
      %v2477 = vpop.f32.mrb[0].mxu0
      %2478 = vmatprep.mubr.bf16.mxu0 0
      %2479 = vmatmul.mubr.bf16.gmra.mrb[0].mxu0 %v616
      %v2480 = vpop.f32.mrb[0].mxu0
      %v2481 = vadd.f32 0.0, %v2480
      %v2482 = vpop.f32.mrb[0].mxu0
      %v2483 = vpop.f32.mrb[0].mxu0
      %v2484 = vadd.f32 0.0, %v2483
      %v2485 = vpop.f32.mrb[0].mxu0
      %2486 = vmatprep.mubr.bf16.mxu0 0
      %2487 = vmatmul.mubr.bf16.gmra.mrb[0].mxu0 %v619
      %v2488 = vpop.f32.mrb[0].mxu0
      %v2489 = vadd.f32 0.0, %v2488
      %v2490 = vpop.f32.mrb[0].mxu0
      %v2491 = vpop.f32.mrb[0].mxu0
      %v2492 = vadd.f32 0.0, %v2491
      %v2493 = vpop.f32.mrb[0].mxu0
      %2494 = vmatprep.mubr.bf16.mxu0 0
      %2495 = vmatmul.mubr.bf16.gmra.mrb[0].mxu0 %v622
      %v2496 = vpop.f32.mrb[0].mxu0
      %v2497 = vadd.f32 0.0, %v2496
      %v2498 = vpop.f32.mrb[0].mxu0
      %v2499 = vpop.f32.mrb[0].mxu0
      %v2500 = vadd.f32 0.0, %v2499
      %v2501 = vpop.f32.mrb[0].mxu0
      %2502 = vmatprep.mubr.bf16.mxu0 0
      %2503 = vmatmul.mubr.bf16.gmra.mrb[0].mxu0 %v625
      %v2504 = vpop.f32.mrb[0].mxu0
      %v2505 = vadd.f32 0.0, %v2504
      %v2506 = vpop.f32.mrb[0].mxu0
      %v2507 = vpop.f32.mrb[0].mxu0
      %v2508 = vadd.f32 0.0, %v2507
      %v2509 = vpop.f32.mrb[0].mxu0
      %2510 = vmatprep.mubr.bf16.mxu0 0
      %2511 = vmatmul.mubr.bf16.gmra.mrb[0].mxu0 %v628
      %v2512 = vpop.f32.mrb[0].mxu0
      %v2513 = vadd.f32 0.0, %v2512
      %v2514 = vpop.f32.mrb[0].mxu0
      %v2515 = vpop.f32.mrb[0].mxu0
      %v2516 = vadd.f32 0.0, %v2515
      %v2517 = vpop.f32.mrb[0].mxu0
      %2518 = vmatprep.mubr.bf16.mxu0 0
      %2519 = vmatmul.mubr.bf16.gmra.mrb[0].mxu0 %v631
      %v2520 = vpop.f32.mrb[0].mxu0
      %v2521 = vadd.f32 0.0, %v2520
      %v2522 = vpop.f32.mrb[0].mxu0
      %v2523 = vpop.f32.mrb[0].mxu0
      %v2524 = vadd.f32 0.0, %v2523
      %v2525 = vpop.f32.mrb[0].mxu0
      %2526 = vmatprep.mubr.bf16.mxu0 0
      %2527 = vmatmul.mubr.bf16.gmra.mrb[0].mxu0 %v634
      %v2528 = vpop.f32.mrb[0].mxu0
      %v2529 = vadd.f32 0.0, %v2528
      %v2530 = vpop.f32.mrb[0].mxu0
      %v2531 = vpop.f32.mrb[0].mxu0
      %v2532 = vadd.f32 0.0, %v2531
      %v2533 = vpop.f32.mrb[0].mxu0
      %2534 = vmatprep.mubr.bf16.mxu0 0
      %2535 = vmatmul.mubr.bf16.gmra.mrb[0].mxu0 %v637
      %v2536 = vpop.f32.mrb[0].mxu0
      %v2537 = vadd.f32 0.0, %v2536
      %v2538 = vpop.f32.mrb[0].mxu0
      %v2539 = vpop.f32.mrb[0].mxu0
      %v2540 = vadd.f32 0.0, %v2539
      %v2541 = vpop.f32.mrb[0].mxu0
      %2542 = vmatprep.mubr.bf16.mxu0 0
      %2543 = vmatmul.mubr.bf16.gmra.mrb[0].mxu0 %v640
      %v2544 = vpop.f32.mrb[0].mxu0
      %v2545 = vadd.f32 0.0, %v2544
      %v2546 = vpop.f32.mrb[0].mxu0
      %v2547 = vpop.f32.mrb[0].mxu0
      %v2548 = vadd.f32 0.0, %v2547
      %v2549 = vpop.f32.mrb[0].mxu0
      %2550 = vmatprep.mubr.bf16.mxu0 0
      %2551 = vmatmul.mubr.bf16.gmra.mrb[0].mxu0 %v643
      %v2552 = vpop.f32.mrb[0].mxu0
      %v2553 = vadd.f32 0.0, %v2552
      %v2554 = vpop.f32.mrb[0].mxu0
      %v2555 = vpop.f32.mrb[0].mxu0
      %v2556 = vadd.f32 0.0, %v2555
      %v2557 = vpop.f32.mrb[0].mxu0
      %2558 = vmatprep.mubr.bf16.mxu0 0
      %2559 = vmatmul.mubr.bf16.gmra.mrb[0].mxu0 %v646
      %v2560 = vpop.f32.mrb[0].mxu0
      %v2561 = vadd.f32 0.0, %v2560
      %v2562 = vpop.f32.mrb[0].mxu0
      %v2563 = vpop.f32.mrb[0].mxu0
      %v2564 = vadd.f32 0.0, %v2563
      %v2565 = vpop.f32.mrb[0].mxu0
      %2566 = vmatprep.mubr.bf16.mxu0 0
      %2567 = vmatmul.mubr.bf16.gmra.mrb[0].mxu0 %v649
      %v2568 = vpop.f32.mrb[0].mxu0
      %v2569 = vadd.f32 0.0, %v2568
      %v2570 = vpop.f32.mrb[0].mxu0
      %v2571 = vpop.f32.mrb[0].mxu0
      %v2572 = vadd.f32 0.0, %v2571
      %v2573 = vpop.f32.mrb[0].mxu0
      %2574 = vmatprep.mubr.bf16.mxu0 0
      %2575 = vmatmul.mubr.bf16.gmra.mrb[0].mxu0 %v652
      %v2576 = vpop.f32.mrb[0].mxu0
      %v2577 = vadd.f32 0.0, %v2576
      %v2578 = vpop.f32.mrb[0].mxu0
      %v2579 = vpop.f32.mrb[0].mxu0
      %v2580 = vadd.f32 0.0, %v2579
      %v2581 = vpop.f32.mrb[0].mxu0
      %2582 = vmatprep.mubr.bf16.mxu0 0
      %2583 = vmatmul.mubr.bf16.gmra.mrb[0].mxu0 %v655
      %v2584 = vpop.f32.mrb[0].mxu0
      %v2585 = vadd.f32 0.0, %v2584
      %v2586 = vpop.f32.mrb[0].mxu0
      %v2587 = vpop.f32.mrb[0].mxu0
      %v2588 = vadd.f32 0.0, %v2587
      %v2589 = vpop.f32.mrb[0].mxu0
      %2590 = vmatprep.mubr.bf16.mxu0 0
      %2591 = vmatmul.mubr.bf16.gmra.mrb[0].mxu0 %v1233
      %v2592 = vpop.f32.mrb[0].mxu0
      %v2593 = vadd.f32 0.0, %v2592
      %v2594 = vpop.f32.mrb[0].mxu0
      %v2595 = vpop.f32.mrb[0].mxu0
      %v2596 = vadd.f32 0.0, %v2595
      %v2597 = vpop.f32.mrb[0].mxu0
      %2598 = vdwg.mxu0
      %v2600 = vsel %vm657, %v2432, 0
      %2602 = vmatprep.subr.bf16.mxu0 0
      %2603 = vmatpush1.bf16.msra.mxu0 %v2600
      %2604 = vmatprep.subr.bf16.mxu0 0
      %2605 = vmatpush1.bf16.msra.mxu0 0
      %2606 = vmatprep.subr.bf16.mxu0 0
      %2607 = vmatpush1.bf16.msra.mxu0 0
      %2608 = vmatprep.subr.bf16.mxu0 0
      %2609 = vmatpush1.bf16.msra.mxu0 0
      %2610 = vmatprep.subr.bf16.mxu0 0
      %2611 = vmatpush1.bf16.msra.mxu0 0
      %2612 = vmatprep.subr.bf16.mxu0 0
      %2613 = vmatpush1.bf16.msra.mxu0 0
      %2614 = vmatprep.subr.bf16.mxu0 0
      %2615 = vmatpush1.bf16.msra.mxu0 0
      %2616 = vmatprep.subr.bf16.mxu0 0
      %2617 = vmatpush1.bf16.msra.mxu0 0
      %2618 = vmatprep.subr.bf16.mxu0 0
      %2619 = vmatpush1.bf16.msra.mxu0 0
      %2620 = vmatprep.subr.bf16.mxu0 0
      %2621 = vmatpush1.bf16.msra.mxu0 0
      %2622 = vmatprep.subr.bf16.mxu0 0
      %2623 = vmatpush1.bf16.msra.mxu0 0
      %2624 = vmatprep.subr.bf16.mxu0 0
      %2625 = vmatpush1.bf16.msra.mxu0 0
      %2626 = vmatprep.subr.bf16.mxu0 0
      %2627 = vmatpush1.bf16.msra.mxu0 0
      %2628 = vmatprep.subr.bf16.mxu0 0
      %2629 = vmatpush1.bf16.msra.mxu0 0
      %2630 = vmatprep.subr.bf16.mxu0 0
      %2631 = vmatpush1.bf16.msra.mxu0 0
      %2632 = vmatprep.subr.bf16.mxu0 0
      %2633 = vmatpush1.bf16.msra.mxu0 0
      %2634 = vmatprep.mubr.bf16.mxu0 0
      %2635 = vmatmul.mubr.bf16.gmra.mrb[0].mxu0 %v824
      %v2636 = vpop.f32.mrb[0].mxu0
      %v2637 = vadd.f32 %v2473, %v2636
      %v2638 = vpop.f32.mrb[0].mxu0
      %v2639 = vpop.f32.mrb[0].mxu0
      %v2640 = vadd.f32 %v2476, %v2639
      %v2641 = vpop.f32.mrb[0].mxu0
      %2642 = vmatprep.mubr.bf16.mxu0 0
      %2643 = vmatmul.mubr.bf16.gmra.mrb[0].mxu0 %v826
      %v2644 = vpop.f32.mrb[0].mxu0
      %v2645 = vadd.f32 %v2481, %v2644
      %v2646 = vpop.f32.mrb[0].mxu0
      %v2647 = vpop.f32.mrb[0].mxu0
      %v2648 = vadd.f32 %v2484, %v2647
      %v2649 = vpop.f32.mrb[0].mxu0
      %2650 = vmatprep.mubr.bf16.mxu0 0
      %2651 = vmatmul.mubr.bf16.gmra.mrb[0].mxu0 %v828
      %v2652 = vpop.f32.mrb[0].mxu0
      %v2653 = vadd.f32 %v2489, %v2652
      %v2654 = vpop.f32.mrb[0].mxu0
      %v2655 = vpop.f32.mrb[0].mxu0
      %v2656 = vadd.f32 %v2492, %v2655
      %v2657 = vpop.f32.mrb[0].mxu0
      %2658 = vmatprep.mubr.bf16.mxu0 0
      %2659 = vmatmul.mubr.bf16.gmra.mrb[0].mxu0 %v830
      %v2660 = vpop.f32.mrb[0].mxu0
      %v2661 = vadd.f32 %v2497, %v2660
      %v2662 = vpop.f32.mrb[0].mxu0
      %v2663 = vpop.f32.mrb[0].mxu0
      %v2664 = vadd.f32 %v2500, %v2663
      %v2665 = vpop.f32.mrb[0].mxu0
      %2666 = vmatprep.mubr.bf16.mxu0 0
      %2667 = vmatmul.mubr.bf16.gmra.mrb[0].mxu0 %v832
      %v2668 = vpop.f32.mrb[0].mxu0
      %v2669 = vadd.f32 %v2505, %v2668
      %v2670 = vpop.f32.mrb[0].mxu0
      %v2671 = vpop.f32.mrb[0].mxu0
      %v2672 = vadd.f32 %v2508, %v2671
      %v2673 = vpop.f32.mrb[0].mxu0
      %2674 = vmatprep.mubr.bf16.mxu0 0
      %2675 = vmatmul.mubr.bf16.gmra.mrb[0].mxu0 %v834
      %v2676 = vpop.f32.mrb[0].mxu0
      %v2677 = vadd.f32 %v2513, %v2676
      %v2678 = vpop.f32.mrb[0].mxu0
      %v2679 = vpop.f32.mrb[0].mxu0
      %v2680 = vadd.f32 %v2516, %v2679
      %v2681 = vpop.f32.mrb[0].mxu0
      %2682 = vmatprep.mubr.bf16.mxu0 0
      %2683 = vmatmul.mubr.bf16.gmra.mrb[0].mxu0 %v836
      %v2684 = vpop.f32.mrb[0].mxu0
      %v2685 = vadd.f32 %v2521, %v2684
      %v2686 = vpop.f32.mrb[0].mxu0
      %v2687 = vpop.f32.mrb[0].mxu0
      %v2688 = vadd.f32 %v2524, %v2687
      %v2689 = vpop.f32.mrb[0].mxu0
      %2690 = vmatprep.mubr.bf16.mxu0 0
      %2691 = vmatmul.mubr.bf16.gmra.mrb[0].mxu0 %v838
      %v2692 = vpop.f32.mrb[0].mxu0
      %v2693 = vadd.f32 %v2529, %v2692
      %v2694 = vpop.f32.mrb[0].mxu0
      %v2695 = vpop.f32.mrb[0].mxu0
      %v2696 = vadd.f32 %v2532, %v2695
      %v2697 = vpop.f32.mrb[0].mxu0
      %2698 = vmatprep.mubr.bf16.mxu0 0
      %2699 = vmatmul.mubr.bf16.gmra.mrb[0].mxu0 %v840
      %v2700 = vpop.f32.mrb[0].mxu0
      %v2701 = vadd.f32 %v2537, %v2700
      %v2702 = vpop.f32.mrb[0].mxu0
      %v2703 = vpop.f32.mrb[0].mxu0
      %v2704 = vadd.f32 %v2540, %v2703
      %v2705 = vpop.f32.mrb[0].mxu0
      %2706 = vmatprep.mubr.bf16.mxu0 0
      %2707 = vmatmul.mubr.bf16.gmra.mrb[0].mxu0 %v842
      %v2708 = vpop.f32.mrb[0].mxu0
      %v2709 = vadd.f32 %v2545, %v2708
      %v2710 = vpop.f32.mrb[0].mxu0
      %v2711 = vpop.f32.mrb[0].mxu0
      %v2712 = vadd.f32 %v2548, %v2711
      %v2713 = vpop.f32.mrb[0].mxu0
      %2714 = vmatprep.mubr.bf16.mxu0 0
      %2715 = vmatmul.mubr.bf16.gmra.mrb[0].mxu0 %v844
      %v2716 = vpop.f32.mrb[0].mxu0
      %v2717 = vadd.f32 %v2553, %v2716
      %v2718 = vpop.f32.mrb[0].mxu0
      %v2719 = vpop.f32.mrb[0].mxu0
      %v2720 = vadd.f32 %v2556, %v2719
      %v2721 = vpop.f32.mrb[0].mxu0
      %2722 = vmatprep.mubr.bf16.mxu0 0
      %2723 = vmatmul.mubr.bf16.gmra.mrb[0].mxu0 %v846
      %v2724 = vpop.f32.mrb[0].mxu0
      %v2725 = vadd.f32 %v2561, %v2724
      %v2726 = vpop.f32.mrb[0].mxu0
      %v2727 = vpop.f32.mrb[0].mxu0
      %v2728 = vadd.f32 %v2564, %v2727
      %v2729 = vpop.f32.mrb[0].mxu0
      %2730 = vmatprep.mubr.bf16.mxu0 0
      %2731 = vmatmul.mubr.bf16.gmra.mrb[0].mxu0 %v848
      %v2732 = vpop.f32.mrb[0].mxu0
      %v2733 = vadd.f32 %v2569, %v2732
      %v2734 = vpop.f32.mrb[0].mxu0
      %v2735 = vpop.f32.mrb[0].mxu0
      %v2736 = vadd.f32 %v2572, %v2735
      %v2737 = vpop.f32.mrb[0].mxu0
      %2738 = vmatprep.mubr.bf16.mxu0 0
      %2739 = vmatmul.mubr.bf16.gmra.mrb[0].mxu0 %v850
      %v2740 = vpop.f32.mrb[0].mxu0
      %v2741 = vadd.f32 %v2577, %v2740
      %v2742 = vpop.f32.mrb[0].mxu0
      %v2743 = vpop.f32.mrb[0].mxu0
      %v2744 = vadd.f32 %v2580, %v2743
      %v2745 = vpop.f32.mrb[0].mxu0
      %2746 = vmatprep.mubr.bf16.mxu0 0
      %2747 = vmatmul.mubr.bf16.gmra.mrb[0].mxu0 %v852
      %v2748 = vpop.f32.mrb[0].mxu0
      %v2749 = vadd.f32 %v2585, %v2748
      %v2750 = vpop.f32.mrb[0].mxu0
      %v2751 = vpop.f32.mrb[0].mxu0
      %v2752 = vadd.f32 %v2588, %v2751
      %v2753 = vpop.f32.mrb[0].mxu0
      %2754 = vmatprep.mubr.bf16.mxu0 0
      %2755 = vmatmul.mubr.bf16.gmra.mrb[0].mxu0 %v1021
      %v2756 = vpop.f32.mrb[0].mxu0
      %v2757 = vadd.f32 %v2593, %v2756
      %v2758 = vpop.f32.mrb[0].mxu0
      %v2759 = vpop.f32.mrb[0].mxu0
      %v2760 = vadd.f32 %v2596, %v2759
      %v2761 = vpop.f32.mrb[0].mxu0
      %2762 = vdwg.mxu0
      %s2763 = scalar_lea.vmem %s2, 20
      %v2764 = vld [vmem:[%s2763] sm:$0x3]
      %v2766 = vsel %vm608, %v392, 0
      %v2769 = vsel %vm657, %v2764, 0
      %2771 = vmatprep.subr.bf16.mxu0 0
      %2772 = vmatpush1.bf16.msra.mxu0 %v2769
      %2773 = vmatprep.subr.bf16.mxu0 0
      %2774 = vmatpush1.bf16.msra.mxu0 0
      %2775 = vmatprep.subr.bf16.mxu0 0
      %2776 = vmatpush1.bf16.msra.mxu0 0
      %2777 = vmatprep.subr.bf16.mxu0 0
      %2778 = vmatpush1.bf16.msra.mxu0 0
      %2779 = vmatprep.subr.bf16.mxu0 0
      %2780 = vmatpush1.bf16.msra.mxu0 0
      %2781 = vmatprep.subr.bf16.mxu0 0
      %2782 = vmatpush1.bf16.msra.mxu0 0
      %2783 = vmatprep.subr.bf16.mxu0 0
      %2784 = vmatpush1.bf16.msra.mxu0 0
      %2785 = vmatprep.subr.bf16.mxu0 0
      %2786 = vmatpush1.bf16.msra.mxu0 0
      %2787 = vmatprep.subr.bf16.mxu0 0
      %2788 = vmatpush1.bf16.msra.mxu0 0
      %2789 = vmatprep.subr.bf16.mxu0 0
      %2790 = vmatpush1.bf16.msra.mxu0 0
      %2791 = vmatprep.subr.bf16.mxu0 0
      %2792 = vmatpush1.bf16.msra.mxu0 0
      %2793 = vmatprep.subr.bf16.mxu0 0
      %2794 = vmatpush1.bf16.msra.mxu0 0
      %2795 = vmatprep.subr.bf16.mxu0 0
      %2796 = vmatpush1.bf16.msra.mxu0 0
      %2797 = vmatprep.subr.bf16.mxu0 0
      %2798 = vmatpush1.bf16.msra.mxu0 0
      %2799 = vmatprep.subr.bf16.mxu0 0
      %2800 = vmatpush1.bf16.msra.mxu0 0
      %2801 = vmatprep.subr.bf16.mxu0 0
      %2802 = vmatpush1.bf16.msra.mxu0 0
      %2803 = vmatprep.mubr.bf16.mxu0 0
      %2804 = vmatmul.mubr.bf16.gmra.mrb[0].mxu0 %v826
      %v2805 = vpop.f32.mrb[0].mxu0
      %v2806 = vadd.f32 0.0, %v2805
      %v2807 = vpop.f32.mrb[0].mxu0
      %v2808 = vpop.f32.mrb[0].mxu0
      %v2809 = vadd.f32 0.0, %v2808
      %v2810 = vpop.f32.mrb[0].mxu0
      %2811 = vmatprep.mubr.bf16.mxu0 0
      %2812 = vmatmul.mubr.bf16.gmra.mrb[0].mxu0 %v828
      %v2813 = vpop.f32.mrb[0].mxu0
      %v2814 = vadd.f32 0.0, %v2813
      %v2815 = vpop.f32.mrb[0].mxu0
      %v2816 = vpop.f32.mrb[0].mxu0
      %v2817 = vadd.f32 0.0, %v2816
      %v2818 = vpop.f32.mrb[0].mxu0
      %2819 = vmatprep.mubr.bf16.mxu0 0
      %2820 = vmatmul.mubr.bf16.gmra.mrb[0].mxu0 %v830
      %v2821 = vpop.f32.mrb[0].mxu0
      %v2822 = vadd.f32 0.0, %v2821
      %v2823 = vpop.f32.mrb[0].mxu0
      %v2824 = vpop.f32.mrb[0].mxu0
      %v2825 = vadd.f32 0.0, %v2824
      %v2826 = vpop.f32.mrb[0].mxu0
      %2827 = vmatprep.mubr.bf16.mxu0 0
      %2828 = vmatmul.mubr.bf16.gmra.mrb[0].mxu0 %v832
      %v2829 = vpop.f32.mrb[0].mxu0
      %v2830 = vadd.f32 0.0, %v2829
      %v2831 = vpop.f32.mrb[0].mxu0
      %v2832 = vpop.f32.mrb[0].mxu0
      %v2833 = vadd.f32 0.0, %v2832
      %v2834 = vpop.f32.mrb[0].mxu0
      %2835 = vmatprep.mubr.bf16.mxu0 0
      %2836 = vmatmul.mubr.bf16.gmra.mrb[0].mxu0 %v834
      %v2837 = vpop.f32.mrb[0].mxu0
      %v2838 = vadd.f32 0.0, %v2837
      %v2839 = vpop.f32.mrb[0].mxu0
      %v2840 = vpop.f32.mrb[0].mxu0
      %v2841 = vadd.f32 0.0, %v2840
      %v2842 = vpop.f32.mrb[0].mxu0
      %2843 = vmatprep.mubr.bf16.mxu0 0
      %2844 = vmatmul.mubr.bf16.gmra.mrb[0].mxu0 %v836
      %v2845 = vpop.f32.mrb[0].mxu0
      %v2846 = vadd.f32 0.0, %v2845
      %v2847 = vpop.f32.mrb[0].mxu0
      %v2848 = vpop.f32.mrb[0].mxu0
      %v2849 = vadd.f32 0.0, %v2848
      %v2850 = vpop.f32.mrb[0].mxu0
      %2851 = vmatprep.mubr.bf16.mxu0 0
      %2852 = vmatmul.mubr.bf16.gmra.mrb[0].mxu0 %v838
      %v2853 = vpop.f32.mrb[0].mxu0
      %v2854 = vadd.f32 0.0, %v2853
      %v2855 = vpop.f32.mrb[0].mxu0
      %v2856 = vpop.f32.mrb[0].mxu0
      %v2857 = vadd.f32 0.0, %v2856
      %v2858 = vpop.f32.mrb[0].mxu0
      %2859 = vmatprep.mubr.bf16.mxu0 0
      %2860 = vmatmul.mubr.bf16.gmra.mrb[0].mxu0 %v840
      %v2861 = vpop.f32.mrb[0].mxu0
      %v2862 = vadd.f32 0.0, %v2861
      %v2863 = vpop.f32.mrb[0].mxu0
      %v2864 = vpop.f32.mrb[0].mxu0
      %v2865 = vadd.f32 0.0, %v2864
      %v2866 = vpop.f32.mrb[0].mxu0
      %2867 = vmatprep.mubr.bf16.mxu0 0
      %2868 = vmatmul.mubr.bf16.gmra.mrb[0].mxu0 %v842
      %v2869 = vpop.f32.mrb[0].mxu0
      %v2870 = vadd.f32 0.0, %v2869
      %v2871 = vpop.f32.mrb[0].mxu0
      %v2872 = vpop.f32.mrb[0].mxu0
      %v2873 = vadd.f32 0.0, %v2872
      %v2874 = vpop.f32.mrb[0].mxu0
      %2875 = vmatprep.mubr.bf16.mxu0 0
      %2876 = vmatmul.mubr.bf16.gmra.mrb[0].mxu0 %v844
      %v2877 = vpop.f32.mrb[0].mxu0
      %v2878 = vadd.f32 0.0, %v2877
      %v2879 = vpop.f32.mrb[0].mxu0
      %v2880 = vpop.f32.mrb[0].mxu0
      %v2881 = vadd.f32 0.0, %v2880
      %v2882 = vpop.f32.mrb[0].mxu0
      %2883 = vmatprep.mubr.bf16.mxu0 0
      %2884 = vmatmul.mubr.bf16.gmra.mrb[0].mxu0 %v846
      %v2885 = vpop.f32.mrb[0].mxu0
      %v2886 = vadd.f32 0.0, %v2885
      %v2887 = vpop.f32.mrb[0].mxu0
      %v2888 = vpop.f32.mrb[0].mxu0
      %v2889 = vadd.f32 0.0, %v2888
      %v2890 = vpop.f32.mrb[0].mxu0
      %2891 = vmatprep.mubr.bf16.mxu0 0
      %2892 = vmatmul.mubr.bf16.gmra.mrb[0].mxu0 %v848
      %v2893 = vpop.f32.mrb[0].mxu0
      %v2894 = vadd.f32 0.0, %v2893
      %v2895 = vpop.f32.mrb[0].mxu0
      %v2896 = vpop.f32.mrb[0].mxu0
      %v2897 = vadd.f32 0.0, %v2896
      %v2898 = vpop.f32.mrb[0].mxu0
      %2899 = vmatprep.mubr.bf16.mxu0 0
      %2900 = vmatmul.mubr.bf16.gmra.mrb[0].mxu0 %v850
      %v2901 = vpop.f32.mrb[0].mxu0
      %v2902 = vadd.f32 0.0, %v2901
      %v2903 = vpop.f32.mrb[0].mxu0
      %v2904 = vpop.f32.mrb[0].mxu0
      %v2905 = vadd.f32 0.0, %v2904
      %v2906 = vpop.f32.mrb[0].mxu0
      %2907 = vmatprep.mubr.bf16.mxu0 0
      %2908 = vmatmul.mubr.bf16.gmra.mrb[0].mxu0 %v852
      %v2909 = vpop.f32.mrb[0].mxu0
      %v2910 = vadd.f32 0.0, %v2909
      %v2911 = vpop.f32.mrb[0].mxu0
      %v2912 = vpop.f32.mrb[0].mxu0
      %v2913 = vadd.f32 0.0, %v2912
      %v2914 = vpop.f32.mrb[0].mxu0
      %2915 = vmatprep.mubr.bf16.mxu0 0
      %2916 = vmatmul.mubr.bf16.gmra.mrb[0].mxu0 %v1021
      %v2917 = vpop.f32.mrb[0].mxu0
      %v2918 = vadd.f32 0.0, %v2917
      %v2919 = vpop.f32.mrb[0].mxu0
      %v2920 = vpop.f32.mrb[0].mxu0
      %v2921 = vadd.f32 0.0, %v2920
      %v2922 = vpop.f32.mrb[0].mxu0
      %2923 = vmatprep.mubr.bf16.mxu0 0
      %2924 = vmatmul.mubr.bf16.gmra.mrb[0].mxu0 %v2766
      %v2925 = vpop.f32.mrb[0].mxu0
      %v2926 = vadd.f32 0.0, %v2925
      %v2927 = vpop.f32.mrb[0].mxu0
      %v2928 = vpop.f32.mrb[0].mxu0
      %v2929 = vadd.f32 0.0, %v2928
      %v2930 = vpop.f32.mrb[0].mxu0
      %2931 = vdwg.mxu0
      %v2932 = vadd.f32 %v2637, %v2806
      %v2933 = vadd.f32 %v2640, %v2809
      %v2934 = vadd.f32 %v2645, %v2814
      %v2935 = vadd.f32 %v2648, %v2817
      %v2936 = vadd.f32 %v2653, %v2822
      %v2937 = vadd.f32 %v2656, %v2825
      %v2938 = vadd.f32 %v2661, %v2830
      %v2939 = vadd.f32 %v2664, %v2833
      %v2940 = vadd.f32 %v2669, %v2838
      %v2941 = vadd.f32 %v2672, %v2841
      %v2942 = vadd.f32 %v2677, %v2846
      %v2943 = vadd.f32 %v2680, %v2849
      %v2944 = vadd.f32 %v2685, %v2854
      %v2945 = vadd.f32 %v2688, %v2857
      %v2946 = vadd.f32 %v2693, %v2862
      %v2947 = vadd.f32 %v2696, %v2865
      %v2948 = vadd.f32 %v2701, %v2870
      %v2949 = vadd.f32 %v2704, %v2873
      %v2950 = vadd.f32 %v2709, %v2878
      %v2951 = vadd.f32 %v2712, %v2881
      %v2952 = vadd.f32 %v2717, %v2886
      %v2953 = vadd.f32 %v2720, %v2889
      %v2954 = vadd.f32 %v2725, %v2894
      %v2955 = vadd.f32 %v2728, %v2897
      %v2956 = vadd.f32 %v2733, %v2902
      %v2957 = vadd.f32 %v2736, %v2905
      %v2958 = vadd.f32 %v2741, %v2910
      %v2959 = vadd.f32 %v2744, %v2913
      %v2960 = vadd.f32 %v2749, %v2918
      %v2961 = vadd.f32 %v2752, %v2921
      %v2962 = vadd.f32 %v2757, %v2926
      %v2963 = vadd.f32 %v2760, %v2929
      %s2964 = scalar_lea.vmem %s2, 22
      %v2965 = vld [vmem:[%s2964] sm:$0x3]
      %v2966 = vshrl.u32 %v392, 16
      %v2968 = vshll.u32 %v392, 16
      %v2970 = vrot.slane %v2968, 1
      %v2971 = vor.u32 %v2966, %v2970
      %v2973 = vshll.u32 %v410, 16
      %v2975 = vrot.slane %v2973, 1
      %v2976 = vsel %vm415, %v2971, %v2975
      %v2978 = vsel %vm608, %v2976, 0
      %v2981 = vsel %vm657, %v2965, 0
      %2983 = vmatprep.subr.bf16.mxu0 0
      %2984 = vmatpush1.bf16.msra.mxu0 %v2981
      %2985 = vmatprep.subr.bf16.mxu0 0
      %2986 = vmatpush1.bf16.msra.mxu0 0
      %2987 = vmatprep.subr.bf16.mxu0 0
      %2988 = vmatpush1.bf16.msra.mxu0 0
      %2989 = vmatprep.subr.bf16.mxu0 0
      %2990 = vmatpush1.bf16.msra.mxu0 0
      %2991 = vmatprep.subr.bf16.mxu0 0
      %2992 = vmatpush1.bf16.msra.mxu0 0
      %2993 = vmatprep.subr.bf16.mxu0 0
      %2994 = vmatpush1.bf16.msra.mxu0 0
      %2995 = vmatprep.subr.bf16.mxu0 0
      %2996 = vmatpush1.bf16.msra.mxu0 0
      %2997 = vmatprep.subr.bf16.mxu0 0
      %2998 = vmatpush1.bf16.msra.mxu0 0
      %2999 = vmatprep.subr.bf16.mxu0 0
      %3000 = vmatpush1.bf16.msra.mxu0 0
      %3001 = vmatprep.subr.bf16.mxu0 0
      %3002 = vmatpush1.bf16.msra.mxu0 0
      %3003 = vmatprep.subr.bf16.mxu0 0
      %3004 = vmatpush1.bf16.msra.mxu0 0
      %3005 = vmatprep.subr.bf16.mxu0 0
      %3006 = vmatpush1.bf16.msra.mxu0 0
      %3007 = vmatprep.subr.bf16.mxu0 0
      %3008 = vmatpush1.bf16.msra.mxu0 0
      %3009 = vmatprep.subr.bf16.mxu0 0
      %3010 = vmatpush1.bf16.msra.mxu0 0
      %3011 = vmatprep.subr.bf16.mxu0 0
      %3012 = vmatpush1.bf16.msra.mxu0 0
      %3013 = vmatprep.subr.bf16.mxu0 0
      %3014 = vmatpush1.bf16.msra.mxu0 0
      %3015 = vmatprep.mubr.bf16.mxu0 0
      %3016 = vmatmul.mubr.bf16.gmra.mrb[0].mxu0 %v616
      %v3017 = vpop.f32.mrb[0].mxu0
      %v3018 = vadd.f32 0.0, %v3017
      %v3019 = vpop.f32.mrb[0].mxu0
      %v3020 = vpop.f32.mrb[0].mxu0
      %v3021 = vadd.f32 0.0, %v3020
      %v3022 = vpop.f32.mrb[0].mxu0
      %3023 = vmatprep.mubr.bf16.mxu0 0
      %3024 = vmatmul.mubr.bf16.gmra.mrb[0].mxu0 %v619
      %v3025 = vpop.f32.mrb[0].mxu0
      %v3026 = vadd.f32 0.0, %v3025
      %v3027 = vpop.f32.mrb[0].mxu0
      %v3028 = vpop.f32.mrb[0].mxu0
      %v3029 = vadd.f32 0.0, %v3028
      %v3030 = vpop.f32.mrb[0].mxu0
      %3031 = vmatprep.mubr.bf16.mxu0 0
      %3032 = vmatmul.mubr.bf16.gmra.mrb[0].mxu0 %v622
      %v3033 = vpop.f32.mrb[0].mxu0
      %v3034 = vadd.f32 0.0, %v3033
      %v3035 = vpop.f32.mrb[0].mxu0
      %v3036 = vpop.f32.mrb[0].mxu0
      %v3037 = vadd.f32 0.0, %v3036
      %v3038 = vpop.f32.mrb[0].mxu0
      %3039 = vmatprep.mubr.bf16.mxu0 0
      %3040 = vmatmul.mubr.bf16.gmra.mrb[0].mxu0 %v625
      %v3041 = vpop.f32.mrb[0].mxu0
      %v3042 = vadd.f32 0.0, %v3041
      %v3043 = vpop.f32.mrb[0].mxu0
      %v3044 = vpop.f32.mrb[0].mxu0
      %v3045 = vadd.f32 0.0, %v3044
      %v3046 = vpop.f32.mrb[0].mxu0
      %3047 = vmatprep.mubr.bf16.mxu0 0
      %3048 = vmatmul.mubr.bf16.gmra.mrb[0].mxu0 %v628
      %v3049 = vpop.f32.mrb[0].mxu0
      %v3050 = vadd.f32 0.0, %v3049
      %v3051 = vpop.f32.mrb[0].mxu0
      %v3052 = vpop.f32.mrb[0].mxu0
      %v3053 = vadd.f32 0.0, %v3052
      %v3054 = vpop.f32.mrb[0].mxu0
      %3055 = vmatprep.mubr.bf16.mxu0 0
      %3056 = vmatmul.mubr.bf16.gmra.mrb[0].mxu0 %v631
      %v3057 = vpop.f32.mrb[0].mxu0
      %v3058 = vadd.f32 0.0, %v3057
      %v3059 = vpop.f32.mrb[0].mxu0
      %v3060 = vpop.f32.mrb[0].mxu0
      %v3061 = vadd.f32 0.0, %v3060
      %v3062 = vpop.f32.mrb[0].mxu0
      %3063 = vmatprep.mubr.bf16.mxu0 0
      %3064 = vmatmul.mubr.bf16.gmra.mrb[0].mxu0 %v634
      %v3065 = vpop.f32.mrb[0].mxu0
      %v3066 = vadd.f32 0.0, %v3065
      %v3067 = vpop.f32.mrb[0].mxu0
      %v3068 = vpop.f32.mrb[0].mxu0
      %v3069 = vadd.f32 0.0, %v3068
      %v3070 = vpop.f32.mrb[0].mxu0
      %3071 = vmatprep.mubr.bf16.mxu0 0
      %3072 = vmatmul.mubr.bf16.gmra.mrb[0].mxu0 %v637
      %v3073 = vpop.f32.mrb[0].mxu0
      %v3074 = vadd.f32 0.0, %v3073
      %v3075 = vpop.f32.mrb[0].mxu0
      %v3076 = vpop.f32.mrb[0].mxu0
      %v3077 = vadd.f32 0.0, %v3076
      %v3078 = vpop.f32.mrb[0].mxu0
      %3079 = vmatprep.mubr.bf16.mxu0 0
      %3080 = vmatmul.mubr.bf16.gmra.mrb[0].mxu0 %v640
      %v3081 = vpop.f32.mrb[0].mxu0
      %v3082 = vadd.f32 0.0, %v3081
      %v3083 = vpop.f32.mrb[0].mxu0
      %v3084 = vpop.f32.mrb[0].mxu0
      %v3085 = vadd.f32 0.0, %v3084
      %v3086 = vpop.f32.mrb[0].mxu0
      %3087 = vmatprep.mubr.bf16.mxu0 0
      %3088 = vmatmul.mubr.bf16.gmra.mrb[0].mxu0 %v643
      %v3089 = vpop.f32.mrb[0].mxu0
      %v3090 = vadd.f32 0.0, %v3089
      %v3091 = vpop.f32.mrb[0].mxu0
      %v3092 = vpop.f32.mrb[0].mxu0
      %v3093 = vadd.f32 0.0, %v3092
      %v3094 = vpop.f32.mrb[0].mxu0
      %3095 = vmatprep.mubr.bf16.mxu0 0
      %3096 = vmatmul.mubr.bf16.gmra.mrb[0].mxu0 %v646
      %v3097 = vpop.f32.mrb[0].mxu0
      %v3098 = vadd.f32 0.0, %v3097
      %v3099 = vpop.f32.mrb[0].mxu0
      %v3100 = vpop.f32.mrb[0].mxu0
      %v3101 = vadd.f32 0.0, %v3100
      %v3102 = vpop.f32.mrb[0].mxu0
      %3103 = vmatprep.mubr.bf16.mxu0 0
      %3104 = vmatmul.mubr.bf16.gmra.mrb[0].mxu0 %v649
      %v3105 = vpop.f32.mrb[0].mxu0
      %v3106 = vadd.f32 0.0, %v3105
      %v3107 = vpop.f32.mrb[0].mxu0
      %v3108 = vpop.f32.mrb[0].mxu0
      %v3109 = vadd.f32 0.0, %v3108
      %v3110 = vpop.f32.mrb[0].mxu0
      %3111 = vmatprep.mubr.bf16.mxu0 0
      %3112 = vmatmul.mubr.bf16.gmra.mrb[0].mxu0 %v652
      %v3113 = vpop.f32.mrb[0].mxu0
      %v3114 = vadd.f32 0.0, %v3113
      %v3115 = vpop.f32.mrb[0].mxu0
      %v3116 = vpop.f32.mrb[0].mxu0
      %v3117 = vadd.f32 0.0, %v3116
      %v3118 = vpop.f32.mrb[0].mxu0
      %3119 = vmatprep.mubr.bf16.mxu0 0
      %3120 = vmatmul.mubr.bf16.gmra.mrb[0].mxu0 %v655
      %v3121 = vpop.f32.mrb[0].mxu0
      %v3122 = vadd.f32 0.0, %v3121
      %v3123 = vpop.f32.mrb[0].mxu0
      %v3124 = vpop.f32.mrb[0].mxu0
      %v3125 = vadd.f32 0.0, %v3124
      %v3126 = vpop.f32.mrb[0].mxu0
      %3127 = vmatprep.mubr.bf16.mxu0 0
      %3128 = vmatmul.mubr.bf16.gmra.mrb[0].mxu0 %v1233
      %v3129 = vpop.f32.mrb[0].mxu0
      %v3130 = vadd.f32 0.0, %v3129
      %v3131 = vpop.f32.mrb[0].mxu0
      %v3132 = vpop.f32.mrb[0].mxu0
      %v3133 = vadd.f32 0.0, %v3132
      %v3134 = vpop.f32.mrb[0].mxu0
      %3135 = vmatprep.mubr.bf16.mxu0 0
      %3136 = vmatmul.mubr.bf16.gmra.mrb[0].mxu0 %v2978
      %v3137 = vpop.f32.mrb[0].mxu0
      %v3138 = vadd.f32 0.0, %v3137
      %v3139 = vpop.f32.mrb[0].mxu0
      %v3140 = vpop.f32.mrb[0].mxu0
      %v3141 = vadd.f32 0.0, %v3140
      %v3142 = vpop.f32.mrb[0].mxu0
      %3143 = vdwg.mxu0
      %v3144 = vadd.f32 %v2932, %v3018
      %v3145 = vadd.f32 %v2933, %v3021
      %v3146 = vadd.f32 %v2934, %v3026
      %v3147 = vadd.f32 %v2935, %v3029
      %v3148 = vadd.f32 %v2936, %v3034
      %v3149 = vadd.f32 %v2937, %v3037
      %v3150 = vadd.f32 %v2938, %v3042
      %v3151 = vadd.f32 %v2939, %v3045
      %v3152 = vadd.f32 %v2940, %v3050
      %v3153 = vadd.f32 %v2941, %v3053
      %v3154 = vadd.f32 %v2942, %v3058
      %v3155 = vadd.f32 %v2943, %v3061
      %v3156 = vadd.f32 %v2944, %v3066
      %v3157 = vadd.f32 %v2945, %v3069
      %v3158 = vadd.f32 %v2946, %v3074
      %v3159 = vadd.f32 %v2947, %v3077
      %v3160 = vadd.f32 %v2948, %v3082
      %v3161 = vadd.f32 %v2949, %v3085
      %v3162 = vadd.f32 %v2950, %v3090
      %v3163 = vadd.f32 %v2951, %v3093
      %v3164 = vadd.f32 %v2952, %v3098
      %v3165 = vadd.f32 %v2953, %v3101
      %v3166 = vadd.f32 %v2954, %v3106
      %v3167 = vadd.f32 %v2955, %v3109
      %v3168 = vadd.f32 %v2956, %v3114
      %v3169 = vadd.f32 %v2957, %v3117
      %v3170 = vadd.f32 %v2958, %v3122
      %v3171 = vadd.f32 %v2959, %v3125
      %v3172 = vadd.f32 %v2960, %v3130
      %v3173 = vadd.f32 %v2961, %v3133
      %v3174 = vadd.f32 %v2962, %v3138
      %v3175 = vadd.f32 %v2963, %v3141
      %v3176 = vadd.f32 %v3144, %v1435
      %v3177 = vadd.f32 %v3145, %v1435
      %v3178 = vadd.f32 %v3146, %v1435
      %v3179 = vadd.f32 %v3147, %v1435
      %v3180 = vadd.f32 %v3148, %v1435
      %v3181 = vadd.f32 %v3149, %v1435
      %v3182 = vadd.f32 %v3150, %v1435
      %v3183 = vadd.f32 %v3151, %v1435
      %v3184 = vadd.f32 %v3152, %v1435
      %v3185 = vadd.f32 %v3153, %v1435
      %v3186 = vadd.f32 %v3154, %v1435
      %v3187 = vadd.f32 %v3155, %v1435
      %v3188 = vadd.f32 %v3156, %v1435
      %v3189 = vadd.f32 %v3157, %v1435
      %v3190 = vadd.f32 %v3158, %v1435
      %v3191 = vadd.f32 %v3159, %v1435
      %v3192 = vadd.f32 %v3160, %v1435
      %v3193 = vadd.f32 %v3161, %v1435
      %v3194 = vadd.f32 %v3162, %v1435
      %v3195 = vadd.f32 %v3163, %v1435
      %v3196 = vadd.f32 %v3164, %v1435
      %v3197 = vadd.f32 %v3165, %v1435
      %v3198 = vadd.f32 %v3166, %v1435
      %v3199 = vadd.f32 %v3167, %v1435
      %v3200 = vadd.f32 %v3168, %v1435
      %v3201 = vadd.f32 %v3169, %v1435
      %v3202 = vadd.f32 %v3170, %v1435
      %v3203 = vadd.f32 %v3171, %v1435
      %v3204 = vadd.f32 %v3172, %v1435
      %v3205 = vadd.f32 %v3173, %v1435
      %v3206 = vadd.f32 %v3174, %v1435
      %v3207 = vadd.f32 %v3175, %v1435
      %s3208 = scalar_lea.vmem %s318, 512
      %3209 = vst.msk [vmem:[%s3208] sm:$0xff] %vm608, %v3176
      %3210 = vst.msk [vmem:[%s3208 + $0x8] sm:$0xff] %vm608, %v3177
      %3211 = vst.msk [vmem:[%s3208 + $0x10] sm:$0xff] %vm608, %v3178
      %3212 = vst.msk [vmem:[%s3208 + $0x18] sm:$0xff] %vm608, %v3179
      %3213 = vst.msk [vmem:[%s3208 + $0x20] sm:$0xff] %vm608, %v3180
      %3214 = vst.msk [vmem:[%s3208 + $0x28] sm:$0xff] %vm608, %v3181
      %3215 = vst.msk [vmem:[%s3208 + $0x30] sm:$0xff] %vm608, %v3182
      %3216 = vst.msk [vmem:[%s3208 + $0x38] sm:$0xff] %vm608, %v3183
      %3217 = vst.msk [vmem:[%s3208 + $0x40] sm:$0xff] %vm608, %v3184
      %3218 = vst.msk [vmem:[%s3208 + $0x48] sm:$0xff] %vm608, %v3185
      %3219 = vst.msk [vmem:[%s3208 + $0x50] sm:$0xff] %vm608, %v3186
      %3220 = vst.msk [vmem:[%s3208 + $0x58] sm:$0xff] %vm608, %v3187
      %3221 = vst.msk [vmem:[%s3208 + $0x60] sm:$0xff] %vm608, %v3188
      %3222 = vst.msk [vmem:[%s3208 + $0x68] sm:$0xff] %vm608, %v3189
      %3223 = vst.msk [vmem:[%s3208 + $0x70] sm:$0xff] %vm608, %v3190
      %3224 = vst.msk [vmem:[%s3208 + $0x78] sm:$0xff] %vm608, %v3191
      %3225 = vst.msk [vmem:[%s3208 + $0x80] sm:$0xff] %vm608, %v3192
      %3226 = vst.msk [vmem:[%s3208 + $0x88] sm:$0xff] %vm608, %v3193
      %3227 = vst.msk [vmem:[%s3208 + $0x90] sm:$0xff] %vm608, %v3194
      %3228 = vst.msk [vmem:[%s3208 + $0x98] sm:$0xff] %vm608, %v3195
      %3229 = vst.msk [vmem:[%s3208 + $0xa0] sm:$0xff] %vm608, %v3196
      %3230 = vst.msk [vmem:[%s3208 + $0xa8] sm:$0xff] %vm608, %v3197
      %3231 = vst.msk [vmem:[%s3208 + $0xb0] sm:$0xff] %vm608, %v3198
      %3232 = vst.msk [vmem:[%s3208 + $0xb8] sm:$0xff] %vm608, %v3199
      %3233 = vst.msk [vmem:[%s3208 + $0xc0] sm:$0xff] %vm608, %v3200
      %3234 = vst.msk [vmem:[%s3208 + $0xc8] sm:$0xff] %vm608, %v3201
      %3235 = vst.msk [vmem:[%s3208 + $0xd0] sm:$0xff] %vm608, %v3202
      %3236 = vst.msk [vmem:[%s3208 + $0xd8] sm:$0xff] %vm608, %v3203
      %3237 = vst.msk [vmem:[%s3208 + $0xe0] sm:$0xff] %vm608, %v3204
      %3238 = vst.msk [vmem:[%s3208 + $0xe8] sm:$0xff] %vm608, %v3205
      %3239 = vst.msk [vmem:[%s3208 + $0xf0] sm:$0xff] %vm608, %v3206
      %3240 = vst.msk [vmem:[%s3208 + $0xf8] sm:$0xff] %vm608, %v3207
      %s3241 = scalar_lea.vmem %s2, 24
      %v3242 = vld [vmem:[%s3241] sm:$0x3]
      %s3243 = scalar_lea.vmem %s2, 26
      %v3244 = vld [vmem:[%s3243] sm:$0x3]
      %v3246 = vsel %vm657, %v3244, 0
      %3248 = vmatprep.subr.bf16.mxu0 0
      %3249 = vmatpush1.bf16.msra.mxu0 %v3246
      %3250 = vmatprep.subr.bf16.mxu0 0
      %3251 = vmatpush1.bf16.msra.mxu0 0
      %3252 = vmatprep.subr.bf16.mxu0 0
      %3253 = vmatpush1.bf16.msra.mxu0 0
      %3254 = vmatprep.subr.bf16.mxu0 0
      %3255 = vmatpush1.bf16.msra.mxu0 0
      %3256 = vmatprep.subr.bf16.mxu0 0
      %3257 = vmatpush1.bf16.msra.mxu0 0
      %3258 = vmatprep.subr.bf16.mxu0 0
      %3259 = vmatpush1.bf16.msra.mxu0 0
      %3260 = vmatprep.subr.bf16.mxu0 0
      %3261 = vmatpush1.bf16.msra.mxu0 0
      %3262 = vmatprep.subr.bf16.mxu0 0
      %3263 = vmatpush1.bf16.msra.mxu0 0
      %3264 = vmatprep.subr.bf16.mxu0 0
      %3265 = vmatpush1.bf16.msra.mxu0 0
      %3266 = vmatprep.subr.bf16.mxu0 0
      %3267 = vmatpush1.bf16.msra.mxu0 0
      %3268 = vmatprep.subr.bf16.mxu0 0
      %3269 = vmatpush1.bf16.msra.mxu0 0
      %3270 = vmatprep.subr.bf16.mxu0 0
      %3271 = vmatpush1.bf16.msra.mxu0 0
      %3272 = vmatprep.subr.bf16.mxu0 0
      %3273 = vmatpush1.bf16.msra.mxu0 0
      %3274 = vmatprep.subr.bf16.mxu0 0
      %3275 = vmatpush1.bf16.msra.mxu0 0
      %3276 = vmatprep.subr.bf16.mxu0 0
      %3277 = vmatpush1.bf16.msra.mxu0 0
      %3278 = vmatprep.subr.bf16.mxu0 0
      %3279 = vmatpush1.bf16.msra.mxu0 0
      %3280 = vmatprep.mubr.bf16.mxu0 0
      %3281 = vmatmul.mubr.bf16.gmra.mrb[0].mxu0 %v1590
      %v3282 = vpop.f32.mrb[0].mxu0
      %v3283 = vadd.f32 0.0, %v3282
      %v3284 = vpop.f32.mrb[0].mxu0
      %v3285 = vpop.f32.mrb[0].mxu0
      %v3286 = vadd.f32 0.0, %v3285
      %v3287 = vpop.f32.mrb[0].mxu0
      %3288 = vmatprep.mubr.bf16.mxu0 0
      %3289 = vmatmul.mubr.bf16.gmra.mrb[0].mxu0 %v1593
      %v3290 = vpop.f32.mrb[0].mxu0
      %v3291 = vadd.f32 0.0, %v3290
      %v3292 = vpop.f32.mrb[0].mxu0
      %v3293 = vpop.f32.mrb[0].mxu0
      %v3294 = vadd.f32 0.0, %v3293
      %v3295 = vpop.f32.mrb[0].mxu0
      %3296 = vmatprep.mubr.bf16.mxu0 0
      %3297 = vmatmul.mubr.bf16.gmra.mrb[0].mxu0 %v1596
      %v3298 = vpop.f32.mrb[0].mxu0
      %v3299 = vadd.f32 0.0, %v3298
      %v3300 = vpop.f32.mrb[0].mxu0
      %v3301 = vpop.f32.mrb[0].mxu0
      %v3302 = vadd.f32 0.0, %v3301
      %v3303 = vpop.f32.mrb[0].mxu0
      %3304 = vmatprep.mubr.bf16.mxu0 0
      %3305 = vmatmul.mubr.bf16.gmra.mrb[0].mxu0 %v1599
      %v3306 = vpop.f32.mrb[0].mxu0
      %v3307 = vadd.f32 0.0, %v3306
      %v3308 = vpop.f32.mrb[0].mxu0
      %v3309 = vpop.f32.mrb[0].mxu0
      %v3310 = vadd.f32 0.0, %v3309
      %v3311 = vpop.f32.mrb[0].mxu0
      %3312 = vmatprep.mubr.bf16.mxu0 0
      %3313 = vmatmul.mubr.bf16.gmra.mrb[0].mxu0 %v1602
      %v3314 = vpop.f32.mrb[0].mxu0
      %v3315 = vadd.f32 0.0, %v3314
      %v3316 = vpop.f32.mrb[0].mxu0
      %v3317 = vpop.f32.mrb[0].mxu0
      %v3318 = vadd.f32 0.0, %v3317
      %v3319 = vpop.f32.mrb[0].mxu0
      %3320 = vmatprep.mubr.bf16.mxu0 0
      %3321 = vmatmul.mubr.bf16.gmra.mrb[0].mxu0 %v1605
      %v3322 = vpop.f32.mrb[0].mxu0
      %v3323 = vadd.f32 0.0, %v3322
      %v3324 = vpop.f32.mrb[0].mxu0
      %v3325 = vpop.f32.mrb[0].mxu0
      %v3326 = vadd.f32 0.0, %v3325
      %v3327 = vpop.f32.mrb[0].mxu0
      %3328 = vmatprep.mubr.bf16.mxu0 0
      %3329 = vmatmul.mubr.bf16.gmra.mrb[0].mxu0 %v1608
      %v3330 = vpop.f32.mrb[0].mxu0
      %v3331 = vadd.f32 0.0, %v3330
      %v3332 = vpop.f32.mrb[0].mxu0
      %v3333 = vpop.f32.mrb[0].mxu0
      %v3334 = vadd.f32 0.0, %v3333
      %v3335 = vpop.f32.mrb[0].mxu0
      %3336 = vmatprep.mubr.bf16.mxu0 0
      %3337 = vmatmul.mubr.bf16.gmra.mrb[0].mxu0 %v1611
      %v3338 = vpop.f32.mrb[0].mxu0
      %v3339 = vadd.f32 0.0, %v3338
      %v3340 = vpop.f32.mrb[0].mxu0
      %v3341 = vpop.f32.mrb[0].mxu0
      %v3342 = vadd.f32 0.0, %v3341
      %v3343 = vpop.f32.mrb[0].mxu0
      %3344 = vmatprep.mubr.bf16.mxu0 0
      %3345 = vmatmul.mubr.bf16.gmra.mrb[0].mxu0 %v1614
      %v3346 = vpop.f32.mrb[0].mxu0
      %v3347 = vadd.f32 0.0, %v3346
      %v3348 = vpop.f32.mrb[0].mxu0
      %v3349 = vpop.f32.mrb[0].mxu0
      %v3350 = vadd.f32 0.0, %v3349
      %v3351 = vpop.f32.mrb[0].mxu0
      %3352 = vmatprep.mubr.bf16.mxu0 0
      %3353 = vmatmul.mubr.bf16.gmra.mrb[0].mxu0 %v1617
      %v3354 = vpop.f32.mrb[0].mxu0
      %v3355 = vadd.f32 0.0, %v3354
      %v3356 = vpop.f32.mrb[0].mxu0
      %v3357 = vpop.f32.mrb[0].mxu0
      %v3358 = vadd.f32 0.0, %v3357
      %v3359 = vpop.f32.mrb[0].mxu0
      %3360 = vmatprep.mubr.bf16.mxu0 0
      %3361 = vmatmul.mubr.bf16.gmra.mrb[0].mxu0 %v1620
      %v3362 = vpop.f32.mrb[0].mxu0
      %v3363 = vadd.f32 0.0, %v3362
      %v3364 = vpop.f32.mrb[0].mxu0
      %v3365 = vpop.f32.mrb[0].mxu0
      %v3366 = vadd.f32 0.0, %v3365
      %v3367 = vpop.f32.mrb[0].mxu0
      %3368 = vmatprep.mubr.bf16.mxu0 0
      %3369 = vmatmul.mubr.bf16.gmra.mrb[0].mxu0 %v1623
      %v3370 = vpop.f32.mrb[0].mxu0
      %v3371 = vadd.f32 0.0, %v3370
      %v3372 = vpop.f32.mrb[0].mxu0
      %v3373 = vpop.f32.mrb[0].mxu0
      %v3374 = vadd.f32 0.0, %v3373
      %v3375 = vpop.f32.mrb[0].mxu0
      %3376 = vmatprep.mubr.bf16.mxu0 0
      %3377 = vmatmul.mubr.bf16.gmra.mrb[0].mxu0 %v1626
      %v3378 = vpop.f32.mrb[0].mxu0
      %v3379 = vadd.f32 0.0, %v3378
      %v3380 = vpop.f32.mrb[0].mxu0
      %v3381 = vpop.f32.mrb[0].mxu0
      %v3382 = vadd.f32 0.0, %v3381
      %v3383 = vpop.f32.mrb[0].mxu0
      %3384 = vmatprep.mubr.bf16.mxu0 0
      %3385 = vmatmul.mubr.bf16.gmra.mrb[0].mxu0 %v1629
      %v3386 = vpop.f32.mrb[0].mxu0
      %v3387 = vadd.f32 0.0, %v3386
      %v3388 = vpop.f32.mrb[0].mxu0
      %v3389 = vpop.f32.mrb[0].mxu0
      %v3390 = vadd.f32 0.0, %v3389
      %v3391 = vpop.f32.mrb[0].mxu0
      %3392 = vmatprep.mubr.bf16.mxu0 0
      %3393 = vmatmul.mubr.bf16.gmra.mrb[0].mxu0 %v1632
      %v3394 = vpop.f32.mrb[0].mxu0
      %v3395 = vadd.f32 0.0, %v3394
      %v3396 = vpop.f32.mrb[0].mxu0
      %v3397 = vpop.f32.mrb[0].mxu0
      %v3398 = vadd.f32 0.0, %v3397
      %v3399 = vpop.f32.mrb[0].mxu0
      %3400 = vmatprep.mubr.bf16.mxu0 0
      %3401 = vmatmul.mubr.bf16.gmra.mrb[0].mxu0 %v2168
      %v3402 = vpop.f32.mrb[0].mxu0
      %v3403 = vadd.f32 0.0, %v3402
      %v3404 = vpop.f32.mrb[0].mxu0
      %v3405 = vpop.f32.mrb[0].mxu0
      %v3406 = vadd.f32 0.0, %v3405
      %v3407 = vpop.f32.mrb[0].mxu0
      %3408 = vdwg.mxu0
      %v3410 = vsel %vm657, %v3242, 0
      %3412 = vmatprep.subr.bf16.mxu0 0
      %3413 = vmatpush1.bf16.msra.mxu0 %v3410
      %3414 = vmatprep.subr.bf16.mxu0 0
      %3415 = vmatpush1.bf16.msra.mxu0 0
      %3416 = vmatprep.subr.bf16.mxu0 0
      %3417 = vmatpush1.bf16.msra.mxu0 0
      %3418 = vmatprep.subr.bf16.mxu0 0
      %3419 = vmatpush1.bf16.msra.mxu0 0
      %3420 = vmatprep.subr.bf16.mxu0 0
      %3421 = vmatpush1.bf16.msra.mxu0 0
      %3422 = vmatprep.subr.bf16.mxu0 0
      %3423 = vmatpush1.bf16.msra.mxu0 0
      %3424 = vmatprep.subr.bf16.mxu0 0
      %3425 = vmatpush1.bf16.msra.mxu0 0
      %3426 = vmatprep.subr.bf16.mxu0 0
      %3427 = vmatpush1.bf16.msra.mxu0 0
      %3428 = vmatprep.subr.bf16.mxu0 0
      %3429 = vmatpush1.bf16.msra.mxu0 0
      %3430 = vmatprep.subr.bf16.mxu0 0
      %3431 = vmatpush1.bf16.msra.mxu0 0
      %3432 = vmatprep.subr.bf16.mxu0 0
      %3433 = vmatpush1.bf16.msra.mxu0 0
      %3434 = vmatprep.subr.bf16.mxu0 0
      %3435 = vmatpush1.bf16.msra.mxu0 0
      %3436 = vmatprep.subr.bf16.mxu0 0
      %3437 = vmatpush1.bf16.msra.mxu0 0
      %3438 = vmatprep.subr.bf16.mxu0 0
      %3439 = vmatpush1.bf16.msra.mxu0 0
      %3440 = vmatprep.subr.bf16.mxu0 0
      %3441 = vmatpush1.bf16.msra.mxu0 0
      %3442 = vmatprep.subr.bf16.mxu0 0
      %3443 = vmatpush1.bf16.msra.mxu0 0
      %3444 = vmatprep.mubr.bf16.mxu0 0
      %3445 = vmatmul.mubr.bf16.gmra.mrb[0].mxu0 %v613
      %v3446 = vpop.f32.mrb[0].mxu0
      %v3447 = vadd.f32 %v3283, %v3446
      %v3448 = vpop.f32.mrb[0].mxu0
      %v3449 = vpop.f32.mrb[0].mxu0
      %v3450 = vadd.f32 %v3286, %v3449
      %v3451 = vpop.f32.mrb[0].mxu0
      %3452 = vmatprep.mubr.bf16.mxu0 0
      %3453 = vmatmul.mubr.bf16.gmra.mrb[0].mxu0 %v616
      %v3454 = vpop.f32.mrb[0].mxu0
      %v3455 = vadd.f32 %v3291, %v3454
      %v3456 = vpop.f32.mrb[0].mxu0
      %v3457 = vpop.f32.mrb[0].mxu0
      %v3458 = vadd.f32 %v3294, %v3457
      %v3459 = vpop.f32.mrb[0].mxu0
      %3460 = vmatprep.mubr.bf16.mxu0 0
      %3461 = vmatmul.mubr.bf16.gmra.mrb[0].mxu0 %v619
      %v3462 = vpop.f32.mrb[0].mxu0
      %v3463 = vadd.f32 %v3299, %v3462
      %v3464 = vpop.f32.mrb[0].mxu0
      %v3465 = vpop.f32.mrb[0].mxu0
      %v3466 = vadd.f32 %v3302, %v3465
      %v3467 = vpop.f32.mrb[0].mxu0
      %3468 = vmatprep.mubr.bf16.mxu0 0
      %3469 = vmatmul.mubr.bf16.gmra.mrb[0].mxu0 %v622
      %v3470 = vpop.f32.mrb[0].mxu0
      %v3471 = vadd.f32 %v3307, %v3470
      %v3472 = vpop.f32.mrb[0].mxu0
      %v3473 = vpop.f32.mrb[0].mxu0
      %v3474 = vadd.f32 %v3310, %v3473
      %v3475 = vpop.f32.mrb[0].mxu0
      %3476 = vmatprep.mubr.bf16.mxu0 0
      %3477 = vmatmul.mubr.bf16.gmra.mrb[0].mxu0 %v625
      %v3478 = vpop.f32.mrb[0].mxu0
      %v3479 = vadd.f32 %v3315, %v3478
      %v3480 = vpop.f32.mrb[0].mxu0
      %v3481 = vpop.f32.mrb[0].mxu0
      %v3482 = vadd.f32 %v3318, %v3481
      %v3483 = vpop.f32.mrb[0].mxu0
      %3484 = vmatprep.mubr.bf16.mxu0 0
      %3485 = vmatmul.mubr.bf16.gmra.mrb[0].mxu0 %v628
      %v3486 = vpop.f32.mrb[0].mxu0
      %v3487 = vadd.f32 %v3323, %v3486
      %v3488 = vpop.f32.mrb[0].mxu0
      %v3489 = vpop.f32.mrb[0].mxu0
      %v3490 = vadd.f32 %v3326, %v3489
      %v3491 = vpop.f32.mrb[0].mxu0
      %3492 = vmatprep.mubr.bf16.mxu0 0
      %3493 = vmatmul.mubr.bf16.gmra.mrb[0].mxu0 %v631
      %v3494 = vpop.f32.mrb[0].mxu0
      %v3495 = vadd.f32 %v3331, %v3494
      %v3496 = vpop.f32.mrb[0].mxu0
      %v3497 = vpop.f32.mrb[0].mxu0
      %v3498 = vadd.f32 %v3334, %v3497
      %v3499 = vpop.f32.mrb[0].mxu0
      %3500 = vmatprep.mubr.bf16.mxu0 0
      %3501 = vmatmul.mubr.bf16.gmra.mrb[0].mxu0 %v634
      %v3502 = vpop.f32.mrb[0].mxu0
      %v3503 = vadd.f32 %v3339, %v3502
      %v3504 = vpop.f32.mrb[0].mxu0
      %v3505 = vpop.f32.mrb[0].mxu0
      %v3506 = vadd.f32 %v3342, %v3505
      %v3507 = vpop.f32.mrb[0].mxu0
      %3508 = vmatprep.mubr.bf16.mxu0 0
      %3509 = vmatmul.mubr.bf16.gmra.mrb[0].mxu0 %v637
      %v3510 = vpop.f32.mrb[0].mxu0
      %v3511 = vadd.f32 %v3347, %v3510
      %v3512 = vpop.f32.mrb[0].mxu0
      %v3513 = vpop.f32.mrb[0].mxu0
      %v3514 = vadd.f32 %v3350, %v3513
      %v3515 = vpop.f32.mrb[0].mxu0
      %3516 = vmatprep.mubr.bf16.mxu0 0
      %3517 = vmatmul.mubr.bf16.gmra.mrb[0].mxu0 %v640
      %v3518 = vpop.f32.mrb[0].mxu0
      %v3519 = vadd.f32 %v3355, %v3518
      %v3520 = vpop.f32.mrb[0].mxu0
      %v3521 = vpop.f32.mrb[0].mxu0
      %v3522 = vadd.f32 %v3358, %v3521
      %v3523 = vpop.f32.mrb[0].mxu0
      %3524 = vmatprep.mubr.bf16.mxu0 0
      %3525 = vmatmul.mubr.bf16.gmra.mrb[0].mxu0 %v643
      %v3526 = vpop.f32.mrb[0].mxu0
      %v3527 = vadd.f32 %v3363, %v3526
      %v3528 = vpop.f32.mrb[0].mxu0
      %v3529 = vpop.f32.mrb[0].mxu0
      %v3530 = vadd.f32 %v3366, %v3529
      %v3531 = vpop.f32.mrb[0].mxu0
      %3532 = vmatprep.mubr.bf16.mxu0 0
      %3533 = vmatmul.mubr.bf16.gmra.mrb[0].mxu0 %v646
      %v3534 = vpop.f32.mrb[0].mxu0
      %v3535 = vadd.f32 %v3371, %v3534
      %v3536 = vpop.f32.mrb[0].mxu0
      %v3537 = vpop.f32.mrb[0].mxu0
      %v3538 = vadd.f32 %v3374, %v3537
      %v3539 = vpop.f32.mrb[0].mxu0
      %3540 = vmatprep.mubr.bf16.mxu0 0
      %3541 = vmatmul.mubr.bf16.gmra.mrb[0].mxu0 %v649
      %v3542 = vpop.f32.mrb[0].mxu0
      %v3543 = vadd.f32 %v3379, %v3542
      %v3544 = vpop.f32.mrb[0].mxu0
      %v3545 = vpop.f32.mrb[0].mxu0
      %v3546 = vadd.f32 %v3382, %v3545
      %v3547 = vpop.f32.mrb[0].mxu0
      %3548 = vmatprep.mubr.bf16.mxu0 0
      %3549 = vmatmul.mubr.bf16.gmra.mrb[0].mxu0 %v652
      %v3550 = vpop.f32.mrb[0].mxu0
      %v3551 = vadd.f32 %v3387, %v3550
      %v3552 = vpop.f32.mrb[0].mxu0
      %v3553 = vpop.f32.mrb[0].mxu0
      %v3554 = vadd.f32 %v3390, %v3553
      %v3555 = vpop.f32.mrb[0].mxu0
      %3556 = vmatprep.mubr.bf16.mxu0 0
      %3557 = vmatmul.mubr.bf16.gmra.mrb[0].mxu0 %v655
      %v3558 = vpop.f32.mrb[0].mxu0
      %v3559 = vadd.f32 %v3395, %v3558
      %v3560 = vpop.f32.mrb[0].mxu0
      %v3561 = vpop.f32.mrb[0].mxu0
      %v3562 = vadd.f32 %v3398, %v3561
      %v3563 = vpop.f32.mrb[0].mxu0
      %3564 = vmatprep.mubr.bf16.mxu0 0
      %3565 = vmatmul.mubr.bf16.gmra.mrb[0].mxu0 %v1233
      %v3566 = vpop.f32.mrb[0].mxu0
      %v3567 = vadd.f32 %v3403, %v3566
      %v3568 = vpop.f32.mrb[0].mxu0
      %v3569 = vpop.f32.mrb[0].mxu0
      %v3570 = vadd.f32 %v3406, %v3569
      %v3571 = vpop.f32.mrb[0].mxu0
      %3572 = vdwg.mxu0
      %s3573 = scalar_lea.vmem %s2, 28
      %v3574 = vld [vmem:[%s3573] sm:$0x3]
      %v3576 = vsel %vm657, %v3574, 0
      %3578 = vmatprep.subr.bf16.mxu0 0
      %3579 = vmatpush1.bf16.msra.mxu0 %v3576
      %3580 = vmatprep.subr.bf16.mxu0 0
      %3581 = vmatpush1.bf16.msra.mxu0 0
      %3582 = vmatprep.subr.bf16.mxu0 0
      %3583 = vmatpush1.bf16.msra.mxu0 0
      %3584 = vmatprep.subr.bf16.mxu0 0
      %3585 = vmatpush1.bf16.msra.mxu0 0
      %3586 = vmatprep.subr.bf16.mxu0 0
      %3587 = vmatpush1.bf16.msra.mxu0 0
      %3588 = vmatprep.subr.bf16.mxu0 0
      %3589 = vmatpush1.bf16.msra.mxu0 0
      %3590 = vmatprep.subr.bf16.mxu0 0
      %3591 = vmatpush1.bf16.msra.mxu0 0
      %3592 = vmatprep.subr.bf16.mxu0 0
      %3593 = vmatpush1.bf16.msra.mxu0 0
      %3594 = vmatprep.subr.bf16.mxu0 0
      %3595 = vmatpush1.bf16.msra.mxu0 0
      %3596 = vmatprep.subr.bf16.mxu0 0
      %3597 = vmatpush1.bf16.msra.mxu0 0
      %3598 = vmatprep.subr.bf16.mxu0 0
      %3599 = vmatpush1.bf16.msra.mxu0 0
      %3600 = vmatprep.subr.bf16.mxu0 0
      %3601 = vmatpush1.bf16.msra.mxu0 0
      %3602 = vmatprep.subr.bf16.mxu0 0
      %3603 = vmatpush1.bf16.msra.mxu0 0
      %3604 = vmatprep.subr.bf16.mxu0 0
      %3605 = vmatpush1.bf16.msra.mxu0 0
      %3606 = vmatprep.subr.bf16.mxu0 0
      %3607 = vmatpush1.bf16.msra.mxu0 0
      %3608 = vmatprep.subr.bf16.mxu0 0
      %3609 = vmatpush1.bf16.msra.mxu0 0
      %3610 = vmatprep.mubr.bf16.mxu0 0
      %3611 = vmatmul.mubr.bf16.gmra.mrb[0].mxu0 %v616
      %v3612 = vpop.f32.mrb[0].mxu0
      %v3613 = vadd.f32 0.0, %v3612
      %v3614 = vpop.f32.mrb[0].mxu0
      %v3615 = vpop.f32.mrb[0].mxu0
      %v3616 = vadd.f32 0.0, %v3615
      %v3617 = vpop.f32.mrb[0].mxu0
      %3618 = vmatprep.mubr.bf16.mxu0 0
      %3619 = vmatmul.mubr.bf16.gmra.mrb[0].mxu0 %v619
      %v3620 = vpop.f32.mrb[0].mxu0
      %v3621 = vadd.f32 0.0, %v3620
      %v3622 = vpop.f32.mrb[0].mxu0
      %v3623 = vpop.f32.mrb[0].mxu0
      %v3624 = vadd.f32 0.0, %v3623
      %v3625 = vpop.f32.mrb[0].mxu0
      %3626 = vmatprep.mubr.bf16.mxu0 0
      %3627 = vmatmul.mubr.bf16.gmra.mrb[0].mxu0 %v622
      %v3628 = vpop.f32.mrb[0].mxu0
      %v3629 = vadd.f32 0.0, %v3628
      %v3630 = vpop.f32.mrb[0].mxu0
      %v3631 = vpop.f32.mrb[0].mxu0
      %v3632 = vadd.f32 0.0, %v3631
      %v3633 = vpop.f32.mrb[0].mxu0
      %3634 = vmatprep.mubr.bf16.mxu0 0
      %3635 = vmatmul.mubr.bf16.gmra.mrb[0].mxu0 %v625
      %v3636 = vpop.f32.mrb[0].mxu0
      %v3637 = vadd.f32 0.0, %v3636
      %v3638 = vpop.f32.mrb[0].mxu0
      %v3639 = vpop.f32.mrb[0].mxu0
      %v3640 = vadd.f32 0.0, %v3639
      %v3641 = vpop.f32.mrb[0].mxu0
      %3642 = vmatprep.mubr.bf16.mxu0 0
      %3643 = vmatmul.mubr.bf16.gmra.mrb[0].mxu0 %v628
      %v3644 = vpop.f32.mrb[0].mxu0
      %v3645 = vadd.f32 0.0, %v3644
      %v3646 = vpop.f32.mrb[0].mxu0
      %v3647 = vpop.f32.mrb[0].mxu0
      %v3648 = vadd.f32 0.0, %v3647
      %v3649 = vpop.f32.mrb[0].mxu0
      %3650 = vmatprep.mubr.bf16.mxu0 0
      %3651 = vmatmul.mubr.bf16.gmra.mrb[0].mxu0 %v631
      %v3652 = vpop.f32.mrb[0].mxu0
      %v3653 = vadd.f32 0.0, %v3652
      %v3654 = vpop.f32.mrb[0].mxu0
      %v3655 = vpop.f32.mrb[0].mxu0
      %v3656 = vadd.f32 0.0, %v3655
      %v3657 = vpop.f32.mrb[0].mxu0
      %3658 = vmatprep.mubr.bf16.mxu0 0
      %3659 = vmatmul.mubr.bf16.gmra.mrb[0].mxu0 %v634
      %v3660 = vpop.f32.mrb[0].mxu0
      %v3661 = vadd.f32 0.0, %v3660
      %v3662 = vpop.f32.mrb[0].mxu0
      %v3663 = vpop.f32.mrb[0].mxu0
      %v3664 = vadd.f32 0.0, %v3663
      %v3665 = vpop.f32.mrb[0].mxu0
      %3666 = vmatprep.mubr.bf16.mxu0 0
      %3667 = vmatmul.mubr.bf16.gmra.mrb[0].mxu0 %v637
      %v3668 = vpop.f32.mrb[0].mxu0
      %v3669 = vadd.f32 0.0, %v3668
      %v3670 = vpop.f32.mrb[0].mxu0
      %v3671 = vpop.f32.mrb[0].mxu0
      %v3672 = vadd.f32 0.0, %v3671
      %v3673 = vpop.f32.mrb[0].mxu0
      %3674 = vmatprep.mubr.bf16.mxu0 0
      %3675 = vmatmul.mubr.bf16.gmra.mrb[0].mxu0 %v640
      %v3676 = vpop.f32.mrb[0].mxu0
      %v3677 = vadd.f32 0.0, %v3676
      %v3678 = vpop.f32.mrb[0].mxu0
      %v3679 = vpop.f32.mrb[0].mxu0
      %v3680 = vadd.f32 0.0, %v3679
      %v3681 = vpop.f32.mrb[0].mxu0
      %3682 = vmatprep.mubr.bf16.mxu0 0
      %3683 = vmatmul.mubr.bf16.gmra.mrb[0].mxu0 %v643
      %v3684 = vpop.f32.mrb[0].mxu0
      %v3685 = vadd.f32 0.0, %v3684
      %v3686 = vpop.f32.mrb[0].mxu0
      %v3687 = vpop.f32.mrb[0].mxu0
      %v3688 = vadd.f32 0.0, %v3687
      %v3689 = vpop.f32.mrb[0].mxu0
      %3690 = vmatprep.mubr.bf16.mxu0 0
      %3691 = vmatmul.mubr.bf16.gmra.mrb[0].mxu0 %v646
      %v3692 = vpop.f32.mrb[0].mxu0
      %v3693 = vadd.f32 0.0, %v3692
      %v3694 = vpop.f32.mrb[0].mxu0
      %v3695 = vpop.f32.mrb[0].mxu0
      %v3696 = vadd.f32 0.0, %v3695
      %v3697 = vpop.f32.mrb[0].mxu0
      %3698 = vmatprep.mubr.bf16.mxu0 0
      %3699 = vmatmul.mubr.bf16.gmra.mrb[0].mxu0 %v649
      %v3700 = vpop.f32.mrb[0].mxu0
      %v3701 = vadd.f32 0.0, %v3700
      %v3702 = vpop.f32.mrb[0].mxu0
      %v3703 = vpop.f32.mrb[0].mxu0
      %v3704 = vadd.f32 0.0, %v3703
      %v3705 = vpop.f32.mrb[0].mxu0
      %3706 = vmatprep.mubr.bf16.mxu0 0
      %3707 = vmatmul.mubr.bf16.gmra.mrb[0].mxu0 %v652
      %v3708 = vpop.f32.mrb[0].mxu0
      %v3709 = vadd.f32 0.0, %v3708
      %v3710 = vpop.f32.mrb[0].mxu0
      %v3711 = vpop.f32.mrb[0].mxu0
      %v3712 = vadd.f32 0.0, %v3711
      %v3713 = vpop.f32.mrb[0].mxu0
      %3714 = vmatprep.mubr.bf16.mxu0 0
      %3715 = vmatmul.mubr.bf16.gmra.mrb[0].mxu0 %v655
      %v3716 = vpop.f32.mrb[0].mxu0
      %v3717 = vadd.f32 0.0, %v3716
      %v3718 = vpop.f32.mrb[0].mxu0
      %v3719 = vpop.f32.mrb[0].mxu0
      %v3720 = vadd.f32 0.0, %v3719
      %v3721 = vpop.f32.mrb[0].mxu0
      %3722 = vmatprep.mubr.bf16.mxu0 0
      %3723 = vmatmul.mubr.bf16.gmra.mrb[0].mxu0 %v1233
      %v3724 = vpop.f32.mrb[0].mxu0
      %v3725 = vadd.f32 0.0, %v3724
      %v3726 = vpop.f32.mrb[0].mxu0
      %v3727 = vpop.f32.mrb[0].mxu0
      %v3728 = vadd.f32 0.0, %v3727
      %v3729 = vpop.f32.mrb[0].mxu0
      %3730 = vmatprep.mubr.bf16.mxu0 0
      %3731 = vmatmul.mubr.bf16.gmra.mrb[0].mxu0 %v2978
      %v3732 = vpop.f32.mrb[0].mxu0
      %v3733 = vadd.f32 0.0, %v3732
      %v3734 = vpop.f32.mrb[0].mxu0
      %v3735 = vpop.f32.mrb[0].mxu0
      %v3736 = vadd.f32 0.0, %v3735
      %v3737 = vpop.f32.mrb[0].mxu0
      %3738 = vdwg.mxu0
      %v3739 = vadd.f32 %v3447, %v3613
      %v3740 = vadd.f32 %v3450, %v3616
      %v3741 = vadd.f32 %v3455, %v3621
      %v3742 = vadd.f32 %v3458, %v3624
      %v3743 = vadd.f32 %v3463, %v3629
      %v3744 = vadd.f32 %v3466, %v3632
      %v3745 = vadd.f32 %v3471, %v3637
      %v3746 = vadd.f32 %v3474, %v3640
      %v3747 = vadd.f32 %v3479, %v3645
      %v3748 = vadd.f32 %v3482, %v3648
      %v3749 = vadd.f32 %v3487, %v3653
      %v3750 = vadd.f32 %v3490, %v3656
      %v3751 = vadd.f32 %v3495, %v3661
      %v3752 = vadd.f32 %v3498, %v3664
      %v3753 = vadd.f32 %v3503, %v3669
      %v3754 = vadd.f32 %v3506, %v3672
      %v3755 = vadd.f32 %v3511, %v3677
      %v3756 = vadd.f32 %v3514, %v3680
      %v3757 = vadd.f32 %v3519, %v3685
      %v3758 = vadd.f32 %v3522, %v3688
      %v3759 = vadd.f32 %v3527, %v3693
      %v3760 = vadd.f32 %v3530, %v3696
      %v3761 = vadd.f32 %v3535, %v3701
      %v3762 = vadd.f32 %v3538, %v3704
      %v3763 = vadd.f32 %v3543, %v3709
      %v3764 = vadd.f32 %v3546, %v3712
      %v3765 = vadd.f32 %v3551, %v3717
      %v3766 = vadd.f32 %v3554, %v3720
      %v3767 = vadd.f32 %v3559, %v3725
      %v3768 = vadd.f32 %v3562, %v3728
      %v3769 = vadd.f32 %v3567, %v3733
      %v3770 = vadd.f32 %v3570, %v3736
      %s3771 = scalar_lea.vmem %s2, 30
      %v3772 = vld [vmem:[%s3771] sm:$0x3]
      %v3775 = vrot.slane %v392, 1
      %v3776 = vrot.slane %v410, 1
      %v3777 = vsel %vm1537, %v3775, %v3776
      %v3779 = vsel %vm608, %v3777, 0
      %v3782 = vsel %vm657, %v3772, 0
      %3784 = vmatprep.subr.bf16.mxu0 0
      %3785 = vmatpush1.bf16.msra.mxu0 %v3782
      %3786 = vmatprep.subr.bf16.mxu0 0
      %3787 = vmatpush1.bf16.msra.mxu0 0
      %3788 = vmatprep.subr.bf16.mxu0 0
      %3789 = vmatpush1.bf16.msra.mxu0 0
      %3790 = vmatprep.subr.bf16.mxu0 0
      %3791 = vmatpush1.bf16.msra.mxu0 0
      %3792 = vmatprep.subr.bf16.mxu0 0
      %3793 = vmatpush1.bf16.msra.mxu0 0
      %3794 = vmatprep.subr.bf16.mxu0 0
      %3795 = vmatpush1.bf16.msra.mxu0 0
      %3796 = vmatprep.subr.bf16.mxu0 0
      %3797 = vmatpush1.bf16.msra.mxu0 0
      %3798 = vmatprep.subr.bf16.mxu0 0
      %3799 = vmatpush1.bf16.msra.mxu0 0
      %3800 = vmatprep.subr.bf16.mxu0 0
      %3801 = vmatpush1.bf16.msra.mxu0 0
      %3802 = vmatprep.subr.bf16.mxu0 0
      %3803 = vmatpush1.bf16.msra.mxu0 0
      %3804 = vmatprep.subr.bf16.mxu0 0
      %3805 = vmatpush1.bf16.msra.mxu0 0
      %3806 = vmatprep.subr.bf16.mxu0 0
      %3807 = vmatpush1.bf16.msra.mxu0 0
      %3808 = vmatprep.subr.bf16.mxu0 0
      %3809 = vmatpush1.bf16.msra.mxu0 0
      %3810 = vmatprep.subr.bf16.mxu0 0
      %3811 = vmatpush1.bf16.msra.mxu0 0
      %3812 = vmatprep.subr.bf16.mxu0 0
      %3813 = vmatpush1.bf16.msra.mxu0 0
      %3814 = vmatprep.subr.bf16.mxu0 0
      %3815 = vmatpush1.bf16.msra.mxu0 0
      %3816 = vmatprep.mubr.bf16.mxu0 0
      %3817 = vmatmul.mubr.bf16.gmra.mrb[0].mxu0 %v1593
      %v3818 = vpop.f32.mrb[0].mxu0
      %v3819 = vadd.f32 0.0, %v3818
      %v3820 = vpop.f32.mrb[0].mxu0
      %v3821 = vpop.f32.mrb[0].mxu0
      %v3822 = vadd.f32 0.0, %v3821
      %v3823 = vpop.f32.mrb[0].mxu0
      %3824 = vmatprep.mubr.bf16.mxu0 0
      %3825 = vmatmul.mubr.bf16.gmra.mrb[0].mxu0 %v1596
      %v3826 = vpop.f32.mrb[0].mxu0
      %v3827 = vadd.f32 0.0, %v3826
      %v3828 = vpop.f32.mrb[0].mxu0
      %v3829 = vpop.f32.mrb[0].mxu0
      %v3830 = vadd.f32 0.0, %v3829
      %v3831 = vpop.f32.mrb[0].mxu0
      %3832 = vmatprep.mubr.bf16.mxu0 0
      %3833 = vmatmul.mubr.bf16.gmra.mrb[0].mxu0 %v1599
      %v3834 = vpop.f32.mrb[0].mxu0
      %v3835 = vadd.f32 0.0, %v3834
      %v3836 = vpop.f32.mrb[0].mxu0
      %v3837 = vpop.f32.mrb[0].mxu0
      %v3838 = vadd.f32 0.0, %v3837
      %v3839 = vpop.f32.mrb[0].mxu0
      %3840 = vmatprep.mubr.bf16.mxu0 0
      %3841 = vmatmul.mubr.bf16.gmra.mrb[0].mxu0 %v1602
      %v3842 = vpop.f32.mrb[0].mxu0
      %v3843 = vadd.f32 0.0, %v3842
      %v3844 = vpop.f32.mrb[0].mxu0
      %v3845 = vpop.f32.mrb[0].mxu0
      %v3846 = vadd.f32 0.0, %v3845
      %v3847 = vpop.f32.mrb[0].mxu0
      %3848 = vmatprep.mubr.bf16.mxu0 0
      %3849 = vmatmul.mubr.bf16.gmra.mrb[0].mxu0 %v1605
      %v3850 = vpop.f32.mrb[0].mxu0
      %v3851 = vadd.f32 0.0, %v3850
      %v3852 = vpop.f32.mrb[0].mxu0
      %v3853 = vpop.f32.mrb[0].mxu0
      %v3854 = vadd.f32 0.0, %v3853
      %v3855 = vpop.f32.mrb[0].mxu0
      %3856 = vmatprep.mubr.bf16.mxu0 0
      %3857 = vmatmul.mubr.bf16.gmra.mrb[0].mxu0 %v1608
      %v3858 = vpop.f32.mrb[0].mxu0
      %v3859 = vadd.f32 0.0, %v3858
      %v3860 = vpop.f32.mrb[0].mxu0
      %v3861 = vpop.f32.mrb[0].mxu0
      %v3862 = vadd.f32 0.0, %v3861
      %v3863 = vpop.f32.mrb[0].mxu0
      %3864 = vmatprep.mubr.bf16.mxu0 0
      %3865 = vmatmul.mubr.bf16.gmra.mrb[0].mxu0 %v1611
      %v3866 = vpop.f32.mrb[0].mxu0
      %v3867 = vadd.f32 0.0, %v3866
      %v3868 = vpop.f32.mrb[0].mxu0
      %v3869 = vpop.f32.mrb[0].mxu0
      %v3870 = vadd.f32 0.0, %v3869
      %v3871 = vpop.f32.mrb[0].mxu0
      %3872 = vmatprep.mubr.bf16.mxu0 0
      %3873 = vmatmul.mubr.bf16.gmra.mrb[0].mxu0 %v1614
      %v3874 = vpop.f32.mrb[0].mxu0
      %v3875 = vadd.f32 0.0, %v3874
      %v3876 = vpop.f32.mrb[0].mxu0
      %v3877 = vpop.f32.mrb[0].mxu0
      %v3878 = vadd.f32 0.0, %v3877
      %v3879 = vpop.f32.mrb[0].mxu0
      %3880 = vmatprep.mubr.bf16.mxu0 0
      %3881 = vmatmul.mubr.bf16.gmra.mrb[0].mxu0 %v1617
      %v3882 = vpop.f32.mrb[0].mxu0
      %v3883 = vadd.f32 0.0, %v3882
      %v3884 = vpop.f32.mrb[0].mxu0
      %v3885 = vpop.f32.mrb[0].mxu0
      %v3886 = vadd.f32 0.0, %v3885
      %v3887 = vpop.f32.mrb[0].mxu0
      %3888 = vmatprep.mubr.bf16.mxu0 0
      %3889 = vmatmul.mubr.bf16.gmra.mrb[0].mxu0 %v1620
      %v3890 = vpop.f32.mrb[0].mxu0
      %v3891 = vadd.f32 0.0, %v3890
      %v3892 = vpop.f32.mrb[0].mxu0
      %v3893 = vpop.f32.mrb[0].mxu0
      %v3894 = vadd.f32 0.0, %v3893
      %v3895 = vpop.f32.mrb[0].mxu0
      %3896 = vmatprep.mubr.bf16.mxu0 0
      %3897 = vmatmul.mubr.bf16.gmra.mrb[0].mxu0 %v1623
      %v3898 = vpop.f32.mrb[0].mxu0
      %v3899 = vadd.f32 0.0, %v3898
      %v3900 = vpop.f32.mrb[0].mxu0
      %v3901 = vpop.f32.mrb[0].mxu0
      %v3902 = vadd.f32 0.0, %v3901
      %v3903 = vpop.f32.mrb[0].mxu0
      %3904 = vmatprep.mubr.bf16.mxu0 0
      %3905 = vmatmul.mubr.bf16.gmra.mrb[0].mxu0 %v1626
      %v3906 = vpop.f32.mrb[0].mxu0
      %v3907 = vadd.f32 0.0, %v3906
      %v3908 = vpop.f32.mrb[0].mxu0
      %v3909 = vpop.f32.mrb[0].mxu0
      %v3910 = vadd.f32 0.0, %v3909
      %v3911 = vpop.f32.mrb[0].mxu0
      %3912 = vmatprep.mubr.bf16.mxu0 0
      %3913 = vmatmul.mubr.bf16.gmra.mrb[0].mxu0 %v1629
      %v3914 = vpop.f32.mrb[0].mxu0
      %v3915 = vadd.f32 0.0, %v3914
      %v3916 = vpop.f32.mrb[0].mxu0
      %v3917 = vpop.f32.mrb[0].mxu0
      %v3918 = vadd.f32 0.0, %v3917
      %v3919 = vpop.f32.mrb[0].mxu0
      %3920 = vmatprep.mubr.bf16.mxu0 0
      %3921 = vmatmul.mubr.bf16.gmra.mrb[0].mxu0 %v1632
      %v3922 = vpop.f32.mrb[0].mxu0
      %v3923 = vadd.f32 0.0, %v3922
      %v3924 = vpop.f32.mrb[0].mxu0
      %v3925 = vpop.f32.mrb[0].mxu0
      %v3926 = vadd.f32 0.0, %v3925
      %v3927 = vpop.f32.mrb[0].mxu0
      %3928 = vmatprep.mubr.bf16.mxu0 0
      %3929 = vmatmul.mubr.bf16.gmra.mrb[0].mxu0 %v2168
      %v3930 = vpop.f32.mrb[0].mxu0
      %v3931 = vadd.f32 0.0, %v3930
      %v3932 = vpop.f32.mrb[0].mxu0
      %v3933 = vpop.f32.mrb[0].mxu0
      %v3934 = vadd.f32 0.0, %v3933
      %v3935 = vpop.f32.mrb[0].mxu0
      %3936 = vmatprep.mubr.bf16.mxu0 0
      %3937 = vmatmul.mubr.bf16.gmra.mrb[0].mxu0 %v3779
      %v3938 = vpop.f32.mrb[0].mxu0
      %v3939 = vadd.f32 0.0, %v3938
      %v3940 = vpop.f32.mrb[0].mxu0
      %v3941 = vpop.f32.mrb[0].mxu0
      %v3942 = vadd.f32 0.0, %v3941
      %v3943 = vpop.f32.mrb[0].mxu0
      %3944 = vdwg.mxu0
      %v3945 = vadd.f32 %v3739, %v3819
      %v3946 = vadd.f32 %v3740, %v3822
      %v3947 = vadd.f32 %v3741, %v3827
      %v3948 = vadd.f32 %v3742, %v3830
      %v3949 = vadd.f32 %v3743, %v3835
      %v3950 = vadd.f32 %v3744, %v3838
      %v3951 = vadd.f32 %v3745, %v3843
      %v3952 = vadd.f32 %v3746, %v3846
      %v3953 = vadd.f32 %v3747, %v3851
      %v3954 = vadd.f32 %v3748, %v3854
      %v3955 = vadd.f32 %v3749, %v3859
      %v3956 = vadd.f32 %v3750, %v3862
      %v3957 = vadd.f32 %v3751, %v3867
      %v3958 = vadd.f32 %v3752, %v3870
      %v3959 = vadd.f32 %v3753, %v3875
      %v3960 = vadd.f32 %v3754, %v3878
      %v3961 = vadd.f32 %v3755, %v3883
      %v3962 = vadd.f32 %v3756, %v3886
      %v3963 = vadd.f32 %v3757, %v3891
      %v3964 = vadd.f32 %v3758, %v3894
      %v3965 = vadd.f32 %v3759, %v3899
      %v3966 = vadd.f32 %v3760, %v3902
      %v3967 = vadd.f32 %v3761, %v3907
      %v3968 = vadd.f32 %v3762, %v3910
      %v3969 = vadd.f32 %v3763, %v3915
      %v3970 = vadd.f32 %v3764, %v3918
      %v3971 = vadd.f32 %v3765, %v3923
      %v3972 = vadd.f32 %v3766, %v3926
      %v3973 = vadd.f32 %v3767, %v3931
      %v3974 = vadd.f32 %v3768, %v3934
      %v3975 = vadd.f32 %v3769, %v3939
      %v3976 = vadd.f32 %v3770, %v3942
      %v3977 = vadd.f32 %v3945, %v1435
      %v3978 = vadd.f32 %v3946, %v1435
      %v3979 = vadd.f32 %v3947, %v1435
      %v3980 = vadd.f32 %v3948, %v1435
      %v3981 = vadd.f32 %v3949, %v1435
      %v3982 = vadd.f32 %v3950, %v1435
      %v3983 = vadd.f32 %v3951, %v1435
      %v3984 = vadd.f32 %v3952, %v1435
      %v3985 = vadd.f32 %v3953, %v1435
      %v3986 = vadd.f32 %v3954, %v1435
      %v3987 = vadd.f32 %v3955, %v1435
      %v3988 = vadd.f32 %v3956, %v1435
      %v3989 = vadd.f32 %v3957, %v1435
      %v3990 = vadd.f32 %v3958, %v1435
      %v3991 = vadd.f32 %v3959, %v1435
      %v3992 = vadd.f32 %v3960, %v1435
      %v3993 = vadd.f32 %v3961, %v1435
      %v3994 = vadd.f32 %v3962, %v1435
      %v3995 = vadd.f32 %v3963, %v1435
      %v3996 = vadd.f32 %v3964, %v1435
      %v3997 = vadd.f32 %v3965, %v1435
      %v3998 = vadd.f32 %v3966, %v1435
      %v3999 = vadd.f32 %v3967, %v1435
      %v4000 = vadd.f32 %v3968, %v1435
      %v4001 = vadd.f32 %v3969, %v1435
      %v4002 = vadd.f32 %v3970, %v1435
      %v4003 = vadd.f32 %v3971, %v1435
      %v4004 = vadd.f32 %v3972, %v1435
      %v4005 = vadd.f32 %v3973, %v1435
      %v4006 = vadd.f32 %v3974, %v1435
      %v4007 = vadd.f32 %v3975, %v1435
      %v4008 = vadd.f32 %v3976, %v1435
      %s4009 = scalar_lea.vmem %s318, 768
      %4010 = vst.msk [vmem:[%s4009] sm:$0xff] %vm608, %v3977
      %4011 = vst.msk [vmem:[%s4009 + $0x8] sm:$0xff] %vm608, %v3978
      %4012 = vst.msk [vmem:[%s4009 + $0x10] sm:$0xff] %vm608, %v3979
      %4013 = vst.msk [vmem:[%s4009 + $0x18] sm:$0xff] %vm608, %v3980
      %4014 = vst.msk [vmem:[%s4009 + $0x20] sm:$0xff] %vm608, %v3981
      %4015 = vst.msk [vmem:[%s4009 + $0x28] sm:$0xff] %vm608, %v3982
      %4016 = vst.msk [vmem:[%s4009 + $0x30] sm:$0xff] %vm608, %v3983
      %4017 = vst.msk [vmem:[%s4009 + $0x38] sm:$0xff] %vm608, %v3984
      %4018 = vst.msk [vmem:[%s4009 + $0x40] sm:$0xff] %vm608, %v3985
      %4019 = vst.msk [vmem:[%s4009 + $0x48] sm:$0xff] %vm608, %v3986
      %4020 = vst.msk [vmem:[%s4009 + $0x50] sm:$0xff] %vm608, %v3987
      %4021 = vst.msk [vmem:[%s4009 + $0x58] sm:$0xff] %vm608, %v3988
      %4022 = vst.msk [vmem:[%s4009 + $0x60] sm:$0xff] %vm608, %v3989
      %4023 = vst.msk [vmem:[%s4009 + $0x68] sm:$0xff] %vm608, %v3990
      %4024 = vst.msk [vmem:[%s4009 + $0x70] sm:$0xff] %vm608, %v3991
      %4025 = vst.msk [vmem:[%s4009 + $0x78] sm:$0xff] %vm608, %v3992
      %4026 = vst.msk [vmem:[%s4009 + $0x80] sm:$0xff] %vm608, %v3993
      %4027 = vst.msk [vmem:[%s4009 + $0x88] sm:$0xff] %vm608, %v3994
      %4028 = vst.msk [vmem:[%s4009 + $0x90] sm:$0xff] %vm608, %v3995
      %4029 = vst.msk [vmem:[%s4009 + $0x98] sm:$0xff] %vm608, %v3996
      %4030 = vst.msk [vmem:[%s4009 + $0xa0] sm:$0xff] %vm608, %v3997
      %4031 = vst.msk [vmem:[%s4009 + $0xa8] sm:$0xff] %vm608, %v3998
      %4032 = vst.msk [vmem:[%s4009 + $0xb0] sm:$0xff] %vm608, %v3999
      %4033 = vst.msk [vmem:[%s4009 + $0xb8] sm:$0xff] %vm608, %v4000
      %4034 = vst.msk [vmem:[%s4009 + $0xc0] sm:$0xff] %vm608, %v4001
      %4035 = vst.msk [vmem:[%s4009 + $0xc8] sm:$0xff] %vm608, %v4002
      %4036 = vst.msk [vmem:[%s4009 + $0xd0] sm:$0xff] %vm608, %v4003
      %4037 = vst.msk [vmem:[%s4009 + $0xd8] sm:$0xff] %vm608, %v4004
      %4038 = vst.msk [vmem:[%s4009 + $0xe0] sm:$0xff] %vm608, %v4005
      %4039 = vst.msk [vmem:[%s4009 + $0xe8] sm:$0xff] %vm608, %v4006
      %4040 = vst.msk [vmem:[%s4009 + $0xf0] sm:$0xff] %vm608, %v4007
      %4041 = vst.msk [vmem:[%s4009 + $0xf8] sm:$0xff] %vm608, %v4008
      %s4042 = smul.u32 16, %s20
      %p4043 = scmp.lt.s32.totalorder %s19, 1
      %s4044 = scalar_select %p4043, %s19, 1
      %p4045 = scmp.lt.s32.totalorder %s4042, 15
      %s4046 = scalar_select %p4045, %s4042, 15
      %s4047 = smul.addr %s4046, 2
      %s4048 = smul.addr %s4044, 128
      %s4049 = sadd.s32 %s4047, %s4048
      %s4050 = smul.addr %s4049, 8
      %s4051 = scalar_lea.vmem %s4, %s4050
      // Predicated region
      $region37: #{tpu_custom_call.1} parent=35 // pred_check
        %p4052 = pneg %p149
      $region38: #{tpu_custom_call.1} parent=35 // pred_check_branch
        %4054 = sbr.rel (%p4052) target = $region40
      $region39: #{tpu_custom_call.1} parent=35 // pred_region
        %s4055 = smul.u32 16, %s20
      $region40: #{tpu_custom_call.1} parent=35 // pred_fallthru
        _
    $region36: #{tpu_custom_call.1} parent=5 // pred_fallthru
      _
    %p4056 = scmp.le.s32.totalorder 2, %s10
    // Predicated region
    $region41: #{tpu_custom_call.1} parent=5 // pred_check
      %p4057 = pneg %p4056
    $region42: #{tpu_custom_call.1} parent=5 // pred_check_branch
      %4059 = sbr.rel (%p4057) target = $region44
    $region43: #{tpu_custom_call.1} parent=5 // pred_region
      %s4060 = ssub.s32 %s10, 2
      // Predicated region
      $region45: #{tpu_custom_call.1} parent=43 // pred_check
        %p4061 = pneg %p155
      $region46: #{tpu_custom_call.1} parent=43 // pred_check_branch
        %4063 = sbr.rel (%p4061) target = $region48
      $region47: #{tpu_custom_call.1} parent=43 // pred_region
        %s4064 = smul.u32 16, %s22
        %p4065 = scmp.lt.s32.totalorder %s21, 1
        %s4066 = scalar_select %p4065, %s21, 1
        %p4067 = scmp.lt.s32.totalorder %s4064, 15
        %s4068 = scalar_select %p4067, %s4064, 15
        %s4069 = smul.addr %s4068, 2
        %s4070 = smul.addr %s4066, 128
        %s4071 = sadd.s32 %s4069, %s4070
        %s4072 = smul.addr %s4071, 8
        %s4073 = scalar_lea.vmem %s4, %s4072
      $region48: #{tpu_custom_call.1} parent=43 // pred_fallthru
        _
    $region44: #{tpu_custom_call.1} parent=5 // pred_fallthru
      _
  $region6: #{tpu_custom_call.1} parent=0 // loop_footer
    %s14 = sadd.s32 1, %s10
  $region7: #{tpu_custom_call.1} parent=0 // loop_footer_branch
    %9 = sbr.rel target = $region3
  $region8: #{tpu_custom_call.1} parent=0 // loop_exit
    _

</llo_original>
